<compile_context>
chip_gen: v6e
topology: v6e:2x2x1
jax: 0.10.0
libtpu: 0.0.40
codegen_flags: <defaults>
</compile_context>

<pallas_src>
import functools

import numpy as np

import jax
import jax.numpy as jnp
from jax.experimental import pallas as pl
from jax.experimental.pallas import tpu as pltpu

_CP = pltpu.CompilerParams(dimension_semantics=("parallel",))
_PAD_BASE = 8  # sublane-aligned start row of the conv halo scratch


def _full_spec(shape):
    nd = len(shape)
    return pl.BlockSpec(shape, lambda n, _nd=nd: (0,) * _nd)


def _row_spec(H, L):
    return pl.BlockSpec((1, H, L), lambda n: (n, 0, 0))


# --------------------------------------------------------------------------- #
# In-kernel helpers (operate on lane-dense (H, W*C) values)
# --------------------------------------------------------------------------- #
def _zero_halo(pad_ref, *, H, p, hi, WC):
    b = _PAD_BASE
    if p > 0:
        pad_ref[b - p:b, :] = jnp.zeros((p, WC), jnp.float32)
    if hi > 0:
        pad_ref[b + H:b + H + hi, :] = jnp.zeros((hi, WC), jnp.float32)


def _banded_conv(pad_ref, x, w_ref, b_ref, *, H, kh, zero_halo=True):
    """'same' kxk conv on lane-dense activations.

    x:       (H, W*Cin) f32 value.
    pad_ref: VMEM scratch (>= _PAD_BASE + H + kh//2, W*Cin) for the H halo.
    w_ref:   (kh, W*Cin, W*Cout) banded weights; the dx taps and the zero
             padding at the W border are already folded into each matrix.
    b_ref:   (1, W*Cout) lane-tiled bias.
    """
    f32 = jnp.float32
    p = (kh - 1) // 2
    hi = kh - 1 - p
    WCin = x.shape[1]
    b = _PAD_BASE
    if zero_halo:
        _zero_halo(pad_ref, H=H, p=p, hi=hi, WC=WCin)
    pad_ref[b:b + H, :] = x.astype(f32)
    # Bias folded into the first tap accumulation (no explicit zeros+add).
    acc = jnp.dot(pad_ref[b - p:b - p + H, :], w_ref[0],
                  preferred_element_type=f32) + b_ref[...]
    for dy in range(1, kh):
        row = pad_ref[b - p + dy:b - p + dy + H, :]
        acc = acc + jnp.dot(row, w_ref[dy], preferred_element_type=f32)
    return acc


# --------------------------------------------------------------------------- #
# Pallas kernels
# --------------------------------------------------------------------------- #
def _conv_kernel(x_ref, w_ref, b_ref, out_ref, pad_ref, *, H, kh):
    acc = _banded_conv(pad_ref, x_ref[0].astype(jnp.float32), w_ref, b_ref,
                       H=H, kh=kh)
    out_ref[0] = acc.astype(out_ref.dtype)


def _conv_add_kernel(x_ref, res_ref, w_ref, b_ref, out_ref, pad_ref, *, H, kh):
    acc = _banded_conv(pad_ref, x_ref[0].astype(jnp.float32), w_ref, b_ref,
                       H=H, kh=kh)
    out_ref[0] = (acc + res_ref[0].astype(jnp.float32)).astype(out_ref.dtype)


def _upsample_kernel(x_ref, w_ref, b_ref, out_ref):
    # 1x1 conv + SiLU, with pixel_shuffle folded into the weight column order.
    y = jnp.dot(x_ref[0].astype(jnp.float32), w_ref[...],
                preferred_element_type=jnp.float32) + b_ref[...]
    y = y * jax.nn.sigmoid(y)
    out_ref[0] = y.astype(out_ref.dtype)


def _fmb_kernel(x0_ref, mask_ref,
                aw1_ref, ab1_ref, aw2_ref, ab2_ref, adw_ref, adb_ref,
                bw1_ref, bb1_ref, bw2_ref, bb2_ref, bdw_ref, bdb_ref,
                fw3_ref, fb3_ref, fw1_ref, fb1_ref,
                out_ref, pad_ref, *, H, WC, k, eps):
    """One full FeatureMixingBlock for one batch element, fully VMEM-resident."""
    f32 = jnp.float32
    n_elem = H * WC
    mask_hi = mask_ref[...]  # (1, WC): 1.0 on the pass-through (upper) channels

    # Zero the (max) H halo once; every banded conv below reuses it.
    kmax = max(k, 3)
    pmax = (kmax - 1) // 2
    _zero_halo(pad_ref, H=H, p=pmax, hi=kmax - 1 - pmax, WC=WC)

    def channel_proj(z0, w1_ref, b1_ref, w2_ref, b2_ref):
        # F.layer_norm over [C,H,W] (biased var, no affine) fused with
        # split -> PWMLP(1x1 -> SiLU -> 1x1) -> concat -> +z0 residual.
        # channel_shuffle(groups=C) in the reference is the identity.
        mean = jnp.sum(z0) / n_elem
        zc = z0 - mean
        var = jnp.sum(zc * zc) / n_elem
        zn = zc * jax.lax.rsqrt(var + eps)
        h = jnp.dot(zn, w1_ref[...], preferred_element_type=f32) + b1_ref[...]
        h = h * jax.nn.sigmoid(h)
        y = jnp.dot(h, w2_ref[...], preferred_element_type=f32) + b2_ref[...]
        return y + zn * mask_hi + z0

    x0 = x0_ref[0].astype(f32)
    # ShuffleMixerLayer a (reference uses channel_proj_output twice).
    x = channel_proj(x0, aw1_ref, ab1_ref, aw2_ref, ab2_ref)
    x = _banded_conv(pad_ref, x, adw_ref, adb_ref, H=H, kh=k, zero_halo=False)
    x = channel_proj(x, aw1_ref, ab1_ref, aw2_ref, ab2_ref)
    # ShuffleMixerLayer b.
    x = channel_proj(x, bw1_ref, bb1_ref, bw2_ref, bb2_ref)
    x = _banded_conv(pad_ref, x, bdw_ref, bdb_ref, H=H, kh=k, zero_halo=False)
    x = channel_proj(x, bw1_ref, bb1_ref, bw2_ref, bb2_ref)
    x = x0 + x
    # FusedMBConv: 3x3 conv -> SiLU -> 1x1 conv -> +residual.
    h = _banded_conv(pad_ref, x, fw3_ref, fb3_ref, H=H, kh=3, zero_halo=False)
    h = h * jax.nn.sigmoid(h)
    y = jnp.dot(h, fw1_ref[...], preferred_element_type=f32) + fb1_ref[...]
    out_ref[0] = (y + x).astype(out_ref.dtype)


# --------------------------------------------------------------------------- #
# pallas_call wrappers (grid over batch, whole-image lane-dense blocks)
# --------------------------------------------------------------------------- #
def banded_conv2d(x, w_banded, b_lane, *, kh, residual=None):
    N, H, WCin = x.shape
    WCout = w_banded.shape[2]
    scratch = [pltpu.VMEM((_PAD_BASE + H + 8, WCin), jnp.float32)]
    if residual is None:
        kernel = functools.partial(_conv_kernel, H=H, kh=kh)
        in_specs = [_row_spec(H, WCin), _full_spec(w_banded.shape),
                    _full_spec(b_lane.shape)]
        args = (x, w_banded, b_lane)
    else:
        kernel = functools.partial(_conv_add_kernel, H=H, kh=kh)
        in_specs = [_row_spec(H, WCin), _row_spec(H, WCout),
                    _full_spec(w_banded.shape), _full_spec(b_lane.shape)]
        args = (x, residual, w_banded, b_lane)
    return pl.pallas_call(
        kernel,
        out_shape=jax.ShapeDtypeStruct((N, H, WCout), x.dtype),
        grid=(N,),
        in_specs=in_specs,
        out_specs=_row_spec(H, WCout),
        scratch_shapes=scratch,
        compiler_params=_CP,
    )(*args)


def upsample_block(x, w_shuf, b_shuf):
    # x: (N, H, W*C);  w_shuf: (W*C, 4*W*C) pre-permuted so the matmul output is
    # already in pixel-shuffled lane order;  b_shuf: (1, 4*W*C).
    N, H, WC = x.shape
    L = w_shuf.shape[1]
    y = pl.pallas_call(
        _upsample_kernel,
        out_shape=jax.ShapeDtypeStruct((N, H, L), x.dtype),
        grid=(N,),
        in_specs=[_row_spec(H, WC), _full_spec(w_shuf.shape),
                  _full_spec(b_shuf.shape)],
        out_specs=_row_spec(H, L),
        compiler_params=_CP,
    )(x, w_shuf, b_shuf)
    # Free reshape: (N, H, 2*(2W*C)) -> (N, 2H, 2W*C) interleaves rows 2h+i.
    return y.reshape(N, 2 * H, L // 2)


def feature_mixing_block(x, prep):
    N, H, WC = x.shape
    k = prep["k"]
    args = (x, prep["mask_hi"],
            prep["a_w1"], prep["a_b1"], prep["a_w2"], prep["a_b2"],
            prep["a_dw"], prep["a_db"],
            prep["b_w1"], prep["b_b1"], prep["b_w2"], prep["b_b2"],
            prep["b_dw"], prep["b_db"],
            prep["f_w3"], prep["f_b3"], prep["f_w1"], prep["f_b1"])
    in_specs = [_row_spec(H, WC)] + [_full_spec(a.shape) for a in args[1:]]

    # Advisory cost estimate so XLA can overlap the plain-JAX glue around us.
    Lh = prep["a_w1"].shape[1]
    Lm = prep["f_w3"].shape[2]
    dot_flops = (4 * (2 * H * WC * Lh + 2 * H * Lh * WC)
                 + 2 * (k * 2 * H * WC * WC)
                 + 3 * 2 * H * WC * Lm
                 + 2 * H * Lm * WC)
    trans = 4 * H * Lh + H * Lm
    wbytes = sum(int(np.prod(a.shape)) for a in args[1:]) * 4
    cost = pl.CostEstimate(flops=int(N * dot_flops),
                           transcendentals=int(N * trans),
                           bytes_accessed=int(N * 2 * H * WC * 4 + wbytes))

    kernel = functools.partial(_fmb_kernel, H=H, WC=WC, k=k, eps=1e-5)
    return pl.pallas_call(
        kernel,
        out_shape=jax.ShapeDtypeStruct((N, H, WC), x.dtype),
        grid=(N,),
        in_specs=in_specs,
        out_specs=_row_spec(H, WC),
        scratch_shapes=[pltpu.VMEM((_PAD_BASE + H + 8, WC), jnp.float32)],
        compiler_params=_CP,
        cost_estimate=cost,
    )(*args)


# --------------------------------------------------------------------------- #
# Wrapper-side weight preparation (tiny, weight-only work; enables lane-dense
# kernels without any per-tap slicing / relayout inside the kernels).
# --------------------------------------------------------------------------- #
def _eye(W, off):
    return jnp.asarray(np.eye(W, k=off), jnp.float32)


def _lane_bias(b, W):
    return jnp.tile(b, W)[None, :]  # (1, W*len(b))


def _banded_dense(W, taps):
    # taps: (kh, kw, Cin, Cout) -> (kh, W*Cin, W*Cout)
    kh, kw = taps.shape[0], taps.shape[1]
    pw = (kw - 1) // 2
    rows = []
    for dy in range(kh):
        m = None
        for dx in range(kw):
            t = jnp.kron(_eye(W, pw - dx), taps[dy, dx])
            m = t if m is None else m + t
        rows.append(m)
    return jnp.stack(rows)


def _banded_depthwise(W, taps):
    # taps: (kh, kw, C) depthwise weights -> (kh, W*C, W*C)
    kh, kw = taps.shape[0], taps.shape[1]
    pw = (kw - 1) // 2
    rows = []
    for dy in range(kh):
        m = None
        for dx in range(kw):
            t = jnp.kron(_eye(W, pw - dx), jnp.diag(taps[dy, dx]))
            m = t if m is None else m + t
        rows.append(m)
    return jnp.stack(rows)


def _mask_hi(W, C):
    Ch = C // 2
    m = np.concatenate([np.zeros(Ch, np.float32), np.ones(C - Ch, np.float32)])
    return jnp.asarray(np.tile(m, W))[None, :]  # (1, W*C)


def _prep_channel_proj(W, C, cp):
    # cp: w1 (Ch, 2Ch), b1 (2Ch,), w2 (2Ch, Ch), b2 (Ch,)
    Ch, Hd = cp["w1"].shape
    w1_full = jnp.zeros((C, Hd), jnp.float32).at[:Ch, :].set(cp["w1"])
    w2_full = jnp.zeros((Hd, C), jnp.float32).at[:, :Ch].set(cp["w2"])
    w1k = jnp.kron(_eye(W, 0), w1_full)                 # (W*C, W*Hd)
    w2k = jnp.kron(_eye(W, 0), w2_full)                 # (W*Hd, W*C)
    b1l = _lane_bias(cp["b1"], W)                       # (1, W*Hd)
    b2_full = jnp.zeros((C,), jnp.float32).at[:Ch].set(cp["b2"])
    b2l = _lane_bias(b2_full, W)                        # (1, W*C)
    return w1k, b1l, w2k, b2l


def _prep_block(W, C, bp, mask_hi):
    a_w1, a_b1, a_w2, a_b2 = _prep_channel_proj(W, C, bp["a"]["cp"])
    b_w1, b_b1, b_w2, b_b2 = _prep_channel_proj(W, C, bp["b"]["cp"])
    return {
        "k": int(bp["a"]["dw_w"].shape[0]),
        "mask_hi": mask_hi,
        "a_w1": a_w1, "a_b1": a_b1, "a_w2": a_w2, "a_b2": a_b2,
        "a_dw": _banded_depthwise(W, bp["a"]["dw_w"]),
        "a_db": _lane_bias(bp["a"]["dw_b"], W),
        "b_w1": b_w1, "b_b1": b_b1, "b_w2": b_w2, "b_b2": b_b2,
        "b_dw": _banded_depthwise(W, bp["b"]["dw_w"]),
        "b_db": _lane_bias(bp["b"]["dw_b"], W),
        "f_w3": _banded_dense(W, bp["fmb_w_in"]),
        "f_b3": _lane_bias(bp["fmb_b_in"], W),
        "f_w1": jnp.kron(_eye(W, 0), bp["fmb_w_out"]),
        "f_b1": _lane_bias(bp["fmb_b_out"], W),
    }


def _prep_upsampler(W, C, w, b):
    # w: (C, 4C), b: (4C,).  Fold pixel_shuffle(2) into the column order so the
    # kernel output lanes are (i, w, j, c): col = i*2WC + (2w+j)*C + c reads
    # conv output channel 4c + 2i + j at spatial w.
    M = jnp.kron(_eye(W, 0), w)                          # (W*C, W*4C)
    i_ = np.arange(2)[:, None, None, None]
    w_ = np.arange(W)[None, :, None, None]
    j_ = np.arange(2)[None, None, :, None]
    c_ = np.arange(C)[None, None, None, :]
    oc = 4 * c_ + 2 * i_ + j_
    src = np.broadcast_to(w_ * 4 * C + oc, (2, W, 2, C)).reshape(-1)
    oc_b = np.broadcast_to(oc, (2, W, 2, C)).reshape(-1)
    w_shuf = M[:, src]                                   # (W*C, 4*W*C)
    b_shuf = b[oc_b][None, :]                            # (1, 4*W*C)
    return w_shuf, b_shuf


# --------------------------------------------------------------------------- #
# Plain-JAX glue
# --------------------------------------------------------------------------- #
def _resize_indices(out_size, in_size, scale):
    d = jnp.arange(out_size, dtype=jnp.float32)
    src = (d + 0.5) / scale - 0.5
    src = jnp.where(src < 0.0, 0.0, src)  # PyTorch clamps negatives to 0
    i0 = jnp.floor(src).astype(jnp.int32)
    i1 = jnp.minimum(i0 + 1, in_size - 1)
    w1 = src - i0.astype(jnp.float32)
    return i0, i1, 1.0 - w1, w1


def bilinear_upsample(x, scale):
    # F.interpolate(mode='bilinear', align_corners=False), NHWC.
    # TODO(synk): static-index gather kept in plain JAX (not a matmul hot path).
    N, H, W, C = x.shape
    h0, h1, wh0, wh1 = _resize_indices(H * scale, H, scale)
    w0, w1, ww0, ww1 = _resize_indices(W * scale, W, scale)
    top = x[:, h0] * wh0[None, :, None, None] + x[:, h1] * wh1[None, :, None, None]
    out = (top[:, :, w0] * ww0[None, None, :, None]
           + top[:, :, w1] * ww1[None, None, :, None])
    return out


# --------------------------------------------------------------------------- #
# Model composition
# --------------------------------------------------------------------------- #
def shuffle_mixer_forward(image_nchw, params, *, four_times_scale=False):
    N, Cin, H, W = image_nchw.shape
    x_nhwc = jnp.transpose(image_nchw, (0, 2, 3, 1))     # NCHW -> NHWC
    scale = 4 if four_times_scale else 2
    sH, sW = H * scale, W * scale
    up_ld = bilinear_upsample(x_nhwc, scale).reshape(N, sH, sW * Cin)

    F = params["feat_w"].shape[3]
    x = x_nhwc.reshape(N, H, W * Cin)                    # lane-dense NHWC

    # Feature extraction 3x3 conv.
    res = banded_conv2d(x, _banded_dense(W, params["feat_w"]),
                        _lane_bias(params["feat_b"], W), kh=3)   # (N, H, W*F)

    # Feature mixing blocks: one fused Pallas kernel per block.
    mask_hi = _mask_hi(W, F)
    for bp in params["blocks"]:
        res = feature_mixing_block(res, _prep_block(W, F, bp, mask_hi))

    # Upsampler(s): 1x1 conv + pixel_shuffle + SiLU fused.
    w_sh, b_sh = _prep_upsampler(W, F, params["ups_w"], params["ups_b"])
    res = upsample_block(res, w_sh, b_sh)                # (N, 2H, 2W*F)
    cur_w = 2 * W
    if four_times_scale:
        w_sh2, b_sh2 = _prep_upsampler(cur_w, F, params["ups2_w"], params["ups2_b"])
        res = upsample_block(res, w_sh2, b_sh2)
        cur_w = 2 * cur_w

    # Final 3x3 conv with the bilinear residual add fused into its epilogue.
    out = banded_conv2d(res, _banded_dense(cur_w, params["out_w"]),
                        _lane_bias(params["out_b"], cur_w), kh=3,
                        residual=up_ld)                  # (N, sH, sW*Cin)

    out = out.reshape(N, sH, sW, Cin)
    return jnp.transpose(out, (0, 3, 1, 2))              # back to NCHW


# --------------------------------------------------------------------------- #
# Deterministic synthetic parameters (layouts: conv (kh,kw,Cin,Cout), bias (C,))
# --------------------------------------------------------------------------- #
def init_params(key, in_ch, features, k, num_blocks):
    def nxt():
        nonlocal key
        key, sub = jax.random.split(key)
        return sub

    def w(shape, scl=0.1):
        return jax.random.normal(nxt(), shape, jnp.float32) * scl

    F = features
    Ch = F // 2
    params = {
        "feat_w": w((3, 3, in_ch, F)), "feat_b": w((F,)),
        "blocks": [],
        "ups_w": w((F, 4 * F)), "ups_b": w((4 * F,)),
        "out_w": w((3, 3, F, in_ch)), "out_b": w((in_ch,)),
    }

    def make_layer():
        return {
            "cp": {"w1": w((Ch, 2 * Ch)), "b1": w((2 * Ch,)),
                   "w2": w((2 * Ch, Ch)), "b2": w((Ch,))},
            "dw_w": w((k, k, F)), "dw_b": w((F,)),
        }

    for _ in range(num_blocks):
        params["blocks"].append({
            "a": make_layer(),
            "b": make_layer(),
            "fmb_w_in": w((3, 3, F, F + 16)), "fmb_b_in": w((F + 16,)),
            "fmb_w_out": w((F + 16, F)), "fmb_b_out": w((F,)),
        })
    return params


if __name__ == "__main__":
    key = jax.random.PRNGKey(0)
    k_img, k_par = jax.random.split(key)

    in_ch, features, depth_kernel_size, n_blocks = 3, 8, 3, 1
    N, H, W = 2, 16, 16

    image = jax.random.normal(k_img, (N, in_ch, H, W), jnp.float32)
    params = init_params(k_par, in_ch, features, depth_kernel_size, n_blocks)

    fwd = jax.jit(shuffle_mixer_forward)
    out = fwd(image, params)
    jax.block_until_ready(out)

    assert out.shape == (N, in_ch, 2 * H, 2 * W), out.shape
    assert out.dtype == jnp.float32
    print("KERNEL_OK")
</pallas_src>

<mosaic_0001>
module attributes {stable_mosaic.version = 11 : i64} {
  func.func @_conv_kernel(%arg0: i32, %arg1: memref<1x16x48xf32, #tpu.memory_space<vmem>>, %arg2: memref<3x48x128xf32, #tpu.memory_space<vmem>>, %arg3: memref<1x128xf32, #tpu.memory_space<vmem>>, %arg4: memref<1x16x128xf32, #tpu.memory_space<vmem>>, %arg5: memref<32x48xf32, #tpu.memory_space<vmem>>) attributes {dimension_semantics = [#tpu.dimension_semantics<parallel>], iteration_bounds = array<i64: 2>, scalar_prefetch = 0 : i64, scratch_operands = 1 : i64, tpu.core_type = #tpu.core_type<tc>, window_params = [{transform_indices = @transform_0, window_bounds = array<i64: 1, 16, 48>}, {pipeline_mode = #tpu.pipeline_mode<synchronous>, transform_indices = @transform_1, window_bounds = array<i64: 3, 48, 128>}, {pipeline_mode = #tpu.pipeline_mode<synchronous>, transform_indices = @transform_2, window_bounds = array<i64: 1, 128>}, {transform_indices = @transform_3, window_bounds = array<i64: 1, 16, 128>}]} {
    %c0 = arith.constant 0 : index
    %c0_0 = arith.constant 0 : index
    %c0_1 = arith.constant 0 : index
    %0 = vector.load %arg1[%c0, %c0_0, %c0_1] : memref<1x16x48xf32, #tpu.memory_space<vmem>>, vector<1x16x48xf32>
    %1 = vector.shape_cast %0 : vector<1x16x48xf32> to vector<16x48xf32>
    %cst = arith.constant 0.000000e+00 : f32
    %2 = vector.broadcast %cst : f32 to vector<1x48xf32>
    %c7 = arith.constant 7 : index
    %c0_2 = arith.constant 0 : index
    %3 = vector.load %arg5[%c7, %c0_2] : memref<32x48xf32, #tpu.memory_space<vmem>>, vector<1x48xf32>
    tpu.vector_store %arg5[%c7, %c0_2], %2 {strides = array<i32>} : memref<32x48xf32, #tpu.memory_space<vmem>>, vector<1x48xf32>,
    %cst_3 = arith.constant 0.000000e+00 : f32
    %4 = vector.broadcast %cst_3 : f32 to vector<1x48xf32>
    %c24 = arith.constant 24 : index
    %c0_4 = arith.constant 0 : index
    %5 = vector.load %arg5[%c24, %c0_4] : memref<32x48xf32, #tpu.memory_space<vmem>>, vector<1x48xf32>
    tpu.vector_store %arg5[%c24, %c0_4], %4 {strides = array<i32>} : memref<32x48xf32, #tpu.memory_space<vmem>>, vector<1x48xf32>,
    %c8 = arith.constant 8 : index
    %c0_5 = arith.constant 0 : index
    %6 = vector.load %arg5[%c8, %c0_5] : memref<32x48xf32, #tpu.memory_space<vmem>>, vector<16x48xf32>
    tpu.vector_store %arg5[%c8, %c0_5], %1 {strides = array<i32>} : memref<32x48xf32, #tpu.memory_space<vmem>>, vector<16x48xf32>,
    %c7_6 = arith.constant 7 : index
    %c0_7 = arith.constant 0 : index
    %7 = vector.load %arg5[%c7_6, %c0_7] : memref<32x48xf32, #tpu.memory_space<vmem>>, vector<16x48xf32>
    %c0_8 = arith.constant 0 : index
    %c0_9 = arith.constant 0 : index
    %c0_10 = arith.constant 0 : index
    %8 = vector.load %arg2[%c0_8, %c0_9, %c0_10] : memref<3x48x128xf32, #tpu.memory_space<vmem>>, vector<1x48x128xf32>
    %9 = vector.shape_cast %8 : vector<1x48x128xf32> to vector<48x128xf32>
    %cst_11 = arith.constant dense<0.000000e+00> : vector<16x128xf32>
    %10 = tpu.matmul %7, %9, %cst_11 {dimension_numbers = #tpu.dot_dimension_numbers<[1], [0], [0], [1], [0, 0, 1, 1], [], []>} : vector<16x48xf32>, vector<48x128xf32>, vector<16x128xf32> -> vector<16x128xf32>
    %c0_12 = arith.constant 0 : index
    %c0_13 = arith.constant 0 : index
    %11 = vector.load %arg3[%c0_12, %c0_13] : memref<1x128xf32, #tpu.memory_space<vmem>>, vector<1x128xf32>
    %12 = vector.broadcast %11 : vector<1x128xf32> to vector<16x128xf32>
    %13 = arith.addf %10, %12 : vector<16x128xf32>
    %c8_14 = arith.constant 8 : index
    %c0_15 = arith.constant 0 : index
    %14 = vector.load %arg5[%c8_14, %c0_15] : memref<32x48xf32, #tpu.memory_space<vmem>>, vector<16x48xf32>
    %c1 = arith.constant 1 : index
    %c0_16 = arith.constant 0 : index
    %c0_17 = arith.constant 0 : index
    %15 = vector.load %arg2[%c1, %c0_16, %c0_17] : memref<3x48x128xf32, #tpu.memory_space<vmem>>, vector<1x48x128xf32>
    %16 = vector.shape_cast %15 : vector<1x48x128xf32> to vector<48x128xf32>
    %cst_18 = arith.constant dense<0.000000e+00> : vector<16x128xf32>
    %17 = tpu.matmul %14, %16, %cst_18 {dimension_numbers = #tpu.dot_dimension_numbers<[1], [0], [0], [1], [0, 0, 1, 1], [], []>} : vector<16x48xf32>, vector<48x128xf32>, vector<16x128xf32> -> vector<16x128xf32>
    %18 = arith.addf %13, %17 : vector<16x128xf32>
    %c9 = arith.constant 9 : index
    %c0_19 = arith.constant 0 : index
    %19 = vector.load %arg5[%c9, %c0_19] : memref<32x48xf32, #tpu.memory_space<vmem>>, vector<16x48xf32>
    %c2 = arith.constant 2 : index
    %c0_20 = arith.constant 0 : index
    %c0_21 = arith.constant 0 : index
    %20 = vector.load %arg2[%c2, %c0_20, %c0_21] : memref<3x48x128xf32, #tpu.memory_space<vmem>>, vector<1x48x128xf32>
    %21 = vector.shape_cast %20 : vector<1x48x128xf32> to vector<48x128xf32>
    %cst_22 = arith.constant dense<0.000000e+00> : vector<16x128xf32>
    %22 = tpu.matmul %19, %21, %cst_22 {dimension_numbers = #tpu.dot_dimension_numbers<[1], [0], [0], [1], [0, 0, 1, 1], [], []>} : vector<16x48xf32>, vector<48x128xf32>, vector<16x128xf32> -> vector<16x128xf32>
    %23 = arith.addf %18, %22 : vector<16x128xf32>
    %c0_23 = arith.constant 0 : index
    %c0_24 = arith.constant 0 : index
    %c0_25 = arith.constant 0 : index
    %24 = vector.load %arg4[%c0_23, %c0_24, %c0_25] : memref<1x16x128xf32, #tpu.memory_space<vmem>>, vector<1x16x128xf32>
    %25 = vector.shape_cast %24 : vector<1x16x128xf32> to vector<16x128xf32>
    %26 = vector.shape_cast %23 : vector<16x128xf32> to vector<1x16x128xf32>
    tpu.vector_store %arg4[%c0_23, %c0_24, %c0_25], %26 {strides = array<i32>} : memref<1x16x128xf32, #tpu.memory_space<vmem>>, vector<1x16x128xf32>,
    return
  }
  func.func @transform_0(%arg0: i32) -> (i32, i32, i32) {
    %c0_i32 = arith.constant 0 : i32
    %c0_i32_0 = arith.constant 0 : i32
    %c0_i32_1 = arith.constant 0 : i32
    return %arg0, %c0_i32, %c0_i32_0 : i32, i32, i32
  }
  func.func @transform_1(%arg0: i32) -> (i32, i32, i32) {
    %c0_i32 = arith.constant 0 : i32
    %c0_i32_0 = arith.constant 0 : i32
    %c0_i32_1 = arith.constant 0 : i32
    %c0_i32_2 = arith.constant 0 : i32
    return %c0_i32, %c0_i32_0, %c0_i32_1 : i32, i32, i32
  }
  func.func @transform_2(%arg0: i32) -> (i32, i32) {
    %c0_i32 = arith.constant 0 : i32
    %c0_i32_0 = arith.constant 0 : i32
    %c0_i32_1 = arith.constant 0 : i32
    return %c0_i32, %c0_i32_0 : i32, i32
  }
  func.func @transform_3(%arg0: i32) -> (i32, i32, i32) {
    %c0_i32 = arith.constant 0 : i32
    %c0_i32_0 = arith.constant 0 : i32
    %c0_i32_1 = arith.constant 0 : i32
    return %arg0, %c0_i32, %c0_i32_0 : i32, i32, i32
  }
}

module attributes {stable_mosaic.version = 11 : i64} {
  func.func @_fmb_kernel(%arg0: i32, %arg1: memref<1x16x128xf32, #tpu.memory_space<vmem>>, %arg2: memref<1x128xf32, #tpu.memory_space<vmem>>, %arg3: memref<128x128xf32, #tpu.memory_space<vmem>>, %arg4: memref<1x128xf32, #tpu.memory_space<vmem>>, %arg5: memref<128x128xf32, #tpu.memory_space<vmem>>, %arg6: memref<1x128xf32, #tpu.memory_space<vmem>>, %arg7: memref<3x128x128xf32, #tpu.memory_space<vmem>>, %arg8: memref<1x128xf32, #tpu.memory_space<vmem>>, %arg9: memref<128x128xf32, #tpu.memory_space<vmem>>, %arg10: memref<1x128xf32, #tpu.memory_space<vmem>>, %arg11: memref<128x128xf32, #tpu.memory_space<vmem>>, %arg12: memref<1x128xf32, #tpu.memory_space<vmem>>, %arg13: memref<3x128x128xf32, #tpu.memory_space<vmem>>, %arg14: memref<1x128xf32, #tpu.memory_space<vmem>>, %arg15: memref<3x128x384xf32, #tpu.memory_space<vmem>>, %arg16: memref<1x384xf32, #tpu.memory_space<vmem>>, %arg17: memref<384x128xf32, #tpu.memory_space<vmem>>, %arg18: memref<1x128xf32, #tpu.memory_space<vmem>>, %arg19: memref<1x16x128xf32, #tpu.memory_space<vmem>>, %arg20: memref<32x128xf32, #tpu.memory_space<vmem>>) attributes {dimension_semantics = [#tpu.dimension_semantics<parallel>], iteration_bounds = array<i64: 2>, scalar_prefetch = 0 : i64, scratch_operands = 1 : i64, tpu.core_type = #tpu.core_type<tc>, window_params = [{transform_indices = @transform_0, window_bounds = array<i64: 1, 16, 128>}, {pipeline_mode = #tpu.pipeline_mode<synchronous>, transform_indices = @transform_1, window_bounds = array<i64: 1, 128>}, {pipeline_mode = #tpu.pipeline_mode<synchronous>, transform_indices = @transform_2, window_bounds = array<i64: 128, 128>}, {pipeline_mode = #tpu.pipeline_mode<synchronous>, transform_indices = @transform_3, window_bounds = array<i64: 1, 128>}, {pipeline_mode = #tpu.pipeline_mode<synchronous>, transform_indices = @transform_4, window_bounds = array<i64: 128, 128>}, {pipeline_mode = #tpu.pipeline_mode<synchronous>, transform_indices = @transform_5, window_bounds = array<i64: 1, 128>}, {pipeline_mode = #tpu.pipeline_mode<synchronous>, transform_indices = @transform_6, window_bounds = array<i64: 3, 128, 128>}, {pipeline_mode = #tpu.pipeline_mode<synchronous>, transform_indices = @transform_7, window_bounds = array<i64: 1, 128>}, {pipeline_mode = #tpu.pipeline_mode<synchronous>, transform_indices = @transform_8, window_bounds = array<i64: 128, 128>}, {pipeline_mode = #tpu.pipeline_mode<synchronous>, transform_indices = @transform_9, window_bounds = array<i64: 1, 128>}, {pipeline_mode = #tpu.pipeline_mode<synchronous>, transform_indices = @transform_10, window_bounds = array<i64: 128, 128>}, {pipeline_mode = #tpu.pipeline_mode<synchronous>, transform_indices = @transform_11, window_bounds = array<i64: 1, 128>}, {pipeline_mode = #tpu.pipeline_mode<synchronous>, transform_indices = @transform_12, window_bounds = array<i64: 3, 128, 128>}, {pipeline_mode = #tpu.pipeline_mode<synchronous>, transform_indices = @transform_13, window_bounds = array<i64: 1, 128>}, {pipeline_mode = #tpu.pipeline_mode<synchronous>, transform_indices = @transform_14, window_bounds = array<i64: 3, 128, 384>}, {pipeline_mode = #tpu.pipeline_mode<synchronous>, transform_indices = @transform_15, window_bounds = array<i64: 1, 384>}, {pipeline_mode = #tpu.pipeline_mode<synchronous>, transform_indices = @transform_16, window_bounds = array<i64: 384, 128>}, {pipeline_mode = #tpu.pipeline_mode<synchronous>, transform_indices = @transform_17, window_bounds = array<i64: 1, 128>}, {transform_indices = @transform_18, window_bounds = array<i64: 1, 16, 128>}]} {
    %c0 = arith.constant 0 : index
    %c0_0 = arith.constant 0 : index
    %0 = vector.load %arg2[%c0, %c0_0] : memref<1x128xf32, #tpu.memory_space<vmem>>, vector<1x128xf32>
    %cst = arith.constant 0.000000e+00 : f32
    %1 = vector.broadcast %cst : f32 to vector<1x128xf32>
    %c7 = arith.constant 7 : index
    %c0_1 = arith.constant 0 : index
    %2 = vector.load %arg20[%c7, %c0_1] : memref<32x128xf32, #tpu.memory_space<vmem>>, vector<1x128xf32>
    tpu.vector_store %arg20[%c7, %c0_1], %1 {strides = array<i32>} : memref<32x128xf32, #tpu.memory_space<vmem>>, vector<1x128xf32>,
    %cst_2 = arith.constant 0.000000e+00 : f32
    %3 = vector.broadcast %cst_2 : f32 to vector<1x128xf32>
    %c24 = arith.constant 24 : index
    %c0_3 = arith.constant 0 : index
    %4 = vector.load %arg20[%c24, %c0_3] : memref<32x128xf32, #tpu.memory_space<vmem>>, vector<1x128xf32>
    tpu.vector_store %arg20[%c24, %c0_3], %3 {strides = array<i32>} : memref<32x128xf32, #tpu.memory_space<vmem>>, vector<1x128xf32>,
    %c0_4 = arith.constant 0 : index
    %c0_5 = arith.constant 0 : index
    %c0_6 = arith.constant 0 : index
    %5 = vector.load %arg1[%c0_4, %c0_5, %c0_6] : memref<1x16x128xf32, #tpu.memory_space<vmem>>, vector<1x16x128xf32>
    %6 = vector.shape_cast %5 : vector<1x16x128xf32> to vector<16x128xf32>
    %7 = vector.shape_cast %6 : vector<16x128xf32> to vector<1x16x128xf32>
    %cst_7 = arith.constant dense<0.000000e+00> : vector<1xf32>
    %8 = vector.multi_reduction <add>, %7, %cst_7 [1, 2] : vector<1x16x128xf32> to vector<1xf32>
    %9 = vector.shape_cast %8 : vector<1xf32> to vector<1x1x1xf32>
    %10 = vector.extract %9[0, 0, 0] : f32 from vector<1x1x1xf32>
    %cst_8 = arith.constant 2.048000e+03 : f32
    %11 = arith.divf %10, %cst_8 : f32
    %12 = vector.broadcast %11 : f32 to vector<16x128xf32>
    %13 = arith.subf %6, %12 : vector<16x128xf32>
    %14 = arith.mulf %13, %13 : vector<16x128xf32>
    %15 = vector.shape_cast %14 : vector<16x128xf32> to vector<1x16x128xf32>
    %cst_9 = arith.constant dense<0.000000e+00> : vector<1xf32>
    %16 = vector.multi_reduction <add>, %15, %cst_9 [1, 2] : vector<1x16x128xf32> to vector<1xf32>
    %17 = vector.shape_cast %16 : vector<1xf32> to vector<1x1x1xf32>
    %18 = vector.extract %17[0, 0, 0] : f32 from vector<1x1x1xf32>
    %cst_10 = arith.constant 2.048000e+03 : f32
    %19 = arith.divf %18, %cst_10 : f32
    %cst_11 = arith.constant 9.99999974E-6 : f32
    %20 = arith.addf %19, %cst_11 : f32
    %21 = math.rsqrt %20 : f32
    %22 = vector.broadcast %21 : f32 to vector<16x128xf32>
    %23 = arith.mulf %13, %22 : vector<16x128xf32>
    %c0_12 = arith.constant 0 : index
    %c0_13 = arith.constant 0 : index
    %24 = vector.load %arg3[%c0_12, %c0_13] : memref<128x128xf32, #tpu.memory_space<vmem>>, vector<128x128xf32>
    %cst_14 = arith.constant dense<0.000000e+00> : vector<16x128xf32>
    %25 = tpu.matmul %23, %24, %cst_14 {dimension_numbers = #tpu.dot_dimension_numbers<[1], [0], [0], [1], [0, 0, 1, 1], [], []>} : vector<16x128xf32>, vector<128x128xf32>, vector<16x128xf32> -> vector<16x128xf32>
    %c0_15 = arith.constant 0 : index
    %c0_16 = arith.constant 0 : index
    %26 = vector.load %arg4[%c0_15, %c0_16] : memref<1x128xf32, #tpu.memory_space<vmem>>, vector<1x128xf32>
    %27 = vector.broadcast %26 : vector<1x128xf32> to vector<16x128xf32>
    %28 = arith.addf %25, %27 : vector<16x128xf32>
    %29 = arith.negf %28 : vector<16x128xf32>
    %30 = math.exp %29 : vector<16x128xf32>
    %cst_17 = arith.constant 1.000000e+00 : f32
    %31 = vector.broadcast %cst_17 : f32 to vector<16x128xf32>
    %32 = arith.addf %31, %30 : vector<16x128xf32>
    %33 = arith.divf %31, %32 : vector<16x128xf32>
    %34 = arith.mulf %28, %33 : vector<16x128xf32>
    %c0_18 = arith.constant 0 : index
    %c0_19 = arith.constant 0 : index
    %35 = vector.load %arg5[%c0_18, %c0_19] : memref<128x128xf32, #tpu.memory_space<vmem>>, vector<128x128xf32>
    %cst_20 = arith.constant dense<0.000000e+00> : vector<16x128xf32>
    %36 = tpu.matmul %34, %35, %cst_20 {dimension_numbers = #tpu.dot_dimension_numbers<[1], [0], [0], [1], [0, 0, 1, 1], [], []>} : vector<16x128xf32>, vector<128x128xf32>, vector<16x128xf32> -> vector<16x128xf32>
    %c0_21 = arith.constant 0 : index
    %c0_22 = arith.constant 0 : index
    %37 = vector.load %arg6[%c0_21, %c0_22] : memref<1x128xf32, #tpu.memory_space<vmem>>, vector<1x128xf32>
    %38 = vector.broadcast %37 : vector<1x128xf32> to vector<16x128xf32>
    %39 = arith.addf %36, %38 : vector<16x128xf32>
    %40 = vector.broadcast %0 : vector<1x128xf32> to vector<16x128xf32>
    %41 = arith.mulf %23, %40 : vector<16x128xf32>
    %42 = arith.addf %39, %41 : vector<16x128xf32>
    %43 = arith.addf %42, %6 : vector<16x128xf32>
    %c8 = arith.constant 8 : index
    %c0_23 = arith.constant 0 : index
    %44 = vector.load %arg20[%c8, %c0_23] : memref<32x128xf32, #tpu.memory_space<vmem>>, vector<16x128xf32>
    tpu.vector_store %arg20[%c8, %c0_23], %43 {strides = array<i32>} : memref<32x128xf32, #tpu.memory_space<vmem>>, vector<16x128xf32>,
    %c7_24 = arith.constant 7 : index
    %c0_25 = arith.constant 0 : index
    %45 = vector.load %arg20[%c7_24, %c0_25] : memref<32x128xf32, #tpu.memory_space<vmem>>, vector<16x128xf32>
    %c0_26 = arith.constant 0 : index
    %c0_27 = arith.constant 0 : index
    %c0_28 = arith.constant 0 : index
    %46 = vector.load %arg7[%c0_26, %c0_27, %c0_28] : memref<3x128x128xf32, #tpu.memory_space<vmem>>, vector<1x128x128xf32>
    %47 = vector.shape_cast %46 : vector<1x128x128xf32> to vector<128x128xf32>
    %cst_29 = arith.constant dense<0.000000e+00> : vector<16x128xf32>
    %48 = tpu.matmul %45, %47, %cst_29 {dimension_numbers = #tpu.dot_dimension_numbers<[1], [0], [0], [1], [0, 0, 1, 1], [], []>} : vector<16x128xf32>, vector<128x128xf32>, vector<16x128xf32> -> vector<16x128xf32>
    %c0_30 = arith.constant 0 : index
    %c0_31 = arith.constant 0 : index
    %49 = vector.load %arg8[%c0_30, %c0_31] : memref<1x128xf32, #tpu.memory_space<vmem>>, vector<1x128xf32>
    %50 = vector.broadcast %49 : vector<1x128xf32> to vector<16x128xf32>
    %51 = arith.addf %48, %50 : vector<16x128xf32>
    %c8_32 = arith.constant 8 : index
    %c0_33 = arith.constant 0 : index
    %52 = vector.load %arg20[%c8_32, %c0_33] : memref<32x128xf32, #tpu.memory_space<vmem>>, vector<16x128xf32>
    %c1 = arith.constant 1 : index
    %c0_34 = arith.constant 0 : index
    %c0_35 = arith.constant 0 : index
    %53 = vector.load %arg7[%c1, %c0_34, %c0_35] : memref<3x128x128xf32, #tpu.memory_space<vmem>>, vector<1x128x128xf32>
    %54 = vector.shape_cast %53 : vector<1x128x128xf32> to vector<128x128xf32>
    %cst_36 = arith.constant dense<0.000000e+00> : vector<16x128xf32>
    %55 = tpu.matmul %52, %54, %cst_36 {dimension_numbers = #tpu.dot_dimension_numbers<[1], [0], [0], [1], [0, 0, 1, 1], [], []>} : vector<16x128xf32>, vector<128x128xf32>, vector<16x128xf32> -> vector<16x128xf32>
    %56 = arith.addf %51, %55 : vector<16x128xf32>
    %c9 = arith.constant 9 : index
    %c0_37 = arith.constant 0 : index
    %57 = vector.load %arg20[%c9, %c0_37] : memref<32x128xf32, #tpu.memory_space<vmem>>, vector<16x128xf32>
    %c2 = arith.constant 2 : index
    %c0_38 = arith.constant 0 : index
    %c0_39 = arith.constant 0 : index
    %58 = vector.load %arg7[%c2, %c0_38, %c0_39] : memref<3x128x128xf32, #tpu.memory_space<vmem>>, vector<1x128x128xf32>
    %59 = vector.shape_cast %58 : vector<1x128x128xf32> to vector<128x128xf32>
    %cst_40 = arith.constant dense<0.000000e+00> : vector<16x128xf32>
    %60 = tpu.matmul %57, %59, %cst_40 {dimension_numbers = #tpu.dot_dimension_numbers<[1], [0], [0], [1], [0, 0, 1, 1], [], []>} : vector<16x128xf32>, vector<128x128xf32>, vector<16x128xf32> -> vector<16x128xf32>
    %61 = arith.addf %56, %60 : vector<16x128xf32>
    %62 = vector.shape_cast %61 : vector<16x128xf32> to vector<1x16x128xf32>
    %cst_41 = arith.constant dense<0.000000e+00> : vector<1xf32>
    %63 = vector.multi_reduction <add>, %62, %cst_41 [1, 2] : vector<1x16x128xf32> to vector<1xf32>
    %64 = vector.shape_cast %63 : vector<1xf32> to vector<1x1x1xf32>
    %65 = vector.extract %64[0, 0, 0] : f32 from vector<1x1x1xf32>
    %cst_42 = arith.constant 2.048000e+03 : f32
    %66 = arith.divf %65, %cst_42 : f32
    %67 = vector.broadcast %66 : f32 to vector<16x128xf32>
    %68 = arith.subf %61, %67 : vector<16x128xf32>
    %69 = arith.mulf %68, %68 : vector<16x128xf32>
    %70 = vector.shape_cast %69 : vector<16x128xf32> to vector<1x16x128xf32>
    %cst_43 = arith.constant dense<0.000000e+00> : vector<1xf32>
    %71 = vector.multi_reduction <add>, %70, %cst_43 [1, 2] : vector<1x16x128xf32> to vector<1xf32>
    %72 = vector.shape_cast %71 : vector<1xf32> to vector<1x1x1xf32>
    %73 = vector.extract %72[0, 0, 0] : f32 from vector<1x1x1xf32>
    %cst_44 = arith.constant 2.048000e+03 : f32
    %74 = arith.divf %73, %cst_44 : f32
    %cst_45 = arith.constant 9.99999974E-6 : f32
    %75 = arith.addf %74, %cst_45 : f32
    %76 = math.rsqrt %75 : f32
    %77 = vector.broadcast %76 : f32 to vector<16x128xf32>
    %78 = arith.mulf %68, %77 : vector<16x128xf32>
    %c0_46 = arith.constant 0 : index
    %c0_47 = arith.constant 0 : index
    %79 = vector.load %arg3[%c0_46, %c0_47] : memref<128x128xf32, #tpu.memory_space<vmem>>, vector<128x128xf32>
    %cst_48 = arith.constant dense<0.000000e+00> : vector<16x128xf32>
    %80 = tpu.matmul %78, %79, %cst_48 {dimension_numbers = #tpu.dot_dimension_numbers<[1], [0], [0], [1], [0, 0, 1, 1], [], []>} : vector<16x128xf32>, vector<128x128xf32>, vector<16x128xf32> -> vector<16x128xf32>
    %c0_49 = arith.constant 0 : index
    %c0_50 = arith.constant 0 : index
    %81 = vector.load %arg4[%c0_49, %c0_50] : memref<1x128xf32, #tpu.memory_space<vmem>>, vector<1x128xf32>
    %82 = vector.broadcast %81 : vector<1x128xf32> to vector<16x128xf32>
    %83 = arith.addf %80, %82 : vector<16x128xf32>
    %84 = arith.negf %83 : vector<16x128xf32>
    %85 = math.exp %84 : vector<16x128xf32>
    %cst_51 = arith.constant 1.000000e+00 : f32
    %86 = vector.broadcast %cst_51 : f32 to vector<16x128xf32>
    %87 = arith.addf %86, %85 : vector<16x128xf32>
    %88 = arith.divf %86, %87 : vector<16x128xf32>
    %89 = arith.mulf %83, %88 : vector<16x128xf32>
    %c0_52 = arith.constant 0 : index
    %c0_53 = arith.constant 0 : index
    %90 = vector.load %arg5[%c0_52, %c0_53] : memref<128x128xf32, #tpu.memory_space<vmem>>, vector<128x128xf32>
    %cst_54 = arith.constant dense<0.000000e+00> : vector<16x128xf32>
    %91 = tpu.matmul %89, %90, %cst_54 {dimension_numbers = #tpu.dot_dimension_numbers<[1], [0], [0], [1], [0, 0, 1, 1], [], []>} : vector<16x128xf32>, vector<128x128xf32>, vector<16x128xf32> -> vector<16x128xf32>
    %c0_55 = arith.constant 0 : index
    %c0_56 = arith.constant 0 : index
    %92 = vector.load %arg6[%c0_55, %c0_56] : memref<1x128xf32, #tpu.memory_space<vmem>>, vector<1x128xf32>
    %93 = vector.broadcast %92 : vector<1x128xf32> to vector<16x128xf32>
    %94 = arith.addf %91, %93 : vector<16x128xf32>
    %95 = vector.broadcast %0 : vector<1x128xf32> to vector<16x128xf32>
    %96 = arith.mulf %78, %95 : vector<16x128xf32>
    %97 = arith.addf %94, %96 : vector<16x128xf32>
    %98 = arith.addf %97, %61 : vector<16x128xf32>
    %99 = vector.shape_cast %98 : vector<16x128xf32> to vector<1x16x128xf32>
    %cst_57 = arith.constant dense<0.000000e+00> : vector<1xf32>
    %100 = vector.multi_reduction <add>, %99, %cst_57 [1, 2] : vector<1x16x128xf32> to vector<1xf32>
    %101 = vector.shape_cast %100 : vector<1xf32> to vector<1x1x1xf32>
    %102 = vector.extract %101[0, 0, 0] : f32 from vector<1x1x1xf32>
    %cst_58 = arith.constant 2.048000e+03 : f32
    %103 = arith.divf %102, %cst_58 : f32
    %104 = vector.broadcast %103 : f32 to vector<16x128xf32>
    %105 = arith.subf %98, %104 : vector<16x128xf32>
    %106 = arith.mulf %105, %105 : vector<16x128xf32>
    %107 = vector.shape_cast %106 : vector<16x128xf32> to vector<1x16x128xf32>
    %cst_59 = arith.constant dense<0.000000e+00> : vector<1xf32>
    %108 = vector.multi_reduction <add>, %107, %cst_59 [1, 2] : vector<1x16x128xf32> to vector<1xf32>
    %109 = vector.shape_cast %108 : vector<1xf32> to vector<1x1x1xf32>
    %110 = vector.extract %109[0, 0, 0] : f32 from vector<1x1x1xf32>
    %cst_60 = arith.constant 2.048000e+03 : f32
    %111 = arith.divf %110, %cst_60 : f32
    %cst_61 = arith.constant 9.99999974E-6 : f32
    %112 = arith.addf %111, %cst_61 : f32
    %113 = math.rsqrt %112 : f32
    %114 = vector.broadcast %113 : f32 to vector<16x128xf32>
    %115 = arith.mulf %105, %114 : vector<16x128xf32>
    %c0_62 = arith.constant 0 : index
    %c0_63 = arith.constant 0 : index
    %116 = vector.load %arg9[%c0_62, %c0_63] : memref<128x128xf32, #tpu.memory_space<vmem>>, vector<128x128xf32>
    %cst_64 = arith.constant dense<0.000000e+00> : vector<16x128xf32>
    %117 = tpu.matmul %115, %116, %cst_64 {dimension_numbers = #tpu.dot_dimension_numbers<[1], [0], [0], [1], [0, 0, 1, 1], [], []>} : vector<16x128xf32>, vector<128x128xf32>, vector<16x128xf32> -> vector<16x128xf32>
    %c0_65 = arith.constant 0 : index
    %c0_66 = arith.constant 0 : index
    %118 = vector.load %arg10[%c0_65, %c0_66] : memref<1x128xf32, #tpu.memory_space<vmem>>, vector<1x128xf32>
    %119 = vector.broadcast %118 : vector<1x128xf32> to vector<16x128xf32>
    %120 = arith.addf %117, %119 : vector<16x128xf32>
    %121 = arith.negf %120 : vector<16x128xf32>
    %122 = math.exp %121 : vector<16x128xf32>
    %cst_67 = arith.constant 1.000000e+00 : f32
    %123 = vector.broadcast %cst_67 : f32 to vector<16x128xf32>
    %124 = arith.addf %123, %122 : vector<16x128xf32>
    %125 = arith.divf %123, %124 : vector<16x128xf32>
    %126 = arith.mulf %120, %125 : vector<16x128xf32>
    %c0_68 = arith.constant 0 : index
    %c0_69 = arith.constant 0 : index
    %127 = vector.load %arg11[%c0_68, %c0_69] : memref<128x128xf32, #tpu.memory_space<vmem>>, vector<128x128xf32>
    %cst_70 = arith.constant dense<0.000000e+00> : vector<16x128xf32>
    %128 = tpu.matmul %126, %127, %cst_70 {dimension_numbers = #tpu.dot_dimension_numbers<[1], [0], [0], [1], [0, 0, 1, 1], [], []>} : vector<16x128xf32>, vector<128x128xf32>, vector<16x128xf32> -> vector<16x128xf32>
    %c0_71 = arith.constant 0 : index
    %c0_72 = arith.constant 0 : index
    %129 = vector.load %arg12[%c0_71, %c0_72] : memref<1x128xf32, #tpu.memory_space<vmem>>, vector<1x128xf32>
    %130 = vector.broadcast %129 : vector<1x128xf32> to vector<16x128xf32>
    %131 = arith.addf %128, %130 : vector<16x128xf32>
    %132 = vector.broadcast %0 : vector<1x128xf32> to vector<16x128xf32>
    %133 = arith.mulf %115, %132 : vector<16x128xf32>
    %134 = arith.addf %131, %133 : vector<16x128xf32>
    %135 = arith.addf %134, %98 : vector<16x128xf32>
    %c8_73 = arith.constant 8 : index
    %c0_74 = arith.constant 0 : index
    %136 = vector.load %arg20[%c8_73, %c0_74] : memref<32x128xf32, #tpu.memory_space<vmem>>, vector<16x128xf32>
    tpu.vector_store %arg20[%c8_73, %c0_74], %135 {strides = array<i32>} : memref<32x128xf32, #tpu.memory_space<vmem>>, vector<16x128xf32>,
    %c7_75 = arith.constant 7 : index
    %c0_76 = arith.constant 0 : index
    %137 = vector.load %arg20[%c7_75, %c0_76] : memref<32x128xf32, #tpu.memory_space<vmem>>, vector<16x128xf32>
    %c0_77 = arith.constant 0 : index
    %c0_78 = arith.constant 0 : index
    %c0_79 = arith.constant 0 : index
    %138 = vector.load %arg13[%c0_77, %c0_78, %c0_79] : memref<3x128x128xf32, #tpu.memory_space<vmem>>, vector<1x128x128xf32>
    %139 = vector.shape_cast %138 : vector<1x128x128xf32> to vector<128x128xf32>
    %cst_80 = arith.constant dense<0.000000e+00> : vector<16x128xf32>
    %140 = tpu.matmul %137, %139, %cst_80 {dimension_numbers = #tpu.dot_dimension_numbers<[1], [0], [0], [1], [0, 0, 1, 1], [], []>} : vector<16x128xf32>, vector<128x128xf32>, vector<16x128xf32> -> vector<16x128xf32>
    %c0_81 = arith.constant 0 : index
    %c0_82 = arith.constant 0 : index
    %141 = vector.load %arg14[%c0_81, %c0_82] : memref<1x128xf32, #tpu.memory_space<vmem>>, vector<1x128xf32>
    %142 = vector.broadcast %141 : vector<1x128xf32> to vector<16x128xf32>
    %143 = arith.addf %140, %142 : vector<16x128xf32>
    %c8_83 = arith.constant 8 : index
    %c0_84 = arith.constant 0 : index
    %144 = vector.load %arg20[%c8_83, %c0_84] : memref<32x128xf32, #tpu.memory_space<vmem>>, vector<16x128xf32>
    %c1_85 = arith.constant 1 : index
    %c0_86 = arith.constant 0 : index
    %c0_87 = arith.constant 0 : index
    %145 = vector.load %arg13[%c1_85, %c0_86, %c0_87] : memref<3x128x128xf32, #tpu.memory_space<vmem>>, vector<1x128x128xf32>
    %146 = vector.shape_cast %145 : vector<1x128x128xf32> to vector<128x128xf32>
    %cst_88 = arith.constant dense<0.000000e+00> : vector<16x128xf32>
    %147 = tpu.matmul %144, %146, %cst_88 {dimension_numbers = #tpu.dot_dimension_numbers<[1], [0], [0], [1], [0, 0, 1, 1], [], []>} : vector<16x128xf32>, vector<128x128xf32>, vector<16x128xf32> -> vector<16x128xf32>
    %148 = arith.addf %143, %147 : vector<16x128xf32>
    %c9_89 = arith.constant 9 : index
    %c0_90 = arith.constant 0 : index
    %149 = vector.load %arg20[%c9_89, %c0_90] : memref<32x128xf32, #tpu.memory_space<vmem>>, vector<16x128xf32>
    %c2_91 = arith.constant 2 : index
    %c0_92 = arith.constant 0 : index
    %c0_93 = arith.constant 0 : index
    %150 = vector.load %arg13[%c2_91, %c0_92, %c0_93] : memref<3x128x128xf32, #tpu.memory_space<vmem>>, vector<1x128x128xf32>
    %151 = vector.shape_cast %150 : vector<1x128x128xf32> to vector<128x128xf32>
    %cst_94 = arith.constant dense<0.000000e+00> : vector<16x128xf32>
    %152 = tpu.matmul %149, %151, %cst_94 {dimension_numbers = #tpu.dot_dimension_numbers<[1], [0], [0], [1], [0, 0, 1, 1], [], []>} : vector<16x128xf32>, vector<128x128xf32>, vector<16x128xf32> -> vector<16x128xf32>
    %153 = arith.addf %148, %152 : vector<16x128xf32>
    %154 = vector.shape_cast %153 : vector<16x128xf32> to vector<1x16x128xf32>
    %cst_95 = arith.constant dense<0.000000e+00> : vector<1xf32>
    %155 = vector.multi_reduction <add>, %154, %cst_95 [1, 2] : vector<1x16x128xf32> to vector<1xf32>
    %156 = vector.shape_cast %155 : vector<1xf32> to vector<1x1x1xf32>
    %157 = vector.extract %156[0, 0, 0] : f32 from vector<1x1x1xf32>
    %cst_96 = arith.constant 2.048000e+03 : f32
    %158 = arith.divf %157, %cst_96 : f32
    %159 = vector.broadcast %158 : f32 to vector<16x128xf32>
    %160 = arith.subf %153, %159 : vector<16x128xf32>
    %161 = arith.mulf %160, %160 : vector<16x128xf32>
    %162 = vector.shape_cast %161 : vector<16x128xf32> to vector<1x16x128xf32>
    %cst_97 = arith.constant dense<0.000000e+00> : vector<1xf32>
    %163 = vector.multi_reduction <add>, %162, %cst_97 [1, 2] : vector<1x16x128xf32> to vector<1xf32>
    %164 = vector.shape_cast %163 : vector<1xf32> to vector<1x1x1xf32>
    %165 = vector.extract %164[0, 0, 0] : f32 from vector<1x1x1xf32>
    %cst_98 = arith.constant 2.048000e+03 : f32
    %166 = arith.divf %165, %cst_98 : f32
    %cst_99 = arith.constant 9.99999974E-6 : f32
    %167 = arith.addf %166, %cst_99 : f32
    %168 = math.rsqrt %167 : f32
    %169 = vector.broadcast %168 : f32 to vector<16x128xf32>
    %170 = arith.mulf %160, %169 : vector<16x128xf32>
    %c0_100 = arith.constant 0 : index
    %c0_101 = arith.constant 0 : index
    %171 = vector.load %arg9[%c0_100, %c0_101] : memref<128x128xf32, #tpu.memory_space<vmem>>, vector<128x128xf32>
    %cst_102 = arith.constant dense<0.000000e+00> : vector<16x128xf32>
    %172 = tpu.matmul %170, %171, %cst_102 {dimension_numbers = #tpu.dot_dimension_numbers<[1], [0], [0], [1], [0, 0, 1, 1], [], []>} : vector<16x128xf32>, vector<128x128xf32>, vector<16x128xf32> -> vector<16x128xf32>
    %c0_103 = arith.constant 0 : index
    %c0_104 = arith.constant 0 : index
    %173 = vector.load %arg10[%c0_103, %c0_104] : memref<1x128xf32, #tpu.memory_space<vmem>>, vector<1x128xf32>
    %174 = vector.broadcast %173 : vector<1x128xf32> to vector<16x128xf32>
    %175 = arith.addf %172, %174 : vector<16x128xf32>
    %176 = arith.negf %175 : vector<16x128xf32>
    %177 = math.exp %176 : vector<16x128xf32>
    %cst_105 = arith.constant 1.000000e+00 : f32
    %178 = vector.broadcast %cst_105 : f32 to vector<16x128xf32>
    %179 = arith.addf %178, %177 : vector<16x128xf32>
    %180 = arith.divf %178, %179 : vector<16x128xf32>
    %181 = arith.mulf %175, %180 : vector<16x128xf32>
    %c0_106 = arith.constant 0 : index
    %c0_107 = arith.constant 0 : index
    %182 = vector.load %arg11[%c0_106, %c0_107] : memref<128x128xf32, #tpu.memory_space<vmem>>, vector<128x128xf32>
    %cst_108 = arith.constant dense<0.000000e+00> : vector<16x128xf32>
    %183 = tpu.matmul %181, %182, %cst_108 {dimension_numbers = #tpu.dot_dimension_numbers<[1], [0], [0], [1], [0, 0, 1, 1], [], []>} : vector<16x128xf32>, vector<128x128xf32>, vector<16x128xf32> -> vector<16x128xf32>
    %c0_109 = arith.constant 0 : index
    %c0_110 = arith.constant 0 : index
    %184 = vector.load %arg12[%c0_109, %c0_110] : memref<1x128xf32, #tpu.memory_space<vmem>>, vector<1x128xf32>
    %185 = vector.broadcast %184 : vector<1x128xf32> to vector<16x128xf32>
    %186 = arith.addf %183, %185 : vector<16x128xf32>
    %187 = vector.broadcast %0 : vector<1x128xf32> to vector<16x128xf32>
    %188 = arith.mulf %170, %187 : vector<16x128xf32>
    %189 = arith.addf %186, %188 : vector<16x128xf32>
    %190 = arith.addf %189, %153 : vector<16x128xf32>
    %191 = arith.addf %6, %190 : vector<16x128xf32>
    %c8_111 = arith.constant 8 : index
    %c0_112 = arith.constant 0 : index
    %192 = vector.load %arg20[%c8_111, %c0_112] : memref<32x128xf32, #tpu.memory_space<vmem>>, vector<16x128xf32>
    tpu.vector_store %arg20[%c8_111, %c0_112], %191 {strides = array<i32>} : memref<32x128xf32, #tpu.memory_space<vmem>>, vector<16x128xf32>,
    %c7_113 = arith.constant 7 : index
    %c0_114 = arith.constant 0 : index
    %193 = vector.load %arg20[%c7_113, %c0_114] : memref<32x128xf32, #tpu.memory_space<vmem>>, vector<16x128xf32>
    %c0_115 = arith.constant 0 : index
    %c0_116 = arith.constant 0 : index
    %c0_117 = arith.constant 0 : index
    %194 = vector.load %arg15[%c0_115, %c0_116, %c0_117] : memref<3x128x384xf32, #tpu.memory_space<vmem>>, vector<1x128x384xf32>
    %195 = vector.shape_cast %194 : vector<1x128x384xf32> to vector<128x384xf32>
    %cst_118 = arith.constant dense<0.000000e+00> : vector<16x384xf32>
    %196 = tpu.matmul %193, %195, %cst_118 {dimension_numbers = #tpu.dot_dimension_numbers<[1], [0], [0], [1], [0, 0, 1, 1], [], []>} : vector<16x128xf32>, vector<128x384xf32>, vector<16x384xf32> -> vector<16x384xf32>
    %c0_119 = arith.constant 0 : index
    %c0_120 = arith.constant 0 : index
    %197 = vector.load %arg16[%c0_119, %c0_120] : memref<1x384xf32, #tpu.memory_space<vmem>>, vector<1x384xf32>
    %198 = vector.broadcast %197 : vector<1x384xf32> to vector<16x384xf32>
    %199 = arith.addf %196, %198 : vector<16x384xf32>
    %c8_121 = arith.constant 8 : index
    %c0_122 = arith.constant 0 : index
    %200 = vector.load %arg20[%c8_121, %c0_122] : memref<32x128xf32, #tpu.memory_space<vmem>>, vector<16x128xf32>
    %c1_123 = arith.constant 1 : index
    %c0_124 = arith.constant 0 : index
    %c0_125 = arith.constant 0 : index
    %201 = vector.load %arg15[%c1_123, %c0_124, %c0_125] : memref<3x128x384xf32, #tpu.memory_space<vmem>>, vector<1x128x384xf32>
    %202 = vector.shape_cast %201 : vector<1x128x384xf32> to vector<128x384xf32>
    %cst_126 = arith.constant dense<0.000000e+00> : vector<16x384xf32>
    %203 = tpu.matmul %200, %202, %cst_126 {dimension_numbers = #tpu.dot_dimension_numbers<[1], [0], [0], [1], [0, 0, 1, 1], [], []>} : vector<16x128xf32>, vector<128x384xf32>, vector<16x384xf32> -> vector<16x384xf32>
    %204 = arith.addf %199, %203 : vector<16x384xf32>
    %c9_127 = arith.constant 9 : index
    %c0_128 = arith.constant 0 : index
    %205 = vector.load %arg20[%c9_127, %c0_128] : memref<32x128xf32, #tpu.memory_space<vmem>>, vector<16x128xf32>
    %c2_129 = arith.constant 2 : index
    %c0_130 = arith.constant 0 : index
    %c0_131 = arith.constant 0 : index
    %206 = vector.load %arg15[%c2_129, %c0_130, %c0_131] : memref<3x128x384xf32, #tpu.memory_space<vmem>>, vector<1x128x384xf32>
    %207 = vector.shape_cast %206 : vector<1x128x384xf32> to vector<128x384xf32>
    %cst_132 = arith.constant dense<0.000000e+00> : vector<16x384xf32>
    %208 = tpu.matmul %205, %207, %cst_132 {dimension_numbers = #tpu.dot_dimension_numbers<[1], [0], [0], [1], [0, 0, 1, 1], [], []>} : vector<16x128xf32>, vector<128x384xf32>, vector<16x384xf32> -> vector<16x384xf32>
    %209 = arith.addf %204, %208 : vector<16x384xf32>
    %210 = arith.negf %209 : vector<16x384xf32>
    %211 = math.exp %210 : vector<16x384xf32>
    %cst_133 = arith.constant 1.000000e+00 : f32
    %212 = vector.broadcast %cst_133 : f32 to vector<16x384xf32>
    %213 = arith.addf %212, %211 : vector<16x384xf32>
    %214 = arith.divf %212, %213 : vector<16x384xf32>
    %215 = arith.mulf %209, %214 : vector<16x384xf32>
    %c0_134 = arith.constant 0 : index
    %c0_135 = arith.constant 0 : index
    %216 = vector.load %arg17[%c0_134, %c0_135] : memref<384x128xf32, #tpu.memory_space<vmem>>, vector<384x128xf32>
    %cst_136 = arith.constant dense<0.000000e+00> : vector<16x128xf32>
    %217 = tpu.matmul %215, %216, %cst_136 {dimension_numbers = #tpu.dot_dimension_numbers<[1], [0], [0], [1], [0, 0, 1, 1], [], []>} : vector<16x384xf32>, vector<384x128xf32>, vector<16x128xf32> -> vector<16x128xf32>
    %c0_137 = arith.constant 0 : index
    %c0_138 = arith.constant 0 : index
    %218 = vector.load %arg18[%c0_137, %c0_138] : memref<1x128xf32, #tpu.memory_space<vmem>>, vector<1x128xf32>
    %219 = vector.broadcast %218 : vector<1x128xf32> to vector<16x128xf32>
    %220 = arith.addf %217, %219 : vector<16x128xf32>
    %221 = arith.addf %220, %191 : vector<16x128xf32>
    %c0_139 = arith.constant 0 : index
    %c0_140 = arith.constant 0 : index
    %c0_141 = arith.constant 0 : index
    %222 = vector.load %arg19[%c0_139, %c0_140, %c0_141] : memref<1x16x128xf32, #tpu.memory_space<vmem>>, vector<1x16x128xf32>
    %223 = vector.shape_cast %222 : vector<1x16x128xf32> to vector<16x128xf32>
    %224 = vector.shape_cast %221 : vector<16x128xf32> to vector<1x16x128xf32>
    tpu.vector_store %arg19[%c0_139, %c0_140, %c0_141], %224 {strides = array<i32>} : memref<1x16x128xf32, #tpu.memory_space<vmem>>, vector<1x16x128xf32>,
    return
  }
  func.func @transform_0(%arg0: i32) -> (i32, i32, i32) {
    %c0_i32 = arith.constant 0 : i32
    %c0_i32_0 = arith.constant 0 : i32
    %c0_i32_1 = arith.constant 0 : i32
    return %arg0, %c0_i32, %c0_i32_0 : i32, i32, i32
  }
  func.func @transform_1(%arg0: i32) -> (i32, i32) {
    %c0_i32 = arith.constant 0 : i32
    %c0_i32_0 = arith.constant 0 : i32
    %c0_i32_1 = arith.constant 0 : i32
    return %c0_i32, %c0_i32_0 : i32, i32
  }
  func.func @transform_2(%arg0: i32) -> (i32, i32) {
    %c0_i32 = arith.constant 0 : i32
    %c0_i32_0 = arith.constant 0 : i32
    %c0_i32_1 = arith.constant 0 : i32
    return %c0_i32, %c0_i32_0 : i32, i32
  }
  func.func @transform_3(%arg0: i32) -> (i32, i32) {
    %c0_i32 = arith.constant 0 : i32
    %c0_i32_0 = arith.constant 0 : i32
    %c0_i32_1 = arith.constant 0 : i32
    return %c0_i32, %c0_i32_0 : i32, i32
  }
  func.func @transform_4(%arg0: i32) -> (i32, i32) {
    %c0_i32 = arith.constant 0 : i32
    %c0_i32_0 = arith.constant 0 : i32
    %c0_i32_1 = arith.constant 0 : i32
    return %c0_i32, %c0_i32_0 : i32, i32
  }
  func.func @transform_5(%arg0: i32) -> (i32, i32) {
    %c0_i32 = arith.constant 0 : i32
    %c0_i32_0 = arith.constant 0 : i32
    %c0_i32_1 = arith.constant 0 : i32
    return %c0_i32, %c0_i32_0 : i32, i32
  }
  func.func @transform_6(%arg0: i32) -> (i32, i32, i32) {
    %c0_i32 = arith.constant 0 : i32
    %c0_i32_0 = arith.constant 0 : i32
    %c0_i32_1 = arith.constant 0 : i32
    %c0_i32_2 = arith.constant 0 : i32
    return %c0_i32, %c0_i32_0, %c0_i32_1 : i32, i32, i32
  }
  func.func @transform_7(%arg0: i32) -> (i32, i32) {
    %c0_i32 = arith.constant 0 : i32
    %c0_i32_0 = arith.constant 0 : i32
    %c0_i32_1 = arith.constant 0 : i32
    return %c0_i32, %c0_i32_0 : i32, i32
  }
  func.func @transform_8(%arg0: i32) -> (i32, i32) {
    %c0_i32 = arith.constant 0 : i32
    %c0_i32_0 = arith.constant 0 : i32
    %c0_i32_1 = arith.constant 0 : i32
    return %c0_i32, %c0_i32_0 : i32, i32
  }
  func.func @transform_9(%arg0: i32) -> (i32, i32) {
    %c0_i32 = arith.constant 0 : i32
    %c0_i32_0 = arith.constant 0 : i32
    %c0_i32_1 = arith.constant 0 : i32
    return %c0_i32, %c0_i32_0 : i32, i32
  }
  func.func @transform_10(%arg0: i32) -> (i32, i32) {
    %c0_i32 = arith.constant 0 : i32
    %c0_i32_0 = arith.constant 0 : i32
    %c0_i32_1 = arith.constant 0 : i32
    return %c0_i32, %c0_i32_0 : i32, i32
  }
  func.func @transform_11(%arg0: i32) -> (i32, i32) {
    %c0_i32 = arith.constant 0 : i32
    %c0_i32_0 = arith.constant 0 : i32
    %c0_i32_1 = arith.constant 0 : i32
    return %c0_i32, %c0_i32_0 : i32, i32
  }
  func.func @transform_12(%arg0: i32) -> (i32, i32, i32) {
    %c0_i32 = arith.constant 0 : i32
    %c0_i32_0 = arith.constant 0 : i32
    %c0_i32_1 = arith.constant 0 : i32
    %c0_i32_2 = arith.constant 0 : i32
    return %c0_i32, %c0_i32_0, %c0_i32_1 : i32, i32, i32
  }
  func.func @transform_13(%arg0: i32) -> (i32, i32) {
    %c0_i32 = arith.constant 0 : i32
    %c0_i32_0 = arith.constant 0 : i32
    %c0_i32_1 = arith.constant 0 : i32
    return %c0_i32, %c0_i32_0 : i32, i32
  }
  func.func @transform_14(%arg0: i32) -> (i32, i32, i32) {
    %c0_i32 = arith.constant 0 : i32
    %c0_i32_0 = arith.constant 0 : i32
    %c0_i32_1 = arith.constant 0 : i32
    %c0_i32_2 = arith.constant 0 : i32
    return %c0_i32, %c0_i32_0, %c0_i32_1 : i32, i32, i32
  }
  func.func @transform_15(%arg0: i32) -> (i32, i32) {
    %c0_i32 = arith.constant 0 : i32
    %c0_i32_0 = arith.constant 0 : i32
    %c0_i32_1 = arith.constant 0 : i32
    return %c0_i32, %c0_i32_0 : i32, i32
  }
  func.func @transform_16(%arg0: i32) -> (i32, i32) {
    %c0_i32 = arith.constant 0 : i32
    %c0_i32_0 = arith.constant 0 : i32
    %c0_i32_1 = arith.constant 0 : i32
    return %c0_i32, %c0_i32_0 : i32, i32
  }
  func.func @transform_17(%arg0: i32) -> (i32, i32) {
    %c0_i32 = arith.constant 0 : i32
    %c0_i32_0 = arith.constant 0 : i32
    %c0_i32_1 = arith.constant 0 : i32
    return %c0_i32, %c0_i32_0 : i32, i32
  }
  func.func @transform_18(%arg0: i32) -> (i32, i32, i32) {
    %c0_i32 = arith.constant 0 : i32
    %c0_i32_0 = arith.constant 0 : i32
    %c0_i32_1 = arith.constant 0 : i32
    return %arg0, %c0_i32, %c0_i32_0 : i32, i32, i32
  }
}

module attributes {stable_mosaic.version = 11 : i64} {
  func.func @_upsample_kernel(%arg0: i32, %arg1: memref<1x16x128xf32, #tpu.memory_space<vmem>>, %arg2: memref<128x512xf32, #tpu.memory_space<vmem>>, %arg3: memref<1x512xf32, #tpu.memory_space<vmem>>, %arg4: memref<1x16x512xf32, #tpu.memory_space<vmem>>) attributes {dimension_semantics = [#tpu.dimension_semantics<parallel>], iteration_bounds = array<i64: 2>, scalar_prefetch = 0 : i64, scratch_operands = 0 : i64, tpu.core_type = #tpu.core_type<tc>, window_params = [{transform_indices = @transform_0, window_bounds = array<i64: 1, 16, 128>}, {pipeline_mode = #tpu.pipeline_mode<synchronous>, transform_indices = @transform_1, window_bounds = array<i64: 128, 512>}, {pipeline_mode = #tpu.pipeline_mode<synchronous>, transform_indices = @transform_2, window_bounds = array<i64: 1, 512>}, {transform_indices = @transform_3, window_bounds = array<i64: 1, 16, 512>}]} {
    %c0 = arith.constant 0 : index
    %c0_0 = arith.constant 0 : index
    %c0_1 = arith.constant 0 : index
    %0 = vector.load %arg1[%c0, %c0_0, %c0_1] : memref<1x16x128xf32, #tpu.memory_space<vmem>>, vector<1x16x128xf32>
    %1 = vector.shape_cast %0 : vector<1x16x128xf32> to vector<16x128xf32>
    %c0_2 = arith.constant 0 : index
    %c0_3 = arith.constant 0 : index
    %2 = vector.load %arg2[%c0_2, %c0_3] : memref<128x512xf32, #tpu.memory_space<vmem>>, vector<128x512xf32>
    %cst = arith.constant dense<0.000000e+00> : vector<16x512xf32>
    %3 = tpu.matmul %1, %2, %cst {dimension_numbers = #tpu.dot_dimension_numbers<[1], [0], [0], [1], [0, 0, 1, 1], [], []>} : vector<16x128xf32>, vector<128x512xf32>, vector<16x512xf32> -> vector<16x512xf32>
    %c0_4 = arith.constant 0 : index
    %c0_5 = arith.constant 0 : index
    %4 = vector.load %arg3[%c0_4, %c0_5] : memref<1x512xf32, #tpu.memory_space<vmem>>, vector<1x512xf32>
    %5 = vector.broadcast %4 : vector<1x512xf32> to vector<16x512xf32>
    %6 = arith.addf %3, %5 : vector<16x512xf32>
    %7 = arith.negf %6 : vector<16x512xf32>
    %8 = math.exp %7 : vector<16x512xf32>
    %cst_6 = arith.constant 1.000000e+00 : f32
    %9 = vector.broadcast %cst_6 : f32 to vector<16x512xf32>
    %10 = arith.addf %9, %8 : vector<16x512xf32>
    %11 = arith.divf %9, %10 : vector<16x512xf32>
    %12 = arith.mulf %6, %11 : vector<16x512xf32>
    %c0_7 = arith.constant 0 : index
    %c0_8 = arith.constant 0 : index
    %c0_9 = arith.constant 0 : index
    %13 = vector.load %arg4[%c0_7, %c0_8, %c0_9] : memref<1x16x512xf32, #tpu.memory_space<vmem>>, vector<1x16x512xf32>
    %14 = vector.shape_cast %13 : vector<1x16x512xf32> to vector<16x512xf32>
    %15 = vector.shape_cast %12 : vector<16x512xf32> to vector<1x16x512xf32>
    tpu.vector_store %arg4[%c0_7, %c0_8, %c0_9], %15 {strides = array<i32>} : memref<1x16x512xf32, #tpu.memory_space<vmem>>, vector<1x16x512xf32>,
    return
  }
  func.func @transform_0(%arg0: i32) -> (i32, i32, i32) {
    %c0_i32 = arith.constant 0 : i32
    %c0_i32_0 = arith.constant 0 : i32
    %c0_i32_1 = arith.constant 0 : i32
    return %arg0, %c0_i32, %c0_i32_0 : i32, i32, i32
  }
  func.func @transform_1(%arg0: i32) -> (i32, i32) {
    %c0_i32 = arith.constant 0 : i32
    %c0_i32_0 = arith.constant 0 : i32
    %c0_i32_1 = arith.constant 0 : i32
    return %c0_i32, %c0_i32_0 : i32, i32
  }
  func.func @transform_2(%arg0: i32) -> (i32, i32) {
    %c0_i32 = arith.constant 0 : i32
    %c0_i32_0 = arith.constant 0 : i32
    %c0_i32_1 = arith.constant 0 : i32
    return %c0_i32, %c0_i32_0 : i32, i32
  }
  func.func @transform_3(%arg0: i32) -> (i32, i32, i32) {
    %c0_i32 = arith.constant 0 : i32
    %c0_i32_0 = arith.constant 0 : i32
    %c0_i32_1 = arith.constant 0 : i32
    return %arg0, %c0_i32, %c0_i32_0 : i32, i32, i32
  }
}

module attributes {stable_mosaic.version = 11 : i64} {
  func.func @_conv_add_kernel(%arg0: i32, %arg1: memref<1x32x256xf32, #tpu.memory_space<vmem>>, %arg2: memref<1x32x96xf32, #tpu.memory_space<vmem>>, %arg3: memref<3x256x96xf32, #tpu.memory_space<vmem>>, %arg4: memref<1x96xf32, #tpu.memory_space<vmem>>, %arg5: memref<1x32x96xf32, #tpu.memory_space<vmem>>, %arg6: memref<48x256xf32, #tpu.memory_space<vmem>>) attributes {dimension_semantics = [#tpu.dimension_semantics<parallel>], iteration_bounds = array<i64: 2>, scalar_prefetch = 0 : i64, scratch_operands = 1 : i64, tpu.core_type = #tpu.core_type<tc>, window_params = [{transform_indices = @transform_0, window_bounds = array<i64: 1, 32, 256>}, {transform_indices = @transform_1, window_bounds = array<i64: 1, 32, 96>}, {pipeline_mode = #tpu.pipeline_mode<synchronous>, transform_indices = @transform_2, window_bounds = array<i64: 3, 256, 96>}, {pipeline_mode = #tpu.pipeline_mode<synchronous>, transform_indices = @transform_3, window_bounds = array<i64: 1, 96>}, {transform_indices = @transform_4, window_bounds = array<i64: 1, 32, 96>}]} {
    %c0 = arith.constant 0 : index
    %c0_0 = arith.constant 0 : index
    %c0_1 = arith.constant 0 : index
    %0 = vector.load %arg1[%c0, %c0_0, %c0_1] : memref<1x32x256xf32, #tpu.memory_space<vmem>>, vector<1x32x256xf32>
    %1 = vector.shape_cast %0 : vector<1x32x256xf32> to vector<32x256xf32>
    %cst = arith.constant 0.000000e+00 : f32
    %2 = vector.broadcast %cst : f32 to vector<1x256xf32>
    %c7 = arith.constant 7 : index
    %c0_2 = arith.constant 0 : index
    %3 = vector.load %arg6[%c7, %c0_2] : memref<48x256xf32, #tpu.memory_space<vmem>>, vector<1x256xf32>
    tpu.vector_store %arg6[%c7, %c0_2], %2 {strides = array<i32>} : memref<48x256xf32, #tpu.memory_space<vmem>>, vector<1x256xf32>,
    %cst_3 = arith.constant 0.000000e+00 : f32
    %4 = vector.broadcast %cst_3 : f32 to vector<1x256xf32>
    %c40 = arith.constant 40 : index
    %c0_4 = arith.constant 0 : index
    %5 = vector.load %arg6[%c40, %c0_4] : memref<48x256xf32, #tpu.memory_space<vmem>>, vector<1x256xf32>
    tpu.vector_store %arg6[%c40, %c0_4], %4 {strides = array<i32>} : memref<48x256xf32, #tpu.memory_space<vmem>>, vector<1x256xf32>,
    %c8 = arith.constant 8 : index
    %c0_5 = arith.constant 0 : index
    %6 = vector.load %arg6[%c8, %c0_5] : memref<48x256xf32, #tpu.memory_space<vmem>>, vector<32x256xf32>
    tpu.vector_store %arg6[%c8, %c0_5], %1 {strides = array<i32>} : memref<48x256xf32, #tpu.memory_space<vmem>>, vector<32x256xf32>,
    %c7_6 = arith.constant 7 : index
    %c0_7 = arith.constant 0 : index
    %7 = vector.load %arg6[%c7_6, %c0_7] : memref<48x256xf32, #tpu.memory_space<vmem>>, vector<32x256xf32>
    %c0_8 = arith.constant 0 : index
    %c0_9 = arith.constant 0 : index
    %c0_10 = arith.constant 0 : index
    %8 = vector.load %arg3[%c0_8, %c0_9, %c0_10] : memref<3x256x96xf32, #tpu.memory_space<vmem>>, vector<1x256x96xf32>
    %9 = vector.shape_cast %8 : vector<1x256x96xf32> to vector<256x96xf32>
    %cst_11 = arith.constant dense<0.000000e+00> : vector<32x96xf32>
    %10 = tpu.matmul %7, %9, %cst_11 {dimension_numbers = #tpu.dot_dimension_numbers<[1], [0], [0], [1], [0, 0, 1, 1], [], []>} : vector<32x256xf32>, vector<256x96xf32>, vector<32x96xf32> -> vector<32x96xf32>
    %c0_12 = arith.constant 0 : index
    %c0_13 = arith.constant 0 : index
    %11 = vector.load %arg4[%c0_12, %c0_13] : memref<1x96xf32, #tpu.memory_space<vmem>>, vector<1x96xf32>
    %12 = vector.broadcast %11 : vector<1x96xf32> to vector<32x96xf32>
    %13 = arith.addf %10, %12 : vector<32x96xf32>
    %c8_14 = arith.constant 8 : index
    %c0_15 = arith.constant 0 : index
    %14 = vector.load %arg6[%c8_14, %c0_15] : memref<48x256xf32, #tpu.memory_space<vmem>>, vector<32x256xf32>
    %c1 = arith.constant 1 : index
    %c0_16 = arith.constant 0 : index
    %c0_17 = arith.constant 0 : index
    %15 = vector.load %arg3[%c1, %c0_16, %c0_17] : memref<3x256x96xf32, #tpu.memory_space<vmem>>, vector<1x256x96xf32>
    %16 = vector.shape_cast %15 : vector<1x256x96xf32> to vector<256x96xf32>
    %cst_18 = arith.constant dense<0.000000e+00> : vector<32x96xf32>
    %17 = tpu.matmul %14, %16, %cst_18 {dimension_numbers = #tpu.dot_dimension_numbers<[1], [0], [0], [1], [0, 0, 1, 1], [], []>} : vector<32x256xf32>, vector<256x96xf32>, vector<32x96xf32> -> vector<32x96xf32>
    %18 = arith.addf %13, %17 : vector<32x96xf32>
    %c9 = arith.constant 9 : index
    %c0_19 = arith.constant 0 : index
    %19 = vector.load %arg6[%c9, %c0_19] : memref<48x256xf32, #tpu.memory_space<vmem>>, vector<32x256xf32>
    %c2 = arith.constant 2 : index
    %c0_20 = arith.constant 0 : index
    %c0_21 = arith.constant 0 : index
    %20 = vector.load %arg3[%c2, %c0_20, %c0_21] : memref<3x256x96xf32, #tpu.memory_space<vmem>>, vector<1x256x96xf32>
    %21 = vector.shape_cast %20 : vector<1x256x96xf32> to vector<256x96xf32>
    %cst_22 = arith.constant dense<0.000000e+00> : vector<32x96xf32>
    %22 = tpu.matmul %19, %21, %cst_22 {dimension_numbers = #tpu.dot_dimension_numbers<[1], [0], [0], [1], [0, 0, 1, 1], [], []>} : vector<32x256xf32>, vector<256x96xf32>, vector<32x96xf32> -> vector<32x96xf32>
    %23 = arith.addf %18, %22 : vector<32x96xf32>
    %c0_23 = arith.constant 0 : index
    %c0_24 = arith.constant 0 : index
    %c0_25 = arith.constant 0 : index
    %24 = vector.load %arg2[%c0_23, %c0_24, %c0_25] : memref<1x32x96xf32, #tpu.memory_space<vmem>>, vector<1x32x96xf32>
    %25 = vector.shape_cast %24 : vector<1x32x96xf32> to vector<32x96xf32>
    %26 = arith.addf %23, %25 : vector<32x96xf32>
    %c0_26 = arith.constant 0 : index
    %c0_27 = arith.constant 0 : index
    %c0_28 = arith.constant 0 : index
    %27 = vector.load %arg5[%c0_26, %c0_27, %c0_28] : memref<1x32x96xf32, #tpu.memory_space<vmem>>, vector<1x32x96xf32>
    %28 = vector.shape_cast %27 : vector<1x32x96xf32> to vector<32x96xf32>
    %29 = vector.shape_cast %26 : vector<32x96xf32> to vector<1x32x96xf32>
    tpu.vector_store %arg5[%c0_26, %c0_27, %c0_28], %29 {strides = array<i32>} : memref<1x32x96xf32, #tpu.memory_space<vmem>>, vector<1x32x96xf32>,
    return
  }
  func.func @transform_0(%arg0: i32) -> (i32, i32, i32) {
    %c0_i32 = arith.constant 0 : i32
    %c0_i32_0 = arith.constant 0 : i32
    %c0_i32_1 = arith.constant 0 : i32
    return %arg0, %c0_i32, %c0_i32_0 : i32, i32, i32
  }
  func.func @transform_1(%arg0: i32) -> (i32, i32, i32) {
    %c0_i32 = arith.constant 0 : i32
    %c0_i32_0 = arith.constant 0 : i32
    %c0_i32_1 = arith.constant 0 : i32
    return %arg0, %c0_i32, %c0_i32_0 : i32, i32, i32
  }
  func.func @transform_2(%arg0: i32) -> (i32, i32, i32) {
    %c0_i32 = arith.constant 0 : i32
    %c0_i32_0 = arith.constant 0 : i32
    %c0_i32_1 = arith.constant 0 : i32
    %c0_i32_2 = arith.constant 0 : i32
    return %c0_i32, %c0_i32_0, %c0_i32_1 : i32, i32, i32
  }
  func.func @transform_3(%arg0: i32) -> (i32, i32) {
    %c0_i32 = arith.constant 0 : i32
    %c0_i32_0 = arith.constant 0 : i32
    %c0_i32_1 = arith.constant 0 : i32
    return %c0_i32, %c0_i32_0 : i32, i32
  }
  func.func @transform_4(%arg0: i32) -> (i32, i32, i32) {
    %c0_i32 = arith.constant 0 : i32
    %c0_i32_0 = arith.constant 0 : i32
    %c0_i32_1 = arith.constant 0 : i32
    return %arg0, %c0_i32, %c0_i32_0 : i32, i32, i32
  }
}

</mosaic_0001>

<llo_original>
// kernel: tile.73
$region0: #{tile.73}
  #allocation0 [shape = 's32[1]{0}', space=sflag, size = 0x4, scoped, tag = 'scoped memory for tile.73']
  %s0 = inlined_call_operand.vmem [shape: f32[8], index: 0, kind: input, shape index: {}]
  %s1 = inlined_call_operand.vmem [shape: f32[16,8], index: 1, kind: output, shape index: {}]
  // Predicated region
  $region2: #{tile.73} parent=0 // pred_check
    _
  $region3: #{tile.73} parent=0 // pred_check_branch
    %3 = sbr.rel (0) target = $region5
  $region4: #{tile.73} parent=0 // pred_region
    _
  $region5: #{tile.73} parent=0 // pred_fallthru
    _
  %v4 = vld [vmem:[%s0] ss:$0 sm:$0xff]
  %5 = vst [vmem:[%s1] sm:$0xff] %v4
  %s6 = scalar_lea.vmem %s1, 8
  %7 = vst [vmem:[%s6] sm:$0xff] %v4

// kernel: tile.58
$region0: #{tile.58}
  #allocation2 [shape = 's32[1]{0}', space=sflag, size = 0x4, scoped, tag = 'scoped memory for tile.58']
  %s0 = inlined_call_operand.hbm [shape: f32[8], index: 0, kind: input, shape index: {}]
  %s1 = inlined_call_operand.vmem [shape: f32[16,8], index: 1, kind: output, shape index: {}]
  $region1: #{tile.58} parent=0
    #allocation0 [shape = 'u8[512]{0}', space=vmem, size = 0x400, scoped, tag = 'operand span for operand 0']
    #allocation1 [shape = 's32[1]{0}', space=sflag, size = 0x4, scoped, tag = 'scoped memory for tile.58']
    %2 = vsyncpa [#allocation1], 0
    // Predicated region
    $region2: #{tile.58} parent=1 // pred_check
      _
    $region3: #{tile.58} parent=1 // pred_check_branch
      %4 = sbr.rel (0) target = $region5
    $region4: #{tile.58} parent=1 // pred_region
      %s6 = ssub.s32 16, 16
      %7 = vsyncadd [#allocation1], %s6
      %s9 = sshll.u32 [#allocation0], 4
      %s10 = int_to_ptr.vmem [resolvable:$true] %s9
      %12 = dma.hbm_to_vmem [thread:$0]  %s0, 16, %s10, [#allocation1]
    $region5: #{tile.58} parent=1 // pred_fallthru
      _
    // Predicated region
    $region6: #{tile.58} parent=1 // pred_check
      _
    $region7: #{tile.58} parent=1 // pred_check_branch
      %14 = sbr.rel (0) target = $region9
    $region8: #{tile.58} parent=1 // pred_region
      %15 = dma.done [#allocation1], 16
    $region9: #{tile.58} parent=1 // pred_fallthru
      _
    %v16 = vld [vmem:[#allocation0] ss:$0 sm:$0xff]
    %17 = vst [vmem:[%s1] sm:$0xff] %v16
    %s18 = scalar_lea.vmem %s1, 8
    %19 = vst [vmem:[%s18] sm:$0xff] %v16
    %20 = vsyncpa [#allocation1], 1

// kernel: tile.74
$region0: #{tile.74}
  %s0 = inlined_call_operand.vmem [shape: f32[16,8], index: 0, kind: input, shape index: {}]
  %s1 = inlined_call_operand.vmem [shape: f32[1,128], index: 1, kind: output, shape index: {}]
  $region1: #{tile.74} parent=0
    #allocation0 [shape = 'u8[4096]{0}', space=vmem, size = 0x1000, scoped, tag = 'scoped mem for output reshape']
    %v2 = vld [vmem:[%s0] sm:$0x1]
    %vm3 = vcmask 64512
    %4 = vst.msk [vmem:[#allocation0] sm:$0x1] %vm3, %v2
    %s5 = scalar_lea.vmem %s0, 15
    %v6 = vld [vmem:[%s5] sm:$0x1]
    %7 = vrot.lane.b32.xlu0 %v6, 120
    %v8 = vpop.permute.xlu0 %7
    %vm9 = vcmask 1048512
    %10 = vst.msk [vmem:[#allocation0] sm:$0x1] %vm9, %v8
    %s11 = scalar_lea.vmem %s0, 14
    %v12 = vld [vmem:[%s11] sm:$0x1]
    %13 = vrot.lane.b32.xlu0 %v12, 112
    %v14 = vpop.permute.xlu0 %13
    %vm15 = vcmask 982912
    %16 = vst.msk [vmem:[#allocation0] sm:$0x1] %vm15, %v14
    %s17 = scalar_lea.vmem %s0, 13
    %v18 = vld [vmem:[%s17] sm:$0x1]
    %19 = vrot.lane.b32.xlu0 %v18, 104
    %v20 = vpop.permute.xlu0 %19
    %vm21 = vcmask 917312
    %22 = vst.msk [vmem:[#allocation0] sm:$0x1] %vm21, %v20
    %s23 = scalar_lea.vmem %s0, 12
    %v24 = vld [vmem:[%s23] sm:$0x1]
    %25 = vrot.lane.b32.xlu0 %v24, 96
    %v26 = vpop.permute.xlu0 %25
    %vm27 = vcmask 851712
    %28 = vst.msk [vmem:[#allocation0] sm:$0x1] %vm27, %v26
    %s29 = scalar_lea.vmem %s0, 11
    %v30 = vld [vmem:[%s29] sm:$0x1]
    %31 = vrot.lane.b32.xlu0 %v30, 88
    %v32 = vpop.permute.xlu0 %31
    %vm33 = vcmask 786112
    %34 = vst.msk [vmem:[#allocation0] sm:$0x1] %vm33, %v32
    %s35 = scalar_lea.vmem %s0, 10
    %v36 = vld [vmem:[%s35] sm:$0x1]
    %37 = vrot.lane.b32.xlu0 %v36, 80
    %v38 = vpop.permute.xlu0 %37
    %vm39 = vcmask 720512
    %40 = vst.msk [vmem:[#allocation0] sm:$0x1] %vm39, %v38
    %s41 = scalar_lea.vmem %s0, 9
    %v42 = vld [vmem:[%s41] sm:$0x1]
    %43 = vrot.lane.b32.xlu0 %v42, 72
    %v44 = vpop.permute.xlu0 %43
    %vm45 = vcmask 654912
    %46 = vst.msk [vmem:[#allocation0] sm:$0x1] %vm45, %v44
    %s47 = scalar_lea.vmem %s0, 8
    %v48 = vld [vmem:[%s47] sm:$0x1]
    %49 = vrot.lane.b32.xlu0 %v48, 64
    %v50 = vpop.permute.xlu0 %49
    %vm51 = vcmask 589312
    %52 = vst.msk [vmem:[#allocation0] sm:$0x1] %vm51, %v50
    %s53 = scalar_lea.vmem %s0, 7
    %v54 = vld [vmem:[%s53] sm:$0x1]
    %55 = vrot.lane.b32.xlu0 %v54, 56
    %v56 = vpop.permute.xlu0 %55
    %vm57 = vcmask 523712
    %58 = vst.msk [vmem:[#allocation0] sm:$0x1] %vm57, %v56
    %s59 = scalar_lea.vmem %s0, 6
    %v60 = vld [vmem:[%s59] sm:$0x1]
    %61 = vrot.lane.b32.xlu0 %v60, 48
    %v62 = vpop.permute.xlu0 %61
    %vm63 = vcmask 458112
    %64 = vst.msk [vmem:[#allocation0] sm:$0x1] %vm63, %v62
    %s65 = scalar_lea.vmem %s0, 5
    %v66 = vld [vmem:[%s65] sm:$0x1]
    %67 = vrot.lane.b32.xlu0 %v66, 40
    %v68 = vpop.permute.xlu0 %67
    %vm69 = vcmask 392512
    %70 = vst.msk [vmem:[#allocation0] sm:$0x1] %vm69, %v68
    %s71 = scalar_lea.vmem %s0, 4
    %v72 = vld [vmem:[%s71] sm:$0x1]
    %73 = vrot.lane.b32.xlu0 %v72, 32
    %v74 = vpop.permute.xlu0 %73
    %vm75 = vcmask 326912
    %76 = vst.msk [vmem:[#allocation0] sm:$0x1] %vm75, %v74
    %s77 = scalar_lea.vmem %s0, 3
    %v78 = vld [vmem:[%s77] sm:$0x1]
    %79 = vrot.lane.b32.xlu0 %v78, 24
    %v80 = vpop.permute.xlu0 %79
    %vm81 = vcmask 261312
    %82 = vst.msk [vmem:[#allocation0] sm:$0x1] %vm81, %v80
    %s83 = scalar_lea.vmem %s0, 2
    %v84 = vld [vmem:[%s83] sm:$0x1]
    %85 = vrot.lane.b32.xlu0 %v84, 16
    %v86 = vpop.permute.xlu0 %85
    %vm87 = vcmask 195712
    %88 = vst.msk [vmem:[#allocation0] sm:$0x1] %vm87, %v86
    %s89 = scalar_lea.vmem %s0, 1
    %v90 = vld [vmem:[%s89] sm:$0x1]
    %91 = vrot.lane.b32.xlu0 %v90, 8
    %v92 = vpop.permute.xlu0 %91
    %vm93 = vcmask 130112
    %94 = vst.msk [vmem:[#allocation0] sm:$0x1] %vm93, %v92
    %s96 = sshll.u32 1, 1
    %s97 = ssub.s32 %s96, 1
    %v99 = vld [vmem:[#allocation0] sm:%s97]
    %s100 = sshll.u32 1, 1
    %s101 = ssub.s32 %s100, 1
    %102 = vst [vmem:[%s1] sm:%s101] %v99

// kernel: tile.88
$region0: #{tile.88}
  #allocation2 [shape = 's32[1]{0}', space=sflag, size = 0x4, scoped, tag = 'scoped memory for tile.88']
  %s0 = inlined_call_operand.hbm [shape: f32[24], index: 0, kind: input, shape index: {}]
  %s1 = inlined_call_operand.vmem [shape: f32[16,24], index: 1, kind: output, shape index: {}]
  $region1: #{tile.88} parent=0
    #allocation0 [shape = 'u8[512]{0}', space=vmem, size = 0x400, scoped, tag = 'operand span for operand 0']
    #allocation1 [shape = 's32[1]{0}', space=sflag, size = 0x4, scoped, tag = 'scoped memory for tile.88']
    %2 = vsyncpa [#allocation1], 0
    // Predicated region
    $region2: #{tile.88} parent=1 // pred_check
      _
    $region3: #{tile.88} parent=1 // pred_check_branch
      %4 = sbr.rel (0) target = $region5
    $region4: #{tile.88} parent=1 // pred_region
      %s6 = ssub.s32 16, 16
      %7 = vsyncadd [#allocation1], %s6
      %s9 = sshll.u32 [#allocation0], 4
      %s10 = int_to_ptr.vmem [resolvable:$true] %s9
      %12 = dma.hbm_to_vmem [thread:$0]  %s0, 16, %s10, [#allocation1]
    $region5: #{tile.88} parent=1 // pred_fallthru
      _
    // Predicated region
    $region6: #{tile.88} parent=1 // pred_check
      _
    $region7: #{tile.88} parent=1 // pred_check_branch
      %14 = sbr.rel (0) target = $region9
    $region8: #{tile.88} parent=1 // pred_region
      %15 = dma.done [#allocation1], 16
    $region9: #{tile.88} parent=1 // pred_fallthru
      _
    %v16 = vld [vmem:[#allocation0] ss:$0 sm:$0xff]
    %17 = vst [vmem:[%s1] sm:$0xff] %v16
    %s18 = scalar_lea.vmem %s1, 8
    %19 = vst [vmem:[%s18] sm:$0xff] %v16
    %20 = vsyncpa [#allocation1], 1

// kernel: tile.89
$region0: #{tile.89}
  %s0 = inlined_call_operand.vmem [shape: f32[16,24], index: 0, kind: input, shape index: {}]
  %s1 = inlined_call_operand.vmem [shape: f32[1,384], index: 1, kind: output, shape index: {}]
  $region1: #{tile.89} parent=0
    #allocation0 [shape = 'u8[12288]{0}', space=vmem, size = 0x3000, scoped, tag = 'scoped mem for output reshape']
    %v2 = vld [vmem:[%s0] sm:$0x1]
    %vm3 = vcmask 195584
    %4 = vst.msk [vmem:[#allocation0] sm:$0x1] %vm3, %v2
    %s5 = scalar_lea.vmem %s0, 5
    %v6 = vld [vmem:[%s5] sm:$0x1]
    %s7 = scalar_lea.vmem %s0, 5
    %v8 = vld [vmem:[%s7] sm:$0x1]
    %vm9 = vcmask 64512
    %v10 = vsel %vm9, %v8, %v6
    %11 = vrot.lane.b32.xlu0 %v10, 120
    %v12 = vpop.permute.xlu0 %11
    %vm13 = vcmask 130048
    %s14 = scalar_lea.vmem [#allocation0], 8
    %15 = vst.msk [vmem:[%s14] sm:$0x1] %vm13, %v12
    %vm16 = vcmask 1048512
    %17 = vst.msk [vmem:[#allocation0] sm:$0x1] %vm16, %v12
    %s18 = scalar_lea.vmem %s0, 10
    %v19 = vld [vmem:[%s18] sm:$0x1]
    %s20 = scalar_lea.vmem %s0, 10
    %v21 = vld [vmem:[%s20] sm:$0x1]
    %vm22 = vcmask 130048
    %v23 = vsel %vm22, %v21, %v19
    %24 = vrot.lane.b32.xlu0 %v23, 112
    %v25 = vpop.permute.xlu0 %24
    %vm26 = vcmask 64512
    %s27 = scalar_lea.vmem [#allocation0], 16
    %28 = vst.msk [vmem:[%s27] sm:$0x1] %vm26, %v25
    %vm29 = vcmask 1048448
    %s30 = scalar_lea.vmem [#allocation0], 8
    %31 = vst.msk [vmem:[%s30] sm:$0x1] %vm29, %v25
    %s32 = scalar_lea.vmem %s0, 15
    %v33 = vld [vmem:[%s32] sm:$0x1]
    %34 = vrot.lane.b32.xlu0 %v33, 104
    %v35 = vpop.permute.xlu0 %34
    %vm36 = vcmask 1048384
    %s37 = scalar_lea.vmem [#allocation0], 16
    %38 = vst.msk [vmem:[%s37] sm:$0x1] %vm36, %v35
    %s39 = scalar_lea.vmem %s0, 4
    %v40 = vld [vmem:[%s39] sm:$0x1]
    %41 = vrot.lane.b32.xlu0 %v40, 96
    %v42 = vpop.permute.xlu0 %41
    %vm43 = vcmask 982784
    %44 = vst.msk [vmem:[#allocation0] sm:$0x1] %vm43, %v42
    %s45 = scalar_lea.vmem %s0, 9
    %v46 = vld [vmem:[%s45] sm:$0x1]
    %47 = vrot.lane.b32.xlu0 %v46, 88
    %v48 = vpop.permute.xlu0 %47
    %vm49 = vcmask 917184
    %s50 = scalar_lea.vmem [#allocation0], 8
    %51 = vst.msk [vmem:[%s50] sm:$0x1] %vm49, %v48
    %s52 = scalar_lea.vmem %s0, 14
    %v53 = vld [vmem:[%s52] sm:$0x1]
    %54 = vrot.lane.b32.xlu0 %v53, 80
    %v55 = vpop.permute.xlu0 %54
    %vm56 = vcmask 851584
    %s57 = scalar_lea.vmem [#allocation0], 16
    %58 = vst.msk [vmem:[%s57] sm:$0x1] %vm56, %v55
    %s59 = scalar_lea.vmem %s0, 3
    %v60 = vld [vmem:[%s59] sm:$0x1]
    %61 = vrot.lane.b32.xlu0 %v60, 72
    %v62 = vpop.permute.xlu0 %61
    %vm63 = vcmask 785984
    %64 = vst.msk [vmem:[#allocation0] sm:$0x1] %vm63, %v62
    %s65 = scalar_lea.vmem %s0, 8
    %v66 = vld [vmem:[%s65] sm:$0x1]
    %67 = vrot.lane.b32.xlu0 %v66, 64
    %v68 = vpop.permute.xlu0 %67
    %vm69 = vcmask 720384
    %s70 = scalar_lea.vmem [#allocation0], 8
    %71 = vst.msk [vmem:[%s70] sm:$0x1] %vm69, %v68
    %s72 = scalar_lea.vmem %s0, 13
    %v73 = vld [vmem:[%s72] sm:$0x1]
    %74 = vrot.lane.b32.xlu0 %v73, 56
    %v75 = vpop.permute.xlu0 %74
    %vm76 = vcmask 654784
    %s77 = scalar_lea.vmem [#allocation0], 16
    %78 = vst.msk [vmem:[%s77] sm:$0x1] %vm76, %v75
    %s79 = scalar_lea.vmem %s0, 2
    %v80 = vld [vmem:[%s79] sm:$0x1]
    %81 = vrot.lane.b32.xlu0 %v80, 48
    %v82 = vpop.permute.xlu0 %81
    %vm83 = vcmask 589184
    %84 = vst.msk [vmem:[#allocation0] sm:$0x1] %vm83, %v82
    %s85 = scalar_lea.vmem %s0, 7
    %v86 = vld [vmem:[%s85] sm:$0x1]
    %87 = vrot.lane.b32.xlu0 %v86, 40
    %v88 = vpop.permute.xlu0 %87
    %vm89 = vcmask 523584
    %s90 = scalar_lea.vmem [#allocation0], 8
    %91 = vst.msk [vmem:[%s90] sm:$0x1] %vm89, %v88
    %s92 = scalar_lea.vmem %s0, 12
    %v93 = vld [vmem:[%s92] sm:$0x1]
    %94 = vrot.lane.b32.xlu0 %v93, 32
    %v95 = vpop.permute.xlu0 %94
    %vm96 = vcmask 457984
    %s97 = scalar_lea.vmem [#allocation0], 16
    %98 = vst.msk [vmem:[%s97] sm:$0x1] %vm96, %v95
    %s99 = scalar_lea.vmem %s0, 1
    %v100 = vld [vmem:[%s99] sm:$0x1]
    %101 = vrot.lane.b32.xlu0 %v100, 24
    %v102 = vpop.permute.xlu0 %101
    %vm103 = vcmask 392384
    %104 = vst.msk [vmem:[#allocation0] sm:$0x1] %vm103, %v102
    %s105 = scalar_lea.vmem %s0, 6
    %v106 = vld [vmem:[%s105] sm:$0x1]
    %107 = vrot.lane.b32.xlu0 %v106, 16
    %v108 = vpop.permute.xlu0 %107
    %vm109 = vcmask 326784
    %s110 = scalar_lea.vmem [#allocation0], 8
    %111 = vst.msk [vmem:[%s110] sm:$0x1] %vm109, %v108
    %s112 = scalar_lea.vmem %s0, 11
    %v113 = vld [vmem:[%s112] sm:$0x1]
    %114 = vrot.lane.b32.xlu0 %v113, 8
    %v115 = vpop.permute.xlu0 %114
    %vm116 = vcmask 261184
    %s117 = scalar_lea.vmem [#allocation0], 16
    %118 = vst.msk [vmem:[%s117] sm:$0x1] %vm116, %v115
    %s120 = sshll.u32 1, 1
    %s121 = ssub.s32 %s120, 1
    %v123 = vld [vmem:[#allocation0] sm:%s121]
    %s124 = sshll.u32 1, 1
    %s125 = ssub.s32 %s124, 1
    %126 = vst [vmem:[%s1] sm:%s125] %v123
    %s127 = scalar_lea.vmem [#allocation0], 8
    %v128 = vld [vmem:[%s127] sm:%s121]
    %s129 = sshll.u32 1, 1
    %s130 = ssub.s32 %s129, 1
    %s131 = scalar_lea.vmem %s1, 1
    %132 = vst [vmem:[%s131] sm:%s130] %v128
    %s133 = scalar_lea.vmem [#allocation0], 16
    %v134 = vld [vmem:[%s133] sm:%s121]
    %s135 = sshll.u32 1, 1
    %s136 = ssub.s32 %s135, 1
    %s137 = smul.addr 1, 2
    %s138 = scalar_lea.vmem %s1, %s137
    %139 = vst [vmem:[%s138] sm:%s136] %v134

// kernel: tile.98
$region0: #{tile.98}
  #allocation2 [shape = 's32[1]{0}', space=sflag, size = 0x4, scoped, tag = 'scoped memory for tile.98']
  %s0 = inlined_call_operand.hbm [shape: f32[3], index: 0, kind: input, shape index: {}]
  %s1 = inlined_call_operand.vmem [shape: f32[32,3], index: 1, kind: output, shape index: {}]
  $region1: #{tile.98} parent=0
    #allocation0 [shape = 'u8[512]{0}', space=vmem, size = 0x400, scoped, tag = 'operand span for operand 0']
    #allocation1 [shape = 's32[1]{0}', space=sflag, size = 0x4, scoped, tag = 'scoped memory for tile.98']
    %2 = vsyncpa [#allocation1], 0
    // Predicated region
    $region2: #{tile.98} parent=1 // pred_check
      _
    $region3: #{tile.98} parent=1 // pred_check_branch
      %4 = sbr.rel (0) target = $region5
    $region4: #{tile.98} parent=1 // pred_region
      %s6 = ssub.s32 16, 16
      %7 = vsyncadd [#allocation1], %s6
      %s9 = sshll.u32 [#allocation0], 4
      %s10 = int_to_ptr.vmem [resolvable:$true] %s9
      %12 = dma.hbm_to_vmem [thread:$0]  %s0, 16, %s10, [#allocation1]
    $region5: #{tile.98} parent=1 // pred_fallthru
      _
    // Predicated region
    $region6: #{tile.98} parent=1 // pred_check
      _
    $region7: #{tile.98} parent=1 // pred_check_branch
      %14 = sbr.rel (0) target = $region9
    $region8: #{tile.98} parent=1 // pred_region
      %15 = dma.done [#allocation1], 16
    $region9: #{tile.98} parent=1 // pred_fallthru
      _
    %v16 = vld [vmem:[#allocation0] ss:$0 sm:$0xff]
    %17 = vst [vmem:[%s1] sm:$0xff] %v16
    %s18 = scalar_lea.vmem %s1, 8
    %19 = vst [vmem:[%s18] sm:$0xff] %v16
    %s20 = scalar_lea.vmem %s1, 16
    %21 = vst [vmem:[%s20] sm:$0xff] %v16
    %s22 = scalar_lea.vmem %s1, 24
    %23 = vst [vmem:[%s22] sm:$0xff] %v16
    %24 = vsyncpa [#allocation1], 1

// kernel: tile.99
$region0: #{tile.99}
  %s0 = inlined_call_operand.vmem [shape: f32[32,3], index: 0, kind: input, shape index: {}]
  %s1 = inlined_call_operand.vmem [shape: f32[1,96], index: 1, kind: output, shape index: {}]
  $region1: #{tile.99} parent=0
    #allocation0 [shape = 'u8[4096]{0}', space=vmem, size = 0x1000, scoped, tag = 'scoped mem for output reshape']
    %v2 = vld [vmem:[%s0] sm:$0x1]
    %vm3 = vcmask 23552
    %4 = vst.msk [vmem:[#allocation0] sm:$0x1] %vm3, %v2
    %s5 = scalar_lea.vmem %s0, 31
    %v6 = vld [vmem:[%s5] sm:$0x1]
    %7 = vrot.lane.b32.xlu0 %v6, 93
    %v8 = vpop.permute.xlu0 %7
    %vm9 = vcmask 786152
    %10 = vst.msk [vmem:[#allocation0] sm:$0x1] %vm9, %v8
    %s11 = scalar_lea.vmem %s0, 30
    %v12 = vld [vmem:[%s11] sm:$0x1]
    %13 = vrot.lane.b32.xlu0 %v12, 90
    %v14 = vpop.permute.xlu0 %13
    %vm15 = vcmask 761552
    %16 = vst.msk [vmem:[#allocation0] sm:$0x1] %vm15, %v14
    %s17 = scalar_lea.vmem %s0, 29
    %v18 = vld [vmem:[%s17] sm:$0x1]
    %19 = vrot.lane.b32.xlu0 %v18, 87
    %v20 = vpop.permute.xlu0 %19
    %vm21 = vcmask 736952
    %22 = vst.msk [vmem:[#allocation0] sm:$0x1] %vm21, %v20
    %s23 = scalar_lea.vmem %s0, 28
    %v24 = vld [vmem:[%s23] sm:$0x1]
    %25 = vrot.lane.b32.xlu0 %v24, 84
    %v26 = vpop.permute.xlu0 %25
    %vm27 = vcmask 712352
    %28 = vst.msk [vmem:[#allocation0] sm:$0x1] %vm27, %v26
    %s29 = scalar_lea.vmem %s0, 27
    %v30 = vld [vmem:[%s29] sm:$0x1]
    %31 = vrot.lane.b32.xlu0 %v30, 81
    %v32 = vpop.permute.xlu0 %31
    %vm33 = vcmask 687752
    %34 = vst.msk [vmem:[#allocation0] sm:$0x1] %vm33, %v32
    %s35 = scalar_lea.vmem %s0, 26
    %v36 = vld [vmem:[%s35] sm:$0x1]
    %37 = vrot.lane.b32.xlu0 %v36, 78
    %v38 = vpop.permute.xlu0 %37
    %vm39 = vcmask 663152
    %40 = vst.msk [vmem:[#allocation0] sm:$0x1] %vm39, %v38
    %s41 = scalar_lea.vmem %s0, 25
    %v42 = vld [vmem:[%s41] sm:$0x1]
    %43 = vrot.lane.b32.xlu0 %v42, 75
    %v44 = vpop.permute.xlu0 %43
    %vm45 = vcmask 638552
    %46 = vst.msk [vmem:[#allocation0] sm:$0x1] %vm45, %v44
    %s47 = scalar_lea.vmem %s0, 24
    %v48 = vld [vmem:[%s47] sm:$0x1]
    %49 = vrot.lane.b32.xlu0 %v48, 72
    %v50 = vpop.permute.xlu0 %49
    %vm51 = vcmask 613952
    %52 = vst.msk [vmem:[#allocation0] sm:$0x1] %vm51, %v50
    %s53 = scalar_lea.vmem %s0, 23
    %v54 = vld [vmem:[%s53] sm:$0x1]
    %55 = vrot.lane.b32.xlu0 %v54, 69
    %v56 = vpop.permute.xlu0 %55
    %vm57 = vcmask 589352
    %58 = vst.msk [vmem:[#allocation0] sm:$0x1] %vm57, %v56
    %s59 = scalar_lea.vmem %s0, 22
    %v60 = vld [vmem:[%s59] sm:$0x1]
    %61 = vrot.lane.b32.xlu0 %v60, 66
    %v62 = vpop.permute.xlu0 %61
    %vm63 = vcmask 564752
    %64 = vst.msk [vmem:[#allocation0] sm:$0x1] %vm63, %v62
    %s65 = scalar_lea.vmem %s0, 21
    %v66 = vld [vmem:[%s65] sm:$0x1]
    %67 = vrot.lane.b32.xlu0 %v66, 63
    %v68 = vpop.permute.xlu0 %67
    %vm69 = vcmask 540152
    %70 = vst.msk [vmem:[#allocation0] sm:$0x1] %vm69, %v68
    %s71 = scalar_lea.vmem %s0, 20
    %v72 = vld [vmem:[%s71] sm:$0x1]
    %73 = vrot.lane.b32.xlu0 %v72, 60
    %v74 = vpop.permute.xlu0 %73
    %vm75 = vcmask 515552
    %76 = vst.msk [vmem:[#allocation0] sm:$0x1] %vm75, %v74
    %s77 = scalar_lea.vmem %s0, 19
    %v78 = vld [vmem:[%s77] sm:$0x1]
    %79 = vrot.lane.b32.xlu0 %v78, 57
    %v80 = vpop.permute.xlu0 %79
    %vm81 = vcmask 490952
    %82 = vst.msk [vmem:[#allocation0] sm:$0x1] %vm81, %v80
    %s83 = scalar_lea.vmem %s0, 18
    %v84 = vld [vmem:[%s83] sm:$0x1]
    %85 = vrot.lane.b32.xlu0 %v84, 54
    %v86 = vpop.permute.xlu0 %85
    %vm87 = vcmask 466352
    %88 = vst.msk [vmem:[#allocation0] sm:$0x1] %vm87, %v86
    %s89 = scalar_lea.vmem %s0, 17
    %v90 = vld [vmem:[%s89] sm:$0x1]
    %91 = vrot.lane.b32.xlu0 %v90, 51
    %v92 = vpop.permute.xlu0 %91
    %vm93 = vcmask 441752
    %94 = vst.msk [vmem:[#allocation0] sm:$0x1] %vm93, %v92
    %s95 = scalar_lea.vmem %s0, 16
    %v96 = vld [vmem:[%s95] sm:$0x1]
    %97 = vrot.lane.b32.xlu0 %v96, 48
    %v98 = vpop.permute.xlu0 %97
    %vm99 = vcmask 417152
    %100 = vst.msk [vmem:[#allocation0] sm:$0x1] %vm99, %v98
    %s101 = scalar_lea.vmem %s0, 15
    %v102 = vld [vmem:[%s101] sm:$0x1]
    %103 = vrot.lane.b32.xlu0 %v102, 45
    %v104 = vpop.permute.xlu0 %103
    %vm105 = vcmask 392552
    %106 = vst.msk [vmem:[#allocation0] sm:$0x1] %vm105, %v104
    %s107 = scalar_lea.vmem %s0, 14
    %v108 = vld [vmem:[%s107] sm:$0x1]
    %109 = vrot.lane.b32.xlu0 %v108, 42
    %v110 = vpop.permute.xlu0 %109
    %vm111 = vcmask 367952
    %112 = vst.msk [vmem:[#allocation0] sm:$0x1] %vm111, %v110
    %s113 = scalar_lea.vmem %s0, 13
    %v114 = vld [vmem:[%s113] sm:$0x1]
    %115 = vrot.lane.b32.xlu0 %v114, 39
    %v116 = vpop.permute.xlu0 %115
    %vm117 = vcmask 343352
    %118 = vst.msk [vmem:[#allocation0] sm:$0x1] %vm117, %v116
    %s119 = scalar_lea.vmem %s0, 12
    %v120 = vld [vmem:[%s119] sm:$0x1]
    %121 = vrot.lane.b32.xlu0 %v120, 36
    %v122 = vpop.permute.xlu0 %121
    %vm123 = vcmask 318752
    %124 = vst.msk [vmem:[#allocation0] sm:$0x1] %vm123, %v122
    %s125 = scalar_lea.vmem %s0, 11
    %v126 = vld [vmem:[%s125] sm:$0x1]
    %127 = vrot.lane.b32.xlu0 %v126, 33
    %v128 = vpop.permute.xlu0 %127
    %vm129 = vcmask 294152
    %130 = vst.msk [vmem:[#allocation0] sm:$0x1] %vm129, %v128
    %s131 = scalar_lea.vmem %s0, 10
    %v132 = vld [vmem:[%s131] sm:$0x1]
    %133 = vrot.lane.b32.xlu0 %v132, 30
    %v134 = vpop.permute.xlu0 %133
    %vm135 = vcmask 269552
    %136 = vst.msk [vmem:[#allocation0] sm:$0x1] %vm135, %v134
    %s137 = scalar_lea.vmem %s0, 9
    %v138 = vld [vmem:[%s137] sm:$0x1]
    %139 = vrot.lane.b32.xlu0 %v138, 27
    %v140 = vpop.permute.xlu0 %139
    %vm141 = vcmask 244952
    %142 = vst.msk [vmem:[#allocation0] sm:$0x1] %vm141, %v140
    %s143 = scalar_lea.vmem %s0, 8
    %v144 = vld [vmem:[%s143] sm:$0x1]
    %145 = vrot.lane.b32.xlu0 %v144, 24
    %v146 = vpop.permute.xlu0 %145
    %vm147 = vcmask 220352
    %148 = vst.msk [vmem:[#allocation0] sm:$0x1] %vm147, %v146
    %s149 = scalar_lea.vmem %s0, 7
    %v150 = vld [vmem:[%s149] sm:$0x1]
    %151 = vrot.lane.b32.xlu0 %v150, 21
    %v152 = vpop.permute.xlu0 %151
    %vm153 = vcmask 195752
    %154 = vst.msk [vmem:[#allocation0] sm:$0x1] %vm153, %v152
    %s155 = scalar_lea.vmem %s0, 6
    %v156 = vld [vmem:[%s155] sm:$0x1]
    %157 = vrot.lane.b32.xlu0 %v156, 18
    %v158 = vpop.permute.xlu0 %157
    %vm159 = vcmask 171152
    %160 = vst.msk [vmem:[#allocation0] sm:$0x1] %vm159, %v158
    %s161 = scalar_lea.vmem %s0, 5
    %v162 = vld [vmem:[%s161] sm:$0x1]
    %163 = vrot.lane.b32.xlu0 %v162, 15
    %v164 = vpop.permute.xlu0 %163
    %vm165 = vcmask 146552
    %166 = vst.msk [vmem:[#allocation0] sm:$0x1] %vm165, %v164
    %s167 = scalar_lea.vmem %s0, 4
    %v168 = vld [vmem:[%s167] sm:$0x1]
    %169 = vrot.lane.b32.xlu0 %v168, 12
    %v170 = vpop.permute.xlu0 %169
    %vm171 = vcmask 121952
    %172 = vst.msk [vmem:[#allocation0] sm:$0x1] %vm171, %v170
    %s173 = scalar_lea.vmem %s0, 3
    %v174 = vld [vmem:[%s173] sm:$0x1]
    %175 = vrot.lane.b32.xlu0 %v174, 9
    %v176 = vpop.permute.xlu0 %175
    %vm177 = vcmask 97352
    %178 = vst.msk [vmem:[#allocation0] sm:$0x1] %vm177, %v176
    %s179 = scalar_lea.vmem %s0, 2
    %v180 = vld [vmem:[%s179] sm:$0x1]
    %181 = vrot.lane.b32.xlu0 %v180, 6
    %v182 = vpop.permute.xlu0 %181
    %vm183 = vcmask 72752
    %184 = vst.msk [vmem:[#allocation0] sm:$0x1] %vm183, %v182
    %s185 = scalar_lea.vmem %s0, 1
    %v186 = vld [vmem:[%s185] sm:$0x1]
    %187 = vrot.lane.b32.xlu0 %v186, 3
    %v188 = vpop.permute.xlu0 %187
    %vm189 = vcmask 48152
    %190 = vst.msk [vmem:[#allocation0] sm:$0x1] %vm189, %v188
    %s192 = sshll.u32 1, 1
    %s193 = ssub.s32 %s192, 1
    %v195 = vld [vmem:[#allocation0] sm:%s193]
    %s196 = sshll.u32 1, 1
    %s197 = ssub.s32 %s196, 1
    %198 = vst [vmem:[%s1] sm:%s197] %v195

// kernel: shuffle_mixer_forward.4
$region0: #{shuffle_mixer_forward.4}
  #allocation0 [shape = 'u32[]', space=smem, size = 0x4, offset = 0x4, fixed_abs, tag = 'smem constant byte address 0x4 - core index']
  #allocation1 [shape = 'u32[144,128]{1,0:T(1,128)}', space=vmem, size = 0x12000, scoped, tag = 'internal scratch']
  #allocation2 [shape = 'f32[32,48]{1,0:T(8,128)}', space=vmem, size = 0x4000, scoped, tag = 'scratch operand']
  %s0 = inlined_call_operand.vmem [shape: f32[2,16,48], index: 0, kind: input, shape index: {}]
  %s1 = inlined_call_operand.vmem [shape: f32[3,48,128], index: 1, kind: input, shape index: {}]
  %s2 = inlined_call_operand.vmem [shape: f32[1,128], index: 2, kind: input, shape index: {}]
  %s3 = inlined_call_operand.vmem [shape: f32[2,16,128], index: 3, kind: output, shape index: {}]
  %s4 = sld [smem:[#allocation0]]
  $region45: #{shuffle_mixer_forward.4} parent=0
    _
  %s6 = ssub.s32 1, %s4
  %s7 = scalar_select 0, %s6, %s4
  loop: start=0, step=1, limit=4
  $region2: #{shuffle_mixer_forward.4} parent=0 // loop_pre_header
    _
  $region3: #{shuffle_mixer_forward.4} parent=0 // loop_header
    %s9 = sphi 0, %s13
    %p10 = scmp.ge.s32.totalorder %s9, 4
    %s19 = sphi 0, %s21
    %s22 = sphi 0, %s19
    %s23 = sphi 0, %s22
    %s39 = sphi 0, %s23
    %s43 = sphi 0, %s43
    %s45 = sphi 0, %s43
    %s46 = sphi 0, %s45
    %s60 = sphi 0, %s46
    %s64 = sphi 0, %s64
    %s66 = sphi 0, %s64
    %s67 = sphi 0, %s66
    %s81 = sphi 0, %s67
    %s87 = sphi 0, %s89
    %s90 = sphi 0, %s87
    %s91 = sphi 0, %s90
    %s107 = sphi 0, %s91
  $region4: #{shuffle_mixer_forward.4} parent=0 // loop_header_branch
    %12 = sbr.rel (%p10) target = $region8
  $region5: #{shuffle_mixer_forward.4} parent=0 // loop_body
    %s14 = ssub.s32 %s9, 1
    %s15 = ssub.s32 %s9, 2
    %s16 = sadd.s32 %s9, 1
    %s17 = ssub.s32 %s9, %s16
    %p18 = scmp.eq.s32.totalorder %s17, 0
    %s20 = sadd.s32 %s19, 1
    %s21 = scalar_select %p18, %s19, %s20
    %p24 = pneg %p18
    %p25 = scmp.eq.s32.totalorder %s9, 1
    %p26 = por %p24, %p25
    %p27 = scmp.ne.s32.totalorder %s19, %s22
    %p28 = scmp.eq.s32.totalorder %s9, 0
    %p29 = por %p27, %p28
    %p30 = scmp.ne.s32.totalorder %s19, %s22
    %p31 = scmp.eq.s32.totalorder %s14, 1
    %p32 = por %p30, %p31
    %p33 = scmp.ne.s32.totalorder %s22, %s23
    %p34 = scmp.eq.s32.totalorder %s14, 0
    %p35 = por %p33, %p34
    %p36 = scmp.ne.s32.totalorder %s22, %s23
    %p37 = scmp.eq.s32.totalorder %s15, 1
    %p38 = por %p36, %p37
    %p40 = scmp.ne.s32.totalorder %s23, %s39
    %p41 = scmp.eq.s32.totalorder %s15, 0
    %p42 = por %p40, %p41
    %s44 = sadd.s32 %s43, 1
    %p47 = scmp.eq.s32.totalorder %s9, 1
    %p48 = scmp.ne.s32.totalorder %s43, %s45
    %p49 = scmp.eq.s32.totalorder %s9, 0
    %p50 = por %p48, %p49
    %p51 = scmp.ne.s32.totalorder %s43, %s45
    %p52 = scmp.eq.s32.totalorder %s14, 1
    %p53 = por %p51, %p52
    %p54 = scmp.ne.s32.totalorder %s45, %s46
    %p55 = scmp.eq.s32.totalorder %s14, 0
    %p56 = por %p54, %p55
    %p57 = scmp.ne.s32.totalorder %s45, %s46
    %p58 = scmp.eq.s32.totalorder %s15, 1
    %p59 = por %p57, %p58
    %p61 = scmp.ne.s32.totalorder %s46, %s60
    %p62 = scmp.eq.s32.totalorder %s15, 0
    %p63 = por %p61, %p62
    %s65 = sadd.s32 %s64, 1
    %p68 = scmp.eq.s32.totalorder %s9, 1
    %p69 = scmp.ne.s32.totalorder %s64, %s66
    %p70 = scmp.eq.s32.totalorder %s9, 0
    %p71 = por %p69, %p70
    %p72 = scmp.ne.s32.totalorder %s64, %s66
    %p73 = scmp.eq.s32.totalorder %s14, 1
    %p74 = por %p72, %p73
    %p75 = scmp.ne.s32.totalorder %s66, %s67
    %p76 = scmp.eq.s32.totalorder %s14, 0
    %p77 = por %p75, %p76
    %p78 = scmp.ne.s32.totalorder %s66, %s67
    %p79 = scmp.eq.s32.totalorder %s15, 1
    %p80 = por %p78, %p79
    %p82 = scmp.ne.s32.totalorder %s67, %s81
    %p83 = scmp.eq.s32.totalorder %s15, 0
    %p84 = por %p82, %p83
    %s85 = ssub.s32 %s9, %s16
    %p86 = scmp.eq.s32.totalorder %s85, 0
    %s88 = sadd.s32 %s87, 1
    %s89 = scalar_select %p86, %s87, %s88
    %p92 = pneg %p86
    %p93 = scmp.eq.s32.totalorder %s9, 1
    %p94 = por %p92, %p93
    %p95 = scmp.ne.s32.totalorder %s87, %s90
    %p96 = scmp.eq.s32.totalorder %s9, 0
    %p97 = por %p95, %p96
    %p98 = scmp.ne.s32.totalorder %s87, %s90
    %p99 = scmp.eq.s32.totalorder %s14, 1
    %p100 = por %p98, %p99
    %p101 = scmp.ne.s32.totalorder %s90, %s91
    %p102 = scmp.eq.s32.totalorder %s14, 0
    %p103 = por %p101, %p102
    %p104 = scmp.ne.s32.totalorder %s90, %s91
    %p105 = scmp.eq.s32.totalorder %s15, 1
    %p106 = por %p104, %p105
    %p108 = scmp.ne.s32.totalorder %s91, %s107
    %p109 = scmp.eq.s32.totalorder %s15, 0
    %p110 = por %p108, %p109
    %p111 = scmp.le.s32.totalorder 1, %s9
    %p112 = scmp.lt.s32.totalorder %s9, 3
    %p113 = pnand %p111, %p112
    %p114 = pneg %p113
    // Predicated region
    $region9: #{shuffle_mixer_forward.4} parent=5 // pred_check
      _
    $region10: #{shuffle_mixer_forward.4} parent=5 // pred_check_branch
      %116 = sbr.rel (%p113) target = $region12
    $region11: #{shuffle_mixer_forward.4} parent=5 // pred_region
      %s117 = ssub.s32 %s9, 1
      // Predicated region
      $region13: #{shuffle_mixer_forward.4} parent=11 // pred_check
        %p118 = pneg %p56
      $region14: #{shuffle_mixer_forward.4} parent=11 // pred_check_branch
        %120 = sbr.rel (%p118) target = $region16
      $region15: #{shuffle_mixer_forward.4} parent=11 // pred_region
        _
      $region16: #{shuffle_mixer_forward.4} parent=11 // pred_fallthru
        _
      // Predicated region
      $region17: #{shuffle_mixer_forward.4} parent=11 // pred_check
        %p121 = pneg %p77
      $region18: #{shuffle_mixer_forward.4} parent=11 // pred_check_branch
        %123 = sbr.rel (%p121) target = $region20
      $region19: #{shuffle_mixer_forward.4} parent=11 // pred_region
        _
      $region20: #{shuffle_mixer_forward.4} parent=11 // pred_fallthru
        _
    $region12: #{shuffle_mixer_forward.4} parent=5 // pred_fallthru
      _
    %p124 = scmp.lt.s32.totalorder %s9, 2
    // Predicated region
    $region21: #{shuffle_mixer_forward.4} parent=5 // pred_check
      %p125 = pneg %p124
    $region22: #{shuffle_mixer_forward.4} parent=5 // pred_check_branch
      %127 = sbr.rel (%p125) target = $region24
    $region23: #{shuffle_mixer_forward.4} parent=5 // pred_region
      // Predicated region
      $region25: #{shuffle_mixer_forward.4} parent=23 // pred_check
        %p128 = pneg %p29
      $region26: #{shuffle_mixer_forward.4} parent=23 // pred_check_branch
        %130 = sbr.rel (%p128) target = $region28
      $region27: #{shuffle_mixer_forward.4} parent=23 // pred_region
        %p131 = scmp.lt.s32.totalorder %s9, 1
        %s132 = scalar_select %p131, %s9, 1
        %s133 = smul.addr %s132, 2
        %s134 = smul.addr %s133, 8
        %s135 = scalar_lea.vmem %s0, %s134
      $region28: #{shuffle_mixer_forward.4} parent=23 // pred_fallthru
        _
    $region24: #{shuffle_mixer_forward.4} parent=5 // pred_fallthru
      _
    %p136 = scmp.le.s32.totalorder 1, %s9
    %p137 = scmp.lt.s32.totalorder %s9, 3
    %p138 = pnand %p136, %p137
    %p139 = pneg %p138
    // Predicated region
    $region29: #{shuffle_mixer_forward.4} parent=5 // pred_check
      _
    $region30: #{shuffle_mixer_forward.4} parent=5 // pred_check_branch
      %141 = sbr.rel (%p138) target = $region32
    $region31: #{shuffle_mixer_forward.4} parent=5 // pred_region
      %s142 = ssub.s32 %s9, 1
      %p143 = scmp.lt.s32.totalorder %s14, 1
      %s144 = scalar_select %p143, %s14, 1
      %s145 = smul.addr %s144, 2
      %s146 = smul.addr %s145, 8
      %s147 = scalar_lea.vmem %s0, %s146
      %p148 = pneg %p35
      %p149 = pneg %p32
      %p150 = pneg %p56
      %p151 = pneg %p53
      %p152 = pneg %p77
      %p153 = pneg %p74
      %p154 = pneg %p103
      %p155 = pneg %p100
      %p156 = scmp.lt.s32.totalorder %s14, 1
      %s157 = scalar_select %p156, %s14, 1
      %s158 = smul.addr %s157, 2
      %s159 = smul.addr %s158, 8
      %s160 = scalar_lea.vmem %s3, %s159
      %p161 = scmp.lt.s32.totalorder %s14, 1
      %s162 = scalar_select %p161, %s14, 1
      %s163 = smul.addr %s162, 2
      %s164 = smul.addr %s163, 8
      %s165 = scalar_lea.vmem %s0, %s164
      %p166 = scmp.lt.s32.totalorder %s14, 1
      %s167 = scalar_select %p166, %s14, 1
      %s168 = smul.addr %s167, 2
      %s169 = smul.addr %s168, 8
      %s170 = scalar_lea.vmem %s3, %s169
      %v171 = vld [vmem:[%s165] sm:$0xff]
      %v172 = vld [vmem:[%s165 + $0x8] sm:$0xff]
      %vm173 = vcmask 385024
      %174 = vst.msk [vmem:[#allocation2 + $0x7] sm:$0x1] %vm173, 0.0
      %175 = vst.msk [vmem:[#allocation2 + $0x18] sm:$0x1] %vm173, 0.0
      %vm176 = vcmask 392192
      %177 = vst.msk [vmem:[#allocation2 + $0x8] sm:$0xff] %vm176, %v171
      %178 = vst.msk [vmem:[#allocation2 + $0x10] sm:$0xff] %vm176, %v172
      %v179 = vld [vmem:[#allocation2 + $0x7] sm:$0xff]
      %v180 = vld [vmem:[#allocation2 + $0xf] sm:$0xff]
      %v181 = vld [vmem:[%s1] sm:$0xff]
      %v182 = vld [vmem:[%s1 + $0x8] sm:$0xff]
      %v183 = vld [vmem:[%s1 + $0x10] sm:$0xff]
      %v184 = vld [vmem:[%s1 + $0x18] sm:$0xff]
      %v185 = vld [vmem:[%s1 + $0x20] sm:$0xff]
      %v186 = vld [vmem:[%s1 + $0x28] sm:$0xff]
      %v187 = vld [vmem:[%s2] sm:$0x1]
      %v189 = vlaneseq
      %v190 = vshrl.u32 %v189, 7
      %v191 = vsub.s32 0, %v190
      %v192 = vrot.slane %v187, %v191
      %v195 = vsel %vm176, %v179, 0
      %v198 = vsel %vm176, %v180, 0
      %200 = vmatprep.subr.mxu0 0.0
      %201 = vmatpush1.msra.mxu0 0.0
      %202 = vmatprep.subr.mxu0 0.0
      %203 = vmatpush1.msra.mxu0 0.0
      %204 = vmatprep.subr.mxu0 0.0
      %205 = vmatpush1.msra.mxu0 0.0
      %206 = vmatprep.subr.mxu0 0.0
      %207 = vmatpush1.msra.mxu0 0.0
      %208 = vmatprep.subr.mxu0 0.0
      %209 = vmatpush1.msra.mxu0 0.0
      %210 = vmatprep.subr.mxu0 0.0
      %211 = vmatpush1.msra.mxu0 0.0
      %212 = vmatprep.subr.mxu0 0.0
      %213 = vmatpush1.msra.mxu0 0.0
      %214 = vmatprep.subr.mxu0 0.0
      %215 = vmatpush1.msra.mxu0 0.0
      %216 = vmatprep.subr.mxu0 0.0
      %217 = vmatpush1.msra.mxu0 0.0
      %218 = vmatprep.subr.mxu0 0.0
      %219 = vmatpush1.msra.mxu0 0.0
      %220 = vmatprep.subr.mxu0 0.0
      %221 = vmatpush1.msra.mxu0 %v186
      %222 = vmatprep.subr.mxu0 0.0
      %223 = vmatpush1.msra.mxu0 %v185
      %224 = vmatprep.subr.mxu0 0.0
      %225 = vmatpush1.msra.mxu0 %v184
      %226 = vmatprep.subr.mxu0 0.0
      %227 = vmatpush1.msra.mxu0 %v183
      %228 = vmatprep.subr.mxu0 0.0
      %229 = vmatpush1.msra.mxu0 %v182
      %230 = vmatprep.subr.mxu0 0.0
      %231 = vmatpush1.msra.mxu0 %v181
      %232 = vmatprep.subr.mxu0 0.0
      %233 = vmatpush2.msra.mxu0 0.0
      %234 = vmatprep.subr.mxu0 0.0
      %235 = vmatpush2.msra.mxu0 0.0
      %236 = vmatprep.subr.mxu0 0.0
      %237 = vmatpush2.msra.mxu0 0.0
      %238 = vmatprep.subr.mxu0 0.0
      %239 = vmatpush2.msra.mxu0 0.0
      %240 = vmatprep.subr.mxu0 0.0
      %241 = vmatpush2.msra.mxu0 0.0
      %242 = vmatprep.subr.mxu0 0.0
      %243 = vmatpush2.msra.mxu0 0.0
      %244 = vmatprep.subr.mxu0 0.0
      %245 = vmatpush2.msra.mxu0 0.0
      %246 = vmatprep.subr.mxu0 0.0
      %247 = vmatpush2.msra.mxu0 0.0
      %248 = vmatprep.subr.mxu0 0.0
      %249 = vmatpush2.msra.mxu0 0.0
      %250 = vmatprep.subr.mxu0 0.0
      %251 = vmatpush2.msra.mxu0 0.0
      %252 = vmatprep.subr.mxu0 0.0
      %253 = vmatpush2.msra.mxu0 0.0
      %254 = vmatprep.subr.mxu0 0.0
      %255 = vmatpush2.msra.mxu0 0.0
      %256 = vmatprep.subr.mxu0 0.0
      %257 = vmatpush2.msra.mxu0 0.0
      %258 = vmatprep.subr.mxu0 0.0
      %259 = vmatpush2.msra.mxu0 0.0
      %260 = vmatprep.subr.mxu0 0.0
      %261 = vmatpush2.msra.mxu0 0.0
      %262 = vmatprep.subr.mxu0 0.0
      %263 = vmatpush2.msra.mxu0 0.0
      %264 = vmatprep.mubr.f32.mxu0 0.0
      %265 = vmatmul.mubr.f32.gmra.mxu0 %v195
      %v266 = vpop.f32.mrf.mxu0
      %v267 = vadd.f32 %v192, %v266
      %v268 = vpop.f32.mrf.mxu0
      %269 = vmatprep.mubr.f32.mxu0 0.0
      %270 = vmatmul.mubr.f32.gmra.mxu0 %v198
      %v271 = vpop.f32.mrf.mxu0
      %v272 = vadd.f32 %v192, %v271
      %v273 = vpop.f32.mrf.mxu0
      %274 = vdwg.mxu0
      %v275 = vld [vmem:[#allocation2 + $0x8] sm:$0xff]
      %v276 = vld [vmem:[#allocation2 + $0x10] sm:$0xff]
      %s277 = scalar_lea.vmem %s1, 48
      %v278 = vld [vmem:[%s277] sm:$0xff]
      %v279 = vld [vmem:[%s277 + $0x8] sm:$0xff]
      %v280 = vld [vmem:[%s277 + $0x10] sm:$0xff]
      %v281 = vld [vmem:[%s277 + $0x18] sm:$0xff]
      %v282 = vld [vmem:[%s277 + $0x20] sm:$0xff]
      %v283 = vld [vmem:[%s277 + $0x28] sm:$0xff]
      %v285 = vsel %vm176, %v275, 0
      %v288 = vsel %vm176, %v276, 0
      %290 = vmatprep.subr.mxu0 0.0
      %291 = vmatpush1.msra.mxu0 0.0
      %292 = vmatprep.subr.mxu0 0.0
      %293 = vmatpush1.msra.mxu0 0.0
      %294 = vmatprep.subr.mxu0 0.0
      %295 = vmatpush1.msra.mxu0 0.0
      %296 = vmatprep.subr.mxu0 0.0
      %297 = vmatpush1.msra.mxu0 0.0
      %298 = vmatprep.subr.mxu0 0.0
      %299 = vmatpush1.msra.mxu0 0.0
      %300 = vmatprep.subr.mxu0 0.0
      %301 = vmatpush1.msra.mxu0 0.0
      %302 = vmatprep.subr.mxu0 0.0
      %303 = vmatpush1.msra.mxu0 0.0
      %304 = vmatprep.subr.mxu0 0.0
      %305 = vmatpush1.msra.mxu0 0.0
      %306 = vmatprep.subr.mxu0 0.0
      %307 = vmatpush1.msra.mxu0 0.0
      %308 = vmatprep.subr.mxu0 0.0
      %309 = vmatpush1.msra.mxu0 0.0
      %310 = vmatprep.subr.mxu0 0.0
      %311 = vmatpush1.msra.mxu0 %v283
      %312 = vmatprep.subr.mxu0 0.0
      %313 = vmatpush1.msra.mxu0 %v282
      %314 = vmatprep.subr.mxu0 0.0
      %315 = vmatpush1.msra.mxu0 %v281
      %316 = vmatprep.subr.mxu0 0.0
      %317 = vmatpush1.msra.mxu0 %v280
      %318 = vmatprep.subr.mxu0 0.0
      %319 = vmatpush1.msra.mxu0 %v279
      %320 = vmatprep.subr.mxu0 0.0
      %321 = vmatpush1.msra.mxu0 %v278
      %322 = vmatprep.subr.mxu0 0.0
      %323 = vmatpush2.msra.mxu0 0.0
      %324 = vmatprep.subr.mxu0 0.0
      %325 = vmatpush2.msra.mxu0 0.0
      %326 = vmatprep.subr.mxu0 0.0
      %327 = vmatpush2.msra.mxu0 0.0
      %328 = vmatprep.subr.mxu0 0.0
      %329 = vmatpush2.msra.mxu0 0.0
      %330 = vmatprep.subr.mxu0 0.0
      %331 = vmatpush2.msra.mxu0 0.0
      %332 = vmatprep.subr.mxu0 0.0
      %333 = vmatpush2.msra.mxu0 0.0
      %334 = vmatprep.subr.mxu0 0.0
      %335 = vmatpush2.msra.mxu0 0.0
      %336 = vmatprep.subr.mxu0 0.0
      %337 = vmatpush2.msra.mxu0 0.0
      %338 = vmatprep.subr.mxu0 0.0
      %339 = vmatpush2.msra.mxu0 0.0
      %340 = vmatprep.subr.mxu0 0.0
      %341 = vmatpush2.msra.mxu0 0.0
      %342 = vmatprep.subr.mxu0 0.0
      %343 = vmatpush2.msra.mxu0 0.0
      %344 = vmatprep.subr.mxu0 0.0
      %345 = vmatpush2.msra.mxu0 0.0
      %346 = vmatprep.subr.mxu0 0.0
      %347 = vmatpush2.msra.mxu0 0.0
      %348 = vmatprep.subr.mxu0 0.0
      %349 = vmatpush2.msra.mxu0 0.0
      %350 = vmatprep.subr.mxu0 0.0
      %351 = vmatpush2.msra.mxu0 0.0
      %352 = vmatprep.subr.mxu0 0.0
      %353 = vmatpush2.msra.mxu0 0.0
      %354 = vmatprep.mubr.f32.mxu0 0.0
      %355 = vmatmul.mubr.f32.gmra.mxu0 %v285
      %v356 = vpop.f32.mrf.mxu0
      %v357 = vadd.f32 0.0, %v356
      %v358 = vpop.f32.mrf.mxu0
      %359 = vmatprep.mubr.f32.mxu0 0.0
      %360 = vmatmul.mubr.f32.gmra.mxu0 %v288
      %v361 = vpop.f32.mrf.mxu0
      %v362 = vadd.f32 0.0, %v361
      %v363 = vpop.f32.mrf.mxu0
      %364 = vdwg.mxu0
      %v365 = vadd.f32 %v267, %v357
      %v366 = vadd.f32 %v272, %v362
      %v367 = vld [vmem:[#allocation2 + $0x9] sm:$0xff]
      %v368 = vld [vmem:[#allocation2 + $0x11] sm:$0xff]
      %s369 = scalar_lea.vmem %s1, 96
      %v370 = vld [vmem:[%s369] sm:$0xff]
      %v371 = vld [vmem:[%s369 + $0x8] sm:$0xff]
      %v372 = vld [vmem:[%s369 + $0x10] sm:$0xff]
      %v373 = vld [vmem:[%s369 + $0x18] sm:$0xff]
      %v374 = vld [vmem:[%s369 + $0x20] sm:$0xff]
      %v375 = vld [vmem:[%s369 + $0x28] sm:$0xff]
      %v377 = vsel %vm176, %v367, 0
      %v380 = vsel %vm176, %v368, 0
      %382 = vmatprep.subr.mxu0 0.0
      %383 = vmatpush1.msra.mxu0 0.0
      %384 = vmatprep.subr.mxu0 0.0
      %385 = vmatpush1.msra.mxu0 0.0
      %386 = vmatprep.subr.mxu0 0.0
      %387 = vmatpush1.msra.mxu0 0.0
      %388 = vmatprep.subr.mxu0 0.0
      %389 = vmatpush1.msra.mxu0 0.0
      %390 = vmatprep.subr.mxu0 0.0
      %391 = vmatpush1.msra.mxu0 0.0
      %392 = vmatprep.subr.mxu0 0.0
      %393 = vmatpush1.msra.mxu0 0.0
      %394 = vmatprep.subr.mxu0 0.0
      %395 = vmatpush1.msra.mxu0 0.0
      %396 = vmatprep.subr.mxu0 0.0
      %397 = vmatpush1.msra.mxu0 0.0
      %398 = vmatprep.subr.mxu0 0.0
      %399 = vmatpush1.msra.mxu0 0.0
      %400 = vmatprep.subr.mxu0 0.0
      %401 = vmatpush1.msra.mxu0 0.0
      %402 = vmatprep.subr.mxu0 0.0
      %403 = vmatpush1.msra.mxu0 %v375
      %404 = vmatprep.subr.mxu0 0.0
      %405 = vmatpush1.msra.mxu0 %v374
      %406 = vmatprep.subr.mxu0 0.0
      %407 = vmatpush1.msra.mxu0 %v373
      %408 = vmatprep.subr.mxu0 0.0
      %409 = vmatpush1.msra.mxu0 %v372
      %410 = vmatprep.subr.mxu0 0.0
      %411 = vmatpush1.msra.mxu0 %v371
      %412 = vmatprep.subr.mxu0 0.0
      %413 = vmatpush1.msra.mxu0 %v370
      %414 = vmatprep.subr.mxu0 0.0
      %415 = vmatpush2.msra.mxu0 0.0
      %416 = vmatprep.subr.mxu0 0.0
      %417 = vmatpush2.msra.mxu0 0.0
      %418 = vmatprep.subr.mxu0 0.0
      %419 = vmatpush2.msra.mxu0 0.0
      %420 = vmatprep.subr.mxu0 0.0
      %421 = vmatpush2.msra.mxu0 0.0
      %422 = vmatprep.subr.mxu0 0.0
      %423 = vmatpush2.msra.mxu0 0.0
      %424 = vmatprep.subr.mxu0 0.0
      %425 = vmatpush2.msra.mxu0 0.0
      %426 = vmatprep.subr.mxu0 0.0
      %427 = vmatpush2.msra.mxu0 0.0
      %428 = vmatprep.subr.mxu0 0.0
      %429 = vmatpush2.msra.mxu0 0.0
      %430 = vmatprep.subr.mxu0 0.0
      %431 = vmatpush2.msra.mxu0 0.0
      %432 = vmatprep.subr.mxu0 0.0
      %433 = vmatpush2.msra.mxu0 0.0
      %434 = vmatprep.subr.mxu0 0.0
      %435 = vmatpush2.msra.mxu0 0.0
      %436 = vmatprep.subr.mxu0 0.0
      %437 = vmatpush2.msra.mxu0 0.0
      %438 = vmatprep.subr.mxu0 0.0
      %439 = vmatpush2.msra.mxu0 0.0
      %440 = vmatprep.subr.mxu0 0.0
      %441 = vmatpush2.msra.mxu0 0.0
      %442 = vmatprep.subr.mxu0 0.0
      %443 = vmatpush2.msra.mxu0 0.0
      %444 = vmatprep.subr.mxu0 0.0
      %445 = vmatpush2.msra.mxu0 0.0
      %446 = vmatprep.mubr.f32.mxu0 0.0
      %447 = vmatmul.mubr.f32.gmra.mxu0 %v377
      %v448 = vpop.f32.mrf.mxu0
      %v449 = vadd.f32 0.0, %v448
      %v450 = vpop.f32.mrf.mxu0
      %451 = vmatprep.mubr.f32.mxu0 0.0
      %452 = vmatmul.mubr.f32.gmra.mxu0 %v380
      %v453 = vpop.f32.mrf.mxu0
      %v454 = vadd.f32 0.0, %v453
      %v455 = vpop.f32.mrf.mxu0
      %456 = vdwg.mxu0
      %v457 = vadd.f32 %v365, %v449
      %v458 = vadd.f32 %v366, %v454
      %459 = vst [vmem:[%s170] sm:$0xff] %v457
      %460 = vst [vmem:[%s170 + $0x8] sm:$0xff] %v458
      %p461 = scmp.lt.s32.totalorder %s14, 1
      %s462 = scalar_select %p461, %s14, 1
      %s463 = smul.addr %s462, 2
      %s464 = smul.addr %s463, 8
      %s465 = scalar_lea.vmem %s3, %s464
      // Predicated region
      $region33: #{shuffle_mixer_forward.4} parent=31 // pred_check
        %p466 = pneg %p100
      $region34: #{shuffle_mixer_forward.4} parent=31 // pred_check_branch
        %468 = sbr.rel (%p466) target = $region36
      $region35: #{shuffle_mixer_forward.4} parent=31 // pred_region
        _
      $region36: #{shuffle_mixer_forward.4} parent=31 // pred_fallthru
        _
    $region32: #{shuffle_mixer_forward.4} parent=5 // pred_fallthru
      _
    %p469 = scmp.le.s32.totalorder 2, %s9
    // Predicated region
    $region37: #{shuffle_mixer_forward.4} parent=5 // pred_check
      %p470 = pneg %p469
    $region38: #{shuffle_mixer_forward.4} parent=5 // pred_check_branch
      %472 = sbr.rel (%p470) target = $region40
    $region39: #{shuffle_mixer_forward.4} parent=5 // pred_region
      %s473 = ssub.s32 %s9, 2
      // Predicated region
      $region41: #{shuffle_mixer_forward.4} parent=39 // pred_check
        %p474 = pneg %p106
      $region42: #{shuffle_mixer_forward.4} parent=39 // pred_check_branch
        %476 = sbr.rel (%p474) target = $region44
      $region43: #{shuffle_mixer_forward.4} parent=39 // pred_region
        %p477 = scmp.lt.s32.totalorder %s15, 1
        %s478 = scalar_select %p477, %s15, 1
        %s479 = smul.addr %s478, 2
        %s480 = smul.addr %s479, 8
        %s481 = scalar_lea.vmem %s3, %s480
      $region44: #{shuffle_mixer_forward.4} parent=39 // pred_fallthru
        _
    $region40: #{shuffle_mixer_forward.4} parent=5 // pred_fallthru
      _
  $region6: #{shuffle_mixer_forward.4} parent=0 // loop_footer
    %s13 = sadd.s32 1, %s9
  $region7: #{shuffle_mixer_forward.4} parent=0 // loop_footer_branch
    %8 = sbr.rel target = $region3
  $region8: #{shuffle_mixer_forward.4} parent=0 // loop_exit
    _

// kernel: shuffle_mixer_forward.5
$region0: #{shuffle_mixer_forward.5}
  #allocation0 [shape = 'u32[]', space=smem, size = 0x4, offset = 0x4, fixed_abs, tag = 'smem constant byte address 0x4 - core index']
  #allocation1 [shape = 'u32[144,128]{1,0:T(1,128)}', space=vmem, size = 0x12000, scoped, tag = 'internal scratch']
  #allocation2 [shape = 'f32[32,128]{1,0:T(8,128)}', space=vmem, size = 0x4000, scoped, tag = 'scratch operand']
  %s0 = inlined_call_operand.vmem [shape: f32[2,16,128], index: 0, kind: input, shape index: {}]
  %s1 = inlined_call_operand.vmem [shape: f32[1,128], index: 1, kind: input, shape index: {}]
  %s2 = inlined_call_operand.vmem [shape: f32[128,128], index: 2, kind: input, shape index: {}]
  %s3 = inlined_call_operand.vmem [shape: f32[1,128], index: 3, kind: input, shape index: {}]
  %s4 = inlined_call_operand.vmem [shape: f32[128,128], index: 4, kind: input, shape index: {}]
  %s5 = inlined_call_operand.vmem [shape: f32[1,128], index: 5, kind: input, shape index: {}]
  %s6 = inlined_call_operand.vmem [shape: f32[3,128,128], index: 6, kind: input, shape index: {}]
  %s7 = inlined_call_operand.vmem [shape: f32[1,128], index: 7, kind: input, shape index: {}]
  %s8 = inlined_call_operand.vmem [shape: f32[128,128], index: 8, kind: input, shape index: {}]
  %s9 = inlined_call_operand.vmem [shape: f32[1,128], index: 9, kind: input, shape index: {}]
  %s10 = inlined_call_operand.vmem [shape: f32[128,128], index: 10, kind: input, shape index: {}]
  %s11 = inlined_call_operand.vmem [shape: f32[1,128], index: 11, kind: input, shape index: {}]
  %s12 = inlined_call_operand.vmem [shape: f32[3,128,128], index: 12, kind: input, shape index: {}]
  %s13 = inlined_call_operand.vmem [shape: f32[1,128], index: 13, kind: input, shape index: {}]
  %s14 = inlined_call_operand.vmem [shape: f32[3,128,384], index: 14, kind: input, shape index: {}]
  %s15 = inlined_call_operand.vmem [shape: f32[1,384], index: 15, kind: input, shape index: {}]
  %s16 = inlined_call_operand.vmem [shape: f32[384,128], index: 16, kind: input, shape index: {}]
  %s17 = inlined_call_operand.vmem [shape: f32[1,128], index: 17, kind: input, shape index: {}]
  %s18 = inlined_call_operand.vmem [shape: f32[2,16,128], index: 18, kind: output, shape index: {}]
  %s19 = sld [smem:[#allocation0]]
  $region105: #{shuffle_mixer_forward.5} parent=0
    _
  %s21 = ssub.s32 1, %s19
  %s22 = scalar_select 0, %s21, %s19
  loop: start=0, step=1, limit=4
  $region2: #{shuffle_mixer_forward.5} parent=0 // loop_pre_header
    _
  $region3: #{shuffle_mixer_forward.5} parent=0 // loop_header
    %s24 = sphi 0, %s28
    %p25 = scmp.ge.s32.totalorder %s24, 4
    %s34 = sphi 0, %s36
    %s37 = sphi 0, %s34
    %s38 = sphi 0, %s37
    %s54 = sphi 0, %s38
    %s58 = sphi 0, %s58
    %s60 = sphi 0, %s58
    %s61 = sphi 0, %s60
    %s75 = sphi 0, %s61
    %s79 = sphi 0, %s79
    %s81 = sphi 0, %s79
    %s82 = sphi 0, %s81
    %s96 = sphi 0, %s82
    %s100 = sphi 0, %s100
    %s102 = sphi 0, %s100
    %s103 = sphi 0, %s102
    %s117 = sphi 0, %s103
    %s121 = sphi 0, %s121
    %s123 = sphi 0, %s121
    %s124 = sphi 0, %s123
    %s138 = sphi 0, %s124
    %s142 = sphi 0, %s142
    %s144 = sphi 0, %s142
    %s145 = sphi 0, %s144
    %s159 = sphi 0, %s145
    %s163 = sphi 0, %s163
    %s165 = sphi 0, %s163
    %s166 = sphi 0, %s165
    %s180 = sphi 0, %s166
    %s184 = sphi 0, %s184
    %s186 = sphi 0, %s184
    %s187 = sphi 0, %s186
    %s201 = sphi 0, %s187
    %s205 = sphi 0, %s205
    %s207 = sphi 0, %s205
    %s208 = sphi 0, %s207
    %s222 = sphi 0, %s208
    %s226 = sphi 0, %s226
    %s228 = sphi 0, %s226
    %s229 = sphi 0, %s228
    %s243 = sphi 0, %s229
    %s247 = sphi 0, %s247
    %s249 = sphi 0, %s247
    %s250 = sphi 0, %s249
    %s264 = sphi 0, %s250
    %s268 = sphi 0, %s268
    %s270 = sphi 0, %s268
    %s271 = sphi 0, %s270
    %s285 = sphi 0, %s271
    %s289 = sphi 0, %s289
    %s291 = sphi 0, %s289
    %s292 = sphi 0, %s291
    %s306 = sphi 0, %s292
    %s310 = sphi 0, %s310
    %s312 = sphi 0, %s310
    %s313 = sphi 0, %s312
    %s327 = sphi 0, %s313
    %s331 = sphi 0, %s331
    %s333 = sphi 0, %s331
    %s334 = sphi 0, %s333
    %s348 = sphi 0, %s334
    %s352 = sphi 0, %s352
    %s354 = sphi 0, %s352
    %s355 = sphi 0, %s354
    %s369 = sphi 0, %s355
    %s373 = sphi 0, %s373
    %s375 = sphi 0, %s373
    %s376 = sphi 0, %s375
    %s390 = sphi 0, %s376
    %s394 = sphi 0, %s394
    %s396 = sphi 0, %s394
    %s397 = sphi 0, %s396
    %s411 = sphi 0, %s397
    %s417 = sphi 0, %s419
    %s420 = sphi 0, %s417
    %s421 = sphi 0, %s420
    %s437 = sphi 0, %s421
  $region4: #{shuffle_mixer_forward.5} parent=0 // loop_header_branch
    %27 = sbr.rel (%p25) target = $region8
  $region5: #{shuffle_mixer_forward.5} parent=0 // loop_body
    %s29 = ssub.s32 %s24, 1
    %s30 = ssub.s32 %s24, 2
    %s31 = sadd.s32 %s24, 1
    %s32 = ssub.s32 %s24, %s31
    %p33 = scmp.eq.s32.totalorder %s32, 0
    %s35 = sadd.s32 %s34, 1
    %s36 = scalar_select %p33, %s34, %s35
    %p39 = pneg %p33
    %p40 = scmp.eq.s32.totalorder %s24, 1
    %p41 = por %p39, %p40
    %p42 = scmp.ne.s32.totalorder %s34, %s37
    %p43 = scmp.eq.s32.totalorder %s24, 0
    %p44 = por %p42, %p43
    %p45 = scmp.ne.s32.totalorder %s34, %s37
    %p46 = scmp.eq.s32.totalorder %s29, 1
    %p47 = por %p45, %p46
    %p48 = scmp.ne.s32.totalorder %s37, %s38
    %p49 = scmp.eq.s32.totalorder %s29, 0
    %p50 = por %p48, %p49
    %p51 = scmp.ne.s32.totalorder %s37, %s38
    %p52 = scmp.eq.s32.totalorder %s30, 1
    %p53 = por %p51, %p52
    %p55 = scmp.ne.s32.totalorder %s38, %s54
    %p56 = scmp.eq.s32.totalorder %s30, 0
    %p57 = por %p55, %p56
    %s59 = sadd.s32 %s58, 1
    %p62 = scmp.eq.s32.totalorder %s24, 1
    %p63 = scmp.ne.s32.totalorder %s58, %s60
    %p64 = scmp.eq.s32.totalorder %s24, 0
    %p65 = por %p63, %p64
    %p66 = scmp.ne.s32.totalorder %s58, %s60
    %p67 = scmp.eq.s32.totalorder %s29, 1
    %p68 = por %p66, %p67
    %p69 = scmp.ne.s32.totalorder %s60, %s61
    %p70 = scmp.eq.s32.totalorder %s29, 0
    %p71 = por %p69, %p70
    %p72 = scmp.ne.s32.totalorder %s60, %s61
    %p73 = scmp.eq.s32.totalorder %s30, 1
    %p74 = por %p72, %p73
    %p76 = scmp.ne.s32.totalorder %s61, %s75
    %p77 = scmp.eq.s32.totalorder %s30, 0
    %p78 = por %p76, %p77
    %s80 = sadd.s32 %s79, 1
    %p83 = scmp.eq.s32.totalorder %s24, 1
    %p84 = scmp.ne.s32.totalorder %s79, %s81
    %p85 = scmp.eq.s32.totalorder %s24, 0
    %p86 = por %p84, %p85
    %p87 = scmp.ne.s32.totalorder %s79, %s81
    %p88 = scmp.eq.s32.totalorder %s29, 1
    %p89 = por %p87, %p88
    %p90 = scmp.ne.s32.totalorder %s81, %s82
    %p91 = scmp.eq.s32.totalorder %s29, 0
    %p92 = por %p90, %p91
    %p93 = scmp.ne.s32.totalorder %s81, %s82
    %p94 = scmp.eq.s32.totalorder %s30, 1
    %p95 = por %p93, %p94
    %p97 = scmp.ne.s32.totalorder %s82, %s96
    %p98 = scmp.eq.s32.totalorder %s30, 0
    %p99 = por %p97, %p98
    %s101 = sadd.s32 %s100, 1
    %p104 = scmp.eq.s32.totalorder %s24, 1
    %p105 = scmp.ne.s32.totalorder %s100, %s102
    %p106 = scmp.eq.s32.totalorder %s24, 0
    %p107 = por %p105, %p106
    %p108 = scmp.ne.s32.totalorder %s100, %s102
    %p109 = scmp.eq.s32.totalorder %s29, 1
    %p110 = por %p108, %p109
    %p111 = scmp.ne.s32.totalorder %s102, %s103
    %p112 = scmp.eq.s32.totalorder %s29, 0
    %p113 = por %p111, %p112
    %p114 = scmp.ne.s32.totalorder %s102, %s103
    %p115 = scmp.eq.s32.totalorder %s30, 1
    %p116 = por %p114, %p115
    %p118 = scmp.ne.s32.totalorder %s103, %s117
    %p119 = scmp.eq.s32.totalorder %s30, 0
    %p120 = por %p118, %p119
    %s122 = sadd.s32 %s121, 1
    %p125 = scmp.eq.s32.totalorder %s24, 1
    %p126 = scmp.ne.s32.totalorder %s121, %s123
    %p127 = scmp.eq.s32.totalorder %s24, 0
    %p128 = por %p126, %p127
    %p129 = scmp.ne.s32.totalorder %s121, %s123
    %p130 = scmp.eq.s32.totalorder %s29, 1
    %p131 = por %p129, %p130
    %p132 = scmp.ne.s32.totalorder %s123, %s124
    %p133 = scmp.eq.s32.totalorder %s29, 0
    %p134 = por %p132, %p133
    %p135 = scmp.ne.s32.totalorder %s123, %s124
    %p136 = scmp.eq.s32.totalorder %s30, 1
    %p137 = por %p135, %p136
    %p139 = scmp.ne.s32.totalorder %s124, %s138
    %p140 = scmp.eq.s32.totalorder %s30, 0
    %p141 = por %p139, %p140
    %s143 = sadd.s32 %s142, 1
    %p146 = scmp.eq.s32.totalorder %s24, 1
    %p147 = scmp.ne.s32.totalorder %s142, %s144
    %p148 = scmp.eq.s32.totalorder %s24, 0
    %p149 = por %p147, %p148
    %p150 = scmp.ne.s32.totalorder %s142, %s144
    %p151 = scmp.eq.s32.totalorder %s29, 1
    %p152 = por %p150, %p151
    %p153 = scmp.ne.s32.totalorder %s144, %s145
    %p154 = scmp.eq.s32.totalorder %s29, 0
    %p155 = por %p153, %p154
    %p156 = scmp.ne.s32.totalorder %s144, %s145
    %p157 = scmp.eq.s32.totalorder %s30, 1
    %p158 = por %p156, %p157
    %p160 = scmp.ne.s32.totalorder %s145, %s159
    %p161 = scmp.eq.s32.totalorder %s30, 0
    %p162 = por %p160, %p161
    %s164 = sadd.s32 %s163, 1
    %p167 = scmp.eq.s32.totalorder %s24, 1
    %p168 = scmp.ne.s32.totalorder %s163, %s165
    %p169 = scmp.eq.s32.totalorder %s24, 0
    %p170 = por %p168, %p169
    %p171 = scmp.ne.s32.totalorder %s163, %s165
    %p172 = scmp.eq.s32.totalorder %s29, 1
    %p173 = por %p171, %p172
    %p174 = scmp.ne.s32.totalorder %s165, %s166
    %p175 = scmp.eq.s32.totalorder %s29, 0
    %p176 = por %p174, %p175
    %p177 = scmp.ne.s32.totalorder %s165, %s166
    %p178 = scmp.eq.s32.totalorder %s30, 1
    %p179 = por %p177, %p178
    %p181 = scmp.ne.s32.totalorder %s166, %s180
    %p182 = scmp.eq.s32.totalorder %s30, 0
    %p183 = por %p181, %p182
    %s185 = sadd.s32 %s184, 1
    %p188 = scmp.eq.s32.totalorder %s24, 1
    %p189 = scmp.ne.s32.totalorder %s184, %s186
    %p190 = scmp.eq.s32.totalorder %s24, 0
    %p191 = por %p189, %p190
    %p192 = scmp.ne.s32.totalorder %s184, %s186
    %p193 = scmp.eq.s32.totalorder %s29, 1
    %p194 = por %p192, %p193
    %p195 = scmp.ne.s32.totalorder %s186, %s187
    %p196 = scmp.eq.s32.totalorder %s29, 0
    %p197 = por %p195, %p196
    %p198 = scmp.ne.s32.totalorder %s186, %s187
    %p199 = scmp.eq.s32.totalorder %s30, 1
    %p200 = por %p198, %p199
    %p202 = scmp.ne.s32.totalorder %s187, %s201
    %p203 = scmp.eq.s32.totalorder %s30, 0
    %p204 = por %p202, %p203
    %s206 = sadd.s32 %s205, 1
    %p209 = scmp.eq.s32.totalorder %s24, 1
    %p210 = scmp.ne.s32.totalorder %s205, %s207
    %p211 = scmp.eq.s32.totalorder %s24, 0
    %p212 = por %p210, %p211
    %p213 = scmp.ne.s32.totalorder %s205, %s207
    %p214 = scmp.eq.s32.totalorder %s29, 1
    %p215 = por %p213, %p214
    %p216 = scmp.ne.s32.totalorder %s207, %s208
    %p217 = scmp.eq.s32.totalorder %s29, 0
    %p218 = por %p216, %p217
    %p219 = scmp.ne.s32.totalorder %s207, %s208
    %p220 = scmp.eq.s32.totalorder %s30, 1
    %p221 = por %p219, %p220
    %p223 = scmp.ne.s32.totalorder %s208, %s222
    %p224 = scmp.eq.s32.totalorder %s30, 0
    %p225 = por %p223, %p224
    %s227 = sadd.s32 %s226, 1
    %p230 = scmp.eq.s32.totalorder %s24, 1
    %p231 = scmp.ne.s32.totalorder %s226, %s228
    %p232 = scmp.eq.s32.totalorder %s24, 0
    %p233 = por %p231, %p232
    %p234 = scmp.ne.s32.totalorder %s226, %s228
    %p235 = scmp.eq.s32.totalorder %s29, 1
    %p236 = por %p234, %p235
    %p237 = scmp.ne.s32.totalorder %s228, %s229
    %p238 = scmp.eq.s32.totalorder %s29, 0
    %p239 = por %p237, %p238
    %p240 = scmp.ne.s32.totalorder %s228, %s229
    %p241 = scmp.eq.s32.totalorder %s30, 1
    %p242 = por %p240, %p241
    %p244 = scmp.ne.s32.totalorder %s229, %s243
    %p245 = scmp.eq.s32.totalorder %s30, 0
    %p246 = por %p244, %p245
    %s248 = sadd.s32 %s247, 1
    %p251 = scmp.eq.s32.totalorder %s24, 1
    %p252 = scmp.ne.s32.totalorder %s247, %s249
    %p253 = scmp.eq.s32.totalorder %s24, 0
    %p254 = por %p252, %p253
    %p255 = scmp.ne.s32.totalorder %s247, %s249
    %p256 = scmp.eq.s32.totalorder %s29, 1
    %p257 = por %p255, %p256
    %p258 = scmp.ne.s32.totalorder %s249, %s250
    %p259 = scmp.eq.s32.totalorder %s29, 0
    %p260 = por %p258, %p259
    %p261 = scmp.ne.s32.totalorder %s249, %s250
    %p262 = scmp.eq.s32.totalorder %s30, 1
    %p263 = por %p261, %p262
    %p265 = scmp.ne.s32.totalorder %s250, %s264
    %p266 = scmp.eq.s32.totalorder %s30, 0
    %p267 = por %p265, %p266
    %s269 = sadd.s32 %s268, 1
    %p272 = scmp.eq.s32.totalorder %s24, 1
    %p273 = scmp.ne.s32.totalorder %s268, %s270
    %p274 = scmp.eq.s32.totalorder %s24, 0
    %p275 = por %p273, %p274
    %p276 = scmp.ne.s32.totalorder %s268, %s270
    %p277 = scmp.eq.s32.totalorder %s29, 1
    %p278 = por %p276, %p277
    %p279 = scmp.ne.s32.totalorder %s270, %s271
    %p280 = scmp.eq.s32.totalorder %s29, 0
    %p281 = por %p279, %p280
    %p282 = scmp.ne.s32.totalorder %s270, %s271
    %p283 = scmp.eq.s32.totalorder %s30, 1
    %p284 = por %p282, %p283
    %p286 = scmp.ne.s32.totalorder %s271, %s285
    %p287 = scmp.eq.s32.totalorder %s30, 0
    %p288 = por %p286, %p287
    %s290 = sadd.s32 %s289, 1
    %p293 = scmp.eq.s32.totalorder %s24, 1
    %p294 = scmp.ne.s32.totalorder %s289, %s291
    %p295 = scmp.eq.s32.totalorder %s24, 0
    %p296 = por %p294, %p295
    %p297 = scmp.ne.s32.totalorder %s289, %s291
    %p298 = scmp.eq.s32.totalorder %s29, 1
    %p299 = por %p297, %p298
    %p300 = scmp.ne.s32.totalorder %s291, %s292
    %p301 = scmp.eq.s32.totalorder %s29, 0
    %p302 = por %p300, %p301
    %p303 = scmp.ne.s32.totalorder %s291, %s292
    %p304 = scmp.eq.s32.totalorder %s30, 1
    %p305 = por %p303, %p304
    %p307 = scmp.ne.s32.totalorder %s292, %s306
    %p308 = scmp.eq.s32.totalorder %s30, 0
    %p309 = por %p307, %p308
    %s311 = sadd.s32 %s310, 1
    %p314 = scmp.eq.s32.totalorder %s24, 1
    %p315 = scmp.ne.s32.totalorder %s310, %s312
    %p316 = scmp.eq.s32.totalorder %s24, 0
    %p317 = por %p315, %p316
    %p318 = scmp.ne.s32.totalorder %s310, %s312
    %p319 = scmp.eq.s32.totalorder %s29, 1
    %p320 = por %p318, %p319
    %p321 = scmp.ne.s32.totalorder %s312, %s313
    %p322 = scmp.eq.s32.totalorder %s29, 0
    %p323 = por %p321, %p322
    %p324 = scmp.ne.s32.totalorder %s312, %s313
    %p325 = scmp.eq.s32.totalorder %s30, 1
    %p326 = por %p324, %p325
    %p328 = scmp.ne.s32.totalorder %s313, %s327
    %p329 = scmp.eq.s32.totalorder %s30, 0
    %p330 = por %p328, %p329
    %s332 = sadd.s32 %s331, 1
    %p335 = scmp.eq.s32.totalorder %s24, 1
    %p336 = scmp.ne.s32.totalorder %s331, %s333
    %p337 = scmp.eq.s32.totalorder %s24, 0
    %p338 = por %p336, %p337
    %p339 = scmp.ne.s32.totalorder %s331, %s333
    %p340 = scmp.eq.s32.totalorder %s29, 1
    %p341 = por %p339, %p340
    %p342 = scmp.ne.s32.totalorder %s333, %s334
    %p343 = scmp.eq.s32.totalorder %s29, 0
    %p344 = por %p342, %p343
    %p345 = scmp.ne.s32.totalorder %s333, %s334
    %p346 = scmp.eq.s32.totalorder %s30, 1
    %p347 = por %p345, %p346
    %p349 = scmp.ne.s32.totalorder %s334, %s348
    %p350 = scmp.eq.s32.totalorder %s30, 0
    %p351 = por %p349, %p350
    %s353 = sadd.s32 %s352, 1
    %p356 = scmp.eq.s32.totalorder %s24, 1
    %p357 = scmp.ne.s32.totalorder %s352, %s354
    %p358 = scmp.eq.s32.totalorder %s24, 0
    %p359 = por %p357, %p358
    %p360 = scmp.ne.s32.totalorder %s352, %s354
    %p361 = scmp.eq.s32.totalorder %s29, 1
    %p362 = por %p360, %p361
    %p363 = scmp.ne.s32.totalorder %s354, %s355
    %p364 = scmp.eq.s32.totalorder %s29, 0
    %p365 = por %p363, %p364
    %p366 = scmp.ne.s32.totalorder %s354, %s355
    %p367 = scmp.eq.s32.totalorder %s30, 1
    %p368 = por %p366, %p367
    %p370 = scmp.ne.s32.totalorder %s355, %s369
    %p371 = scmp.eq.s32.totalorder %s30, 0
    %p372 = por %p370, %p371
    %s374 = sadd.s32 %s373, 1
    %p377 = scmp.eq.s32.totalorder %s24, 1
    %p378 = scmp.ne.s32.totalorder %s373, %s375
    %p379 = scmp.eq.s32.totalorder %s24, 0
    %p380 = por %p378, %p379
    %p381 = scmp.ne.s32.totalorder %s373, %s375
    %p382 = scmp.eq.s32.totalorder %s29, 1
    %p383 = por %p381, %p382
    %p384 = scmp.ne.s32.totalorder %s375, %s376
    %p385 = scmp.eq.s32.totalorder %s29, 0
    %p386 = por %p384, %p385
    %p387 = scmp.ne.s32.totalorder %s375, %s376
    %p388 = scmp.eq.s32.totalorder %s30, 1
    %p389 = por %p387, %p388
    %p391 = scmp.ne.s32.totalorder %s376, %s390
    %p392 = scmp.eq.s32.totalorder %s30, 0
    %p393 = por %p391, %p392
    %s395 = sadd.s32 %s394, 1
    %p398 = scmp.eq.s32.totalorder %s24, 1
    %p399 = scmp.ne.s32.totalorder %s394, %s396
    %p400 = scmp.eq.s32.totalorder %s24, 0
    %p401 = por %p399, %p400
    %p402 = scmp.ne.s32.totalorder %s394, %s396
    %p403 = scmp.eq.s32.totalorder %s29, 1
    %p404 = por %p402, %p403
    %p405 = scmp.ne.s32.totalorder %s396, %s397
    %p406 = scmp.eq.s32.totalorder %s29, 0
    %p407 = por %p405, %p406
    %p408 = scmp.ne.s32.totalorder %s396, %s397
    %p409 = scmp.eq.s32.totalorder %s30, 1
    %p410 = por %p408, %p409
    %p412 = scmp.ne.s32.totalorder %s397, %s411
    %p413 = scmp.eq.s32.totalorder %s30, 0
    %p414 = por %p412, %p413
    %s415 = ssub.s32 %s24, %s31
    %p416 = scmp.eq.s32.totalorder %s415, 0
    %s418 = sadd.s32 %s417, 1
    %s419 = scalar_select %p416, %s417, %s418
    %p422 = pneg %p416
    %p423 = scmp.eq.s32.totalorder %s24, 1
    %p424 = por %p422, %p423
    %p425 = scmp.ne.s32.totalorder %s417, %s420
    %p426 = scmp.eq.s32.totalorder %s24, 0
    %p427 = por %p425, %p426
    %p428 = scmp.ne.s32.totalorder %s417, %s420
    %p429 = scmp.eq.s32.totalorder %s29, 1
    %p430 = por %p428, %p429
    %p431 = scmp.ne.s32.totalorder %s420, %s421
    %p432 = scmp.eq.s32.totalorder %s29, 0
    %p433 = por %p431, %p432
    %p434 = scmp.ne.s32.totalorder %s420, %s421
    %p435 = scmp.eq.s32.totalorder %s30, 1
    %p436 = por %p434, %p435
    %p438 = scmp.ne.s32.totalorder %s421, %s437
    %p439 = scmp.eq.s32.totalorder %s30, 0
    %p440 = por %p438, %p439
    %p441 = scmp.le.s32.totalorder 1, %s24
    %p442 = scmp.lt.s32.totalorder %s24, 3
    %p443 = pnand %p441, %p442
    %p444 = pneg %p443
    // Predicated region
    $region9: #{shuffle_mixer_forward.5} parent=5 // pred_check
      _
    $region10: #{shuffle_mixer_forward.5} parent=5 // pred_check_branch
      %446 = sbr.rel (%p443) target = $region12
    $region11: #{shuffle_mixer_forward.5} parent=5 // pred_region
      %s447 = ssub.s32 %s24, 1
      // Predicated region
      $region13: #{shuffle_mixer_forward.5} parent=11 // pred_check
        %p448 = pneg %p71
      $region14: #{shuffle_mixer_forward.5} parent=11 // pred_check_branch
        %450 = sbr.rel (%p448) target = $region16
      $region15: #{shuffle_mixer_forward.5} parent=11 // pred_region
        _
      $region16: #{shuffle_mixer_forward.5} parent=11 // pred_fallthru
        _
      // Predicated region
      $region17: #{shuffle_mixer_forward.5} parent=11 // pred_check
        %p451 = pneg %p92
      $region18: #{shuffle_mixer_forward.5} parent=11 // pred_check_branch
        %453 = sbr.rel (%p451) target = $region20
      $region19: #{shuffle_mixer_forward.5} parent=11 // pred_region
        _
      $region20: #{shuffle_mixer_forward.5} parent=11 // pred_fallthru
        _
      // Predicated region
      $region21: #{shuffle_mixer_forward.5} parent=11 // pred_check
        %p454 = pneg %p113
      $region22: #{shuffle_mixer_forward.5} parent=11 // pred_check_branch
        %456 = sbr.rel (%p454) target = $region24
      $region23: #{shuffle_mixer_forward.5} parent=11 // pred_region
        _
      $region24: #{shuffle_mixer_forward.5} parent=11 // pred_fallthru
        _
      // Predicated region
      $region25: #{shuffle_mixer_forward.5} parent=11 // pred_check
        %p457 = pneg %p134
      $region26: #{shuffle_mixer_forward.5} parent=11 // pred_check_branch
        %459 = sbr.rel (%p457) target = $region28
      $region27: #{shuffle_mixer_forward.5} parent=11 // pred_region
        _
      $region28: #{shuffle_mixer_forward.5} parent=11 // pred_fallthru
        _
      // Predicated region
      $region29: #{shuffle_mixer_forward.5} parent=11 // pred_check
        %p460 = pneg %p155
      $region30: #{shuffle_mixer_forward.5} parent=11 // pred_check_branch
        %462 = sbr.rel (%p460) target = $region32
      $region31: #{shuffle_mixer_forward.5} parent=11 // pred_region
        _
      $region32: #{shuffle_mixer_forward.5} parent=11 // pred_fallthru
        _
      // Predicated region
      $region33: #{shuffle_mixer_forward.5} parent=11 // pred_check
        %p463 = pneg %p176
      $region34: #{shuffle_mixer_forward.5} parent=11 // pred_check_branch
        %465 = sbr.rel (%p463) target = $region36
      $region35: #{shuffle_mixer_forward.5} parent=11 // pred_region
        _
      $region36: #{shuffle_mixer_forward.5} parent=11 // pred_fallthru
        _
      // Predicated region
      $region37: #{shuffle_mixer_forward.5} parent=11 // pred_check
        %p466 = pneg %p197
      $region38: #{shuffle_mixer_forward.5} parent=11 // pred_check_branch
        %468 = sbr.rel (%p466) target = $region40
      $region39: #{shuffle_mixer_forward.5} parent=11 // pred_region
        _
      $region40: #{shuffle_mixer_forward.5} parent=11 // pred_fallthru
        _
      // Predicated region
      $region41: #{shuffle_mixer_forward.5} parent=11 // pred_check
        %p469 = pneg %p218
      $region42: #{shuffle_mixer_forward.5} parent=11 // pred_check_branch
        %471 = sbr.rel (%p469) target = $region44
      $region43: #{shuffle_mixer_forward.5} parent=11 // pred_region
        _
      $region44: #{shuffle_mixer_forward.5} parent=11 // pred_fallthru
        _
      // Predicated region
      $region45: #{shuffle_mixer_forward.5} parent=11 // pred_check
        %p472 = pneg %p239
      $region46: #{shuffle_mixer_forward.5} parent=11 // pred_check_branch
        %474 = sbr.rel (%p472) target = $region48
      $region47: #{shuffle_mixer_forward.5} parent=11 // pred_region
        _
      $region48: #{shuffle_mixer_forward.5} parent=11 // pred_fallthru
        _
      // Predicated region
      $region49: #{shuffle_mixer_forward.5} parent=11 // pred_check
        %p475 = pneg %p260
      $region50: #{shuffle_mixer_forward.5} parent=11 // pred_check_branch
        %477 = sbr.rel (%p475) target = $region52
      $region51: #{shuffle_mixer_forward.5} parent=11 // pred_region
        _
      $region52: #{shuffle_mixer_forward.5} parent=11 // pred_fallthru
        _
      // Predicated region
      $region53: #{shuffle_mixer_forward.5} parent=11 // pred_check
        %p478 = pneg %p281
      $region54: #{shuffle_mixer_forward.5} parent=11 // pred_check_branch
        %480 = sbr.rel (%p478) target = $region56
      $region55: #{shuffle_mixer_forward.5} parent=11 // pred_region
        _
      $region56: #{shuffle_mixer_forward.5} parent=11 // pred_fallthru
        _
      // Predicated region
      $region57: #{shuffle_mixer_forward.5} parent=11 // pred_check
        %p481 = pneg %p302
      $region58: #{shuffle_mixer_forward.5} parent=11 // pred_check_branch
        %483 = sbr.rel (%p481) target = $region60
      $region59: #{shuffle_mixer_forward.5} parent=11 // pred_region
        _
      $region60: #{shuffle_mixer_forward.5} parent=11 // pred_fallthru
        _
      // Predicated region
      $region61: #{shuffle_mixer_forward.5} parent=11 // pred_check
        %p484 = pneg %p323
      $region62: #{shuffle_mixer_forward.5} parent=11 // pred_check_branch
        %486 = sbr.rel (%p484) target = $region64
      $region63: #{shuffle_mixer_forward.5} parent=11 // pred_region
        _
      $region64: #{shuffle_mixer_forward.5} parent=11 // pred_fallthru
        _
      // Predicated region
      $region65: #{shuffle_mixer_forward.5} parent=11 // pred_check
        %p487 = pneg %p344
      $region66: #{shuffle_mixer_forward.5} parent=11 // pred_check_branch
        %489 = sbr.rel (%p487) target = $region68
      $region67: #{shuffle_mixer_forward.5} parent=11 // pred_region
        _
      $region68: #{shuffle_mixer_forward.5} parent=11 // pred_fallthru
        _
      // Predicated region
      $region69: #{shuffle_mixer_forward.5} parent=11 // pred_check
        %p490 = pneg %p365
      $region70: #{shuffle_mixer_forward.5} parent=11 // pred_check_branch
        %492 = sbr.rel (%p490) target = $region72
      $region71: #{shuffle_mixer_forward.5} parent=11 // pred_region
        _
      $region72: #{shuffle_mixer_forward.5} parent=11 // pred_fallthru
        _
      // Predicated region
      $region73: #{shuffle_mixer_forward.5} parent=11 // pred_check
        %p493 = pneg %p386
      $region74: #{shuffle_mixer_forward.5} parent=11 // pred_check_branch
        %495 = sbr.rel (%p493) target = $region76
      $region75: #{shuffle_mixer_forward.5} parent=11 // pred_region
        _
      $region76: #{shuffle_mixer_forward.5} parent=11 // pred_fallthru
        _
      // Predicated region
      $region77: #{shuffle_mixer_forward.5} parent=11 // pred_check
        %p496 = pneg %p407
      $region78: #{shuffle_mixer_forward.5} parent=11 // pred_check_branch
        %498 = sbr.rel (%p496) target = $region80
      $region79: #{shuffle_mixer_forward.5} parent=11 // pred_region
        _
      $region80: #{shuffle_mixer_forward.5} parent=11 // pred_fallthru
        _
    $region12: #{shuffle_mixer_forward.5} parent=5 // pred_fallthru
      _
    %p499 = scmp.lt.s32.totalorder %s24, 2
    // Predicated region
    $region81: #{shuffle_mixer_forward.5} parent=5 // pred_check
      %p500 = pneg %p499
    $region82: #{shuffle_mixer_forward.5} parent=5 // pred_check_branch
      %502 = sbr.rel (%p500) target = $region84
    $region83: #{shuffle_mixer_forward.5} parent=5 // pred_region
      // Predicated region
      $region85: #{shuffle_mixer_forward.5} parent=83 // pred_check
        %p503 = pneg %p44
      $region86: #{shuffle_mixer_forward.5} parent=83 // pred_check_branch
        %505 = sbr.rel (%p503) target = $region88
      $region87: #{shuffle_mixer_forward.5} parent=83 // pred_region
        %p506 = scmp.lt.s32.totalorder %s24, 1
        %s507 = scalar_select %p506, %s24, 1
        %s508 = smul.addr %s507, 2
        %s509 = smul.addr %s508, 8
        %s510 = scalar_lea.vmem %s0, %s509
      $region88: #{shuffle_mixer_forward.5} parent=83 // pred_fallthru
        _
    $region84: #{shuffle_mixer_forward.5} parent=5 // pred_fallthru
      _
    %p511 = scmp.le.s32.totalorder 1, %s24
    %p512 = scmp.lt.s32.totalorder %s24, 3
    %p513 = pnand %p511, %p512
    %p514 = pneg %p513
    // Predicated region
    $region89: #{shuffle_mixer_forward.5} parent=5 // pred_check
      _
    $region90: #{shuffle_mixer_forward.5} parent=5 // pred_check_branch
      %516 = sbr.rel (%p513) target = $region92
    $region91: #{shuffle_mixer_forward.5} parent=5 // pred_region
      %s517 = ssub.s32 %s24, 1
      %p518 = scmp.lt.s32.totalorder %s29, 1
      %s519 = scalar_select %p518, %s29, 1
      %s520 = smul.addr %s519, 2
      %s521 = smul.addr %s520, 8
      %s522 = scalar_lea.vmem %s0, %s521
      %p523 = pneg %p50
      %p524 = pneg %p47
      %p525 = pneg %p71
      %p526 = pneg %p68
      %p527 = pneg %p92
      %p528 = pneg %p89
      %p529 = pneg %p113
      %p530 = pneg %p110
      %p531 = pneg %p134
      %p532 = pneg %p131
      %p533 = pneg %p155
      %p534 = pneg %p152
      %p535 = pneg %p176
      %p536 = pneg %p173
      %p537 = pneg %p197
      %p538 = pneg %p194
      %p539 = pneg %p218
      %p540 = pneg %p215
      %p541 = pneg %p239
      %p542 = pneg %p236
      %p543 = pneg %p260
      %p544 = pneg %p257
      %p545 = pneg %p281
      %p546 = pneg %p278
      %p547 = pneg %p302
      %p548 = pneg %p299
      %p549 = pneg %p323
      %p550 = pneg %p320
      %p551 = pneg %p344
      %p552 = pneg %p341
      %p553 = pneg %p365
      %p554 = pneg %p362
      %p555 = pneg %p386
      %p556 = pneg %p383
      %p557 = pneg %p407
      %p558 = pneg %p404
      %p559 = pneg %p433
      %p560 = pneg %p430
      %p561 = scmp.lt.s32.totalorder %s29, 1
      %s562 = scalar_select %p561, %s29, 1
      %s563 = smul.addr %s562, 2
      %s564 = smul.addr %s563, 8
      %s565 = scalar_lea.vmem %s18, %s564
      %p566 = scmp.lt.s32.totalorder %s29, 1
      %s567 = scalar_select %p566, %s29, 1
      %s568 = smul.addr %s567, 2
      %s569 = smul.addr %s568, 8
      %s570 = scalar_lea.vmem %s0, %s569
      %p571 = scmp.lt.s32.totalorder %s29, 1
      %s572 = scalar_select %p571, %s29, 1
      %s573 = smul.addr %s572, 2
      %s574 = smul.addr %s573, 8
      %s575 = scalar_lea.vmem %s18, %s574
      %v576 = vld [vmem:[%s1] sm:$0x1]
      %577 = vst [vmem:[#allocation2 + $0x7] sm:$0x1] 0.0
      %578 = vst [vmem:[#allocation2 + $0x18] sm:$0x1] 0.0
      %v579 = vld [vmem:[%s570] sm:$0xff]
      %v580 = vld [vmem:[%s570 + $0x8] sm:$0xff]
      %v581 = vadd.f32 %v579, %v580
      %582 = vadd.xlane.f32.xlu0 %v581
      %v583 = vpop.xlane.xlu0 %582
      %v584 = vrot.slane %v583, 4
      %v585 = vadd.f32 %v583, %v584
      %v586 = vrot.slane %v585, 2
      %v587 = vadd.f32 %v585, %v586
      %v588 = vrot.slane %v587, 1
      %v589 = vadd.f32 %v587, %v588
      %s590 = vtos %v589
      %v591 = vrcp.pop 2048.0
      %s592 = vtos %v591
      %s593 = smul.f32 %s590, %s592
      %v594 = vstv %s593
      %v595 = vsub.f32 %v579, %v594
      %v596 = vsub.f32 %v580, %v594
      %v597 = vmul.f32 %v595, %v595
      %v598 = vmul.f32 %v596, %v596
      %v599 = vadd.f32 %v597, %v598
      %600 = vadd.xlane.f32.xlu0 %v599
      %v601 = vpop.xlane.xlu0 %600
      %v602 = vrot.slane %v601, 4
      %v603 = vadd.f32 %v601, %v602
      %v604 = vrot.slane %v603, 2
      %v605 = vadd.f32 %v603, %v604
      %v606 = vrot.slane %v605, 1
      %v607 = vadd.f32 %v605, %v606
      %s608 = vtos %v607
      %v609 = vrcp.pop 2048.0
      %s610 = vtos %v609
      %s611 = smul.f32 %s608, %s610
      %s612 = sadd.f32 %s611, 1e-05
      %v613 = vstv %s612
      %v614 = vrsqrt.pop %v613
      %s615 = vtos %v614
      %v616 = vstv %s615
      %v617 = vmul.f32 %v595, %v616
      %v618 = vmul.f32 %v596, %v616
      %v619 = vld [vmem:[%s2] sm:$0xff]
      %v620 = vld [vmem:[%s2 + $0x8] sm:$0xff]
      %v621 = vld [vmem:[%s2 + $0x10] sm:$0xff]
      %v622 = vld [vmem:[%s2 + $0x18] sm:$0xff]
      %v623 = vld [vmem:[%s2 + $0x20] sm:$0xff]
      %v624 = vld [vmem:[%s2 + $0x28] sm:$0xff]
      %v625 = vld [vmem:[%s2 + $0x30] sm:$0xff]
      %v626 = vld [vmem:[%s2 + $0x38] sm:$0xff]
      %v627 = vld [vmem:[%s2 + $0x40] sm:$0xff]
      %v628 = vld [vmem:[%s2 + $0x48] sm:$0xff]
      %v629 = vld [vmem:[%s2 + $0x50] sm:$0xff]
      %v630 = vld [vmem:[%s2 + $0x58] sm:$0xff]
      %v631 = vld [vmem:[%s2 + $0x60] sm:$0xff]
      %v632 = vld [vmem:[%s2 + $0x68] sm:$0xff]
      %v633 = vld [vmem:[%s2 + $0x70] sm:$0xff]
      %v634 = vld [vmem:[%s2 + $0x78] sm:$0xff]
      %v635 = vld [vmem:[%s3] sm:$0x1]
      %v637 = vlaneseq
      %v638 = vshrl.u32 %v637, 7
      %v639 = vsub.s32 0, %v638
      %v640 = vrot.slane %v635, %v639
      %642 = vmatprep.subr.mxu0 0.0
      %643 = vmatpush1.msra.mxu0 %v634
      %644 = vmatprep.subr.mxu0 0.0
      %645 = vmatpush1.msra.mxu0 %v633
      %646 = vmatprep.subr.mxu0 0.0
      %647 = vmatpush1.msra.mxu0 %v632
      %648 = vmatprep.subr.mxu0 0.0
      %649 = vmatpush1.msra.mxu0 %v631
      %650 = vmatprep.subr.mxu0 0.0
      %651 = vmatpush1.msra.mxu0 %v630
      %652 = vmatprep.subr.mxu0 0.0
      %653 = vmatpush1.msra.mxu0 %v629
      %654 = vmatprep.subr.mxu0 0.0
      %655 = vmatpush1.msra.mxu0 %v628
      %656 = vmatprep.subr.mxu0 0.0
      %657 = vmatpush1.msra.mxu0 %v627
      %658 = vmatprep.subr.mxu0 0.0
      %659 = vmatpush1.msra.mxu0 %v626
      %660 = vmatprep.subr.mxu0 0.0
      %661 = vmatpush1.msra.mxu0 %v625
      %662 = vmatprep.subr.mxu0 0.0
      %663 = vmatpush1.msra.mxu0 %v624
      %664 = vmatprep.subr.mxu0 0.0
      %665 = vmatpush1.msra.mxu0 %v623
      %666 = vmatprep.subr.mxu0 0.0
      %667 = vmatpush1.msra.mxu0 %v622
      %668 = vmatprep.subr.mxu0 0.0
      %669 = vmatpush1.msra.mxu0 %v621
      %670 = vmatprep.subr.mxu0 0.0
      %671 = vmatpush1.msra.mxu0 %v620
      %672 = vmatprep.subr.mxu0 0.0
      %673 = vmatpush1.msra.mxu0 %v619
      %674 = vmatprep.subr.mxu0 0.0
      %675 = vmatpush2.msra.mxu0 0.0
      %676 = vmatprep.subr.mxu0 0.0
      %677 = vmatpush2.msra.mxu0 0.0
      %678 = vmatprep.subr.mxu0 0.0
      %679 = vmatpush2.msra.mxu0 0.0
      %680 = vmatprep.subr.mxu0 0.0
      %681 = vmatpush2.msra.mxu0 0.0
      %682 = vmatprep.subr.mxu0 0.0
      %683 = vmatpush2.msra.mxu0 0.0
      %684 = vmatprep.subr.mxu0 0.0
      %685 = vmatpush2.msra.mxu0 0.0
      %686 = vmatprep.subr.mxu0 0.0
      %687 = vmatpush2.msra.mxu0 0.0
      %688 = vmatprep.subr.mxu0 0.0
      %689 = vmatpush2.msra.mxu0 0.0
      %690 = vmatprep.subr.mxu0 0.0
      %691 = vmatpush2.msra.mxu0 0.0
      %692 = vmatprep.subr.mxu0 0.0
      %693 = vmatpush2.msra.mxu0 0.0
      %694 = vmatprep.subr.mxu0 0.0
      %695 = vmatpush2.msra.mxu0 0.0
      %696 = vmatprep.subr.mxu0 0.0
      %697 = vmatpush2.msra.mxu0 0.0
      %698 = vmatprep.subr.mxu0 0.0
      %699 = vmatpush2.msra.mxu0 0.0
      %700 = vmatprep.subr.mxu0 0.0
      %701 = vmatpush2.msra.mxu0 0.0
      %702 = vmatprep.subr.mxu0 0.0
      %703 = vmatpush2.msra.mxu0 0.0
      %704 = vmatprep.subr.mxu0 0.0
      %705 = vmatpush2.msra.mxu0 0.0
      %706 = vmatprep.mubr.f32.mxu0 0.0
      %707 = vmatmul.mubr.f32.gmra.mxu0 %v617
      %v708 = vpop.f32.mrf.mxu0
      %v709 = vadd.f32 %v640, %v708
      %v710 = vpop.f32.mrf.mxu0
      %711 = vmatprep.mubr.f32.mxu0 0.0
      %712 = vmatmul.mubr.f32.gmra.mxu0 %v618
      %v713 = vpop.f32.mrf.mxu0
      %v714 = vadd.f32 %v640, %v713
      %v715 = vpop.f32.mrf.mxu0
      %716 = vdwg.mxu0
      %v717 = vxor.u32 %v709, 2147483648
      %v718 = vxor.u32 %v714, 2147483648
      %v719 = vmul.f32 %v717, 1.442695
      %v720 = vpow.pop %v719
      %v721 = vmul.f32 %v718, 1.442695
      %v722 = vpow.pop %v721
      %v723 = vadd.f32 %v720, 1.0
      %v724 = vadd.f32 %v722, 1.0
      %v725 = vrcp.pop %v723
      %v726 = vmul.f32 1.0, %v725
      %v727 = vrcp.pop %v724
      %v728 = vmul.f32 1.0, %v727
      %v729 = vmul.f32 %v709, %v726
      %v730 = vmul.f32 %v714, %v728
      %v731 = vld [vmem:[%s4] sm:$0xff]
      %v732 = vld [vmem:[%s4 + $0x8] sm:$0xff]
      %v733 = vld [vmem:[%s4 + $0x10] sm:$0xff]
      %v734 = vld [vmem:[%s4 + $0x18] sm:$0xff]
      %v735 = vld [vmem:[%s4 + $0x20] sm:$0xff]
      %v736 = vld [vmem:[%s4 + $0x28] sm:$0xff]
      %v737 = vld [vmem:[%s4 + $0x30] sm:$0xff]
      %v738 = vld [vmem:[%s4 + $0x38] sm:$0xff]
      %v739 = vld [vmem:[%s4 + $0x40] sm:$0xff]
      %v740 = vld [vmem:[%s4 + $0x48] sm:$0xff]
      %v741 = vld [vmem:[%s4 + $0x50] sm:$0xff]
      %v742 = vld [vmem:[%s4 + $0x58] sm:$0xff]
      %v743 = vld [vmem:[%s4 + $0x60] sm:$0xff]
      %v744 = vld [vmem:[%s4 + $0x68] sm:$0xff]
      %v745 = vld [vmem:[%s4 + $0x70] sm:$0xff]
      %v746 = vld [vmem:[%s4 + $0x78] sm:$0xff]
      %v747 = vld [vmem:[%s5] sm:$0x1]
      %v749 = vlaneseq
      %v750 = vshrl.u32 %v749, 7
      %v751 = vsub.s32 0, %v750
      %v752 = vrot.slane %v747, %v751
      %754 = vmatprep.subr.mxu0 0.0
      %755 = vmatpush1.msra.mxu0 %v746
      %756 = vmatprep.subr.mxu0 0.0
      %757 = vmatpush1.msra.mxu0 %v745
      %758 = vmatprep.subr.mxu0 0.0
      %759 = vmatpush1.msra.mxu0 %v744
      %760 = vmatprep.subr.mxu0 0.0
      %761 = vmatpush1.msra.mxu0 %v743
      %762 = vmatprep.subr.mxu0 0.0
      %763 = vmatpush1.msra.mxu0 %v742
      %764 = vmatprep.subr.mxu0 0.0
      %765 = vmatpush1.msra.mxu0 %v741
      %766 = vmatprep.subr.mxu0 0.0
      %767 = vmatpush1.msra.mxu0 %v740
      %768 = vmatprep.subr.mxu0 0.0
      %769 = vmatpush1.msra.mxu0 %v739
      %770 = vmatprep.subr.mxu0 0.0
      %771 = vmatpush1.msra.mxu0 %v738
      %772 = vmatprep.subr.mxu0 0.0
      %773 = vmatpush1.msra.mxu0 %v737
      %774 = vmatprep.subr.mxu0 0.0
      %775 = vmatpush1.msra.mxu0 %v736
      %776 = vmatprep.subr.mxu0 0.0
      %777 = vmatpush1.msra.mxu0 %v735
      %778 = vmatprep.subr.mxu0 0.0
      %779 = vmatpush1.msra.mxu0 %v734
      %780 = vmatprep.subr.mxu0 0.0
      %781 = vmatpush1.msra.mxu0 %v733
      %782 = vmatprep.subr.mxu0 0.0
      %783 = vmatpush1.msra.mxu0 %v732
      %784 = vmatprep.subr.mxu0 0.0
      %785 = vmatpush1.msra.mxu0 %v731
      %786 = vmatprep.subr.mxu0 0.0
      %787 = vmatpush2.msra.mxu0 0.0
      %788 = vmatprep.subr.mxu0 0.0
      %789 = vmatpush2.msra.mxu0 0.0
      %790 = vmatprep.subr.mxu0 0.0
      %791 = vmatpush2.msra.mxu0 0.0
      %792 = vmatprep.subr.mxu0 0.0
      %793 = vmatpush2.msra.mxu0 0.0
      %794 = vmatprep.subr.mxu0 0.0
      %795 = vmatpush2.msra.mxu0 0.0
      %796 = vmatprep.subr.mxu0 0.0
      %797 = vmatpush2.msra.mxu0 0.0
      %798 = vmatprep.subr.mxu0 0.0
      %799 = vmatpush2.msra.mxu0 0.0
      %800 = vmatprep.subr.mxu0 0.0
      %801 = vmatpush2.msra.mxu0 0.0
      %802 = vmatprep.subr.mxu0 0.0
      %803 = vmatpush2.msra.mxu0 0.0
      %804 = vmatprep.subr.mxu0 0.0
      %805 = vmatpush2.msra.mxu0 0.0
      %806 = vmatprep.subr.mxu0 0.0
      %807 = vmatpush2.msra.mxu0 0.0
      %808 = vmatprep.subr.mxu0 0.0
      %809 = vmatpush2.msra.mxu0 0.0
      %810 = vmatprep.subr.mxu0 0.0
      %811 = vmatpush2.msra.mxu0 0.0
      %812 = vmatprep.subr.mxu0 0.0
      %813 = vmatpush2.msra.mxu0 0.0
      %814 = vmatprep.subr.mxu0 0.0
      %815 = vmatpush2.msra.mxu0 0.0
      %816 = vmatprep.subr.mxu0 0.0
      %817 = vmatpush2.msra.mxu0 0.0
      %818 = vmatprep.mubr.f32.mxu0 0.0
      %819 = vmatmul.mubr.f32.gmra.mxu0 %v729
      %v820 = vpop.f32.mrf.mxu0
      %v821 = vadd.f32 %v752, %v820
      %v822 = vpop.f32.mrf.mxu0
      %823 = vmatprep.mubr.f32.mxu0 0.0
      %824 = vmatmul.mubr.f32.gmra.mxu0 %v730
      %v825 = vpop.f32.mrf.mxu0
      %v826 = vadd.f32 %v752, %v825
      %v827 = vpop.f32.mrf.mxu0
      %828 = vdwg.mxu0
      %v830 = vlaneseq
      %v831 = vshrl.u32 %v830, 7
      %v832 = vsub.s32 0, %v831
      %v833 = vrot.slane %v576, %v832
      %v835 = vmul.f32 %v617, %v833
      %v836 = vmul.f32 %v618, %v833
      %v837 = vadd.f32 %v821, %v835
      %v838 = vadd.f32 %v826, %v836
      %v839 = vadd.f32 %v837, %v579
      %v840 = vadd.f32 %v838, %v580
      %841 = vst [vmem:[#allocation2 + $0x8] sm:$0xff] %v839
      %842 = vst [vmem:[#allocation2 + $0x10] sm:$0xff] %v840
      %v843 = vld [vmem:[#allocation2 + $0x7] sm:$0xff]
      %v844 = vld [vmem:[#allocation2 + $0xf] sm:$0xff]
      %v845 = vld [vmem:[%s6] sm:$0xff]
      %v846 = vld [vmem:[%s6 + $0x8] sm:$0xff]
      %v847 = vld [vmem:[%s6 + $0x10] sm:$0xff]
      %v848 = vld [vmem:[%s6 + $0x18] sm:$0xff]
      %v849 = vld [vmem:[%s6 + $0x20] sm:$0xff]
      %v850 = vld [vmem:[%s6 + $0x28] sm:$0xff]
      %v851 = vld [vmem:[%s6 + $0x30] sm:$0xff]
      %v852 = vld [vmem:[%s6 + $0x38] sm:$0xff]
      %v853 = vld [vmem:[%s6 + $0x40] sm:$0xff]
      %v854 = vld [vmem:[%s6 + $0x48] sm:$0xff]
      %v855 = vld [vmem:[%s6 + $0x50] sm:$0xff]
      %v856 = vld [vmem:[%s6 + $0x58] sm:$0xff]
      %v857 = vld [vmem:[%s6 + $0x60] sm:$0xff]
      %v858 = vld [vmem:[%s6 + $0x68] sm:$0xff]
      %v859 = vld [vmem:[%s6 + $0x70] sm:$0xff]
      %v860 = vld [vmem:[%s6 + $0x78] sm:$0xff]
      %v861 = vld [vmem:[%s7] sm:$0x1]
      %v863 = vlaneseq
      %v864 = vshrl.u32 %v863, 7
      %v865 = vsub.s32 0, %v864
      %v866 = vrot.slane %v861, %v865
      %868 = vmatprep.subr.mxu0 0.0
      %869 = vmatpush1.msra.mxu0 %v860
      %870 = vmatprep.subr.mxu0 0.0
      %871 = vmatpush1.msra.mxu0 %v859
      %872 = vmatprep.subr.mxu0 0.0
      %873 = vmatpush1.msra.mxu0 %v858
      %874 = vmatprep.subr.mxu0 0.0
      %875 = vmatpush1.msra.mxu0 %v857
      %876 = vmatprep.subr.mxu0 0.0
      %877 = vmatpush1.msra.mxu0 %v856
      %878 = vmatprep.subr.mxu0 0.0
      %879 = vmatpush1.msra.mxu0 %v855
      %880 = vmatprep.subr.mxu0 0.0
      %881 = vmatpush1.msra.mxu0 %v854
      %882 = vmatprep.subr.mxu0 0.0
      %883 = vmatpush1.msra.mxu0 %v853
      %884 = vmatprep.subr.mxu0 0.0
      %885 = vmatpush1.msra.mxu0 %v852
      %886 = vmatprep.subr.mxu0 0.0
      %887 = vmatpush1.msra.mxu0 %v851
      %888 = vmatprep.subr.mxu0 0.0
      %889 = vmatpush1.msra.mxu0 %v850
      %890 = vmatprep.subr.mxu0 0.0
      %891 = vmatpush1.msra.mxu0 %v849
      %892 = vmatprep.subr.mxu0 0.0
      %893 = vmatpush1.msra.mxu0 %v848
      %894 = vmatprep.subr.mxu0 0.0
      %895 = vmatpush1.msra.mxu0 %v847
      %896 = vmatprep.subr.mxu0 0.0
      %897 = vmatpush1.msra.mxu0 %v846
      %898 = vmatprep.subr.mxu0 0.0
      %899 = vmatpush1.msra.mxu0 %v845
      %900 = vmatprep.subr.mxu0 0.0
      %901 = vmatpush2.msra.mxu0 0.0
      %902 = vmatprep.subr.mxu0 0.0
      %903 = vmatpush2.msra.mxu0 0.0
      %904 = vmatprep.subr.mxu0 0.0
      %905 = vmatpush2.msra.mxu0 0.0
      %906 = vmatprep.subr.mxu0 0.0
      %907 = vmatpush2.msra.mxu0 0.0
      %908 = vmatprep.subr.mxu0 0.0
      %909 = vmatpush2.msra.mxu0 0.0
      %910 = vmatprep.subr.mxu0 0.0
      %911 = vmatpush2.msra.mxu0 0.0
      %912 = vmatprep.subr.mxu0 0.0
      %913 = vmatpush2.msra.mxu0 0.0
      %914 = vmatprep.subr.mxu0 0.0
      %915 = vmatpush2.msra.mxu0 0.0
      %916 = vmatprep.subr.mxu0 0.0
      %917 = vmatpush2.msra.mxu0 0.0
      %918 = vmatprep.subr.mxu0 0.0
      %919 = vmatpush2.msra.mxu0 0.0
      %920 = vmatprep.subr.mxu0 0.0
      %921 = vmatpush2.msra.mxu0 0.0
      %922 = vmatprep.subr.mxu0 0.0
      %923 = vmatpush2.msra.mxu0 0.0
      %924 = vmatprep.subr.mxu0 0.0
      %925 = vmatpush2.msra.mxu0 0.0
      %926 = vmatprep.subr.mxu0 0.0
      %927 = vmatpush2.msra.mxu0 0.0
      %928 = vmatprep.subr.mxu0 0.0
      %929 = vmatpush2.msra.mxu0 0.0
      %930 = vmatprep.subr.mxu0 0.0
      %931 = vmatpush2.msra.mxu0 0.0
      %932 = vmatprep.mubr.f32.mxu0 0.0
      %933 = vmatmul.mubr.f32.gmra.mxu0 %v843
      %v934 = vpop.f32.mrf.mxu0
      %v935 = vadd.f32 %v866, %v934
      %v936 = vpop.f32.mrf.mxu0
      %937 = vmatprep.mubr.f32.mxu0 0.0
      %938 = vmatmul.mubr.f32.gmra.mxu0 %v844
      %v939 = vpop.f32.mrf.mxu0
      %v940 = vadd.f32 %v866, %v939
      %v941 = vpop.f32.mrf.mxu0
      %942 = vdwg.mxu0
      %v943 = vld [vmem:[#allocation2 + $0x8] sm:$0xff]
      %v944 = vld [vmem:[#allocation2 + $0x10] sm:$0xff]
      %s945 = scalar_lea.vmem %s6, 128
      %v946 = vld [vmem:[%s945] sm:$0xff]
      %v947 = vld [vmem:[%s945 + $0x8] sm:$0xff]
      %v948 = vld [vmem:[%s945 + $0x10] sm:$0xff]
      %v949 = vld [vmem:[%s945 + $0x18] sm:$0xff]
      %v950 = vld [vmem:[%s945 + $0x20] sm:$0xff]
      %v951 = vld [vmem:[%s945 + $0x28] sm:$0xff]
      %v952 = vld [vmem:[%s945 + $0x30] sm:$0xff]
      %v953 = vld [vmem:[%s945 + $0x38] sm:$0xff]
      %v954 = vld [vmem:[%s945 + $0x40] sm:$0xff]
      %v955 = vld [vmem:[%s945 + $0x48] sm:$0xff]
      %v956 = vld [vmem:[%s945 + $0x50] sm:$0xff]
      %v957 = vld [vmem:[%s945 + $0x58] sm:$0xff]
      %v958 = vld [vmem:[%s945 + $0x60] sm:$0xff]
      %v959 = vld [vmem:[%s945 + $0x68] sm:$0xff]
      %v960 = vld [vmem:[%s945 + $0x70] sm:$0xff]
      %v961 = vld [vmem:[%s945 + $0x78] sm:$0xff]
      %962 = vmatprep.subr.mxu0 0.0
      %963 = vmatpush1.msra.mxu0 %v961
      %964 = vmatprep.subr.mxu0 0.0
      %965 = vmatpush1.msra.mxu0 %v960
      %966 = vmatprep.subr.mxu0 0.0
      %967 = vmatpush1.msra.mxu0 %v959
      %968 = vmatprep.subr.mxu0 0.0
      %969 = vmatpush1.msra.mxu0 %v958
      %970 = vmatprep.subr.mxu0 0.0
      %971 = vmatpush1.msra.mxu0 %v957
      %972 = vmatprep.subr.mxu0 0.0
      %973 = vmatpush1.msra.mxu0 %v956
      %974 = vmatprep.subr.mxu0 0.0
      %975 = vmatpush1.msra.mxu0 %v955
      %976 = vmatprep.subr.mxu0 0.0
      %977 = vmatpush1.msra.mxu0 %v954
      %978 = vmatprep.subr.mxu0 0.0
      %979 = vmatpush1.msra.mxu0 %v953
      %980 = vmatprep.subr.mxu0 0.0
      %981 = vmatpush1.msra.mxu0 %v952
      %982 = vmatprep.subr.mxu0 0.0
      %983 = vmatpush1.msra.mxu0 %v951
      %984 = vmatprep.subr.mxu0 0.0
      %985 = vmatpush1.msra.mxu0 %v950
      %986 = vmatprep.subr.mxu0 0.0
      %987 = vmatpush1.msra.mxu0 %v949
      %988 = vmatprep.subr.mxu0 0.0
      %989 = vmatpush1.msra.mxu0 %v948
      %990 = vmatprep.subr.mxu0 0.0
      %991 = vmatpush1.msra.mxu0 %v947
      %992 = vmatprep.subr.mxu0 0.0
      %993 = vmatpush1.msra.mxu0 %v946
      %994 = vmatprep.subr.mxu0 0.0
      %995 = vmatpush2.msra.mxu0 0.0
      %996 = vmatprep.subr.mxu0 0.0
      %997 = vmatpush2.msra.mxu0 0.0
      %998 = vmatprep.subr.mxu0 0.0
      %999 = vmatpush2.msra.mxu0 0.0
      %1000 = vmatprep.subr.mxu0 0.0
      %1001 = vmatpush2.msra.mxu0 0.0
      %1002 = vmatprep.subr.mxu0 0.0
      %1003 = vmatpush2.msra.mxu0 0.0
      %1004 = vmatprep.subr.mxu0 0.0
      %1005 = vmatpush2.msra.mxu0 0.0
      %1006 = vmatprep.subr.mxu0 0.0
      %1007 = vmatpush2.msra.mxu0 0.0
      %1008 = vmatprep.subr.mxu0 0.0
      %1009 = vmatpush2.msra.mxu0 0.0
      %1010 = vmatprep.subr.mxu0 0.0
      %1011 = vmatpush2.msra.mxu0 0.0
      %1012 = vmatprep.subr.mxu0 0.0
      %1013 = vmatpush2.msra.mxu0 0.0
      %1014 = vmatprep.subr.mxu0 0.0
      %1015 = vmatpush2.msra.mxu0 0.0
      %1016 = vmatprep.subr.mxu0 0.0
      %1017 = vmatpush2.msra.mxu0 0.0
      %1018 = vmatprep.subr.mxu0 0.0
      %1019 = vmatpush2.msra.mxu0 0.0
      %1020 = vmatprep.subr.mxu0 0.0
      %1021 = vmatpush2.msra.mxu0 0.0
      %1022 = vmatprep.subr.mxu0 0.0
      %1023 = vmatpush2.msra.mxu0 0.0
      %1024 = vmatprep.subr.mxu0 0.0
      %1025 = vmatpush2.msra.mxu0 0.0
      %1026 = vmatprep.mubr.f32.mxu0 0.0
      %1027 = vmatmul.mubr.f32.gmra.mxu0 %v943
      %v1028 = vpop.f32.mrf.mxu0
      %v1029 = vadd.f32 0.0, %v1028
      %v1030 = vpop.f32.mrf.mxu0
      %1031 = vmatprep.mubr.f32.mxu0 0.0
      %1032 = vmatmul.mubr.f32.gmra.mxu0 %v944
      %v1033 = vpop.f32.mrf.mxu0
      %v1034 = vadd.f32 0.0, %v1033
      %v1035 = vpop.f32.mrf.mxu0
      %1036 = vdwg.mxu0
      %v1037 = vadd.f32 %v935, %v1029
      %v1038 = vadd.f32 %v940, %v1034
      %v1039 = vld [vmem:[#allocation2 + $0x9] sm:$0xff]
      %v1040 = vld [vmem:[#allocation2 + $0x11] sm:$0xff]
      %s1041 = scalar_lea.vmem %s6, 256
      %v1042 = vld [vmem:[%s1041] sm:$0xff]
      %v1043 = vld [vmem:[%s1041 + $0x8] sm:$0xff]
      %v1044 = vld [vmem:[%s1041 + $0x10] sm:$0xff]
      %v1045 = vld [vmem:[%s1041 + $0x18] sm:$0xff]
      %v1046 = vld [vmem:[%s1041 + $0x20] sm:$0xff]
      %v1047 = vld [vmem:[%s1041 + $0x28] sm:$0xff]
      %v1048 = vld [vmem:[%s1041 + $0x30] sm:$0xff]
      %v1049 = vld [vmem:[%s1041 + $0x38] sm:$0xff]
      %v1050 = vld [vmem:[%s1041 + $0x40] sm:$0xff]
      %v1051 = vld [vmem:[%s1041 + $0x48] sm:$0xff]
      %v1052 = vld [vmem:[%s1041 + $0x50] sm:$0xff]
      %v1053 = vld [vmem:[%s1041 + $0x58] sm:$0xff]
      %v1054 = vld [vmem:[%s1041 + $0x60] sm:$0xff]
      %v1055 = vld [vmem:[%s1041 + $0x68] sm:$0xff]
      %v1056 = vld [vmem:[%s1041 + $0x70] sm:$0xff]
      %v1057 = vld [vmem:[%s1041 + $0x78] sm:$0xff]
      %1058 = vmatprep.subr.mxu0 0.0
      %1059 = vmatpush1.msra.mxu0 %v1057
      %1060 = vmatprep.subr.mxu0 0.0
      %1061 = vmatpush1.msra.mxu0 %v1056
      %1062 = vmatprep.subr.mxu0 0.0
      %1063 = vmatpush1.msra.mxu0 %v1055
      %1064 = vmatprep.subr.mxu0 0.0
      %1065 = vmatpush1.msra.mxu0 %v1054
      %1066 = vmatprep.subr.mxu0 0.0
      %1067 = vmatpush1.msra.mxu0 %v1053
      %1068 = vmatprep.subr.mxu0 0.0
      %1069 = vmatpush1.msra.mxu0 %v1052
      %1070 = vmatprep.subr.mxu0 0.0
      %1071 = vmatpush1.msra.mxu0 %v1051
      %1072 = vmatprep.subr.mxu0 0.0
      %1073 = vmatpush1.msra.mxu0 %v1050
      %1074 = vmatprep.subr.mxu0 0.0
      %1075 = vmatpush1.msra.mxu0 %v1049
      %1076 = vmatprep.subr.mxu0 0.0
      %1077 = vmatpush1.msra.mxu0 %v1048
      %1078 = vmatprep.subr.mxu0 0.0
      %1079 = vmatpush1.msra.mxu0 %v1047
      %1080 = vmatprep.subr.mxu0 0.0
      %1081 = vmatpush1.msra.mxu0 %v1046
      %1082 = vmatprep.subr.mxu0 0.0
      %1083 = vmatpush1.msra.mxu0 %v1045
      %1084 = vmatprep.subr.mxu0 0.0
      %1085 = vmatpush1.msra.mxu0 %v1044
      %1086 = vmatprep.subr.mxu0 0.0
      %1087 = vmatpush1.msra.mxu0 %v1043
      %1088 = vmatprep.subr.mxu0 0.0
      %1089 = vmatpush1.msra.mxu0 %v1042
      %1090 = vmatprep.subr.mxu0 0.0
      %1091 = vmatpush2.msra.mxu0 0.0
      %1092 = vmatprep.subr.mxu0 0.0
      %1093 = vmatpush2.msra.mxu0 0.0
      %1094 = vmatprep.subr.mxu0 0.0
      %1095 = vmatpush2.msra.mxu0 0.0
      %1096 = vmatprep.subr.mxu0 0.0
      %1097 = vmatpush2.msra.mxu0 0.0
      %1098 = vmatprep.subr.mxu0 0.0
      %1099 = vmatpush2.msra.mxu0 0.0
      %1100 = vmatprep.subr.mxu0 0.0
      %1101 = vmatpush2.msra.mxu0 0.0
      %1102 = vmatprep.subr.mxu0 0.0
      %1103 = vmatpush2.msra.mxu0 0.0
      %1104 = vmatprep.subr.mxu0 0.0
      %1105 = vmatpush2.msra.mxu0 0.0
      %1106 = vmatprep.subr.mxu0 0.0
      %1107 = vmatpush2.msra.mxu0 0.0
      %1108 = vmatprep.subr.mxu0 0.0
      %1109 = vmatpush2.msra.mxu0 0.0
      %1110 = vmatprep.subr.mxu0 0.0
      %1111 = vmatpush2.msra.mxu0 0.0
      %1112 = vmatprep.subr.mxu0 0.0
      %1113 = vmatpush2.msra.mxu0 0.0
      %1114 = vmatprep.subr.mxu0 0.0
      %1115 = vmatpush2.msra.mxu0 0.0
      %1116 = vmatprep.subr.mxu0 0.0
      %1117 = vmatpush2.msra.mxu0 0.0
      %1118 = vmatprep.subr.mxu0 0.0
      %1119 = vmatpush2.msra.mxu0 0.0
      %1120 = vmatprep.subr.mxu0 0.0
      %1121 = vmatpush2.msra.mxu0 0.0
      %1122 = vmatprep.mubr.f32.mxu0 0.0
      %1123 = vmatmul.mubr.f32.gmra.mxu0 %v1039
      %v1124 = vpop.f32.mrf.mxu0
      %v1125 = vadd.f32 0.0, %v1124
      %v1126 = vpop.f32.mrf.mxu0
      %1127 = vmatprep.mubr.f32.mxu0 0.0
      %1128 = vmatmul.mubr.f32.gmra.mxu0 %v1040
      %v1129 = vpop.f32.mrf.mxu0
      %v1130 = vadd.f32 0.0, %v1129
      %v1131 = vpop.f32.mrf.mxu0
      %1132 = vdwg.mxu0
      %v1133 = vadd.f32 %v1037, %v1125
      %v1134 = vadd.f32 %v1038, %v1130
      %v1135 = vadd.f32 %v1133, %v1134
      %1136 = vadd.xlane.f32.xlu0 %v1135
      %v1137 = vpop.xlane.xlu0 %1136
      %v1138 = vrot.slane %v1137, 4
      %v1139 = vadd.f32 %v1137, %v1138
      %v1140 = vrot.slane %v1139, 2
      %v1141 = vadd.f32 %v1139, %v1140
      %v1142 = vrot.slane %v1141, 1
      %v1143 = vadd.f32 %v1141, %v1142
      %s1144 = vtos %v1143
      %v1145 = vrcp.pop 2048.0
      %s1146 = vtos %v1145
      %s1147 = smul.f32 %s1144, %s1146
      %v1148 = vstv %s1147
      %v1149 = vsub.f32 %v1133, %v1148
      %v1150 = vsub.f32 %v1134, %v1148
      %v1151 = vmul.f32 %v1149, %v1149
      %v1152 = vmul.f32 %v1150, %v1150
      %v1153 = vadd.f32 %v1151, %v1152
      %1154 = vadd.xlane.f32.xlu0 %v1153
      %v1155 = vpop.xlane.xlu0 %1154
      %v1156 = vrot.slane %v1155, 4
      %v1157 = vadd.f32 %v1155, %v1156
      %v1158 = vrot.slane %v1157, 2
      %v1159 = vadd.f32 %v1157, %v1158
      %v1160 = vrot.slane %v1159, 1
      %v1161 = vadd.f32 %v1159, %v1160
      %s1162 = vtos %v1161
      %v1163 = vrcp.pop 2048.0
      %s1164 = vtos %v1163
      %s1165 = smul.f32 %s1162, %s1164
      %s1166 = sadd.f32 %s1165, 1e-05
      %v1167 = vstv %s1166
      %v1168 = vrsqrt.pop %v1167
      %s1169 = vtos %v1168
      %v1170 = vstv %s1169
      %v1171 = vmul.f32 %v1149, %v1170
      %v1172 = vmul.f32 %v1150, %v1170
      %v1173 = vld [vmem:[%s2] sm:$0xff]
      %v1174 = vld [vmem:[%s2 + $0x8] sm:$0xff]
      %v1175 = vld [vmem:[%s2 + $0x10] sm:$0xff]
      %v1176 = vld [vmem:[%s2 + $0x18] sm:$0xff]
      %v1177 = vld [vmem:[%s2 + $0x20] sm:$0xff]
      %v1178 = vld [vmem:[%s2 + $0x28] sm:$0xff]
      %v1179 = vld [vmem:[%s2 + $0x30] sm:$0xff]
      %v1180 = vld [vmem:[%s2 + $0x38] sm:$0xff]
      %v1181 = vld [vmem:[%s2 + $0x40] sm:$0xff]
      %v1182 = vld [vmem:[%s2 + $0x48] sm:$0xff]
      %v1183 = vld [vmem:[%s2 + $0x50] sm:$0xff]
      %v1184 = vld [vmem:[%s2 + $0x58] sm:$0xff]
      %v1185 = vld [vmem:[%s2 + $0x60] sm:$0xff]
      %v1186 = vld [vmem:[%s2 + $0x68] sm:$0xff]
      %v1187 = vld [vmem:[%s2 + $0x70] sm:$0xff]
      %v1188 = vld [vmem:[%s2 + $0x78] sm:$0xff]
      %v1189 = vld [vmem:[%s3] sm:$0x1]
      %v1191 = vlaneseq
      %v1192 = vshrl.u32 %v1191, 7
      %v1193 = vsub.s32 0, %v1192
      %v1194 = vrot.slane %v1189, %v1193
      %1196 = vmatprep.subr.mxu0 0.0
      %1197 = vmatpush1.msra.mxu0 %v1188
      %1198 = vmatprep.subr.mxu0 0.0
      %1199 = vmatpush1.msra.mxu0 %v1187
      %1200 = vmatprep.subr.mxu0 0.0
      %1201 = vmatpush1.msra.mxu0 %v1186
      %1202 = vmatprep.subr.mxu0 0.0
      %1203 = vmatpush1.msra.mxu0 %v1185
      %1204 = vmatprep.subr.mxu0 0.0
      %1205 = vmatpush1.msra.mxu0 %v1184
      %1206 = vmatprep.subr.mxu0 0.0
      %1207 = vmatpush1.msra.mxu0 %v1183
      %1208 = vmatprep.subr.mxu0 0.0
      %1209 = vmatpush1.msra.mxu0 %v1182
      %1210 = vmatprep.subr.mxu0 0.0
      %1211 = vmatpush1.msra.mxu0 %v1181
      %1212 = vmatprep.subr.mxu0 0.0
      %1213 = vmatpush1.msra.mxu0 %v1180
      %1214 = vmatprep.subr.mxu0 0.0
      %1215 = vmatpush1.msra.mxu0 %v1179
      %1216 = vmatprep.subr.mxu0 0.0
      %1217 = vmatpush1.msra.mxu0 %v1178
      %1218 = vmatprep.subr.mxu0 0.0
      %1219 = vmatpush1.msra.mxu0 %v1177
      %1220 = vmatprep.subr.mxu0 0.0
      %1221 = vmatpush1.msra.mxu0 %v1176
      %1222 = vmatprep.subr.mxu0 0.0
      %1223 = vmatpush1.msra.mxu0 %v1175
      %1224 = vmatprep.subr.mxu0 0.0
      %1225 = vmatpush1.msra.mxu0 %v1174
      %1226 = vmatprep.subr.mxu0 0.0
      %1227 = vmatpush1.msra.mxu0 %v1173
      %1228 = vmatprep.subr.mxu0 0.0
      %1229 = vmatpush2.msra.mxu0 0.0
      %1230 = vmatprep.subr.mxu0 0.0
      %1231 = vmatpush2.msra.mxu0 0.0
      %1232 = vmatprep.subr.mxu0 0.0
      %1233 = vmatpush2.msra.mxu0 0.0
      %1234 = vmatprep.subr.mxu0 0.0
      %1235 = vmatpush2.msra.mxu0 0.0
      %1236 = vmatprep.subr.mxu0 0.0
      %1237 = vmatpush2.msra.mxu0 0.0
      %1238 = vmatprep.subr.mxu0 0.0
      %1239 = vmatpush2.msra.mxu0 0.0
      %1240 = vmatprep.subr.mxu0 0.0
      %1241 = vmatpush2.msra.mxu0 0.0
      %1242 = vmatprep.subr.mxu0 0.0
      %1243 = vmatpush2.msra.mxu0 0.0
      %1244 = vmatprep.subr.mxu0 0.0
      %1245 = vmatpush2.msra.mxu0 0.0
      %1246 = vmatprep.subr.mxu0 0.0
      %1247 = vmatpush2.msra.mxu0 0.0
      %1248 = vmatprep.subr.mxu0 0.0
      %1249 = vmatpush2.msra.mxu0 0.0
      %1250 = vmatprep.subr.mxu0 0.0
      %1251 = vmatpush2.msra.mxu0 0.0
      %1252 = vmatprep.subr.mxu0 0.0
      %1253 = vmatpush2.msra.mxu0 0.0
      %1254 = vmatprep.subr.mxu0 0.0
      %1255 = vmatpush2.msra.mxu0 0.0
      %1256 = vmatprep.subr.mxu0 0.0
      %1257 = vmatpush2.msra.mxu0 0.0
      %1258 = vmatprep.subr.mxu0 0.0
      %1259 = vmatpush2.msra.mxu0 0.0
      %1260 = vmatprep.mubr.f32.mxu0 0.0
      %1261 = vmatmul.mubr.f32.gmra.mxu0 %v1171
      %v1262 = vpop.f32.mrf.mxu0
      %v1263 = vadd.f32 %v1194, %v1262
      %v1264 = vpop.f32.mrf.mxu0
      %1265 = vmatprep.mubr.f32.mxu0 0.0
      %1266 = vmatmul.mubr.f32.gmra.mxu0 %v1172
      %v1267 = vpop.f32.mrf.mxu0
      %v1268 = vadd.f32 %v1194, %v1267
      %v1269 = vpop.f32.mrf.mxu0
      %1270 = vdwg.mxu0
      %v1271 = vxor.u32 %v1263, 2147483648
      %v1272 = vxor.u32 %v1268, 2147483648
      %v1273 = vmul.f32 %v1271, 1.442695
      %v1274 = vpow.pop %v1273
      %v1275 = vmul.f32 %v1272, 1.442695
      %v1276 = vpow.pop %v1275
      %v1277 = vadd.f32 %v1274, 1.0
      %v1278 = vadd.f32 %v1276, 1.0
      %v1279 = vrcp.pop %v1277
      %v1280 = vmul.f32 1.0, %v1279
      %v1281 = vrcp.pop %v1278
      %v1282 = vmul.f32 1.0, %v1281
      %v1283 = vmul.f32 %v1263, %v1280
      %v1284 = vmul.f32 %v1268, %v1282
      %v1285 = vld [vmem:[%s4] sm:$0xff]
      %v1286 = vld [vmem:[%s4 + $0x8] sm:$0xff]
      %v1287 = vld [vmem:[%s4 + $0x10] sm:$0xff]
      %v1288 = vld [vmem:[%s4 + $0x18] sm:$0xff]
      %v1289 = vld [vmem:[%s4 + $0x20] sm:$0xff]
      %v1290 = vld [vmem:[%s4 + $0x28] sm:$0xff]
      %v1291 = vld [vmem:[%s4 + $0x30] sm:$0xff]
      %v1292 = vld [vmem:[%s4 + $0x38] sm:$0xff]
      %v1293 = vld [vmem:[%s4 + $0x40] sm:$0xff]
      %v1294 = vld [vmem:[%s4 + $0x48] sm:$0xff]
      %v1295 = vld [vmem:[%s4 + $0x50] sm:$0xff]
      %v1296 = vld [vmem:[%s4 + $0x58] sm:$0xff]
      %v1297 = vld [vmem:[%s4 + $0x60] sm:$0xff]
      %v1298 = vld [vmem:[%s4 + $0x68] sm:$0xff]
      %v1299 = vld [vmem:[%s4 + $0x70] sm:$0xff]
      %v1300 = vld [vmem:[%s4 + $0x78] sm:$0xff]
      %v1301 = vld [vmem:[%s5] sm:$0x1]
      %v1303 = vlaneseq
      %v1304 = vshrl.u32 %v1303, 7
      %v1305 = vsub.s32 0, %v1304
      %v1306 = vrot.slane %v1301, %v1305
      %1308 = vmatprep.subr.mxu0 0.0
      %1309 = vmatpush1.msra.mxu0 %v1300
      %1310 = vmatprep.subr.mxu0 0.0
      %1311 = vmatpush1.msra.mxu0 %v1299
      %1312 = vmatprep.subr.mxu0 0.0
      %1313 = vmatpush1.msra.mxu0 %v1298
      %1314 = vmatprep.subr.mxu0 0.0
      %1315 = vmatpush1.msra.mxu0 %v1297
      %1316 = vmatprep.subr.mxu0 0.0
      %1317 = vmatpush1.msra.mxu0 %v1296
      %1318 = vmatprep.subr.mxu0 0.0
      %1319 = vmatpush1.msra.mxu0 %v1295
      %1320 = vmatprep.subr.mxu0 0.0
      %1321 = vmatpush1.msra.mxu0 %v1294
      %1322 = vmatprep.subr.mxu0 0.0
      %1323 = vmatpush1.msra.mxu0 %v1293
      %1324 = vmatprep.subr.mxu0 0.0
      %1325 = vmatpush1.msra.mxu0 %v1292
      %1326 = vmatprep.subr.mxu0 0.0
      %1327 = vmatpush1.msra.mxu0 %v1291
      %1328 = vmatprep.subr.mxu0 0.0
      %1329 = vmatpush1.msra.mxu0 %v1290
      %1330 = vmatprep.subr.mxu0 0.0
      %1331 = vmatpush1.msra.mxu0 %v1289
      %1332 = vmatprep.subr.mxu0 0.0
      %1333 = vmatpush1.msra.mxu0 %v1288
      %1334 = vmatprep.subr.mxu0 0.0
      %1335 = vmatpush1.msra.mxu0 %v1287
      %1336 = vmatprep.subr.mxu0 0.0
      %1337 = vmatpush1.msra.mxu0 %v1286
      %1338 = vmatprep.subr.mxu0 0.0
      %1339 = vmatpush1.msra.mxu0 %v1285
      %1340 = vmatprep.subr.mxu0 0.0
      %1341 = vmatpush2.msra.mxu0 0.0
      %1342 = vmatprep.subr.mxu0 0.0
      %1343 = vmatpush2.msra.mxu0 0.0
      %1344 = vmatprep.subr.mxu0 0.0
      %1345 = vmatpush2.msra.mxu0 0.0
      %1346 = vmatprep.subr.mxu0 0.0
      %1347 = vmatpush2.msra.mxu0 0.0
      %1348 = vmatprep.subr.mxu0 0.0
      %1349 = vmatpush2.msra.mxu0 0.0
      %1350 = vmatprep.subr.mxu0 0.0
      %1351 = vmatpush2.msra.mxu0 0.0
      %1352 = vmatprep.subr.mxu0 0.0
      %1353 = vmatpush2.msra.mxu0 0.0
      %1354 = vmatprep.subr.mxu0 0.0
      %1355 = vmatpush2.msra.mxu0 0.0
      %1356 = vmatprep.subr.mxu0 0.0
      %1357 = vmatpush2.msra.mxu0 0.0
      %1358 = vmatprep.subr.mxu0 0.0
      %1359 = vmatpush2.msra.mxu0 0.0
      %1360 = vmatprep.subr.mxu0 0.0
      %1361 = vmatpush2.msra.mxu0 0.0
      %1362 = vmatprep.subr.mxu0 0.0
      %1363 = vmatpush2.msra.mxu0 0.0
      %1364 = vmatprep.subr.mxu0 0.0
      %1365 = vmatpush2.msra.mxu0 0.0
      %1366 = vmatprep.subr.mxu0 0.0
      %1367 = vmatpush2.msra.mxu0 0.0
      %1368 = vmatprep.subr.mxu0 0.0
      %1369 = vmatpush2.msra.mxu0 0.0
      %1370 = vmatprep.subr.mxu0 0.0
      %1371 = vmatpush2.msra.mxu0 0.0
      %1372 = vmatprep.mubr.f32.mxu0 0.0
      %1373 = vmatmul.mubr.f32.gmra.mxu0 %v1283
      %v1374 = vpop.f32.mrf.mxu0
      %v1375 = vadd.f32 %v1306, %v1374
      %v1376 = vpop.f32.mrf.mxu0
      %1377 = vmatprep.mubr.f32.mxu0 0.0
      %1378 = vmatmul.mubr.f32.gmra.mxu0 %v1284
      %v1379 = vpop.f32.mrf.mxu0
      %v1380 = vadd.f32 %v1306, %v1379
      %v1381 = vpop.f32.mrf.mxu0
      %1382 = vdwg.mxu0
      %v1383 = vmul.f32 %v1171, %v833
      %v1384 = vmul.f32 %v1172, %v833
      %v1385 = vadd.f32 %v1375, %v1383
      %v1386 = vadd.f32 %v1380, %v1384
      %v1387 = vadd.f32 %v1385, %v1133
      %v1388 = vadd.f32 %v1386, %v1134
      %v1389 = vadd.f32 %v1387, %v1388
      %1390 = vadd.xlane.f32.xlu0 %v1389
      %v1391 = vpop.xlane.xlu0 %1390
      %v1392 = vrot.slane %v1391, 4
      %v1393 = vadd.f32 %v1391, %v1392
      %v1394 = vrot.slane %v1393, 2
      %v1395 = vadd.f32 %v1393, %v1394
      %v1396 = vrot.slane %v1395, 1
      %v1397 = vadd.f32 %v1395, %v1396
      %s1398 = vtos %v1397
      %v1399 = vrcp.pop 2048.0
      %s1400 = vtos %v1399
      %s1401 = smul.f32 %s1398, %s1400
      %v1402 = vstv %s1401
      %v1403 = vsub.f32 %v1387, %v1402
      %v1404 = vsub.f32 %v1388, %v1402
      %v1405 = vmul.f32 %v1403, %v1403
      %v1406 = vmul.f32 %v1404, %v1404
      %v1407 = vadd.f32 %v1405, %v1406
      %1408 = vadd.xlane.f32.xlu0 %v1407
      %v1409 = vpop.xlane.xlu0 %1408
      %v1410 = vrot.slane %v1409, 4
      %v1411 = vadd.f32 %v1409, %v1410
      %v1412 = vrot.slane %v1411, 2
      %v1413 = vadd.f32 %v1411, %v1412
      %v1414 = vrot.slane %v1413, 1
      %v1415 = vadd.f32 %v1413, %v1414
      %s1416 = vtos %v1415
      %v1417 = vrcp.pop 2048.0
      %s1418 = vtos %v1417
      %s1419 = smul.f32 %s1416, %s1418
      %s1420 = sadd.f32 %s1419, 1e-05
      %v1421 = vstv %s1420
      %v1422 = vrsqrt.pop %v1421
      %s1423 = vtos %v1422
      %v1424 = vstv %s1423
      %v1425 = vmul.f32 %v1403, %v1424
      %v1426 = vmul.f32 %v1404, %v1424
      %v1427 = vld [vmem:[%s8] sm:$0xff]
      %v1428 = vld [vmem:[%s8 + $0x8] sm:$0xff]
      %v1429 = vld [vmem:[%s8 + $0x10] sm:$0xff]
      %v1430 = vld [vmem:[%s8 + $0x18] sm:$0xff]
      %v1431 = vld [vmem:[%s8 + $0x20] sm:$0xff]
      %v1432 = vld [vmem:[%s8 + $0x28] sm:$0xff]
      %v1433 = vld [vmem:[%s8 + $0x30] sm:$0xff]
      %v1434 = vld [vmem:[%s8 + $0x38] sm:$0xff]
      %v1435 = vld [vmem:[%s8 + $0x40] sm:$0xff]
      %v1436 = vld [vmem:[%s8 + $0x48] sm:$0xff]
      %v1437 = vld [vmem:[%s8 + $0x50] sm:$0xff]
      %v1438 = vld [vmem:[%s8 + $0x58] sm:$0xff]
      %v1439 = vld [vmem:[%s8 + $0x60] sm:$0xff]
      %v1440 = vld [vmem:[%s8 + $0x68] sm:$0xff]
      %v1441 = vld [vmem:[%s8 + $0x70] sm:$0xff]
      %v1442 = vld [vmem:[%s8 + $0x78] sm:$0xff]
      %v1443 = vld [vmem:[%s9] sm:$0x1]
      %v1445 = vlaneseq
      %v1446 = vshrl.u32 %v1445, 7
      %v1447 = vsub.s32 0, %v1446
      %v1448 = vrot.slane %v1443, %v1447
      %1450 = vmatprep.subr.mxu0 0.0
      %1451 = vmatpush1.msra.mxu0 %v1442
      %1452 = vmatprep.subr.mxu0 0.0
      %1453 = vmatpush1.msra.mxu0 %v1441
      %1454 = vmatprep.subr.mxu0 0.0
      %1455 = vmatpush1.msra.mxu0 %v1440
      %1456 = vmatprep.subr.mxu0 0.0
      %1457 = vmatpush1.msra.mxu0 %v1439
      %1458 = vmatprep.subr.mxu0 0.0
      %1459 = vmatpush1.msra.mxu0 %v1438
      %1460 = vmatprep.subr.mxu0 0.0
      %1461 = vmatpush1.msra.mxu0 %v1437
      %1462 = vmatprep.subr.mxu0 0.0
      %1463 = vmatpush1.msra.mxu0 %v1436
      %1464 = vmatprep.subr.mxu0 0.0
      %1465 = vmatpush1.msra.mxu0 %v1435
      %1466 = vmatprep.subr.mxu0 0.0
      %1467 = vmatpush1.msra.mxu0 %v1434
      %1468 = vmatprep.subr.mxu0 0.0
      %1469 = vmatpush1.msra.mxu0 %v1433
      %1470 = vmatprep.subr.mxu0 0.0
      %1471 = vmatpush1.msra.mxu0 %v1432
      %1472 = vmatprep.subr.mxu0 0.0
      %1473 = vmatpush1.msra.mxu0 %v1431
      %1474 = vmatprep.subr.mxu0 0.0
      %1475 = vmatpush1.msra.mxu0 %v1430
      %1476 = vmatprep.subr.mxu0 0.0
      %1477 = vmatpush1.msra.mxu0 %v1429
      %1478 = vmatprep.subr.mxu0 0.0
      %1479 = vmatpush1.msra.mxu0 %v1428
      %1480 = vmatprep.subr.mxu0 0.0
      %1481 = vmatpush1.msra.mxu0 %v1427
      %1482 = vmatprep.subr.mxu0 0.0
      %1483 = vmatpush2.msra.mxu0 0.0
      %1484 = vmatprep.subr.mxu0 0.0
      %1485 = vmatpush2.msra.mxu0 0.0
      %1486 = vmatprep.subr.mxu0 0.0
      %1487 = vmatpush2.msra.mxu0 0.0
      %1488 = vmatprep.subr.mxu0 0.0
      %1489 = vmatpush2.msra.mxu0 0.0
      %1490 = vmatprep.subr.mxu0 0.0
      %1491 = vmatpush2.msra.mxu0 0.0
      %1492 = vmatprep.subr.mxu0 0.0
      %1493 = vmatpush2.msra.mxu0 0.0
      %1494 = vmatprep.subr.mxu0 0.0
      %1495 = vmatpush2.msra.mxu0 0.0
      %1496 = vmatprep.subr.mxu0 0.0
      %1497 = vmatpush2.msra.mxu0 0.0
      %1498 = vmatprep.subr.mxu0 0.0
      %1499 = vmatpush2.msra.mxu0 0.0
      %1500 = vmatprep.subr.mxu0 0.0
      %1501 = vmatpush2.msra.mxu0 0.0
      %1502 = vmatprep.subr.mxu0 0.0
      %1503 = vmatpush2.msra.mxu0 0.0
      %1504 = vmatprep.subr.mxu0 0.0
      %1505 = vmatpush2.msra.mxu0 0.0
      %1506 = vmatprep.subr.mxu0 0.0
      %1507 = vmatpush2.msra.mxu0 0.0
      %1508 = vmatprep.subr.mxu0 0.0
      %1509 = vmatpush2.msra.mxu0 0.0
      %1510 = vmatprep.subr.mxu0 0.0
      %1511 = vmatpush2.msra.mxu0 0.0
      %1512 = vmatprep.subr.mxu0 0.0
      %1513 = vmatpush2.msra.mxu0 0.0
      %1514 = vmatprep.mubr.f32.mxu0 0.0
      %1515 = vmatmul.mubr.f32.gmra.mxu0 %v1425
      %v1516 = vpop.f32.mrf.mxu0
      %v1517 = vadd.f32 %v1448, %v1516
      %v1518 = vpop.f32.mrf.mxu0
      %1519 = vmatprep.mubr.f32.mxu0 0.0
      %1520 = vmatmul.mubr.f32.gmra.mxu0 %v1426
      %v1521 = vpop.f32.mrf.mxu0
      %v1522 = vadd.f32 %v1448, %v1521
      %v1523 = vpop.f32.mrf.mxu0
      %1524 = vdwg.mxu0
      %v1525 = vxor.u32 %v1517, 2147483648
      %v1526 = vxor.u32 %v1522, 2147483648
      %v1527 = vmul.f32 %v1525, 1.442695
      %v1528 = vpow.pop %v1527
      %v1529 = vmul.f32 %v1526, 1.442695
      %v1530 = vpow.pop %v1529
      %v1531 = vadd.f32 %v1528, 1.0
      %v1532 = vadd.f32 %v1530, 1.0
      %v1533 = vrcp.pop %v1531
      %v1534 = vmul.f32 1.0, %v1533
      %v1535 = vrcp.pop %v1532
      %v1536 = vmul.f32 1.0, %v1535
      %v1537 = vmul.f32 %v1517, %v1534
      %v1538 = vmul.f32 %v1522, %v1536
      %v1539 = vld [vmem:[%s10] sm:$0xff]
      %v1540 = vld [vmem:[%s10 + $0x8] sm:$0xff]
      %v1541 = vld [vmem:[%s10 + $0x10] sm:$0xff]
      %v1542 = vld [vmem:[%s10 + $0x18] sm:$0xff]
      %v1543 = vld [vmem:[%s10 + $0x20] sm:$0xff]
      %v1544 = vld [vmem:[%s10 + $0x28] sm:$0xff]
      %v1545 = vld [vmem:[%s10 + $0x30] sm:$0xff]
      %v1546 = vld [vmem:[%s10 + $0x38] sm:$0xff]
      %v1547 = vld [vmem:[%s10 + $0x40] sm:$0xff]
      %v1548 = vld [vmem:[%s10 + $0x48] sm:$0xff]
      %v1549 = vld [vmem:[%s10 + $0x50] sm:$0xff]
      %v1550 = vld [vmem:[%s10 + $0x58] sm:$0xff]
      %v1551 = vld [vmem:[%s10 + $0x60] sm:$0xff]
      %v1552 = vld [vmem:[%s10 + $0x68] sm:$0xff]
      %v1553 = vld [vmem:[%s10 + $0x70] sm:$0xff]
      %v1554 = vld [vmem:[%s10 + $0x78] sm:$0xff]
      %v1555 = vld [vmem:[%s11] sm:$0x1]
      %v1557 = vlaneseq
      %v1558 = vshrl.u32 %v1557, 7
      %v1559 = vsub.s32 0, %v1558
      %v1560 = vrot.slane %v1555, %v1559
      %1562 = vmatprep.subr.mxu0 0.0
      %1563 = vmatpush1.msra.mxu0 %v1554
      %1564 = vmatprep.subr.mxu0 0.0
      %1565 = vmatpush1.msra.mxu0 %v1553
      %1566 = vmatprep.subr.mxu0 0.0
      %1567 = vmatpush1.msra.mxu0 %v1552
      %1568 = vmatprep.subr.mxu0 0.0
      %1569 = vmatpush1.msra.mxu0 %v1551
      %1570 = vmatprep.subr.mxu0 0.0
      %1571 = vmatpush1.msra.mxu0 %v1550
      %1572 = vmatprep.subr.mxu0 0.0
      %1573 = vmatpush1.msra.mxu0 %v1549
      %1574 = vmatprep.subr.mxu0 0.0
      %1575 = vmatpush1.msra.mxu0 %v1548
      %1576 = vmatprep.subr.mxu0 0.0
      %1577 = vmatpush1.msra.mxu0 %v1547
      %1578 = vmatprep.subr.mxu0 0.0
      %1579 = vmatpush1.msra.mxu0 %v1546
      %1580 = vmatprep.subr.mxu0 0.0
      %1581 = vmatpush1.msra.mxu0 %v1545
      %1582 = vmatprep.subr.mxu0 0.0
      %1583 = vmatpush1.msra.mxu0 %v1544
      %1584 = vmatprep.subr.mxu0 0.0
      %1585 = vmatpush1.msra.mxu0 %v1543
      %1586 = vmatprep.subr.mxu0 0.0
      %1587 = vmatpush1.msra.mxu0 %v1542
      %1588 = vmatprep.subr.mxu0 0.0
      %1589 = vmatpush1.msra.mxu0 %v1541
      %1590 = vmatprep.subr.mxu0 0.0
      %1591 = vmatpush1.msra.mxu0 %v1540
      %1592 = vmatprep.subr.mxu0 0.0
      %1593 = vmatpush1.msra.mxu0 %v1539
      %1594 = vmatprep.subr.mxu0 0.0
      %1595 = vmatpush2.msra.mxu0 0.0
      %1596 = vmatprep.subr.mxu0 0.0
      %1597 = vmatpush2.msra.mxu0 0.0
      %1598 = vmatprep.subr.mxu0 0.0
      %1599 = vmatpush2.msra.mxu0 0.0
      %1600 = vmatprep.subr.mxu0 0.0
      %1601 = vmatpush2.msra.mxu0 0.0
      %1602 = vmatprep.subr.mxu0 0.0
      %1603 = vmatpush2.msra.mxu0 0.0
      %1604 = vmatprep.subr.mxu0 0.0
      %1605 = vmatpush2.msra.mxu0 0.0
      %1606 = vmatprep.subr.mxu0 0.0
      %1607 = vmatpush2.msra.mxu0 0.0
      %1608 = vmatprep.subr.mxu0 0.0
      %1609 = vmatpush2.msra.mxu0 0.0
      %1610 = vmatprep.subr.mxu0 0.0
      %1611 = vmatpush2.msra.mxu0 0.0
      %1612 = vmatprep.subr.mxu0 0.0
      %1613 = vmatpush2.msra.mxu0 0.0
      %1614 = vmatprep.subr.mxu0 0.0
      %1615 = vmatpush2.msra.mxu0 0.0
      %1616 = vmatprep.subr.mxu0 0.0
      %1617 = vmatpush2.msra.mxu0 0.0
      %1618 = vmatprep.subr.mxu0 0.0
      %1619 = vmatpush2.msra.mxu0 0.0
      %1620 = vmatprep.subr.mxu0 0.0
      %1621 = vmatpush2.msra.mxu0 0.0
      %1622 = vmatprep.subr.mxu0 0.0
      %1623 = vmatpush2.msra.mxu0 0.0
      %1624 = vmatprep.subr.mxu0 0.0
      %1625 = vmatpush2.msra.mxu0 0.0
      %1626 = vmatprep.mubr.f32.mxu0 0.0
      %1627 = vmatmul.mubr.f32.gmra.mxu0 %v1537
      %v1628 = vpop.f32.mrf.mxu0
      %v1629 = vadd.f32 %v1560, %v1628
      %v1630 = vpop.f32.mrf.mxu0
      %1631 = vmatprep.mubr.f32.mxu0 0.0
      %1632 = vmatmul.mubr.f32.gmra.mxu0 %v1538
      %v1633 = vpop.f32.mrf.mxu0
      %v1634 = vadd.f32 %v1560, %v1633
      %v1635 = vpop.f32.mrf.mxu0
      %1636 = vdwg.mxu0
      %v1637 = vmul.f32 %v1425, %v833
      %v1638 = vmul.f32 %v1426, %v833
      %v1639 = vadd.f32 %v1629, %v1637
      %v1640 = vadd.f32 %v1634, %v1638
      %v1641 = vadd.f32 %v1639, %v1387
      %v1642 = vadd.f32 %v1640, %v1388
      %1643 = vst [vmem:[#allocation2 + $0x8] sm:$0xff] %v1641
      %1644 = vst [vmem:[#allocation2 + $0x10] sm:$0xff] %v1642
      %v1645 = vld [vmem:[#allocation2 + $0x7] sm:$0xff]
      %v1646 = vld [vmem:[#allocation2 + $0xf] sm:$0xff]
      %v1647 = vld [vmem:[%s12] sm:$0xff]
      %v1648 = vld [vmem:[%s12 + $0x8] sm:$0xff]
      %v1649 = vld [vmem:[%s12 + $0x10] sm:$0xff]
      %v1650 = vld [vmem:[%s12 + $0x18] sm:$0xff]
      %v1651 = vld [vmem:[%s12 + $0x20] sm:$0xff]
      %v1652 = vld [vmem:[%s12 + $0x28] sm:$0xff]
      %v1653 = vld [vmem:[%s12 + $0x30] sm:$0xff]
      %v1654 = vld [vmem:[%s12 + $0x38] sm:$0xff]
      %v1655 = vld [vmem:[%s12 + $0x40] sm:$0xff]
      %v1656 = vld [vmem:[%s12 + $0x48] sm:$0xff]
      %v1657 = vld [vmem:[%s12 + $0x50] sm:$0xff]
      %v1658 = vld [vmem:[%s12 + $0x58] sm:$0xff]
      %v1659 = vld [vmem:[%s12 + $0x60] sm:$0xff]
      %v1660 = vld [vmem:[%s12 + $0x68] sm:$0xff]
      %v1661 = vld [vmem:[%s12 + $0x70] sm:$0xff]
      %v1662 = vld [vmem:[%s12 + $0x78] sm:$0xff]
      %v1663 = vld [vmem:[%s13] sm:$0x1]
      %v1665 = vlaneseq
      %v1666 = vshrl.u32 %v1665, 7
      %v1667 = vsub.s32 0, %v1666
      %v1668 = vrot.slane %v1663, %v1667
      %1670 = vmatprep.subr.mxu0 0.0
      %1671 = vmatpush1.msra.mxu0 %v1662
      %1672 = vmatprep.subr.mxu0 0.0
      %1673 = vmatpush1.msra.mxu0 %v1661
      %1674 = vmatprep.subr.mxu0 0.0
      %1675 = vmatpush1.msra.mxu0 %v1660
      %1676 = vmatprep.subr.mxu0 0.0
      %1677 = vmatpush1.msra.mxu0 %v1659
      %1678 = vmatprep.subr.mxu0 0.0
      %1679 = vmatpush1.msra.mxu0 %v1658
      %1680 = vmatprep.subr.mxu0 0.0
      %1681 = vmatpush1.msra.mxu0 %v1657
      %1682 = vmatprep.subr.mxu0 0.0
      %1683 = vmatpush1.msra.mxu0 %v1656
      %1684 = vmatprep.subr.mxu0 0.0
      %1685 = vmatpush1.msra.mxu0 %v1655
      %1686 = vmatprep.subr.mxu0 0.0
      %1687 = vmatpush1.msra.mxu0 %v1654
      %1688 = vmatprep.subr.mxu0 0.0
      %1689 = vmatpush1.msra.mxu0 %v1653
      %1690 = vmatprep.subr.mxu0 0.0
      %1691 = vmatpush1.msra.mxu0 %v1652
      %1692 = vmatprep.subr.mxu0 0.0
      %1693 = vmatpush1.msra.mxu0 %v1651
      %1694 = vmatprep.subr.mxu0 0.0
      %1695 = vmatpush1.msra.mxu0 %v1650
      %1696 = vmatprep.subr.mxu0 0.0
      %1697 = vmatpush1.msra.mxu0 %v1649
      %1698 = vmatprep.subr.mxu0 0.0
      %1699 = vmatpush1.msra.mxu0 %v1648
      %1700 = vmatprep.subr.mxu0 0.0
      %1701 = vmatpush1.msra.mxu0 %v1647
      %1702 = vmatprep.subr.mxu0 0.0
      %1703 = vmatpush2.msra.mxu0 0.0
      %1704 = vmatprep.subr.mxu0 0.0
      %1705 = vmatpush2.msra.mxu0 0.0
      %1706 = vmatprep.subr.mxu0 0.0
      %1707 = vmatpush2.msra.mxu0 0.0
      %1708 = vmatprep.subr.mxu0 0.0
      %1709 = vmatpush2.msra.mxu0 0.0
      %1710 = vmatprep.subr.mxu0 0.0
      %1711 = vmatpush2.msra.mxu0 0.0
      %1712 = vmatprep.subr.mxu0 0.0
      %1713 = vmatpush2.msra.mxu0 0.0
      %1714 = vmatprep.subr.mxu0 0.0
      %1715 = vmatpush2.msra.mxu0 0.0
      %1716 = vmatprep.subr.mxu0 0.0
      %1717 = vmatpush2.msra.mxu0 0.0
      %1718 = vmatprep.subr.mxu0 0.0
      %1719 = vmatpush2.msra.mxu0 0.0
      %1720 = vmatprep.subr.mxu0 0.0
      %1721 = vmatpush2.msra.mxu0 0.0
      %1722 = vmatprep.subr.mxu0 0.0
      %1723 = vmatpush2.msra.mxu0 0.0
      %1724 = vmatprep.subr.mxu0 0.0
      %1725 = vmatpush2.msra.mxu0 0.0
      %1726 = vmatprep.subr.mxu0 0.0
      %1727 = vmatpush2.msra.mxu0 0.0
      %1728 = vmatprep.subr.mxu0 0.0
      %1729 = vmatpush2.msra.mxu0 0.0
      %1730 = vmatprep.subr.mxu0 0.0
      %1731 = vmatpush2.msra.mxu0 0.0
      %1732 = vmatprep.subr.mxu0 0.0
      %1733 = vmatpush2.msra.mxu0 0.0
      %1734 = vmatprep.mubr.f32.mxu0 0.0
      %1735 = vmatmul.mubr.f32.gmra.mxu0 %v1645
      %v1736 = vpop.f32.mrf.mxu0
      %v1737 = vadd.f32 %v1668, %v1736
      %v1738 = vpop.f32.mrf.mxu0
      %1739 = vmatprep.mubr.f32.mxu0 0.0
      %1740 = vmatmul.mubr.f32.gmra.mxu0 %v1646
      %v1741 = vpop.f32.mrf.mxu0
      %v1742 = vadd.f32 %v1668, %v1741
      %v1743 = vpop.f32.mrf.mxu0
      %1744 = vdwg.mxu0
      %v1745 = vld [vmem:[#allocation2 + $0x8] sm:$0xff]
      %v1746 = vld [vmem:[#allocation2 + $0x10] sm:$0xff]
      %s1747 = scalar_lea.vmem %s12, 128
      %v1748 = vld [vmem:[%s1747] sm:$0xff]
      %v1749 = vld [vmem:[%s1747 + $0x8] sm:$0xff]
      %v1750 = vld [vmem:[%s1747 + $0x10] sm:$0xff]
      %v1751 = vld [vmem:[%s1747 + $0x18] sm:$0xff]
      %v1752 = vld [vmem:[%s1747 + $0x20] sm:$0xff]
      %v1753 = vld [vmem:[%s1747 + $0x28] sm:$0xff]
      %v1754 = vld [vmem:[%s1747 + $0x30] sm:$0xff]
      %v1755 = vld [vmem:[%s1747 + $0x38] sm:$0xff]
      %v1756 = vld [vmem:[%s1747 + $0x40] sm:$0xff]
      %v1757 = vld [vmem:[%s1747 + $0x48] sm:$0xff]
      %v1758 = vld [vmem:[%s1747 + $0x50] sm:$0xff]
      %v1759 = vld [vmem:[%s1747 + $0x58] sm:$0xff]
      %v1760 = vld [vmem:[%s1747 + $0x60] sm:$0xff]
      %v1761 = vld [vmem:[%s1747 + $0x68] sm:$0xff]
      %v1762 = vld [vmem:[%s1747 + $0x70] sm:$0xff]
      %v1763 = vld [vmem:[%s1747 + $0x78] sm:$0xff]
      %1764 = vmatprep.subr.mxu0 0.0
      %1765 = vmatpush1.msra.mxu0 %v1763
      %1766 = vmatprep.subr.mxu0 0.0
      %1767 = vmatpush1.msra.mxu0 %v1762
      %1768 = vmatprep.subr.mxu0 0.0
      %1769 = vmatpush1.msra.mxu0 %v1761
      %1770 = vmatprep.subr.mxu0 0.0
      %1771 = vmatpush1.msra.mxu0 %v1760
      %1772 = vmatprep.subr.mxu0 0.0
      %1773 = vmatpush1.msra.mxu0 %v1759
      %1774 = vmatprep.subr.mxu0 0.0
      %1775 = vmatpush1.msra.mxu0 %v1758
      %1776 = vmatprep.subr.mxu0 0.0
      %1777 = vmatpush1.msra.mxu0 %v1757
      %1778 = vmatprep.subr.mxu0 0.0
      %1779 = vmatpush1.msra.mxu0 %v1756
      %1780 = vmatprep.subr.mxu0 0.0
      %1781 = vmatpush1.msra.mxu0 %v1755
      %1782 = vmatprep.subr.mxu0 0.0
      %1783 = vmatpush1.msra.mxu0 %v1754
      %1784 = vmatprep.subr.mxu0 0.0
      %1785 = vmatpush1.msra.mxu0 %v1753
      %1786 = vmatprep.subr.mxu0 0.0
      %1787 = vmatpush1.msra.mxu0 %v1752
      %1788 = vmatprep.subr.mxu0 0.0
      %1789 = vmatpush1.msra.mxu0 %v1751
      %1790 = vmatprep.subr.mxu0 0.0
      %1791 = vmatpush1.msra.mxu0 %v1750
      %1792 = vmatprep.subr.mxu0 0.0
      %1793 = vmatpush1.msra.mxu0 %v1749
      %1794 = vmatprep.subr.mxu0 0.0
      %1795 = vmatpush1.msra.mxu0 %v1748
      %1796 = vmatprep.subr.mxu0 0.0
      %1797 = vmatpush2.msra.mxu0 0.0
      %1798 = vmatprep.subr.mxu0 0.0
      %1799 = vmatpush2.msra.mxu0 0.0
      %1800 = vmatprep.subr.mxu0 0.0
      %1801 = vmatpush2.msra.mxu0 0.0
      %1802 = vmatprep.subr.mxu0 0.0
      %1803 = vmatpush2.msra.mxu0 0.0
      %1804 = vmatprep.subr.mxu0 0.0
      %1805 = vmatpush2.msra.mxu0 0.0
      %1806 = vmatprep.subr.mxu0 0.0
      %1807 = vmatpush2.msra.mxu0 0.0
      %1808 = vmatprep.subr.mxu0 0.0
      %1809 = vmatpush2.msra.mxu0 0.0
      %1810 = vmatprep.subr.mxu0 0.0
      %1811 = vmatpush2.msra.mxu0 0.0
      %1812 = vmatprep.subr.mxu0 0.0
      %1813 = vmatpush2.msra.mxu0 0.0
      %1814 = vmatprep.subr.mxu0 0.0
      %1815 = vmatpush2.msra.mxu0 0.0
      %1816 = vmatprep.subr.mxu0 0.0
      %1817 = vmatpush2.msra.mxu0 0.0
      %1818 = vmatprep.subr.mxu0 0.0
      %1819 = vmatpush2.msra.mxu0 0.0
      %1820 = vmatprep.subr.mxu0 0.0
      %1821 = vmatpush2.msra.mxu0 0.0
      %1822 = vmatprep.subr.mxu0 0.0
      %1823 = vmatpush2.msra.mxu0 0.0
      %1824 = vmatprep.subr.mxu0 0.0
      %1825 = vmatpush2.msra.mxu0 0.0
      %1826 = vmatprep.subr.mxu0 0.0
      %1827 = vmatpush2.msra.mxu0 0.0
      %1828 = vmatprep.mubr.f32.mxu0 0.0
      %1829 = vmatmul.mubr.f32.gmra.mxu0 %v1745
      %v1830 = vpop.f32.mrf.mxu0
      %v1831 = vadd.f32 0.0, %v1830
      %v1832 = vpop.f32.mrf.mxu0
      %1833 = vmatprep.mubr.f32.mxu0 0.0
      %1834 = vmatmul.mubr.f32.gmra.mxu0 %v1746
      %v1835 = vpop.f32.mrf.mxu0
      %v1836 = vadd.f32 0.0, %v1835
      %v1837 = vpop.f32.mrf.mxu0
      %1838 = vdwg.mxu0
      %v1839 = vadd.f32 %v1737, %v1831
      %v1840 = vadd.f32 %v1742, %v1836
      %v1841 = vld [vmem:[#allocation2 + $0x9] sm:$0xff]
      %v1842 = vld [vmem:[#allocation2 + $0x11] sm:$0xff]
      %s1843 = scalar_lea.vmem %s12, 256
      %v1844 = vld [vmem:[%s1843] sm:$0xff]
      %v1845 = vld [vmem:[%s1843 + $0x8] sm:$0xff]
      %v1846 = vld [vmem:[%s1843 + $0x10] sm:$0xff]
      %v1847 = vld [vmem:[%s1843 + $0x18] sm:$0xff]
      %v1848 = vld [vmem:[%s1843 + $0x20] sm:$0xff]
      %v1849 = vld [vmem:[%s1843 + $0x28] sm:$0xff]
      %v1850 = vld [vmem:[%s1843 + $0x30] sm:$0xff]
      %v1851 = vld [vmem:[%s1843 + $0x38] sm:$0xff]
      %v1852 = vld [vmem:[%s1843 + $0x40] sm:$0xff]
      %v1853 = vld [vmem:[%s1843 + $0x48] sm:$0xff]
      %v1854 = vld [vmem:[%s1843 + $0x50] sm:$0xff]
      %v1855 = vld [vmem:[%s1843 + $0x58] sm:$0xff]
      %v1856 = vld [vmem:[%s1843 + $0x60] sm:$0xff]
      %v1857 = vld [vmem:[%s1843 + $0x68] sm:$0xff]
      %v1858 = vld [vmem:[%s1843 + $0x70] sm:$0xff]
      %v1859 = vld [vmem:[%s1843 + $0x78] sm:$0xff]
      %1860 = vmatprep.subr.mxu0 0.0
      %1861 = vmatpush1.msra.mxu0 %v1859
      %1862 = vmatprep.subr.mxu0 0.0
      %1863 = vmatpush1.msra.mxu0 %v1858
      %1864 = vmatprep.subr.mxu0 0.0
      %1865 = vmatpush1.msra.mxu0 %v1857
      %1866 = vmatprep.subr.mxu0 0.0
      %1867 = vmatpush1.msra.mxu0 %v1856
      %1868 = vmatprep.subr.mxu0 0.0
      %1869 = vmatpush1.msra.mxu0 %v1855
      %1870 = vmatprep.subr.mxu0 0.0
      %1871 = vmatpush1.msra.mxu0 %v1854
      %1872 = vmatprep.subr.mxu0 0.0
      %1873 = vmatpush1.msra.mxu0 %v1853
      %1874 = vmatprep.subr.mxu0 0.0
      %1875 = vmatpush1.msra.mxu0 %v1852
      %1876 = vmatprep.subr.mxu0 0.0
      %1877 = vmatpush1.msra.mxu0 %v1851
      %1878 = vmatprep.subr.mxu0 0.0
      %1879 = vmatpush1.msra.mxu0 %v1850
      %1880 = vmatprep.subr.mxu0 0.0
      %1881 = vmatpush1.msra.mxu0 %v1849
      %1882 = vmatprep.subr.mxu0 0.0
      %1883 = vmatpush1.msra.mxu0 %v1848
      %1884 = vmatprep.subr.mxu0 0.0
      %1885 = vmatpush1.msra.mxu0 %v1847
      %1886 = vmatprep.subr.mxu0 0.0
      %1887 = vmatpush1.msra.mxu0 %v1846
      %1888 = vmatprep.subr.mxu0 0.0
      %1889 = vmatpush1.msra.mxu0 %v1845
      %1890 = vmatprep.subr.mxu0 0.0
      %1891 = vmatpush1.msra.mxu0 %v1844
      %1892 = vmatprep.subr.mxu0 0.0
      %1893 = vmatpush2.msra.mxu0 0.0
      %1894 = vmatprep.subr.mxu0 0.0
      %1895 = vmatpush2.msra.mxu0 0.0
      %1896 = vmatprep.subr.mxu0 0.0
      %1897 = vmatpush2.msra.mxu0 0.0
      %1898 = vmatprep.subr.mxu0 0.0
      %1899 = vmatpush2.msra.mxu0 0.0
      %1900 = vmatprep.subr.mxu0 0.0
      %1901 = vmatpush2.msra.mxu0 0.0
      %1902 = vmatprep.subr.mxu0 0.0
      %1903 = vmatpush2.msra.mxu0 0.0
      %1904 = vmatprep.subr.mxu0 0.0
      %1905 = vmatpush2.msra.mxu0 0.0
      %1906 = vmatprep.subr.mxu0 0.0
      %1907 = vmatpush2.msra.mxu0 0.0
      %1908 = vmatprep.subr.mxu0 0.0
      %1909 = vmatpush2.msra.mxu0 0.0
      %1910 = vmatprep.subr.mxu0 0.0
      %1911 = vmatpush2.msra.mxu0 0.0
      %1912 = vmatprep.subr.mxu0 0.0
      %1913 = vmatpush2.msra.mxu0 0.0
      %1914 = vmatprep.subr.mxu0 0.0
      %1915 = vmatpush2.msra.mxu0 0.0
      %1916 = vmatprep.subr.mxu0 0.0
      %1917 = vmatpush2.msra.mxu0 0.0
      %1918 = vmatprep.subr.mxu0 0.0
      %1919 = vmatpush2.msra.mxu0 0.0
      %1920 = vmatprep.subr.mxu0 0.0
      %1921 = vmatpush2.msra.mxu0 0.0
      %1922 = vmatprep.subr.mxu0 0.0
      %1923 = vmatpush2.msra.mxu0 0.0
      %1924 = vmatprep.mubr.f32.mxu0 0.0
      %1925 = vmatmul.mubr.f32.gmra.mxu0 %v1841
      %v1926 = vpop.f32.mrf.mxu0
      %v1927 = vadd.f32 0.0, %v1926
      %v1928 = vpop.f32.mrf.mxu0
      %1929 = vmatprep.mubr.f32.mxu0 0.0
      %1930 = vmatmul.mubr.f32.gmra.mxu0 %v1842
      %v1931 = vpop.f32.mrf.mxu0
      %v1932 = vadd.f32 0.0, %v1931
      %v1933 = vpop.f32.mrf.mxu0
      %1934 = vdwg.mxu0
      %v1935 = vadd.f32 %v1839, %v1927
      %v1936 = vadd.f32 %v1840, %v1932
      %v1937 = vadd.f32 %v1935, %v1936
      %1938 = vadd.xlane.f32.xlu0 %v1937
      %v1939 = vpop.xlane.xlu0 %1938
      %v1940 = vrot.slane %v1939, 4
      %v1941 = vadd.f32 %v1939, %v1940
      %v1942 = vrot.slane %v1941, 2
      %v1943 = vadd.f32 %v1941, %v1942
      %v1944 = vrot.slane %v1943, 1
      %v1945 = vadd.f32 %v1943, %v1944
      %s1946 = vtos %v1945
      %v1947 = vrcp.pop 2048.0
      %s1948 = vtos %v1947
      %s1949 = smul.f32 %s1946, %s1948
      %v1950 = vstv %s1949
      %v1951 = vsub.f32 %v1935, %v1950
      %v1952 = vsub.f32 %v1936, %v1950
      %v1953 = vmul.f32 %v1951, %v1951
      %v1954 = vmul.f32 %v1952, %v1952
      %v1955 = vadd.f32 %v1953, %v1954
      %1956 = vadd.xlane.f32.xlu0 %v1955
      %v1957 = vpop.xlane.xlu0 %1956
      %v1958 = vrot.slane %v1957, 4
      %v1959 = vadd.f32 %v1957, %v1958
      %v1960 = vrot.slane %v1959, 2
      %v1961 = vadd.f32 %v1959, %v1960
      %v1962 = vrot.slane %v1961, 1
      %v1963 = vadd.f32 %v1961, %v1962
      %s1964 = vtos %v1963
      %v1965 = vrcp.pop 2048.0
      %s1966 = vtos %v1965
      %s1967 = smul.f32 %s1964, %s1966
      %s1968 = sadd.f32 %s1967, 1e-05
      %v1969 = vstv %s1968
      %v1970 = vrsqrt.pop %v1969
      %s1971 = vtos %v1970
      %v1972 = vstv %s1971
      %v1973 = vmul.f32 %v1951, %v1972
      %v1974 = vmul.f32 %v1952, %v1972
      %v1975 = vld [vmem:[%s8] sm:$0xff]
      %v1976 = vld [vmem:[%s8 + $0x8] sm:$0xff]
      %v1977 = vld [vmem:[%s8 + $0x10] sm:$0xff]
      %v1978 = vld [vmem:[%s8 + $0x18] sm:$0xff]
      %v1979 = vld [vmem:[%s8 + $0x20] sm:$0xff]
      %v1980 = vld [vmem:[%s8 + $0x28] sm:$0xff]
      %v1981 = vld [vmem:[%s8 + $0x30] sm:$0xff]
      %v1982 = vld [vmem:[%s8 + $0x38] sm:$0xff]
      %v1983 = vld [vmem:[%s8 + $0x40] sm:$0xff]
      %v1984 = vld [vmem:[%s8 + $0x48] sm:$0xff]
      %v1985 = vld [vmem:[%s8 + $0x50] sm:$0xff]
      %v1986 = vld [vmem:[%s8 + $0x58] sm:$0xff]
      %v1987 = vld [vmem:[%s8 + $0x60] sm:$0xff]
      %v1988 = vld [vmem:[%s8 + $0x68] sm:$0xff]
      %v1989 = vld [vmem:[%s8 + $0x70] sm:$0xff]
      %v1990 = vld [vmem:[%s8 + $0x78] sm:$0xff]
      %v1991 = vld [vmem:[%s9] sm:$0x1]
      %v1993 = vlaneseq
      %v1994 = vshrl.u32 %v1993, 7
      %v1995 = vsub.s32 0, %v1994
      %v1996 = vrot.slane %v1991, %v1995
      %1998 = vmatprep.subr.mxu0 0.0
      %1999 = vmatpush1.msra.mxu0 %v1990
      %2000 = vmatprep.subr.mxu0 0.0
      %2001 = vmatpush1.msra.mxu0 %v1989
      %2002 = vmatprep.subr.mxu0 0.0
      %2003 = vmatpush1.msra.mxu0 %v1988
      %2004 = vmatprep.subr.mxu0 0.0
      %2005 = vmatpush1.msra.mxu0 %v1987
      %2006 = vmatprep.subr.mxu0 0.0
      %2007 = vmatpush1.msra.mxu0 %v1986
      %2008 = vmatprep.subr.mxu0 0.0
      %2009 = vmatpush1.msra.mxu0 %v1985
      %2010 = vmatprep.subr.mxu0 0.0
      %2011 = vmatpush1.msra.mxu0 %v1984
      %2012 = vmatprep.subr.mxu0 0.0
      %2013 = vmatpush1.msra.mxu0 %v1983
      %2014 = vmatprep.subr.mxu0 0.0
      %2015 = vmatpush1.msra.mxu0 %v1982
      %2016 = vmatprep.subr.mxu0 0.0
      %2017 = vmatpush1.msra.mxu0 %v1981
      %2018 = vmatprep.subr.mxu0 0.0
      %2019 = vmatpush1.msra.mxu0 %v1980
      %2020 = vmatprep.subr.mxu0 0.0
      %2021 = vmatpush1.msra.mxu0 %v1979
      %2022 = vmatprep.subr.mxu0 0.0
      %2023 = vmatpush1.msra.mxu0 %v1978
      %2024 = vmatprep.subr.mxu0 0.0
      %2025 = vmatpush1.msra.mxu0 %v1977
      %2026 = vmatprep.subr.mxu0 0.0
      %2027 = vmatpush1.msra.mxu0 %v1976
      %2028 = vmatprep.subr.mxu0 0.0
      %2029 = vmatpush1.msra.mxu0 %v1975
      %2030 = vmatprep.subr.mxu0 0.0
      %2031 = vmatpush2.msra.mxu0 0.0
      %2032 = vmatprep.subr.mxu0 0.0
      %2033 = vmatpush2.msra.mxu0 0.0
      %2034 = vmatprep.subr.mxu0 0.0
      %2035 = vmatpush2.msra.mxu0 0.0
      %2036 = vmatprep.subr.mxu0 0.0
      %2037 = vmatpush2.msra.mxu0 0.0
      %2038 = vmatprep.subr.mxu0 0.0
      %2039 = vmatpush2.msra.mxu0 0.0
      %2040 = vmatprep.subr.mxu0 0.0
      %2041 = vmatpush2.msra.mxu0 0.0
      %2042 = vmatprep.subr.mxu0 0.0
      %2043 = vmatpush2.msra.mxu0 0.0
      %2044 = vmatprep.subr.mxu0 0.0
      %2045 = vmatpush2.msra.mxu0 0.0
      %2046 = vmatprep.subr.mxu0 0.0
      %2047 = vmatpush2.msra.mxu0 0.0
      %2048 = vmatprep.subr.mxu0 0.0
      %2049 = vmatpush2.msra.mxu0 0.0
      %2050 = vmatprep.subr.mxu0 0.0
      %2051 = vmatpush2.msra.mxu0 0.0
      %2052 = vmatprep.subr.mxu0 0.0
      %2053 = vmatpush2.msra.mxu0 0.0
      %2054 = vmatprep.subr.mxu0 0.0
      %2055 = vmatpush2.msra.mxu0 0.0
      %2056 = vmatprep.subr.mxu0 0.0
      %2057 = vmatpush2.msra.mxu0 0.0
      %2058 = vmatprep.subr.mxu0 0.0
      %2059 = vmatpush2.msra.mxu0 0.0
      %2060 = vmatprep.subr.mxu0 0.0
      %2061 = vmatpush2.msra.mxu0 0.0
      %2062 = vmatprep.mubr.f32.mxu0 0.0
      %2063 = vmatmul.mubr.f32.gmra.mxu0 %v1973
      %v2064 = vpop.f32.mrf.mxu0
      %v2065 = vadd.f32 %v1996, %v2064
      %v2066 = vpop.f32.mrf.mxu0
      %2067 = vmatprep.mubr.f32.mxu0 0.0
      %2068 = vmatmul.mubr.f32.gmra.mxu0 %v1974
      %v2069 = vpop.f32.mrf.mxu0
      %v2070 = vadd.f32 %v1996, %v2069
      %v2071 = vpop.f32.mrf.mxu0
      %2072 = vdwg.mxu0
      %v2073 = vxor.u32 %v2065, 2147483648
      %v2074 = vxor.u32 %v2070, 2147483648
      %v2075 = vmul.f32 %v2073, 1.442695
      %v2076 = vpow.pop %v2075
      %v2077 = vmul.f32 %v2074, 1.442695
      %v2078 = vpow.pop %v2077
      %v2079 = vadd.f32 %v2076, 1.0
      %v2080 = vadd.f32 %v2078, 1.0
      %v2081 = vrcp.pop %v2079
      %v2082 = vmul.f32 1.0, %v2081
      %v2083 = vrcp.pop %v2080
      %v2084 = vmul.f32 1.0, %v2083
      %v2085 = vmul.f32 %v2065, %v2082
      %v2086 = vmul.f32 %v2070, %v2084
      %v2087 = vld [vmem:[%s10] sm:$0xff]
      %v2088 = vld [vmem:[%s10 + $0x8] sm:$0xff]
      %v2089 = vld [vmem:[%s10 + $0x10] sm:$0xff]
      %v2090 = vld [vmem:[%s10 + $0x18] sm:$0xff]
      %v2091 = vld [vmem:[%s10 + $0x20] sm:$0xff]
      %v2092 = vld [vmem:[%s10 + $0x28] sm:$0xff]
      %v2093 = vld [vmem:[%s10 + $0x30] sm:$0xff]
      %v2094 = vld [vmem:[%s10 + $0x38] sm:$0xff]
      %v2095 = vld [vmem:[%s10 + $0x40] sm:$0xff]
      %v2096 = vld [vmem:[%s10 + $0x48] sm:$0xff]
      %v2097 = vld [vmem:[%s10 + $0x50] sm:$0xff]
      %v2098 = vld [vmem:[%s10 + $0x58] sm:$0xff]
      %v2099 = vld [vmem:[%s10 + $0x60] sm:$0xff]
      %v2100 = vld [vmem:[%s10 + $0x68] sm:$0xff]
      %v2101 = vld [vmem:[%s10 + $0x70] sm:$0xff]
      %v2102 = vld [vmem:[%s10 + $0x78] sm:$0xff]
      %v2103 = vld [vmem:[%s11] sm:$0x1]
      %v2105 = vlaneseq
      %v2106 = vshrl.u32 %v2105, 7
      %v2107 = vsub.s32 0, %v2106
      %v2108 = vrot.slane %v2103, %v2107
      %2110 = vmatprep.subr.mxu0 0.0
      %2111 = vmatpush1.msra.mxu0 %v2102
      %2112 = vmatprep.subr.mxu0 0.0
      %2113 = vmatpush1.msra.mxu0 %v2101
      %2114 = vmatprep.subr.mxu0 0.0
      %2115 = vmatpush1.msra.mxu0 %v2100
      %2116 = vmatprep.subr.mxu0 0.0
      %2117 = vmatpush1.msra.mxu0 %v2099
      %2118 = vmatprep.subr.mxu0 0.0
      %2119 = vmatpush1.msra.mxu0 %v2098
      %2120 = vmatprep.subr.mxu0 0.0
      %2121 = vmatpush1.msra.mxu0 %v2097
      %2122 = vmatprep.subr.mxu0 0.0
      %2123 = vmatpush1.msra.mxu0 %v2096
      %2124 = vmatprep.subr.mxu0 0.0
      %2125 = vmatpush1.msra.mxu0 %v2095
      %2126 = vmatprep.subr.mxu0 0.0
      %2127 = vmatpush1.msra.mxu0 %v2094
      %2128 = vmatprep.subr.mxu0 0.0
      %2129 = vmatpush1.msra.mxu0 %v2093
      %2130 = vmatprep.subr.mxu0 0.0
      %2131 = vmatpush1.msra.mxu0 %v2092
      %2132 = vmatprep.subr.mxu0 0.0
      %2133 = vmatpush1.msra.mxu0 %v2091
      %2134 = vmatprep.subr.mxu0 0.0
      %2135 = vmatpush1.msra.mxu0 %v2090
      %2136 = vmatprep.subr.mxu0 0.0
      %2137 = vmatpush1.msra.mxu0 %v2089
      %2138 = vmatprep.subr.mxu0 0.0
      %2139 = vmatpush1.msra.mxu0 %v2088
      %2140 = vmatprep.subr.mxu0 0.0
      %2141 = vmatpush1.msra.mxu0 %v2087
      %2142 = vmatprep.subr.mxu0 0.0
      %2143 = vmatpush2.msra.mxu0 0.0
      %2144 = vmatprep.subr.mxu0 0.0
      %2145 = vmatpush2.msra.mxu0 0.0
      %2146 = vmatprep.subr.mxu0 0.0
      %2147 = vmatpush2.msra.mxu0 0.0
      %2148 = vmatprep.subr.mxu0 0.0
      %2149 = vmatpush2.msra.mxu0 0.0
      %2150 = vmatprep.subr.mxu0 0.0
      %2151 = vmatpush2.msra.mxu0 0.0
      %2152 = vmatprep.subr.mxu0 0.0
      %2153 = vmatpush2.msra.mxu0 0.0
      %2154 = vmatprep.subr.mxu0 0.0
      %2155 = vmatpush2.msra.mxu0 0.0
      %2156 = vmatprep.subr.mxu0 0.0
      %2157 = vmatpush2.msra.mxu0 0.0
      %2158 = vmatprep.subr.mxu0 0.0
      %2159 = vmatpush2.msra.mxu0 0.0
      %2160 = vmatprep.subr.mxu0 0.0
      %2161 = vmatpush2.msra.mxu0 0.0
      %2162 = vmatprep.subr.mxu0 0.0
      %2163 = vmatpush2.msra.mxu0 0.0
      %2164 = vmatprep.subr.mxu0 0.0
      %2165 = vmatpush2.msra.mxu0 0.0
      %2166 = vmatprep.subr.mxu0 0.0
      %2167 = vmatpush2.msra.mxu0 0.0
      %2168 = vmatprep.subr.mxu0 0.0
      %2169 = vmatpush2.msra.mxu0 0.0
      %2170 = vmatprep.subr.mxu0 0.0
      %2171 = vmatpush2.msra.mxu0 0.0
      %2172 = vmatprep.subr.mxu0 0.0
      %2173 = vmatpush2.msra.mxu0 0.0
      %2174 = vmatprep.mubr.f32.mxu0 0.0
      %2175 = vmatmul.mubr.f32.gmra.mxu0 %v2085
      %v2176 = vpop.f32.mrf.mxu0
      %v2177 = vadd.f32 %v2108, %v2176
      %v2178 = vpop.f32.mrf.mxu0
      %2179 = vmatprep.mubr.f32.mxu0 0.0
      %2180 = vmatmul.mubr.f32.gmra.mxu0 %v2086
      %v2181 = vpop.f32.mrf.mxu0
      %v2182 = vadd.f32 %v2108, %v2181
      %v2183 = vpop.f32.mrf.mxu0
      %2184 = vdwg.mxu0
      %v2185 = vmul.f32 %v1973, %v833
      %v2186 = vmul.f32 %v1974, %v833
      %v2187 = vadd.f32 %v2177, %v2185
      %v2188 = vadd.f32 %v2182, %v2186
      %v2189 = vadd.f32 %v2187, %v1935
      %v2190 = vadd.f32 %v2188, %v1936
      %v2191 = vadd.f32 %v579, %v2189
      %v2192 = vadd.f32 %v580, %v2190
      %2193 = vst [vmem:[#allocation2 + $0x8] sm:$0xff] %v2191
      %2194 = vst [vmem:[#allocation2 + $0x10] sm:$0xff] %v2192
      %v2195 = vld [vmem:[#allocation2 + $0x7] sm:$0xff]
      %v2196 = vld [vmem:[#allocation2 + $0xf] sm:$0xff]
      %v2197 = vld [vmem:[%s14] sm:$0xff]
      %v2198 = vld [vmem:[%s14 + $0x8] sm:$0xff]
      %v2199 = vld [vmem:[%s14 + $0x10] sm:$0xff]
      %v2200 = vld [vmem:[%s14 + $0x18] sm:$0xff]
      %v2201 = vld [vmem:[%s14 + $0x20] sm:$0xff]
      %v2202 = vld [vmem:[%s14 + $0x28] sm:$0xff]
      %v2203 = vld [vmem:[%s14 + $0x30] sm:$0xff]
      %v2204 = vld [vmem:[%s14 + $0x38] sm:$0xff]
      %v2205 = vld [vmem:[%s14 + $0x40] sm:$0xff]
      %v2206 = vld [vmem:[%s14 + $0x48] sm:$0xff]
      %v2207 = vld [vmem:[%s14 + $0x50] sm:$0xff]
      %v2208 = vld [vmem:[%s14 + $0x58] sm:$0xff]
      %v2209 = vld [vmem:[%s14 + $0x60] sm:$0xff]
      %v2210 = vld [vmem:[%s14 + $0x68] sm:$0xff]
      %v2211 = vld [vmem:[%s14 + $0x70] sm:$0xff]
      %v2212 = vld [vmem:[%s14 + $0x78] sm:$0xff]
      %v2213 = vld [vmem:[%s14 + $0x80] sm:$0xff]
      %v2214 = vld [vmem:[%s14 + $0x88] sm:$0xff]
      %v2215 = vld [vmem:[%s14 + $0x90] sm:$0xff]
      %v2216 = vld [vmem:[%s14 + $0x98] sm:$0xff]
      %v2217 = vld [vmem:[%s14 + $0xa0] sm:$0xff]
      %v2218 = vld [vmem:[%s14 + $0xa8] sm:$0xff]
      %v2219 = vld [vmem:[%s14 + $0xb0] sm:$0xff]
      %v2220 = vld [vmem:[%s14 + $0xb8] sm:$0xff]
      %v2221 = vld [vmem:[%s14 + $0xc0] sm:$0xff]
      %v2222 = vld [vmem:[%s14 + $0xc8] sm:$0xff]
      %v2223 = vld [vmem:[%s14 + $0xd0] sm:$0xff]
      %v2224 = vld [vmem:[%s14 + $0xd8] sm:$0xff]
      %v2225 = vld [vmem:[%s14 + $0xe0] sm:$0xff]
      %v2226 = vld [vmem:[%s14 + $0xe8] sm:$0xff]
      %v2227 = vld [vmem:[%s14 + $0xf0] sm:$0xff]
      %v2228 = vld [vmem:[%s14 + $0xf8] sm:$0xff]
      %v2229 = vld [vmem:[%s14 + $0x100] sm:$0xff]
      %v2230 = vld [vmem:[%s14 + $0x108] sm:$0xff]
      %v2231 = vld [vmem:[%s14 + $0x110] sm:$0xff]
      %v2232 = vld [vmem:[%s14 + $0x118] sm:$0xff]
      %v2233 = vld [vmem:[%s14 + $0x120] sm:$0xff]
      %v2234 = vld [vmem:[%s14 + $0x128] sm:$0xff]
      %v2235 = vld [vmem:[%s14 + $0x130] sm:$0xff]
      %v2236 = vld [vmem:[%s14 + $0x138] sm:$0xff]
      %v2237 = vld [vmem:[%s14 + $0x140] sm:$0xff]
      %v2238 = vld [vmem:[%s14 + $0x148] sm:$0xff]
      %v2239 = vld [vmem:[%s14 + $0x150] sm:$0xff]
      %v2240 = vld [vmem:[%s14 + $0x158] sm:$0xff]
      %v2241 = vld [vmem:[%s14 + $0x160] sm:$0xff]
      %v2242 = vld [vmem:[%s14 + $0x168] sm:$0xff]
      %v2243 = vld [vmem:[%s14 + $0x170] sm:$0xff]
      %v2244 = vld [vmem:[%s14 + $0x178] sm:$0xff]
      %v2245 = vld [vmem:[%s15] sm:$0x7]
      %v2247 = vlaneseq
      %v2248 = vshrl.u32 %v2247, 7
      %v2249 = vsub.s32 0, %v2248
      %v2250 = vrot.slane %v2245, %v2249
      %v2251 = vlaneseq
      %v2252 = vshrl.u32 %v2251, 7
      %v2253 = vsub.s32 1, %v2252
      %v2254 = vrot.slane %v2245, %v2253
      %v2255 = vlaneseq
      %v2256 = vshrl.u32 %v2255, 7
      %v2257 = vsub.s32 2, %v2256
      %v2258 = vrot.slane %v2245, %v2257
      %2262 = vmatprep.subr.mxu0 %v2243
      %2263 = vmatpush1.msra.mxu0 %v2242
      %2264 = vmatprep.subr.mxu0 %v2240
      %2265 = vmatpush1.msra.mxu0 %v2239
      %2266 = vmatprep.subr.mxu0 %v2237
      %2267 = vmatpush1.msra.mxu0 %v2236
      %2268 = vmatprep.subr.mxu0 %v2234
      %2269 = vmatpush1.msra.mxu0 %v2233
      %2270 = vmatprep.subr.mxu0 %v2231
      %2271 = vmatpush1.msra.mxu0 %v2230
      %2272 = vmatprep.subr.mxu0 %v2228
      %2273 = vmatpush1.msra.mxu0 %v2227
      %2274 = vmatprep.subr.mxu0 %v2225
      %2275 = vmatpush1.msra.mxu0 %v2224
      %2276 = vmatprep.subr.mxu0 %v2222
      %2277 = vmatpush1.msra.mxu0 %v2221
      %2278 = vmatprep.subr.mxu0 %v2219
      %2279 = vmatpush1.msra.mxu0 %v2218
      %2280 = vmatprep.subr.mxu0 %v2216
      %2281 = vmatpush1.msra.mxu0 %v2215
      %2282 = vmatprep.subr.mxu0 %v2213
      %2283 = vmatpush1.msra.mxu0 %v2212
      %2284 = vmatprep.subr.mxu0 %v2210
      %2285 = vmatpush1.msra.mxu0 %v2209
      %2286 = vmatprep.subr.mxu0 %v2207
      %2287 = vmatpush1.msra.mxu0 %v2206
      %2288 = vmatprep.subr.mxu0 %v2204
      %2289 = vmatpush1.msra.mxu0 %v2203
      %2290 = vmatprep.subr.mxu0 %v2201
      %2291 = vmatpush1.msra.mxu0 %v2200
      %2292 = vmatprep.subr.mxu0 %v2198
      %2293 = vmatpush1.msra.mxu0 %v2197
      %2294 = vmatprep.subr.mxu0 0.0
      %2295 = vmatpush2.msra.mxu0 0.0
      %2296 = vmatprep.subr.mxu0 0.0
      %2297 = vmatpush2.msra.mxu0 0.0
      %2298 = vmatprep.subr.mxu0 0.0
      %2299 = vmatpush2.msra.mxu0 0.0
      %2300 = vmatprep.subr.mxu0 0.0
      %2301 = vmatpush2.msra.mxu0 0.0
      %2302 = vmatprep.subr.mxu0 0.0
      %2303 = vmatpush2.msra.mxu0 0.0
      %2304 = vmatprep.subr.mxu0 0.0
      %2305 = vmatpush2.msra.mxu0 0.0
      %2306 = vmatprep.subr.mxu0 0.0
      %2307 = vmatpush2.msra.mxu0 0.0
      %2308 = vmatprep.subr.mxu0 0.0
      %2309 = vmatpush2.msra.mxu0 0.0
      %2310 = vmatprep.subr.mxu0 0.0
      %2311 = vmatpush2.msra.mxu0 0.0
      %2312 = vmatprep.subr.mxu0 0.0
      %2313 = vmatpush2.msra.mxu0 0.0
      %2314 = vmatprep.subr.mxu0 0.0
      %2315 = vmatpush2.msra.mxu0 0.0
      %2316 = vmatprep.subr.mxu0 0.0
      %2317 = vmatpush2.msra.mxu0 0.0
      %2318 = vmatprep.subr.mxu0 0.0
      %2319 = vmatpush2.msra.mxu0 0.0
      %2320 = vmatprep.subr.mxu0 0.0
      %2321 = vmatpush2.msra.mxu0 0.0
      %2322 = vmatprep.subr.mxu0 0.0
      %2323 = vmatpush2.msra.mxu0 0.0
      %2324 = vmatprep.subr.mxu0 0.0
      %2325 = vmatpush2.msra.mxu0 0.0
      %2326 = vmatprep.mubr.f32.mxu0 0.0
      %2327 = vmatmul.mubr.f32.gmra.mxu0 %v2195
      %v2328 = vpop.f32.mrf.mxu0
      %v2329 = vadd.f32 %v2250, %v2328
      %v2330 = vpop.f32.mrf.mxu0
      %v2331 = vadd.f32 %v2254, %v2330
      %2332 = vmatprep.mubr.f32.mxu0 0.0
      %2333 = vmatmul.mubr.f32.gmra.mxu0 %v2196
      %v2334 = vpop.f32.mrf.mxu0
      %v2335 = vadd.f32 %v2250, %v2334
      %v2336 = vpop.f32.mrf.mxu0
      %v2337 = vadd.f32 %v2254, %v2336
      %2338 = vdwg.mxu0
      %2339 = vmatprep.subr.mxu0 0.0
      %2340 = vmatpush1.msra.mxu0 %v2244
      %2341 = vmatprep.subr.mxu0 0.0
      %2342 = vmatpush1.msra.mxu0 %v2241
      %2343 = vmatprep.subr.mxu0 0.0
      %2344 = vmatpush1.msra.mxu0 %v2238
      %2345 = vmatprep.subr.mxu0 0.0
      %2346 = vmatpush1.msra.mxu0 %v2235
      %2347 = vmatprep.subr.mxu0 0.0
      %2348 = vmatpush1.msra.mxu0 %v2232
      %2349 = vmatprep.subr.mxu0 0.0
      %2350 = vmatpush1.msra.mxu0 %v2229
      %2351 = vmatprep.subr.mxu0 0.0
      %2352 = vmatpush1.msra.mxu0 %v2226
      %2353 = vmatprep.subr.mxu0 0.0
      %2354 = vmatpush1.msra.mxu0 %v2223
      %2355 = vmatprep.subr.mxu0 0.0
      %2356 = vmatpush1.msra.mxu0 %v2220
      %2357 = vmatprep.subr.mxu0 0.0
      %2358 = vmatpush1.msra.mxu0 %v2217
      %2359 = vmatprep.subr.mxu0 0.0
      %2360 = vmatpush1.msra.mxu0 %v2214
      %2361 = vmatprep.subr.mxu0 0.0
      %2362 = vmatpush1.msra.mxu0 %v2211
      %2363 = vmatprep.subr.mxu0 0.0
      %2364 = vmatpush1.msra.mxu0 %v2208
      %2365 = vmatprep.subr.mxu0 0.0
      %2366 = vmatpush1.msra.mxu0 %v2205
      %2367 = vmatprep.subr.mxu0 0.0
      %2368 = vmatpush1.msra.mxu0 %v2202
      %2369 = vmatprep.subr.mxu0 0.0
      %2370 = vmatpush1.msra.mxu0 %v2199
      %2371 = vmatprep.subr.mxu0 0.0
      %2372 = vmatpush2.msra.mxu0 0.0
      %2373 = vmatprep.subr.mxu0 0.0
      %2374 = vmatpush2.msra.mxu0 0.0
      %2375 = vmatprep.subr.mxu0 0.0
      %2376 = vmatpush2.msra.mxu0 0.0
      %2377 = vmatprep.subr.mxu0 0.0
      %2378 = vmatpush2.msra.mxu0 0.0
      %2379 = vmatprep.subr.mxu0 0.0
      %2380 = vmatpush2.msra.mxu0 0.0
      %2381 = vmatprep.subr.mxu0 0.0
      %2382 = vmatpush2.msra.mxu0 0.0
      %2383 = vmatprep.subr.mxu0 0.0
      %2384 = vmatpush2.msra.mxu0 0.0
      %2385 = vmatprep.subr.mxu0 0.0
      %2386 = vmatpush2.msra.mxu0 0.0
      %2387 = vmatprep.subr.mxu0 0.0
      %2388 = vmatpush2.msra.mxu0 0.0
      %2389 = vmatprep.subr.mxu0 0.0
      %2390 = vmatpush2.msra.mxu0 0.0
      %2391 = vmatprep.subr.mxu0 0.0
      %2392 = vmatpush2.msra.mxu0 0.0
      %2393 = vmatprep.subr.mxu0 0.0
      %2394 = vmatpush2.msra.mxu0 0.0
      %2395 = vmatprep.subr.mxu0 0.0
      %2396 = vmatpush2.msra.mxu0 0.0
      %2397 = vmatprep.subr.mxu0 0.0
      %2398 = vmatpush2.msra.mxu0 0.0
      %2399 = vmatprep.subr.mxu0 0.0
      %2400 = vmatpush2.msra.mxu0 0.0
      %2401 = vmatprep.subr.mxu0 0.0
      %2402 = vmatpush2.msra.mxu0 0.0
      %2403 = vmatprep.mubr.f32.mxu0 0.0
      %2404 = vmatmul.mubr.f32.gmra.mxu0 %v2195
      %v2405 = vpop.f32.mrf.mxu0
      %v2406 = vadd.f32 %v2258, %v2405
      %v2407 = vpop.f32.mrf.mxu0
      %2408 = vmatprep.mubr.f32.mxu0 0.0
      %2409 = vmatmul.mubr.f32.gmra.mxu0 %v2196
      %v2410 = vpop.f32.mrf.mxu0
      %v2411 = vadd.f32 %v2258, %v2410
      %v2412 = vpop.f32.mrf.mxu0
      %2413 = vdwg.mxu0
      %v2414 = vld [vmem:[#allocation2 + $0x8] sm:$0xff]
      %v2415 = vld [vmem:[#allocation2 + $0x10] sm:$0xff]
      %s2416 = scalar_lea.vmem %s14, 384
      %v2417 = vld [vmem:[%s2416] sm:$0xff]
      %v2418 = vld [vmem:[%s2416 + $0x8] sm:$0xff]
      %v2419 = vld [vmem:[%s2416 + $0x10] sm:$0xff]
      %v2420 = vld [vmem:[%s2416 + $0x18] sm:$0xff]
      %v2421 = vld [vmem:[%s2416 + $0x20] sm:$0xff]
      %v2422 = vld [vmem:[%s2416 + $0x28] sm:$0xff]
      %v2423 = vld [vmem:[%s2416 + $0x30] sm:$0xff]
      %v2424 = vld [vmem:[%s2416 + $0x38] sm:$0xff]
      %v2425 = vld [vmem:[%s2416 + $0x40] sm:$0xff]
      %v2426 = vld [vmem:[%s2416 + $0x48] sm:$0xff]
      %v2427 = vld [vmem:[%s2416 + $0x50] sm:$0xff]
      %v2428 = vld [vmem:[%s2416 + $0x58] sm:$0xff]
      %v2429 = vld [vmem:[%s2416 + $0x60] sm:$0xff]
      %v2430 = vld [vmem:[%s2416 + $0x68] sm:$0xff]
      %v2431 = vld [vmem:[%s2416 + $0x70] sm:$0xff]
      %v2432 = vld [vmem:[%s2416 + $0x78] sm:$0xff]
      %v2433 = vld [vmem:[%s2416 + $0x80] sm:$0xff]
      %v2434 = vld [vmem:[%s2416 + $0x88] sm:$0xff]
      %v2435 = vld [vmem:[%s2416 + $0x90] sm:$0xff]
      %v2436 = vld [vmem:[%s2416 + $0x98] sm:$0xff]
      %v2437 = vld [vmem:[%s2416 + $0xa0] sm:$0xff]
      %v2438 = vld [vmem:[%s2416 + $0xa8] sm:$0xff]
      %v2439 = vld [vmem:[%s2416 + $0xb0] sm:$0xff]
      %v2440 = vld [vmem:[%s2416 + $0xb8] sm:$0xff]
      %v2441 = vld [vmem:[%s2416 + $0xc0] sm:$0xff]
      %v2442 = vld [vmem:[%s2416 + $0xc8] sm:$0xff]
      %v2443 = vld [vmem:[%s2416 + $0xd0] sm:$0xff]
      %v2444 = vld [vmem:[%s2416 + $0xd8] sm:$0xff]
      %v2445 = vld [vmem:[%s2416 + $0xe0] sm:$0xff]
      %v2446 = vld [vmem:[%s2416 + $0xe8] sm:$0xff]
      %v2447 = vld [vmem:[%s2416 + $0xf0] sm:$0xff]
      %v2448 = vld [vmem:[%s2416 + $0xf8] sm:$0xff]
      %v2449 = vld [vmem:[%s2416 + $0x100] sm:$0xff]
      %v2450 = vld [vmem:[%s2416 + $0x108] sm:$0xff]
      %v2451 = vld [vmem:[%s2416 + $0x110] sm:$0xff]
      %v2452 = vld [vmem:[%s2416 + $0x118] sm:$0xff]
      %v2453 = vld [vmem:[%s2416 + $0x120] sm:$0xff]
      %v2454 = vld [vmem:[%s2416 + $0x128] sm:$0xff]
      %v2455 = vld [vmem:[%s2416 + $0x130] sm:$0xff]
      %v2456 = vld [vmem:[%s2416 + $0x138] sm:$0xff]
      %v2457 = vld [vmem:[%s2416 + $0x140] sm:$0xff]
      %v2458 = vld [vmem:[%s2416 + $0x148] sm:$0xff]
      %v2459 = vld [vmem:[%s2416 + $0x150] sm:$0xff]
      %v2460 = vld [vmem:[%s2416 + $0x158] sm:$0xff]
      %v2461 = vld [vmem:[%s2416 + $0x160] sm:$0xff]
      %v2462 = vld [vmem:[%s2416 + $0x168] sm:$0xff]
      %v2463 = vld [vmem:[%s2416 + $0x170] sm:$0xff]
      %v2464 = vld [vmem:[%s2416 + $0x178] sm:$0xff]
      %2465 = vmatprep.subr.mxu0 %v2463
      %2466 = vmatpush1.msra.mxu0 %v2462
      %2467 = vmatprep.subr.mxu0 %v2460
      %2468 = vmatpush1.msra.mxu0 %v2459
      %2469 = vmatprep.subr.mxu0 %v2457
      %2470 = vmatpush1.msra.mxu0 %v2456
      %2471 = vmatprep.subr.mxu0 %v2454
      %2472 = vmatpush1.msra.mxu0 %v2453
      %2473 = vmatprep.subr.mxu0 %v2451
      %2474 = vmatpush1.msra.mxu0 %v2450
      %2475 = vmatprep.subr.mxu0 %v2448
      %2476 = vmatpush1.msra.mxu0 %v2447
      %2477 = vmatprep.subr.mxu0 %v2445
      %2478 = vmatpush1.msra.mxu0 %v2444
      %2479 = vmatprep.subr.mxu0 %v2442
      %2480 = vmatpush1.msra.mxu0 %v2441
      %2481 = vmatprep.subr.mxu0 %v2439
      %2482 = vmatpush1.msra.mxu0 %v2438
      %2483 = vmatprep.subr.mxu0 %v2436
      %2484 = vmatpush1.msra.mxu0 %v2435
      %2485 = vmatprep.subr.mxu0 %v2433
      %2486 = vmatpush1.msra.mxu0 %v2432
      %2487 = vmatprep.subr.mxu0 %v2430
      %2488 = vmatpush1.msra.mxu0 %v2429
      %2489 = vmatprep.subr.mxu0 %v2427
      %2490 = vmatpush1.msra.mxu0 %v2426
      %2491 = vmatprep.subr.mxu0 %v2424
      %2492 = vmatpush1.msra.mxu0 %v2423
      %2493 = vmatprep.subr.mxu0 %v2421
      %2494 = vmatpush1.msra.mxu0 %v2420
      %2495 = vmatprep.subr.mxu0 %v2418
      %2496 = vmatpush1.msra.mxu0 %v2417
      %2497 = vmatprep.subr.mxu0 0.0
      %2498 = vmatpush2.msra.mxu0 0.0
      %2499 = vmatprep.subr.mxu0 0.0
      %2500 = vmatpush2.msra.mxu0 0.0
      %2501 = vmatprep.subr.mxu0 0.0
      %2502 = vmatpush2.msra.mxu0 0.0
      %2503 = vmatprep.subr.mxu0 0.0
      %2504 = vmatpush2.msra.mxu0 0.0
      %2505 = vmatprep.subr.mxu0 0.0
      %2506 = vmatpush2.msra.mxu0 0.0
      %2507 = vmatprep.subr.mxu0 0.0
      %2508 = vmatpush2.msra.mxu0 0.0
      %2509 = vmatprep.subr.mxu0 0.0
      %2510 = vmatpush2.msra.mxu0 0.0
      %2511 = vmatprep.subr.mxu0 0.0
      %2512 = vmatpush2.msra.mxu0 0.0
      %2513 = vmatprep.subr.mxu0 0.0
      %2514 = vmatpush2.msra.mxu0 0.0
      %2515 = vmatprep.subr.mxu0 0.0
      %2516 = vmatpush2.msra.mxu0 0.0
      %2517 = vmatprep.subr.mxu0 0.0
      %2518 = vmatpush2.msra.mxu0 0.0
      %2519 = vmatprep.subr.mxu0 0.0
      %2520 = vmatpush2.msra.mxu0 0.0
      %2521 = vmatprep.subr.mxu0 0.0
      %2522 = vmatpush2.msra.mxu0 0.0
      %2523 = vmatprep.subr.mxu0 0.0
      %2524 = vmatpush2.msra.mxu0 0.0
      %2525 = vmatprep.subr.mxu0 0.0
      %2526 = vmatpush2.msra.mxu0 0.0
      %2527 = vmatprep.subr.mxu0 0.0
      %2528 = vmatpush2.msra.mxu0 0.0
      %2529 = vmatprep.mubr.f32.mxu0 0.0
      %2530 = vmatmul.mubr.f32.gmra.mxu0 %v2414
      %v2531 = vpop.f32.mrf.mxu0
      %v2532 = vadd.f32 0.0, %v2531
      %v2533 = vpop.f32.mrf.mxu0
      %v2534 = vadd.f32 0.0, %v2533
      %2535 = vmatprep.mubr.f32.mxu0 0.0
      %2536 = vmatmul.mubr.f32.gmra.mxu0 %v2415
      %v2537 = vpop.f32.mrf.mxu0
      %v2538 = vadd.f32 0.0, %v2537
      %v2539 = vpop.f32.mrf.mxu0
      %v2540 = vadd.f32 0.0, %v2539
      %2541 = vdwg.mxu0
      %2542 = vmatprep.subr.mxu0 0.0
      %2543 = vmatpush1.msra.mxu0 %v2464
      %2544 = vmatprep.subr.mxu0 0.0
      %2545 = vmatpush1.msra.mxu0 %v2461
      %2546 = vmatprep.subr.mxu0 0.0
      %2547 = vmatpush1.msra.mxu0 %v2458
      %2548 = vmatprep.subr.mxu0 0.0
      %2549 = vmatpush1.msra.mxu0 %v2455
      %2550 = vmatprep.subr.mxu0 0.0
      %2551 = vmatpush1.msra.mxu0 %v2452
      %2552 = vmatprep.subr.mxu0 0.0
      %2553 = vmatpush1.msra.mxu0 %v2449
      %2554 = vmatprep.subr.mxu0 0.0
      %2555 = vmatpush1.msra.mxu0 %v2446
      %2556 = vmatprep.subr.mxu0 0.0
      %2557 = vmatpush1.msra.mxu0 %v2443
      %2558 = vmatprep.subr.mxu0 0.0
      %2559 = vmatpush1.msra.mxu0 %v2440
      %2560 = vmatprep.subr.mxu0 0.0
      %2561 = vmatpush1.msra.mxu0 %v2437
      %2562 = vmatprep.subr.mxu0 0.0
      %2563 = vmatpush1.msra.mxu0 %v2434
      %2564 = vmatprep.subr.mxu0 0.0
      %2565 = vmatpush1.msra.mxu0 %v2431
      %2566 = vmatprep.subr.mxu0 0.0
      %2567 = vmatpush1.msra.mxu0 %v2428
      %2568 = vmatprep.subr.mxu0 0.0
      %2569 = vmatpush1.msra.mxu0 %v2425
      %2570 = vmatprep.subr.mxu0 0.0
      %2571 = vmatpush1.msra.mxu0 %v2422
      %2572 = vmatprep.subr.mxu0 0.0
      %2573 = vmatpush1.msra.mxu0 %v2419
      %2574 = vmatprep.subr.mxu0 0.0
      %2575 = vmatpush2.msra.mxu0 0.0
      %2576 = vmatprep.subr.mxu0 0.0
      %2577 = vmatpush2.msra.mxu0 0.0
      %2578 = vmatprep.subr.mxu0 0.0
      %2579 = vmatpush2.msra.mxu0 0.0
      %2580 = vmatprep.subr.mxu0 0.0
      %2581 = vmatpush2.msra.mxu0 0.0
      %2582 = vmatprep.subr.mxu0 0.0
      %2583 = vmatpush2.msra.mxu0 0.0
      %2584 = vmatprep.subr.mxu0 0.0
      %2585 = vmatpush2.msra.mxu0 0.0
      %2586 = vmatprep.subr.mxu0 0.0
      %2587 = vmatpush2.msra.mxu0 0.0
      %2588 = vmatprep.subr.mxu0 0.0
      %2589 = vmatpush2.msra.mxu0 0.0
      %2590 = vmatprep.subr.mxu0 0.0
      %2591 = vmatpush2.msra.mxu0 0.0
      %2592 = vmatprep.subr.mxu0 0.0
      %2593 = vmatpush2.msra.mxu0 0.0
      %2594 = vmatprep.subr.mxu0 0.0
      %2595 = vmatpush2.msra.mxu0 0.0
      %2596 = vmatprep.subr.mxu0 0.0
      %2597 = vmatpush2.msra.mxu0 0.0
      %2598 = vmatprep.subr.mxu0 0.0
      %2599 = vmatpush2.msra.mxu0 0.0
      %2600 = vmatprep.subr.mxu0 0.0
      %2601 = vmatpush2.msra.mxu0 0.0
      %2602 = vmatprep.subr.mxu0 0.0
      %2603 = vmatpush2.msra.mxu0 0.0
      %2604 = vmatprep.subr.mxu0 0.0
      %2605 = vmatpush2.msra.mxu0 0.0
      %2606 = vmatprep.mubr.f32.mxu0 0.0
      %2607 = vmatmul.mubr.f32.gmra.mxu0 %v2414
      %v2608 = vpop.f32.mrf.mxu0
      %v2609 = vadd.f32 0.0, %v2608
      %v2610 = vpop.f32.mrf.mxu0
      %2611 = vmatprep.mubr.f32.mxu0 0.0
      %2612 = vmatmul.mubr.f32.gmra.mxu0 %v2415
      %v2613 = vpop.f32.mrf.mxu0
      %v2614 = vadd.f32 0.0, %v2613
      %v2615 = vpop.f32.mrf.mxu0
      %2616 = vdwg.mxu0
      %v2617 = vadd.f32 %v2329, %v2532
      %v2618 = vadd.f32 %v2331, %v2534
      %v2619 = vadd.f32 %v2406, %v2609
      %v2620 = vadd.f32 %v2335, %v2538
      %v2621 = vadd.f32 %v2337, %v2540
      %v2622 = vadd.f32 %v2411, %v2614
      %v2623 = vld [vmem:[#allocation2 + $0x9] sm:$0xff]
      %v2624 = vld [vmem:[#allocation2 + $0x11] sm:$0xff]
      %s2625 = scalar_lea.vmem %s14, 768
      %v2626 = vld [vmem:[%s2625] sm:$0xff]
      %v2627 = vld [vmem:[%s2625 + $0x8] sm:$0xff]
      %v2628 = vld [vmem:[%s2625 + $0x10] sm:$0xff]
      %v2629 = vld [vmem:[%s2625 + $0x18] sm:$0xff]
      %v2630 = vld [vmem:[%s2625 + $0x20] sm:$0xff]
      %v2631 = vld [vmem:[%s2625 + $0x28] sm:$0xff]
      %v2632 = vld [vmem:[%s2625 + $0x30] sm:$0xff]
      %v2633 = vld [vmem:[%s2625 + $0x38] sm:$0xff]
      %v2634 = vld [vmem:[%s2625 + $0x40] sm:$0xff]
      %v2635 = vld [vmem:[%s2625 + $0x48] sm:$0xff]
      %v2636 = vld [vmem:[%s2625 + $0x50] sm:$0xff]
      %v2637 = vld [vmem:[%s2625 + $0x58] sm:$0xff]
      %v2638 = vld [vmem:[%s2625 + $0x60] sm:$0xff]
      %v2639 = vld [vmem:[%s2625 + $0x68] sm:$0xff]
      %v2640 = vld [vmem:[%s2625 + $0x70] sm:$0xff]
      %v2641 = vld [vmem:[%s2625 + $0x78] sm:$0xff]
      %v2642 = vld [vmem:[%s2625 + $0x80] sm:$0xff]
      %v2643 = vld [vmem:[%s2625 + $0x88] sm:$0xff]
      %v2644 = vld [vmem:[%s2625 + $0x90] sm:$0xff]
      %v2645 = vld [vmem:[%s2625 + $0x98] sm:$0xff]
      %v2646 = vld [vmem:[%s2625 + $0xa0] sm:$0xff]
      %v2647 = vld [vmem:[%s2625 + $0xa8] sm:$0xff]
      %v2648 = vld [vmem:[%s2625 + $0xb0] sm:$0xff]
      %v2649 = vld [vmem:[%s2625 + $0xb8] sm:$0xff]
      %v2650 = vld [vmem:[%s2625 + $0xc0] sm:$0xff]
      %v2651 = vld [vmem:[%s2625 + $0xc8] sm:$0xff]
      %v2652 = vld [vmem:[%s2625 + $0xd0] sm:$0xff]
      %v2653 = vld [vmem:[%s2625 + $0xd8] sm:$0xff]
      %v2654 = vld [vmem:[%s2625 + $0xe0] sm:$0xff]
      %v2655 = vld [vmem:[%s2625 + $0xe8] sm:$0xff]
      %v2656 = vld [vmem:[%s2625 + $0xf0] sm:$0xff]
      %v2657 = vld [vmem:[%s2625 + $0xf8] sm:$0xff]
      %v2658 = vld [vmem:[%s2625 + $0x100] sm:$0xff]
      %v2659 = vld [vmem:[%s2625 + $0x108] sm:$0xff]
      %v2660 = vld [vmem:[%s2625 + $0x110] sm:$0xff]
      %v2661 = vld [vmem:[%s2625 + $0x118] sm:$0xff]
      %v2662 = vld [vmem:[%s2625 + $0x120] sm:$0xff]
      %v2663 = vld [vmem:[%s2625 + $0x128] sm:$0xff]
      %v2664 = vld [vmem:[%s2625 + $0x130] sm:$0xff]
      %v2665 = vld [vmem:[%s2625 + $0x138] sm:$0xff]
      %v2666 = vld [vmem:[%s2625 + $0x140] sm:$0xff]
      %v2667 = vld [vmem:[%s2625 + $0x148] sm:$0xff]
      %v2668 = vld [vmem:[%s2625 + $0x150] sm:$0xff]
      %v2669 = vld [vmem:[%s2625 + $0x158] sm:$0xff]
      %v2670 = vld [vmem:[%s2625 + $0x160] sm:$0xff]
      %v2671 = vld [vmem:[%s2625 + $0x168] sm:$0xff]
      %v2672 = vld [vmem:[%s2625 + $0x170] sm:$0xff]
      %v2673 = vld [vmem:[%s2625 + $0x178] sm:$0xff]
      %2674 = vmatprep.subr.mxu0 %v2672
      %2675 = vmatpush1.msra.mxu0 %v2671
      %2676 = vmatprep.subr.mxu0 %v2669
      %2677 = vmatpush1.msra.mxu0 %v2668
      %2678 = vmatprep.subr.mxu0 %v2666
      %2679 = vmatpush1.msra.mxu0 %v2665
      %2680 = vmatprep.subr.mxu0 %v2663
      %2681 = vmatpush1.msra.mxu0 %v2662
      %2682 = vmatprep.subr.mxu0 %v2660
      %2683 = vmatpush1.msra.mxu0 %v2659
      %2684 = vmatprep.subr.mxu0 %v2657
      %2685 = vmatpush1.msra.mxu0 %v2656
      %2686 = vmatprep.subr.mxu0 %v2654
      %2687 = vmatpush1.msra.mxu0 %v2653
      %2688 = vmatprep.subr.mxu0 %v2651
      %2689 = vmatpush1.msra.mxu0 %v2650
      %2690 = vmatprep.subr.mxu0 %v2648
      %2691 = vmatpush1.msra.mxu0 %v2647
      %2692 = vmatprep.subr.mxu0 %v2645
      %2693 = vmatpush1.msra.mxu0 %v2644
      %2694 = vmatprep.subr.mxu0 %v2642
      %2695 = vmatpush1.msra.mxu0 %v2641
      %2696 = vmatprep.subr.mxu0 %v2639
      %2697 = vmatpush1.msra.mxu0 %v2638
      %2698 = vmatprep.subr.mxu0 %v2636
      %2699 = vmatpush1.msra.mxu0 %v2635
      %2700 = vmatprep.subr.mxu0 %v2633
      %2701 = vmatpush1.msra.mxu0 %v2632
      %2702 = vmatprep.subr.mxu0 %v2630
      %2703 = vmatpush1.msra.mxu0 %v2629
      %2704 = vmatprep.subr.mxu0 %v2627
      %2705 = vmatpush1.msra.mxu0 %v2626
      %2706 = vmatprep.subr.mxu0 0.0
      %2707 = vmatpush2.msra.mxu0 0.0
      %2708 = vmatprep.subr.mxu0 0.0
      %2709 = vmatpush2.msra.mxu0 0.0
      %2710 = vmatprep.subr.mxu0 0.0
      %2711 = vmatpush2.msra.mxu0 0.0
      %2712 = vmatprep.subr.mxu0 0.0
      %2713 = vmatpush2.msra.mxu0 0.0
      %2714 = vmatprep.subr.mxu0 0.0
      %2715 = vmatpush2.msra.mxu0 0.0
      %2716 = vmatprep.subr.mxu0 0.0
      %2717 = vmatpush2.msra.mxu0 0.0
      %2718 = vmatprep.subr.mxu0 0.0
      %2719 = vmatpush2.msra.mxu0 0.0
      %2720 = vmatprep.subr.mxu0 0.0
      %2721 = vmatpush2.msra.mxu0 0.0
      %2722 = vmatprep.subr.mxu0 0.0
      %2723 = vmatpush2.msra.mxu0 0.0
      %2724 = vmatprep.subr.mxu0 0.0
      %2725 = vmatpush2.msra.mxu0 0.0
      %2726 = vmatprep.subr.mxu0 0.0
      %2727 = vmatpush2.msra.mxu0 0.0
      %2728 = vmatprep.subr.mxu0 0.0
      %2729 = vmatpush2.msra.mxu0 0.0
      %2730 = vmatprep.subr.mxu0 0.0
      %2731 = vmatpush2.msra.mxu0 0.0
      %2732 = vmatprep.subr.mxu0 0.0
      %2733 = vmatpush2.msra.mxu0 0.0
      %2734 = vmatprep.subr.mxu0 0.0
      %2735 = vmatpush2.msra.mxu0 0.0
      %2736 = vmatprep.subr.mxu0 0.0
      %2737 = vmatpush2.msra.mxu0 0.0
      %2738 = vmatprep.mubr.f32.mxu0 0.0
      %2739 = vmatmul.mubr.f32.gmra.mxu0 %v2623
      %v2740 = vpop.f32.mrf.mxu0
      %v2741 = vadd.f32 0.0, %v2740
      %v2742 = vpop.f32.mrf.mxu0
      %v2743 = vadd.f32 0.0, %v2742
      %2744 = vmatprep.mubr.f32.mxu0 0.0
      %2745 = vmatmul.mubr.f32.gmra.mxu0 %v2624
      %v2746 = vpop.f32.mrf.mxu0
      %v2747 = vadd.f32 0.0, %v2746
      %v2748 = vpop.f32.mrf.mxu0
      %v2749 = vadd.f32 0.0, %v2748
      %2750 = vdwg.mxu0
      %2751 = vmatprep.subr.mxu0 0.0
      %2752 = vmatpush1.msra.mxu0 %v2673
      %2753 = vmatprep.subr.mxu0 0.0
      %2754 = vmatpush1.msra.mxu0 %v2670
      %2755 = vmatprep.subr.mxu0 0.0
      %2756 = vmatpush1.msra.mxu0 %v2667
      %2757 = vmatprep.subr.mxu0 0.0
      %2758 = vmatpush1.msra.mxu0 %v2664
      %2759 = vmatprep.subr.mxu0 0.0
      %2760 = vmatpush1.msra.mxu0 %v2661
      %2761 = vmatprep.subr.mxu0 0.0
      %2762 = vmatpush1.msra.mxu0 %v2658
      %2763 = vmatprep.subr.mxu0 0.0
      %2764 = vmatpush1.msra.mxu0 %v2655
      %2765 = vmatprep.subr.mxu0 0.0
      %2766 = vmatpush1.msra.mxu0 %v2652
      %2767 = vmatprep.subr.mxu0 0.0
      %2768 = vmatpush1.msra.mxu0 %v2649
      %2769 = vmatprep.subr.mxu0 0.0
      %2770 = vmatpush1.msra.mxu0 %v2646
      %2771 = vmatprep.subr.mxu0 0.0
      %2772 = vmatpush1.msra.mxu0 %v2643
      %2773 = vmatprep.subr.mxu0 0.0
      %2774 = vmatpush1.msra.mxu0 %v2640
      %2775 = vmatprep.subr.mxu0 0.0
      %2776 = vmatpush1.msra.mxu0 %v2637
      %2777 = vmatprep.subr.mxu0 0.0
      %2778 = vmatpush1.msra.mxu0 %v2634
      %2779 = vmatprep.subr.mxu0 0.0
      %2780 = vmatpush1.msra.mxu0 %v2631
      %2781 = vmatprep.subr.mxu0 0.0
      %2782 = vmatpush1.msra.mxu0 %v2628
      %2783 = vmatprep.subr.mxu0 0.0
      %2784 = vmatpush2.msra.mxu0 0.0
      %2785 = vmatprep.subr.mxu0 0.0
      %2786 = vmatpush2.msra.mxu0 0.0
      %2787 = vmatprep.subr.mxu0 0.0
      %2788 = vmatpush2.msra.mxu0 0.0
      %2789 = vmatprep.subr.mxu0 0.0
      %2790 = vmatpush2.msra.mxu0 0.0
      %2791 = vmatprep.subr.mxu0 0.0
      %2792 = vmatpush2.msra.mxu0 0.0
      %2793 = vmatprep.subr.mxu0 0.0
      %2794 = vmatpush2.msra.mxu0 0.0
      %2795 = vmatprep.subr.mxu0 0.0
      %2796 = vmatpush2.msra.mxu0 0.0
      %2797 = vmatprep.subr.mxu0 0.0
      %2798 = vmatpush2.msra.mxu0 0.0
      %2799 = vmatprep.subr.mxu0 0.0
      %2800 = vmatpush2.msra.mxu0 0.0
      %2801 = vmatprep.subr.mxu0 0.0
      %2802 = vmatpush2.msra.mxu0 0.0
      %2803 = vmatprep.subr.mxu0 0.0
      %2804 = vmatpush2.msra.mxu0 0.0
      %2805 = vmatprep.subr.mxu0 0.0
      %2806 = vmatpush2.msra.mxu0 0.0
      %2807 = vmatprep.subr.mxu0 0.0
      %2808 = vmatpush2.msra.mxu0 0.0
      %2809 = vmatprep.subr.mxu0 0.0
      %2810 = vmatpush2.msra.mxu0 0.0
      %2811 = vmatprep.subr.mxu0 0.0
      %2812 = vmatpush2.msra.mxu0 0.0
      %2813 = vmatprep.subr.mxu0 0.0
      %2814 = vmatpush2.msra.mxu0 0.0
      %2815 = vmatprep.mubr.f32.mxu0 0.0
      %2816 = vmatmul.mubr.f32.gmra.mxu0 %v2623
      %v2817 = vpop.f32.mrf.mxu0
      %v2818 = vadd.f32 0.0, %v2817
      %v2819 = vpop.f32.mrf.mxu0
      %2820 = vmatprep.mubr.f32.mxu0 0.0
      %2821 = vmatmul.mubr.f32.gmra.mxu0 %v2624
      %v2822 = vpop.f32.mrf.mxu0
      %v2823 = vadd.f32 0.0, %v2822
      %v2824 = vpop.f32.mrf.mxu0
      %2825 = vdwg.mxu0
      %v2826 = vadd.f32 %v2617, %v2741
      %v2827 = vadd.f32 %v2618, %v2743
      %v2828 = vadd.f32 %v2619, %v2818
      %v2829 = vadd.f32 %v2620, %v2747
      %v2830 = vadd.f32 %v2621, %v2749
      %v2831 = vadd.f32 %v2622, %v2823
      %v2832 = vxor.u32 %v2826, 2147483648
      %v2833 = vxor.u32 %v2827, 2147483648
      %v2834 = vxor.u32 %v2828, 2147483648
      %v2835 = vxor.u32 %v2829, 2147483648
      %v2836 = vxor.u32 %v2830, 2147483648
      %v2837 = vxor.u32 %v2831, 2147483648
      %v2838 = vmul.f32 %v2832, 1.442695
      %v2839 = vpow.pop %v2838
      %v2840 = vmul.f32 %v2833, 1.442695
      %v2841 = vpow.pop %v2840
      %v2842 = vmul.f32 %v2834, 1.442695
      %v2843 = vpow.pop %v2842
      %v2844 = vmul.f32 %v2835, 1.442695
      %v2845 = vpow.pop %v2844
      %v2846 = vmul.f32 %v2836, 1.442695
      %v2847 = vpow.pop %v2846
      %v2848 = vmul.f32 %v2837, 1.442695
      %v2849 = vpow.pop %v2848
      %v2850 = vadd.f32 %v2839, 1.0
      %v2851 = vadd.f32 %v2841, 1.0
      %v2852 = vadd.f32 %v2843, 1.0
      %v2853 = vadd.f32 %v2845, 1.0
      %v2854 = vadd.f32 %v2847, 1.0
      %v2855 = vadd.f32 %v2849, 1.0
      %v2856 = vrcp.pop %v2850
      %v2857 = vmul.f32 1.0, %v2856
      %v2858 = vrcp.pop %v2851
      %v2859 = vmul.f32 1.0, %v2858
      %v2860 = vrcp.pop %v2852
      %v2861 = vmul.f32 1.0, %v2860
      %v2862 = vrcp.pop %v2853
      %v2863 = vmul.f32 1.0, %v2862
      %v2864 = vrcp.pop %v2854
      %v2865 = vmul.f32 1.0, %v2864
      %v2866 = vrcp.pop %v2855
      %v2867 = vmul.f32 1.0, %v2866
      %v2868 = vmul.f32 %v2826, %v2857
      %v2869 = vmul.f32 %v2827, %v2859
      %v2870 = vmul.f32 %v2828, %v2861
      %v2871 = vmul.f32 %v2829, %v2863
      %v2872 = vmul.f32 %v2830, %v2865
      %v2873 = vmul.f32 %v2831, %v2867
      %v2874 = vld [vmem:[%s16] sm:$0xff]
      %v2875 = vld [vmem:[%s16 + $0x8] sm:$0xff]
      %v2876 = vld [vmem:[%s16 + $0x10] sm:$0xff]
      %v2877 = vld [vmem:[%s16 + $0x18] sm:$0xff]
      %v2878 = vld [vmem:[%s16 + $0x20] sm:$0xff]
      %v2879 = vld [vmem:[%s16 + $0x28] sm:$0xff]
      %v2880 = vld [vmem:[%s16 + $0x30] sm:$0xff]
      %v2881 = vld [vmem:[%s16 + $0x38] sm:$0xff]
      %v2882 = vld [vmem:[%s16 + $0x40] sm:$0xff]
      %v2883 = vld [vmem:[%s16 + $0x48] sm:$0xff]
      %v2884 = vld [vmem:[%s16 + $0x50] sm:$0xff]
      %v2885 = vld [vmem:[%s16 + $0x58] sm:$0xff]
      %v2886 = vld [vmem:[%s16 + $0x60] sm:$0xff]
      %v2887 = vld [vmem:[%s16 + $0x68] sm:$0xff]
      %v2888 = vld [vmem:[%s16 + $0x70] sm:$0xff]
      %v2889 = vld [vmem:[%s16 + $0x78] sm:$0xff]
      %v2890 = vld [vmem:[%s16 + $0x80] sm:$0xff]
      %v2891 = vld [vmem:[%s16 + $0x88] sm:$0xff]
      %v2892 = vld [vmem:[%s16 + $0x90] sm:$0xff]
      %v2893 = vld [vmem:[%s16 + $0x98] sm:$0xff]
      %v2894 = vld [vmem:[%s16 + $0xa0] sm:$0xff]
      %v2895 = vld [vmem:[%s16 + $0xa8] sm:$0xff]
      %v2896 = vld [vmem:[%s16 + $0xb0] sm:$0xff]
      %v2897 = vld [vmem:[%s16 + $0xb8] sm:$0xff]
      %v2898 = vld [vmem:[%s16 + $0xc0] sm:$0xff]
      %v2899 = vld [vmem:[%s16 + $0xc8] sm:$0xff]
      %v2900 = vld [vmem:[%s16 + $0xd0] sm:$0xff]
      %v2901 = vld [vmem:[%s16 + $0xd8] sm:$0xff]
      %v2902 = vld [vmem:[%s16 + $0xe0] sm:$0xff]
      %v2903 = vld [vmem:[%s16 + $0xe8] sm:$0xff]
      %v2904 = vld [vmem:[%s16 + $0xf0] sm:$0xff]
      %v2905 = vld [vmem:[%s16 + $0xf8] sm:$0xff]
      %v2906 = vld [vmem:[%s16 + $0x100] sm:$0xff]
      %v2907 = vld [vmem:[%s16 + $0x108] sm:$0xff]
      %v2908 = vld [vmem:[%s16 + $0x110] sm:$0xff]
      %v2909 = vld [vmem:[%s16 + $0x118] sm:$0xff]
      %v2910 = vld [vmem:[%s16 + $0x120] sm:$0xff]
      %v2911 = vld [vmem:[%s16 + $0x128] sm:$0xff]
      %v2912 = vld [vmem:[%s16 + $0x130] sm:$0xff]
      %v2913 = vld [vmem:[%s16 + $0x138] sm:$0xff]
      %v2914 = vld [vmem:[%s16 + $0x140] sm:$0xff]
      %v2915 = vld [vmem:[%s16 + $0x148] sm:$0xff]
      %v2916 = vld [vmem:[%s16 + $0x150] sm:$0xff]
      %v2917 = vld [vmem:[%s16 + $0x158] sm:$0xff]
      %v2918 = vld [vmem:[%s16 + $0x160] sm:$0xff]
      %v2919 = vld [vmem:[%s16 + $0x168] sm:$0xff]
      %v2920 = vld [vmem:[%s16 + $0x170] sm:$0xff]
      %v2921 = vld [vmem:[%s16 + $0x178] sm:$0xff]
      %v2922 = vld [vmem:[%s17] sm:$0x1]
      %v2924 = vlaneseq
      %v2925 = vshrl.u32 %v2924, 7
      %v2926 = vsub.s32 0, %v2925
      %v2927 = vrot.slane %v2922, %v2926
      %2929 = vmatprep.subr.mxu0 0.0
      %2930 = vmatpush1.msra.mxu0 %v2889
      %2931 = vmatprep.subr.mxu0 0.0
      %2932 = vmatpush1.msra.mxu0 %v2888
      %2933 = vmatprep.subr.mxu0 0.0
      %2934 = vmatpush1.msra.mxu0 %v2887
      %2935 = vmatprep.subr.mxu0 0.0
      %2936 = vmatpush1.msra.mxu0 %v2886
      %2937 = vmatprep.subr.mxu0 0.0
      %2938 = vmatpush1.msra.mxu0 %v2885
      %2939 = vmatprep.subr.mxu0 0.0
      %2940 = vmatpush1.msra.mxu0 %v2884
      %2941 = vmatprep.subr.mxu0 0.0
      %2942 = vmatpush1.msra.mxu0 %v2883
      %2943 = vmatprep.subr.mxu0 0.0
      %2944 = vmatpush1.msra.mxu0 %v2882
      %2945 = vmatprep.subr.mxu0 0.0
      %2946 = vmatpush1.msra.mxu0 %v2881
      %2947 = vmatprep.subr.mxu0 0.0
      %2948 = vmatpush1.msra.mxu0 %v2880
      %2949 = vmatprep.subr.mxu0 0.0
      %2950 = vmatpush1.msra.mxu0 %v2879
      %2951 = vmatprep.subr.mxu0 0.0
      %2952 = vmatpush1.msra.mxu0 %v2878
      %2953 = vmatprep.subr.mxu0 0.0
      %2954 = vmatpush1.msra.mxu0 %v2877
      %2955 = vmatprep.subr.mxu0 0.0
      %2956 = vmatpush1.msra.mxu0 %v2876
      %2957 = vmatprep.subr.mxu0 0.0
      %2958 = vmatpush1.msra.mxu0 %v2875
      %2959 = vmatprep.subr.mxu0 0.0
      %2960 = vmatpush1.msra.mxu0 %v2874
      %2961 = vmatprep.subr.mxu0 0.0
      %2962 = vmatpush2.msra.mxu0 %v2905
      %2963 = vmatprep.subr.mxu0 0.0
      %2964 = vmatpush2.msra.mxu0 %v2904
      %2965 = vmatprep.subr.mxu0 0.0
      %2966 = vmatpush2.msra.mxu0 %v2903
      %2967 = vmatprep.subr.mxu0 0.0
      %2968 = vmatpush2.msra.mxu0 %v2902
      %2969 = vmatprep.subr.mxu0 0.0
      %2970 = vmatpush2.msra.mxu0 %v2901
      %2971 = vmatprep.subr.mxu0 0.0
      %2972 = vmatpush2.msra.mxu0 %v2900
      %2973 = vmatprep.subr.mxu0 0.0
      %2974 = vmatpush2.msra.mxu0 %v2899
      %2975 = vmatprep.subr.mxu0 0.0
      %2976 = vmatpush2.msra.mxu0 %v2898
      %2977 = vmatprep.subr.mxu0 0.0
      %2978 = vmatpush2.msra.mxu0 %v2897
      %2979 = vmatprep.subr.mxu0 0.0
      %2980 = vmatpush2.msra.mxu0 %v2896
      %2981 = vmatprep.subr.mxu0 0.0
      %2982 = vmatpush2.msra.mxu0 %v2895
      %2983 = vmatprep.subr.mxu0 0.0
      %2984 = vmatpush2.msra.mxu0 %v2894
      %2985 = vmatprep.subr.mxu0 0.0
      %2986 = vmatpush2.msra.mxu0 %v2893
      %2987 = vmatprep.subr.mxu0 0.0
      %2988 = vmatpush2.msra.mxu0 %v2892
      %2989 = vmatprep.subr.mxu0 0.0
      %2990 = vmatpush2.msra.mxu0 %v2891
      %2991 = vmatprep.subr.mxu0 0.0
      %2992 = vmatpush2.msra.mxu0 %v2890
      %2993 = vmatprep.mubr.f32.mxu0 %v2869
      %2994 = vmatmul.mubr.f32.gmra.mxu0 %v2868
      %v2995 = vpop.f32.mrf.mxu0
      %v2996 = vadd.f32 %v2927, %v2995
      %v2997 = vpop.f32.mrf.mxu0
      %2998 = vmatprep.mubr.f32.mxu0 %v2872
      %2999 = vmatmul.mubr.f32.gmra.mxu0 %v2871
      %v3000 = vpop.f32.mrf.mxu0
      %v3001 = vadd.f32 %v2927, %v3000
      %v3002 = vpop.f32.mrf.mxu0
      %3003 = vdwg.mxu0
      %3004 = vmatprep.subr.mxu0 0.0
      %3005 = vmatpush1.msra.mxu0 %v2921
      %3006 = vmatprep.subr.mxu0 0.0
      %3007 = vmatpush1.msra.mxu0 %v2920
      %3008 = vmatprep.subr.mxu0 0.0
      %3009 = vmatpush1.msra.mxu0 %v2919
      %3010 = vmatprep.subr.mxu0 0.0
      %3011 = vmatpush1.msra.mxu0 %v2918
      %3012 = vmatprep.subr.mxu0 0.0
      %3013 = vmatpush1.msra.mxu0 %v2917
      %3014 = vmatprep.subr.mxu0 0.0
      %3015 = vmatpush1.msra.mxu0 %v2916
      %3016 = vmatprep.subr.mxu0 0.0
      %3017 = vmatpush1.msra.mxu0 %v2915
      %3018 = vmatprep.subr.mxu0 0.0
      %3019 = vmatpush1.msra.mxu0 %v2914
      %3020 = vmatprep.subr.mxu0 0.0
      %3021 = vmatpush1.msra.mxu0 %v2913
      %3022 = vmatprep.subr.mxu0 0.0
      %3023 = vmatpush1.msra.mxu0 %v2912
      %3024 = vmatprep.subr.mxu0 0.0
      %3025 = vmatpush1.msra.mxu0 %v2911
      %3026 = vmatprep.subr.mxu0 0.0
      %3027 = vmatpush1.msra.mxu0 %v2910
      %3028 = vmatprep.subr.mxu0 0.0
      %3029 = vmatpush1.msra.mxu0 %v2909
      %3030 = vmatprep.subr.mxu0 0.0
      %3031 = vmatpush1.msra.mxu0 %v2908
      %3032 = vmatprep.subr.mxu0 0.0
      %3033 = vmatpush1.msra.mxu0 %v2907
      %3034 = vmatprep.subr.mxu0 0.0
      %3035 = vmatpush1.msra.mxu0 %v2906
      %3036 = vmatprep.subr.mxu0 0.0
      %3037 = vmatpush2.msra.mxu0 0.0
      %3038 = vmatprep.subr.mxu0 0.0
      %3039 = vmatpush2.msra.mxu0 0.0
      %3040 = vmatprep.subr.mxu0 0.0
      %3041 = vmatpush2.msra.mxu0 0.0
      %3042 = vmatprep.subr.mxu0 0.0
      %3043 = vmatpush2.msra.mxu0 0.0
      %3044 = vmatprep.subr.mxu0 0.0
      %3045 = vmatpush2.msra.mxu0 0.0
      %3046 = vmatprep.subr.mxu0 0.0
      %3047 = vmatpush2.msra.mxu0 0.0
      %3048 = vmatprep.subr.mxu0 0.0
      %3049 = vmatpush2.msra.mxu0 0.0
      %3050 = vmatprep.subr.mxu0 0.0
      %3051 = vmatpush2.msra.mxu0 0.0
      %3052 = vmatprep.subr.mxu0 0.0
      %3053 = vmatpush2.msra.mxu0 0.0
      %3054 = vmatprep.subr.mxu0 0.0
      %3055 = vmatpush2.msra.mxu0 0.0
      %3056 = vmatprep.subr.mxu0 0.0
      %3057 = vmatpush2.msra.mxu0 0.0
      %3058 = vmatprep.subr.mxu0 0.0
      %3059 = vmatpush2.msra.mxu0 0.0
      %3060 = vmatprep.subr.mxu0 0.0
      %3061 = vmatpush2.msra.mxu0 0.0
      %3062 = vmatprep.subr.mxu0 0.0
      %3063 = vmatpush2.msra.mxu0 0.0
      %3064 = vmatprep.subr.mxu0 0.0
      %3065 = vmatpush2.msra.mxu0 0.0
      %3066 = vmatprep.subr.mxu0 0.0
      %3067 = vmatpush2.msra.mxu0 0.0
      %3068 = vmatprep.mubr.f32.mxu0 0.0
      %3069 = vmatmul.mubr.f32.gmra.mxu0 %v2870
      %v3070 = vpop.f32.mrf.mxu0
      %v3071 = vadd.f32 %v2996, %v3070
      %v3072 = vpop.f32.mrf.mxu0
      %3073 = vmatprep.mubr.f32.mxu0 0.0
      %3074 = vmatmul.mubr.f32.gmra.mxu0 %v2873
      %v3075 = vpop.f32.mrf.mxu0
      %v3076 = vadd.f32 %v3001, %v3075
      %v3077 = vpop.f32.mrf.mxu0
      %3078 = vdwg.mxu0
      %v3079 = vadd.f32 %v3071, %v2191
      %v3080 = vadd.f32 %v3076, %v2192
      %3081 = vst [vmem:[%s575] sm:$0xff] %v3079
      %3082 = vst [vmem:[%s575 + $0x8] sm:$0xff] %v3080
      %p3083 = scmp.lt.s32.totalorder %s29, 1
      %s3084 = scalar_select %p3083, %s29, 1
      %s3085 = smul.addr %s3084, 2
      %s3086 = smul.addr %s3085, 8
      %s3087 = scalar_lea.vmem %s18, %s3086
      // Predicated region
      $region93: #{shuffle_mixer_forward.5} parent=91 // pred_check
        %p3088 = pneg %p430
      $region94: #{shuffle_mixer_forward.5} parent=91 // pred_check_branch
        %3090 = sbr.rel (%p3088) target = $region96
      $region95: #{shuffle_mixer_forward.5} parent=91 // pred_region
        _
      $region96: #{shuffle_mixer_forward.5} parent=91 // pred_fallthru
        _
    $region92: #{shuffle_mixer_forward.5} parent=5 // pred_fallthru
      _
    %p3091 = scmp.le.s32.totalorder 2, %s24
    // Predicated region
    $region97: #{shuffle_mixer_forward.5} parent=5 // pred_check
      %p3092 = pneg %p3091
    $region98: #{shuffle_mixer_forward.5} parent=5 // pred_check_branch
      %3094 = sbr.rel (%p3092) target = $region100
    $region99: #{shuffle_mixer_forward.5} parent=5 // pred_region
      %s3095 = ssub.s32 %s24, 2
      // Predicated region
      $region101: #{shuffle_mixer_forward.5} parent=99 // pred_check
        %p3096 = pneg %p436
      $region102: #{shuffle_mixer_forward.5} parent=99 // pred_check_branch
        %3098 = sbr.rel (%p3096) target = $region104
      $region103: #{shuffle_mixer_forward.5} parent=99 // pred_region
        %p3099 = scmp.lt.s32.totalorder %s30, 1
        %s3100 = scalar_select %p3099, %s30, 1
        %s3101 = smul.addr %s3100, 2
        %s3102 = smul.addr %s3101, 8
        %s3103 = scalar_lea.vmem %s18, %s3102
      $region104: #{shuffle_mixer_forward.5} parent=99 // pred_fallthru
        _
    $region100: #{shuffle_mixer_forward.5} parent=5 // pred_fallthru
      _
  $region6: #{shuffle_mixer_forward.5} parent=0 // loop_footer
    %s28 = sadd.s32 1, %s24
  $region7: #{shuffle_mixer_forward.5} parent=0 // loop_footer_branch
    %23 = sbr.rel target = $region3
  $region8: #{shuffle_mixer_forward.5} parent=0 // loop_exit
    _

// kernel: shuffle_mixer_forward.6
$region0: #{shuffle_mixer_forward.6}
  #allocation0 [shape = 'u32[]', space=smem, size = 0x4, offset = 0x4, fixed_abs, tag = 'smem constant byte address 0x4 - core index']
  #allocation1 [shape = 'u32[144,128]{1,0:T(1,128)}', space=vmem, size = 0x12000, scoped, tag = 'internal scratch']
  %s0 = inlined_call_operand.vmem [shape: f32[2,16,128], index: 0, kind: input, shape index: {}]
  %s1 = inlined_call_operand.vmem [shape: f32[128,512], index: 1, kind: input, shape index: {}]
  %s2 = inlined_call_operand.vmem [shape: f32[1,512], index: 2, kind: input, shape index: {}]
  %s3 = inlined_call_operand.vmem [shape: f32[2,16,512], index: 3, kind: output, shape index: {}]
  %s4 = sld [smem:[#allocation0]]
  $region45: #{shuffle_mixer_forward.6} parent=0
    _
  %s6 = ssub.s32 1, %s4
  %s7 = scalar_select 0, %s6, %s4
  loop: start=0, step=1, limit=4
  $region2: #{shuffle_mixer_forward.6} parent=0 // loop_pre_header
    _
  $region3: #{shuffle_mixer_forward.6} parent=0 // loop_header
    %s9 = sphi 0, %s13
    %p10 = scmp.ge.s32.totalorder %s9, 4
    %s19 = sphi 0, %s21
    %s22 = sphi 0, %s19
    %s23 = sphi 0, %s22
    %s39 = sphi 0, %s23
    %s43 = sphi 0, %s43
    %s45 = sphi 0, %s43
    %s46 = sphi 0, %s45
    %s60 = sphi 0, %s46
    %s64 = sphi 0, %s64
    %s66 = sphi 0, %s64
    %s67 = sphi 0, %s66
    %s81 = sphi 0, %s67
    %s87 = sphi 0, %s89
    %s90 = sphi 0, %s87
    %s91 = sphi 0, %s90
    %s107 = sphi 0, %s91
  $region4: #{shuffle_mixer_forward.6} parent=0 // loop_header_branch
    %12 = sbr.rel (%p10) target = $region8
  $region5: #{shuffle_mixer_forward.6} parent=0 // loop_body
    %s14 = ssub.s32 %s9, 1
    %s15 = ssub.s32 %s9, 2
    %s16 = sadd.s32 %s9, 1
    %s17 = ssub.s32 %s9, %s16
    %p18 = scmp.eq.s32.totalorder %s17, 0
    %s20 = sadd.s32 %s19, 1
    %s21 = scalar_select %p18, %s19, %s20
    %p24 = pneg %p18
    %p25 = scmp.eq.s32.totalorder %s9, 1
    %p26 = por %p24, %p25
    %p27 = scmp.ne.s32.totalorder %s19, %s22
    %p28 = scmp.eq.s32.totalorder %s9, 0
    %p29 = por %p27, %p28
    %p30 = scmp.ne.s32.totalorder %s19, %s22
    %p31 = scmp.eq.s32.totalorder %s14, 1
    %p32 = por %p30, %p31
    %p33 = scmp.ne.s32.totalorder %s22, %s23
    %p34 = scmp.eq.s32.totalorder %s14, 0
    %p35 = por %p33, %p34
    %p36 = scmp.ne.s32.totalorder %s22, %s23
    %p37 = scmp.eq.s32.totalorder %s15, 1
    %p38 = por %p36, %p37
    %p40 = scmp.ne.s32.totalorder %s23, %s39
    %p41 = scmp.eq.s32.totalorder %s15, 0
    %p42 = por %p40, %p41
    %s44 = sadd.s32 %s43, 1
    %p47 = scmp.eq.s32.totalorder %s9, 1
    %p48 = scmp.ne.s32.totalorder %s43, %s45
    %p49 = scmp.eq.s32.totalorder %s9, 0
    %p50 = por %p48, %p49
    %p51 = scmp.ne.s32.totalorder %s43, %s45
    %p52 = scmp.eq.s32.totalorder %s14, 1
    %p53 = por %p51, %p52
    %p54 = scmp.ne.s32.totalorder %s45, %s46
    %p55 = scmp.eq.s32.totalorder %s14, 0
    %p56 = por %p54, %p55
    %p57 = scmp.ne.s32.totalorder %s45, %s46
    %p58 = scmp.eq.s32.totalorder %s15, 1
    %p59 = por %p57, %p58
    %p61 = scmp.ne.s32.totalorder %s46, %s60
    %p62 = scmp.eq.s32.totalorder %s15, 0
    %p63 = por %p61, %p62
    %s65 = sadd.s32 %s64, 1
    %p68 = scmp.eq.s32.totalorder %s9, 1
    %p69 = scmp.ne.s32.totalorder %s64, %s66
    %p70 = scmp.eq.s32.totalorder %s9, 0
    %p71 = por %p69, %p70
    %p72 = scmp.ne.s32.totalorder %s64, %s66
    %p73 = scmp.eq.s32.totalorder %s14, 1
    %p74 = por %p72, %p73
    %p75 = scmp.ne.s32.totalorder %s66, %s67
    %p76 = scmp.eq.s32.totalorder %s14, 0
    %p77 = por %p75, %p76
    %p78 = scmp.ne.s32.totalorder %s66, %s67
    %p79 = scmp.eq.s32.totalorder %s15, 1
    %p80 = por %p78, %p79
    %p82 = scmp.ne.s32.totalorder %s67, %s81
    %p83 = scmp.eq.s32.totalorder %s15, 0
    %p84 = por %p82, %p83
    %s85 = ssub.s32 %s9, %s16
    %p86 = scmp.eq.s32.totalorder %s85, 0
    %s88 = sadd.s32 %s87, 1
    %s89 = scalar_select %p86, %s87, %s88
    %p92 = pneg %p86
    %p93 = scmp.eq.s32.totalorder %s9, 1
    %p94 = por %p92, %p93
    %p95 = scmp.ne.s32.totalorder %s87, %s90
    %p96 = scmp.eq.s32.totalorder %s9, 0
    %p97 = por %p95, %p96
    %p98 = scmp.ne.s32.totalorder %s87, %s90
    %p99 = scmp.eq.s32.totalorder %s14, 1
    %p100 = por %p98, %p99
    %p101 = scmp.ne.s32.totalorder %s90, %s91
    %p102 = scmp.eq.s32.totalorder %s14, 0
    %p103 = por %p101, %p102
    %p104 = scmp.ne.s32.totalorder %s90, %s91
    %p105 = scmp.eq.s32.totalorder %s15, 1
    %p106 = por %p104, %p105
    %p108 = scmp.ne.s32.totalorder %s91, %s107
    %p109 = scmp.eq.s32.totalorder %s15, 0
    %p110 = por %p108, %p109
    %p111 = scmp.le.s32.totalorder 1, %s9
    %p112 = scmp.lt.s32.totalorder %s9, 3
    %p113 = pnand %p111, %p112
    %p114 = pneg %p113
    // Predicated region
    $region9: #{shuffle_mixer_forward.6} parent=5 // pred_check
      _
    $region10: #{shuffle_mixer_forward.6} parent=5 // pred_check_branch
      %116 = sbr.rel (%p113) target = $region12
    $region11: #{shuffle_mixer_forward.6} parent=5 // pred_region
      %s117 = ssub.s32 %s9, 1
      // Predicated region
      $region13: #{shuffle_mixer_forward.6} parent=11 // pred_check
        %p118 = pneg %p56
      $region14: #{shuffle_mixer_forward.6} parent=11 // pred_check_branch
        %120 = sbr.rel (%p118) target = $region16
      $region15: #{shuffle_mixer_forward.6} parent=11 // pred_region
        _
      $region16: #{shuffle_mixer_forward.6} parent=11 // pred_fallthru
        _
      // Predicated region
      $region17: #{shuffle_mixer_forward.6} parent=11 // pred_check
        %p121 = pneg %p77
      $region18: #{shuffle_mixer_forward.6} parent=11 // pred_check_branch
        %123 = sbr.rel (%p121) target = $region20
      $region19: #{shuffle_mixer_forward.6} parent=11 // pred_region
        _
      $region20: #{shuffle_mixer_forward.6} parent=11 // pred_fallthru
        _
    $region12: #{shuffle_mixer_forward.6} parent=5 // pred_fallthru
      _
    %p124 = scmp.lt.s32.totalorder %s9, 2
    // Predicated region
    $region21: #{shuffle_mixer_forward.6} parent=5 // pred_check
      %p125 = pneg %p124
    $region22: #{shuffle_mixer_forward.6} parent=5 // pred_check_branch
      %127 = sbr.rel (%p125) target = $region24
    $region23: #{shuffle_mixer_forward.6} parent=5 // pred_region
      // Predicated region
      $region25: #{shuffle_mixer_forward.6} parent=23 // pred_check
        %p128 = pneg %p29
      $region26: #{shuffle_mixer_forward.6} parent=23 // pred_check_branch
        %130 = sbr.rel (%p128) target = $region28
      $region27: #{shuffle_mixer_forward.6} parent=23 // pred_region
        %p131 = scmp.lt.s32.totalorder %s9, 1
        %s132 = scalar_select %p131, %s9, 1
        %s133 = smul.addr %s132, 2
        %s134 = smul.addr %s133, 8
        %s135 = scalar_lea.vmem %s0, %s134
      $region28: #{shuffle_mixer_forward.6} parent=23 // pred_fallthru
        _
    $region24: #{shuffle_mixer_forward.6} parent=5 // pred_fallthru
      _
    %p136 = scmp.le.s32.totalorder 1, %s9
    %p137 = scmp.lt.s32.totalorder %s9, 3
    %p138 = pnand %p136, %p137
    %p139 = pneg %p138
    // Predicated region
    $region29: #{shuffle_mixer_forward.6} parent=5 // pred_check
      _
    $region30: #{shuffle_mixer_forward.6} parent=5 // pred_check_branch
      %141 = sbr.rel (%p138) target = $region32
    $region31: #{shuffle_mixer_forward.6} parent=5 // pred_region
      %s142 = ssub.s32 %s9, 1
      %p143 = scmp.lt.s32.totalorder %s14, 1
      %s144 = scalar_select %p143, %s14, 1
      %s145 = smul.addr %s144, 2
      %s146 = smul.addr %s145, 8
      %s147 = scalar_lea.vmem %s0, %s146
      %p148 = pneg %p35
      %p149 = pneg %p32
      %p150 = pneg %p56
      %p151 = pneg %p53
      %p152 = pneg %p77
      %p153 = pneg %p74
      %p154 = pneg %p103
      %p155 = pneg %p100
      %p156 = scmp.lt.s32.totalorder %s14, 1
      %s157 = scalar_select %p156, %s14, 1
      %s158 = smul.addr %s157, 8
      %s159 = smul.addr %s158, 8
      %s160 = scalar_lea.vmem %s3, %s159
      %p161 = scmp.lt.s32.totalorder %s14, 1
      %s162 = scalar_select %p161, %s14, 1
      %s163 = smul.addr %s162, 2
      %s164 = smul.addr %s163, 8
      %s165 = scalar_lea.vmem %s0, %s164
      %p166 = scmp.lt.s32.totalorder %s14, 1
      %s167 = scalar_select %p166, %s14, 1
      %s168 = smul.addr %s167, 8
      %s169 = smul.addr %s168, 8
      %s170 = scalar_lea.vmem %s3, %s169
      %v171 = vld [vmem:[%s165] sm:$0xff]
      %v172 = vld [vmem:[%s165 + $0x8] sm:$0xff]
      %v173 = vld [vmem:[%s1] sm:$0xff]
      %v174 = vld [vmem:[%s1 + $0x8] sm:$0xff]
      %v175 = vld [vmem:[%s1 + $0x10] sm:$0xff]
      %v176 = vld [vmem:[%s1 + $0x18] sm:$0xff]
      %v177 = vld [vmem:[%s1 + $0x20] sm:$0xff]
      %v178 = vld [vmem:[%s1 + $0x28] sm:$0xff]
      %v179 = vld [vmem:[%s1 + $0x30] sm:$0xff]
      %v180 = vld [vmem:[%s1 + $0x38] sm:$0xff]
      %v181 = vld [vmem:[%s1 + $0x40] sm:$0xff]
      %v182 = vld [vmem:[%s1 + $0x48] sm:$0xff]
      %v183 = vld [vmem:[%s1 + $0x50] sm:$0xff]
      %v184 = vld [vmem:[%s1 + $0x58] sm:$0xff]
      %v185 = vld [vmem:[%s1 + $0x60] sm:$0xff]
      %v186 = vld [vmem:[%s1 + $0x68] sm:$0xff]
      %v187 = vld [vmem:[%s1 + $0x70] sm:$0xff]
      %v188 = vld [vmem:[%s1 + $0x78] sm:$0xff]
      %v189 = vld [vmem:[%s1 + $0x80] sm:$0xff]
      %v190 = vld [vmem:[%s1 + $0x88] sm:$0xff]
      %v191 = vld [vmem:[%s1 + $0x90] sm:$0xff]
      %v192 = vld [vmem:[%s1 + $0x98] sm:$0xff]
      %v193 = vld [vmem:[%s1 + $0xa0] sm:$0xff]
      %v194 = vld [vmem:[%s1 + $0xa8] sm:$0xff]
      %v195 = vld [vmem:[%s1 + $0xb0] sm:$0xff]
      %v196 = vld [vmem:[%s1 + $0xb8] sm:$0xff]
      %v197 = vld [vmem:[%s1 + $0xc0] sm:$0xff]
      %v198 = vld [vmem:[%s1 + $0xc8] sm:$0xff]
      %v199 = vld [vmem:[%s1 + $0xd0] sm:$0xff]
      %v200 = vld [vmem:[%s1 + $0xd8] sm:$0xff]
      %v201 = vld [vmem:[%s1 + $0xe0] sm:$0xff]
      %v202 = vld [vmem:[%s1 + $0xe8] sm:$0xff]
      %v203 = vld [vmem:[%s1 + $0xf0] sm:$0xff]
      %v204 = vld [vmem:[%s1 + $0xf8] sm:$0xff]
      %v205 = vld [vmem:[%s1 + $0x100] sm:$0xff]
      %v206 = vld [vmem:[%s1 + $0x108] sm:$0xff]
      %v207 = vld [vmem:[%s1 + $0x110] sm:$0xff]
      %v208 = vld [vmem:[%s1 + $0x118] sm:$0xff]
      %v209 = vld [vmem:[%s1 + $0x120] sm:$0xff]
      %v210 = vld [vmem:[%s1 + $0x128] sm:$0xff]
      %v211 = vld [vmem:[%s1 + $0x130] sm:$0xff]
      %v212 = vld [vmem:[%s1 + $0x138] sm:$0xff]
      %v213 = vld [vmem:[%s1 + $0x140] sm:$0xff]
      %v214 = vld [vmem:[%s1 + $0x148] sm:$0xff]
      %v215 = vld [vmem:[%s1 + $0x150] sm:$0xff]
      %v216 = vld [vmem:[%s1 + $0x158] sm:$0xff]
      %v217 = vld [vmem:[%s1 + $0x160] sm:$0xff]
      %v218 = vld [vmem:[%s1 + $0x168] sm:$0xff]
      %v219 = vld [vmem:[%s1 + $0x170] sm:$0xff]
      %v220 = vld [vmem:[%s1 + $0x178] sm:$0xff]
      %v221 = vld [vmem:[%s1 + $0x180] sm:$0xff]
      %v222 = vld [vmem:[%s1 + $0x188] sm:$0xff]
      %v223 = vld [vmem:[%s1 + $0x190] sm:$0xff]
      %v224 = vld [vmem:[%s1 + $0x198] sm:$0xff]
      %v225 = vld [vmem:[%s1 + $0x1a0] sm:$0xff]
      %v226 = vld [vmem:[%s1 + $0x1a8] sm:$0xff]
      %v227 = vld [vmem:[%s1 + $0x1b0] sm:$0xff]
      %v228 = vld [vmem:[%s1 + $0x1b8] sm:$0xff]
      %v229 = vld [vmem:[%s1 + $0x1c0] sm:$0xff]
      %v230 = vld [vmem:[%s1 + $0x1c8] sm:$0xff]
      %v231 = vld [vmem:[%s1 + $0x1d0] sm:$0xff]
      %v232 = vld [vmem:[%s1 + $0x1d8] sm:$0xff]
      %v233 = vld [vmem:[%s1 + $0x1e0] sm:$0xff]
      %v234 = vld [vmem:[%s1 + $0x1e8] sm:$0xff]
      %v235 = vld [vmem:[%s1 + $0x1f0] sm:$0xff]
      %v236 = vld [vmem:[%s1 + $0x1f8] sm:$0xff]
      %v237 = vld [vmem:[%s2] sm:$0xf]
      %v239 = vlaneseq
      %v240 = vshrl.u32 %v239, 7
      %v241 = vsub.s32 0, %v240
      %v242 = vrot.slane %v237, %v241
      %v243 = vlaneseq
      %v244 = vshrl.u32 %v243, 7
      %v245 = vsub.s32 1, %v244
      %v246 = vrot.slane %v237, %v245
      %v247 = vlaneseq
      %v248 = vshrl.u32 %v247, 7
      %v249 = vsub.s32 2, %v248
      %v250 = vrot.slane %v237, %v249
      %v251 = vlaneseq
      %v252 = vshrl.u32 %v251, 7
      %v253 = vsub.s32 3, %v252
      %v254 = vrot.slane %v237, %v253
      %259 = vmatprep.subr.mxu0 %v234
      %260 = vmatpush1.msra.mxu0 %v233
      %261 = vmatprep.subr.mxu0 %v230
      %262 = vmatpush1.msra.mxu0 %v229
      %263 = vmatprep.subr.mxu0 %v226
      %264 = vmatpush1.msra.mxu0 %v225
      %265 = vmatprep.subr.mxu0 %v222
      %266 = vmatpush1.msra.mxu0 %v221
      %267 = vmatprep.subr.mxu0 %v218
      %268 = vmatpush1.msra.mxu0 %v217
      %269 = vmatprep.subr.mxu0 %v214
      %270 = vmatpush1.msra.mxu0 %v213
      %271 = vmatprep.subr.mxu0 %v210
      %272 = vmatpush1.msra.mxu0 %v209
      %273 = vmatprep.subr.mxu0 %v206
      %274 = vmatpush1.msra.mxu0 %v205
      %275 = vmatprep.subr.mxu0 %v202
      %276 = vmatpush1.msra.mxu0 %v201
      %277 = vmatprep.subr.mxu0 %v198
      %278 = vmatpush1.msra.mxu0 %v197
      %279 = vmatprep.subr.mxu0 %v194
      %280 = vmatpush1.msra.mxu0 %v193
      %281 = vmatprep.subr.mxu0 %v190
      %282 = vmatpush1.msra.mxu0 %v189
      %283 = vmatprep.subr.mxu0 %v186
      %284 = vmatpush1.msra.mxu0 %v185
      %285 = vmatprep.subr.mxu0 %v182
      %286 = vmatpush1.msra.mxu0 %v181
      %287 = vmatprep.subr.mxu0 %v178
      %288 = vmatpush1.msra.mxu0 %v177
      %289 = vmatprep.subr.mxu0 %v174
      %290 = vmatpush1.msra.mxu0 %v173
      %291 = vmatprep.subr.mxu0 0.0
      %292 = vmatpush2.msra.mxu0 0.0
      %293 = vmatprep.subr.mxu0 0.0
      %294 = vmatpush2.msra.mxu0 0.0
      %295 = vmatprep.subr.mxu0 0.0
      %296 = vmatpush2.msra.mxu0 0.0
      %297 = vmatprep.subr.mxu0 0.0
      %298 = vmatpush2.msra.mxu0 0.0
      %299 = vmatprep.subr.mxu0 0.0
      %300 = vmatpush2.msra.mxu0 0.0
      %301 = vmatprep.subr.mxu0 0.0
      %302 = vmatpush2.msra.mxu0 0.0
      %303 = vmatprep.subr.mxu0 0.0
      %304 = vmatpush2.msra.mxu0 0.0
      %305 = vmatprep.subr.mxu0 0.0
      %306 = vmatpush2.msra.mxu0 0.0
      %307 = vmatprep.subr.mxu0 0.0
      %308 = vmatpush2.msra.mxu0 0.0
      %309 = vmatprep.subr.mxu0 0.0
      %310 = vmatpush2.msra.mxu0 0.0
      %311 = vmatprep.subr.mxu0 0.0
      %312 = vmatpush2.msra.mxu0 0.0
      %313 = vmatprep.subr.mxu0 0.0
      %314 = vmatpush2.msra.mxu0 0.0
      %315 = vmatprep.subr.mxu0 0.0
      %316 = vmatpush2.msra.mxu0 0.0
      %317 = vmatprep.subr.mxu0 0.0
      %318 = vmatpush2.msra.mxu0 0.0
      %319 = vmatprep.subr.mxu0 0.0
      %320 = vmatpush2.msra.mxu0 0.0
      %321 = vmatprep.subr.mxu0 0.0
      %322 = vmatpush2.msra.mxu0 0.0
      %323 = vmatprep.mubr.f32.mxu0 0.0
      %324 = vmatmul.mubr.f32.gmra.mxu0 %v171
      %v325 = vpop.f32.mrf.mxu0
      %v326 = vadd.f32 %v242, %v325
      %v327 = vpop.f32.mrf.mxu0
      %v328 = vadd.f32 %v246, %v327
      %329 = vmatprep.mubr.f32.mxu0 0.0
      %330 = vmatmul.mubr.f32.gmra.mxu0 %v172
      %v331 = vpop.f32.mrf.mxu0
      %v332 = vadd.f32 %v242, %v331
      %v333 = vpop.f32.mrf.mxu0
      %v334 = vadd.f32 %v246, %v333
      %335 = vdwg.mxu0
      %336 = vmatprep.subr.mxu0 %v236
      %337 = vmatpush1.msra.mxu0 %v235
      %338 = vmatprep.subr.mxu0 %v232
      %339 = vmatpush1.msra.mxu0 %v231
      %340 = vmatprep.subr.mxu0 %v228
      %341 = vmatpush1.msra.mxu0 %v227
      %342 = vmatprep.subr.mxu0 %v224
      %343 = vmatpush1.msra.mxu0 %v223
      %344 = vmatprep.subr.mxu0 %v220
      %345 = vmatpush1.msra.mxu0 %v219
      %346 = vmatprep.subr.mxu0 %v216
      %347 = vmatpush1.msra.mxu0 %v215
      %348 = vmatprep.subr.mxu0 %v212
      %349 = vmatpush1.msra.mxu0 %v211
      %350 = vmatprep.subr.mxu0 %v208
      %351 = vmatpush1.msra.mxu0 %v207
      %352 = vmatprep.subr.mxu0 %v204
      %353 = vmatpush1.msra.mxu0 %v203
      %354 = vmatprep.subr.mxu0 %v200
      %355 = vmatpush1.msra.mxu0 %v199
      %356 = vmatprep.subr.mxu0 %v196
      %357 = vmatpush1.msra.mxu0 %v195
      %358 = vmatprep.subr.mxu0 %v192
      %359 = vmatpush1.msra.mxu0 %v191
      %360 = vmatprep.subr.mxu0 %v188
      %361 = vmatpush1.msra.mxu0 %v187
      %362 = vmatprep.subr.mxu0 %v184
      %363 = vmatpush1.msra.mxu0 %v183
      %364 = vmatprep.subr.mxu0 %v180
      %365 = vmatpush1.msra.mxu0 %v179
      %366 = vmatprep.subr.mxu0 %v176
      %367 = vmatpush1.msra.mxu0 %v175
      %368 = vmatprep.subr.mxu0 0.0
      %369 = vmatpush2.msra.mxu0 0.0
      %370 = vmatprep.subr.mxu0 0.0
      %371 = vmatpush2.msra.mxu0 0.0
      %372 = vmatprep.subr.mxu0 0.0
      %373 = vmatpush2.msra.mxu0 0.0
      %374 = vmatprep.subr.mxu0 0.0
      %375 = vmatpush2.msra.mxu0 0.0
      %376 = vmatprep.subr.mxu0 0.0
      %377 = vmatpush2.msra.mxu0 0.0
      %378 = vmatprep.subr.mxu0 0.0
      %379 = vmatpush2.msra.mxu0 0.0
      %380 = vmatprep.subr.mxu0 0.0
      %381 = vmatpush2.msra.mxu0 0.0
      %382 = vmatprep.subr.mxu0 0.0
      %383 = vmatpush2.msra.mxu0 0.0
      %384 = vmatprep.subr.mxu0 0.0
      %385 = vmatpush2.msra.mxu0 0.0
      %386 = vmatprep.subr.mxu0 0.0
      %387 = vmatpush2.msra.mxu0 0.0
      %388 = vmatprep.subr.mxu0 0.0
      %389 = vmatpush2.msra.mxu0 0.0
      %390 = vmatprep.subr.mxu0 0.0
      %391 = vmatpush2.msra.mxu0 0.0
      %392 = vmatprep.subr.mxu0 0.0
      %393 = vmatpush2.msra.mxu0 0.0
      %394 = vmatprep.subr.mxu0 0.0
      %395 = vmatpush2.msra.mxu0 0.0
      %396 = vmatprep.subr.mxu0 0.0
      %397 = vmatpush2.msra.mxu0 0.0
      %398 = vmatprep.subr.mxu0 0.0
      %399 = vmatpush2.msra.mxu0 0.0
      %400 = vmatprep.mubr.f32.mxu0 0.0
      %401 = vmatmul.mubr.f32.gmra.mxu0 %v171
      %v402 = vpop.f32.mrf.mxu0
      %v403 = vadd.f32 %v250, %v402
      %v404 = vpop.f32.mrf.mxu0
      %v405 = vadd.f32 %v254, %v404
      %406 = vmatprep.mubr.f32.mxu0 0.0
      %407 = vmatmul.mubr.f32.gmra.mxu0 %v172
      %v408 = vpop.f32.mrf.mxu0
      %v409 = vadd.f32 %v250, %v408
      %v410 = vpop.f32.mrf.mxu0
      %v411 = vadd.f32 %v254, %v410
      %412 = vdwg.mxu0
      %v413 = vxor.u32 %v326, 2147483648
      %v414 = vxor.u32 %v328, 2147483648
      %v415 = vxor.u32 %v403, 2147483648
      %v416 = vxor.u32 %v405, 2147483648
      %v417 = vxor.u32 %v332, 2147483648
      %v418 = vxor.u32 %v334, 2147483648
      %v419 = vxor.u32 %v409, 2147483648
      %v420 = vxor.u32 %v411, 2147483648
      %v421 = vmul.f32 %v413, 1.442695
      %v422 = vpow.pop %v421
      %v423 = vmul.f32 %v414, 1.442695
      %v424 = vpow.pop %v423
      %v425 = vmul.f32 %v415, 1.442695
      %v426 = vpow.pop %v425
      %v427 = vmul.f32 %v416, 1.442695
      %v428 = vpow.pop %v427
      %v429 = vmul.f32 %v417, 1.442695
      %v430 = vpow.pop %v429
      %v431 = vmul.f32 %v418, 1.442695
      %v432 = vpow.pop %v431
      %v433 = vmul.f32 %v419, 1.442695
      %v434 = vpow.pop %v433
      %v435 = vmul.f32 %v420, 1.442695
      %v436 = vpow.pop %v435
      %v437 = vadd.f32 %v422, 1.0
      %v438 = vadd.f32 %v424, 1.0
      %v439 = vadd.f32 %v426, 1.0
      %v440 = vadd.f32 %v428, 1.0
      %v441 = vadd.f32 %v430, 1.0
      %v442 = vadd.f32 %v432, 1.0
      %v443 = vadd.f32 %v434, 1.0
      %v444 = vadd.f32 %v436, 1.0
      %v445 = vrcp.pop %v437
      %v446 = vmul.f32 1.0, %v445
      %v447 = vrcp.pop %v438
      %v448 = vmul.f32 1.0, %v447
      %v449 = vrcp.pop %v439
      %v450 = vmul.f32 1.0, %v449
      %v451 = vrcp.pop %v440
      %v452 = vmul.f32 1.0, %v451
      %v453 = vrcp.pop %v441
      %v454 = vmul.f32 1.0, %v453
      %v455 = vrcp.pop %v442
      %v456 = vmul.f32 1.0, %v455
      %v457 = vrcp.pop %v443
      %v458 = vmul.f32 1.0, %v457
      %v459 = vrcp.pop %v444
      %v460 = vmul.f32 1.0, %v459
      %v461 = vmul.f32 %v326, %v446
      %v462 = vmul.f32 %v328, %v448
      %v463 = vmul.f32 %v403, %v450
      %v464 = vmul.f32 %v405, %v452
      %v465 = vmul.f32 %v332, %v454
      %v466 = vmul.f32 %v334, %v456
      %v467 = vmul.f32 %v409, %v458
      %v468 = vmul.f32 %v411, %v460
      %469 = vst [vmem:[%s170] sm:$0xff] %v461
      %470 = vst [vmem:[%s170 + $0x8] sm:$0xff] %v462
      %471 = vst [vmem:[%s170 + $0x10] sm:$0xff] %v463
      %472 = vst [vmem:[%s170 + $0x18] sm:$0xff] %v464
      %473 = vst [vmem:[%s170 + $0x20] sm:$0xff] %v465
      %474 = vst [vmem:[%s170 + $0x28] sm:$0xff] %v466
      %475 = vst [vmem:[%s170 + $0x30] sm:$0xff] %v467
      %476 = vst [vmem:[%s170 + $0x38] sm:$0xff] %v468
      %p477 = scmp.lt.s32.totalorder %s14, 1
      %s478 = scalar_select %p477, %s14, 1
      %s479 = smul.addr %s478, 8
      %s480 = smul.addr %s479, 8
      %s481 = scalar_lea.vmem %s3, %s480
      // Predicated region
      $region33: #{shuffle_mixer_forward.6} parent=31 // pred_check
        %p482 = pneg %p100
      $region34: #{shuffle_mixer_forward.6} parent=31 // pred_check_branch
        %484 = sbr.rel (%p482) target = $region36
      $region35: #{shuffle_mixer_forward.6} parent=31 // pred_region
        _
      $region36: #{shuffle_mixer_forward.6} parent=31 // pred_fallthru
        _
    $region32: #{shuffle_mixer_forward.6} parent=5 // pred_fallthru
      _
    %p485 = scmp.le.s32.totalorder 2, %s9
    // Predicated region
    $region37: #{shuffle_mixer_forward.6} parent=5 // pred_check
      %p486 = pneg %p485
    $region38: #{shuffle_mixer_forward.6} parent=5 // pred_check_branch
      %488 = sbr.rel (%p486) target = $region40
    $region39: #{shuffle_mixer_forward.6} parent=5 // pred_region
      %s489 = ssub.s32 %s9, 2
      // Predicated region
      $region41: #{shuffle_mixer_forward.6} parent=39 // pred_check
        %p490 = pneg %p106
      $region42: #{shuffle_mixer_forward.6} parent=39 // pred_check_branch
        %492 = sbr.rel (%p490) target = $region44
      $region43: #{shuffle_mixer_forward.6} parent=39 // pred_region
        %p493 = scmp.lt.s32.totalorder %s15, 1
        %s494 = scalar_select %p493, %s15, 1
        %s495 = smul.addr %s494, 8
        %s496 = smul.addr %s495, 8
        %s497 = scalar_lea.vmem %s3, %s496
      $region44: #{shuffle_mixer_forward.6} parent=39 // pred_fallthru
        _
    $region40: #{shuffle_mixer_forward.6} parent=5 // pred_fallthru
      _
  $region6: #{shuffle_mixer_forward.6} parent=0 // loop_footer
    %s13 = sadd.s32 1, %s9
  $region7: #{shuffle_mixer_forward.6} parent=0 // loop_footer_branch
    %8 = sbr.rel target = $region3
  $region8: #{shuffle_mixer_forward.6} parent=0 // loop_exit
    _

// kernel: shuffle_mixer_forward.7
$region0: #{shuffle_mixer_forward.7}
  #allocation0 [shape = 'u32[]', space=smem, size = 0x4, offset = 0x4, fixed_abs, tag = 'smem constant byte address 0x4 - core index']
  #allocation1 [shape = 'u32[144,128]{1,0:T(1,128)}', space=vmem, size = 0x12000, scoped, tag = 'internal scratch']
  #allocation2 [shape = 'f32[48,256]{1,0:T(8,128)}', space=vmem, size = 0xc000, scoped, tag = 'scratch operand']
  %s0 = inlined_call_operand.vmem [shape: f32[2,32,256], index: 0, kind: input, shape index: {}]
  %s1 = inlined_call_operand.vmem [shape: f32[2,32,96], index: 1, kind: input, shape index: {}]
  %s2 = inlined_call_operand.vmem [shape: f32[3,256,96], index: 2, kind: input, shape index: {}]
  %s3 = inlined_call_operand.vmem [shape: f32[1,96], index: 3, kind: input, shape index: {}]
  %s4 = inlined_call_operand.vmem [shape: f32[2,32,96], index: 4, kind: output, shape index: {}]
  %s5 = sld [smem:[#allocation0]]
  $region49: #{shuffle_mixer_forward.7} parent=0
    _
  %s7 = ssub.s32 1, %s5
  %s8 = scalar_select 0, %s7, %s5
  loop: start=0, step=1, limit=4
  $region2: #{shuffle_mixer_forward.7} parent=0 // loop_pre_header
    _
  $region3: #{shuffle_mixer_forward.7} parent=0 // loop_header
    %s10 = sphi 0, %s14
    %p11 = scmp.ge.s32.totalorder %s10, 4
    %s20 = sphi 0, %s22
    %s23 = sphi 0, %s20
    %s24 = sphi 0, %s23
    %s40 = sphi 0, %s24
    %s46 = sphi 0, %s48
    %s49 = sphi 0, %s46
    %s50 = sphi 0, %s49
    %s66 = sphi 0, %s50
    %s70 = sphi 0, %s70
    %s72 = sphi 0, %s70
    %s73 = sphi 0, %s72
    %s87 = sphi 0, %s73
    %s91 = sphi 0, %s91
    %s93 = sphi 0, %s91
    %s94 = sphi 0, %s93
    %s108 = sphi 0, %s94
    %s114 = sphi 0, %s116
    %s117 = sphi 0, %s114
    %s118 = sphi 0, %s117
    %s134 = sphi 0, %s118
  $region4: #{shuffle_mixer_forward.7} parent=0 // loop_header_branch
    %13 = sbr.rel (%p11) target = $region8
  $region5: #{shuffle_mixer_forward.7} parent=0 // loop_body
    %s15 = ssub.s32 %s10, 1
    %s16 = ssub.s32 %s10, 2
    %s17 = sadd.s32 %s10, 1
    %s18 = ssub.s32 %s10, %s17
    %p19 = scmp.eq.s32.totalorder %s18, 0
    %s21 = sadd.s32 %s20, 1
    %s22 = scalar_select %p19, %s20, %s21
    %p25 = pneg %p19
    %p26 = scmp.eq.s32.totalorder %s10, 1
    %p27 = por %p25, %p26
    %p28 = scmp.ne.s32.totalorder %s20, %s23
    %p29 = scmp.eq.s32.totalorder %s10, 0
    %p30 = por %p28, %p29
    %p31 = scmp.ne.s32.totalorder %s20, %s23
    %p32 = scmp.eq.s32.totalorder %s15, 1
    %p33 = por %p31, %p32
    %p34 = scmp.ne.s32.totalorder %s23, %s24
    %p35 = scmp.eq.s32.totalorder %s15, 0
    %p36 = por %p34, %p35
    %p37 = scmp.ne.s32.totalorder %s23, %s24
    %p38 = scmp.eq.s32.totalorder %s16, 1
    %p39 = por %p37, %p38
    %p41 = scmp.ne.s32.totalorder %s24, %s40
    %p42 = scmp.eq.s32.totalorder %s16, 0
    %p43 = por %p41, %p42
    %s44 = ssub.s32 %s10, %s17
    %p45 = scmp.eq.s32.totalorder %s44, 0
    %s47 = sadd.s32 %s46, 1
    %s48 = scalar_select %p45, %s46, %s47
    %p51 = pneg %p45
    %p52 = scmp.eq.s32.totalorder %s10, 1
    %p53 = por %p51, %p52
    %p54 = scmp.ne.s32.totalorder %s46, %s49
    %p55 = scmp.eq.s32.totalorder %s10, 0
    %p56 = por %p54, %p55
    %p57 = scmp.ne.s32.totalorder %s46, %s49
    %p58 = scmp.eq.s32.totalorder %s15, 1
    %p59 = por %p57, %p58
    %p60 = scmp.ne.s32.totalorder %s49, %s50
    %p61 = scmp.eq.s32.totalorder %s15, 0
    %p62 = por %p60, %p61
    %p63 = scmp.ne.s32.totalorder %s49, %s50
    %p64 = scmp.eq.s32.totalorder %s16, 1
    %p65 = por %p63, %p64
    %p67 = scmp.ne.s32.totalorder %s50, %s66
    %p68 = scmp.eq.s32.totalorder %s16, 0
    %p69 = por %p67, %p68
    %s71 = sadd.s32 %s70, 1
    %p74 = scmp.eq.s32.totalorder %s10, 1
    %p75 = scmp.ne.s32.totalorder %s70, %s72
    %p76 = scmp.eq.s32.totalorder %s10, 0
    %p77 = por %p75, %p76
    %p78 = scmp.ne.s32.totalorder %s70, %s72
    %p79 = scmp.eq.s32.totalorder %s15, 1
    %p80 = por %p78, %p79
    %p81 = scmp.ne.s32.totalorder %s72, %s73
    %p82 = scmp.eq.s32.totalorder %s15, 0
    %p83 = por %p81, %p82
    %p84 = scmp.ne.s32.totalorder %s72, %s73
    %p85 = scmp.eq.s32.totalorder %s16, 1
    %p86 = por %p84, %p85
    %p88 = scmp.ne.s32.totalorder %s73, %s87
    %p89 = scmp.eq.s32.totalorder %s16, 0
    %p90 = por %p88, %p89
    %s92 = sadd.s32 %s91, 1
    %p95 = scmp.eq.s32.totalorder %s10, 1
    %p96 = scmp.ne.s32.totalorder %s91, %s93
    %p97 = scmp.eq.s32.totalorder %s10, 0
    %p98 = por %p96, %p97
    %p99 = scmp.ne.s32.totalorder %s91, %s93
    %p100 = scmp.eq.s32.totalorder %s15, 1
    %p101 = por %p99, %p100
    %p102 = scmp.ne.s32.totalorder %s93, %s94
    %p103 = scmp.eq.s32.totalorder %s15, 0
    %p104 = por %p102, %p103
    %p105 = scmp.ne.s32.totalorder %s93, %s94
    %p106 = scmp.eq.s32.totalorder %s16, 1
    %p107 = por %p105, %p106
    %p109 = scmp.ne.s32.totalorder %s94, %s108
    %p110 = scmp.eq.s32.totalorder %s16, 0
    %p111 = por %p109, %p110
    %s112 = ssub.s32 %s10, %s17
    %p113 = scmp.eq.s32.totalorder %s112, 0
    %s115 = sadd.s32 %s114, 1
    %s116 = scalar_select %p113, %s114, %s115
    %p119 = pneg %p113
    %p120 = scmp.eq.s32.totalorder %s10, 1
    %p121 = por %p119, %p120
    %p122 = scmp.ne.s32.totalorder %s114, %s117
    %p123 = scmp.eq.s32.totalorder %s10, 0
    %p124 = por %p122, %p123
    %p125 = scmp.ne.s32.totalorder %s114, %s117
    %p126 = scmp.eq.s32.totalorder %s15, 1
    %p127 = por %p125, %p126
    %p128 = scmp.ne.s32.totalorder %s117, %s118
    %p129 = scmp.eq.s32.totalorder %s15, 0
    %p130 = por %p128, %p129
    %p131 = scmp.ne.s32.totalorder %s117, %s118
    %p132 = scmp.eq.s32.totalorder %s16, 1
    %p133 = por %p131, %p132
    %p135 = scmp.ne.s32.totalorder %s118, %s134
    %p136 = scmp.eq.s32.totalorder %s16, 0
    %p137 = por %p135, %p136
    %p138 = scmp.le.s32.totalorder 1, %s10
    %p139 = scmp.lt.s32.totalorder %s10, 3
    %p140 = pnand %p138, %p139
    %p141 = pneg %p140
    // Predicated region
    $region9: #{shuffle_mixer_forward.7} parent=5 // pred_check
      _
    $region10: #{shuffle_mixer_forward.7} parent=5 // pred_check_branch
      %143 = sbr.rel (%p140) target = $region12
    $region11: #{shuffle_mixer_forward.7} parent=5 // pred_region
      %s144 = ssub.s32 %s10, 1
      // Predicated region
      $region13: #{shuffle_mixer_forward.7} parent=11 // pred_check
        %p145 = pneg %p83
      $region14: #{shuffle_mixer_forward.7} parent=11 // pred_check_branch
        %147 = sbr.rel (%p145) target = $region16
      $region15: #{shuffle_mixer_forward.7} parent=11 // pred_region
        _
      $region16: #{shuffle_mixer_forward.7} parent=11 // pred_fallthru
        _
      // Predicated region
      $region17: #{shuffle_mixer_forward.7} parent=11 // pred_check
        %p148 = pneg %p104
      $region18: #{shuffle_mixer_forward.7} parent=11 // pred_check_branch
        %150 = sbr.rel (%p148) target = $region20
      $region19: #{shuffle_mixer_forward.7} parent=11 // pred_region
        _
      $region20: #{shuffle_mixer_forward.7} parent=11 // pred_fallthru
        _
    $region12: #{shuffle_mixer_forward.7} parent=5 // pred_fallthru
      _
    %p151 = scmp.lt.s32.totalorder %s10, 2
    // Predicated region
    $region21: #{shuffle_mixer_forward.7} parent=5 // pred_check
      %p152 = pneg %p151
    $region22: #{shuffle_mixer_forward.7} parent=5 // pred_check_branch
      %154 = sbr.rel (%p152) target = $region24
    $region23: #{shuffle_mixer_forward.7} parent=5 // pred_region
      // Predicated region
      $region25: #{shuffle_mixer_forward.7} parent=23 // pred_check
        %p155 = pneg %p30
      $region26: #{shuffle_mixer_forward.7} parent=23 // pred_check_branch
        %157 = sbr.rel (%p155) target = $region28
      $region27: #{shuffle_mixer_forward.7} parent=23 // pred_region
        %p158 = scmp.lt.s32.totalorder %s10, 1
        %s159 = scalar_select %p158, %s10, 1
        %s160 = smul.addr %s159, 8
        %s161 = smul.addr %s160, 8
        %s162 = scalar_lea.vmem %s0, %s161
      $region28: #{shuffle_mixer_forward.7} parent=23 // pred_fallthru
        _
      // Predicated region
      $region29: #{shuffle_mixer_forward.7} parent=23 // pred_check
        %p163 = pneg %p56
      $region30: #{shuffle_mixer_forward.7} parent=23 // pred_check_branch
        %165 = sbr.rel (%p163) target = $region32
      $region31: #{shuffle_mixer_forward.7} parent=23 // pred_region
        %p166 = scmp.lt.s32.totalorder %s10, 1
        %s167 = scalar_select %p166, %s10, 1
        %s168 = smul.addr %s167, 4
        %s169 = smul.addr %s168, 8
        %s170 = scalar_lea.vmem %s1, %s169
      $region32: #{shuffle_mixer_forward.7} parent=23 // pred_fallthru
        _
    $region24: #{shuffle_mixer_forward.7} parent=5 // pred_fallthru
      _
    %p171 = scmp.le.s32.totalorder 1, %s10
    %p172 = scmp.lt.s32.totalorder %s10, 3
    %p173 = pnand %p171, %p172
    %p174 = pneg %p173
    // Predicated region
    $region33: #{shuffle_mixer_forward.7} parent=5 // pred_check
      _
    $region34: #{shuffle_mixer_forward.7} parent=5 // pred_check_branch
      %176 = sbr.rel (%p173) target = $region36
    $region35: #{shuffle_mixer_forward.7} parent=5 // pred_region
      %s177 = ssub.s32 %s10, 1
      %p178 = scmp.lt.s32.totalorder %s15, 1
      %s179 = scalar_select %p178, %s15, 1
      %s180 = smul.addr %s179, 8
      %s181 = smul.addr %s180, 8
      %s182 = scalar_lea.vmem %s0, %s181
      %p183 = pneg %p36
      %p184 = pneg %p33
      %p185 = scmp.lt.s32.totalorder %s15, 1
      %s186 = scalar_select %p185, %s15, 1
      %s187 = smul.addr %s186, 4
      %s188 = smul.addr %s187, 8
      %s189 = scalar_lea.vmem %s1, %s188
      %p190 = pneg %p62
      %p191 = pneg %p59
      %p192 = pneg %p83
      %p193 = pneg %p80
      %p194 = pneg %p104
      %p195 = pneg %p101
      %p196 = pneg %p130
      %p197 = pneg %p127
      %p198 = scmp.lt.s32.totalorder %s15, 1
      %s199 = scalar_select %p198, %s15, 1
      %s200 = smul.addr %s199, 4
      %s201 = smul.addr %s200, 8
      %s202 = scalar_lea.vmem %s4, %s201
      %p203 = scmp.lt.s32.totalorder %s15, 1
      %s204 = scalar_select %p203, %s15, 1
      %s205 = smul.addr %s204, 8
      %s206 = smul.addr %s205, 8
      %s207 = scalar_lea.vmem %s0, %s206
      %p208 = scmp.lt.s32.totalorder %s15, 1
      %s209 = scalar_select %p208, %s15, 1
      %s210 = smul.addr %s209, 4
      %s211 = smul.addr %s210, 8
      %s212 = scalar_lea.vmem %s1, %s211
      %p213 = scmp.lt.s32.totalorder %s15, 1
      %s214 = scalar_select %p213, %s15, 1
      %s215 = smul.addr %s214, 4
      %s216 = smul.addr %s215, 8
      %s217 = scalar_lea.vmem %s4, %s216
      %v218 = vld [vmem:[%s207] sm:$0xff]
      %v219 = vld [vmem:[%s207 + $0x8] sm:$0xff]
      %v220 = vld [vmem:[%s207 + $0x10] sm:$0xff]
      %v221 = vld [vmem:[%s207 + $0x18] sm:$0xff]
      %v222 = vld [vmem:[%s207 + $0x20] sm:$0xff]
      %v223 = vld [vmem:[%s207 + $0x28] sm:$0xff]
      %v224 = vld [vmem:[%s207 + $0x30] sm:$0xff]
      %v225 = vld [vmem:[%s207 + $0x38] sm:$0xff]
      %v226 = vlaneseq
      %vm227 = vcmp.ge.s32.totalorder %v226, 0
      %vm228 = vcmp.lt.s32.totalorder %v226, 256
      %vm229 = vmand %vm227, %vm228
      %s230 = scalar_lea.vmem [#allocation2], 7
      %231 = vst.msk [vmem:[%s230] ss:$8 sm:$0x3] %vm229, 0.0
      %232 = vst.msk [vmem:[%s230] ss:$8 sm:$0x0] %vm229, 0.0
      %s233 = scalar_lea.vmem [#allocation2], 80
      %234 = vst.msk [vmem:[%s233] ss:$8 sm:$0x3] %vm229, 0.0
      %235 = vst.msk [vmem:[%s233] ss:$8 sm:$0x0] %vm229, 0.0
      %236 = vst [vmem:[#allocation2 + $0x10] sm:$0xff] %v218
      %237 = vst [vmem:[#allocation2 + $0x18] sm:$0xff] %v219
      %238 = vst [vmem:[#allocation2 + $0x20] sm:$0xff] %v220
      %239 = vst [vmem:[#allocation2 + $0x28] sm:$0xff] %v221
      %240 = vst [vmem:[#allocation2 + $0x30] sm:$0xff] %v222
      %241 = vst [vmem:[#allocation2 + $0x38] sm:$0xff] %v223
      %242 = vst [vmem:[#allocation2 + $0x40] sm:$0xff] %v224
      %243 = vst [vmem:[#allocation2 + $0x48] sm:$0xff] %v225
      %v244 = vld [vmem:[#allocation2] sm:$0x80]
      %v245 = vld [vmem:[#allocation2 + $0x8] sm:$0x80]
      %v246 = vld [vmem:[#allocation2 + $0x10] sm:$0xff]
      %v247 = vld [vmem:[#allocation2 + $0x18] sm:$0xff]
      %v248 = vld [vmem:[#allocation2 + $0x20] sm:$0xff]
      %v249 = vld [vmem:[#allocation2 + $0x28] sm:$0xff]
      %v250 = vld [vmem:[#allocation2 + $0x30] sm:$0xff]
      %v251 = vld [vmem:[#allocation2 + $0x38] sm:$0xff]
      %v252 = vld [vmem:[#allocation2 + $0x40] sm:$0x7f]
      %v253 = vld [vmem:[#allocation2 + $0x48] sm:$0x7f]
      %v254 = vld [vmem:[%s2] sm:$0xff]
      %v255 = vld [vmem:[%s2 + $0x8] sm:$0xff]
      %v256 = vld [vmem:[%s2 + $0x10] sm:$0xff]
      %v257 = vld [vmem:[%s2 + $0x18] sm:$0xff]
      %v258 = vld [vmem:[%s2 + $0x20] sm:$0xff]
      %v259 = vld [vmem:[%s2 + $0x28] sm:$0xff]
      %v260 = vld [vmem:[%s2 + $0x30] sm:$0xff]
      %v261 = vld [vmem:[%s2 + $0x38] sm:$0xff]
      %v262 = vld [vmem:[%s2 + $0x40] sm:$0xff]
      %v263 = vld [vmem:[%s2 + $0x48] sm:$0xff]
      %v264 = vld [vmem:[%s2 + $0x50] sm:$0xff]
      %v265 = vld [vmem:[%s2 + $0x58] sm:$0xff]
      %v266 = vld [vmem:[%s2 + $0x60] sm:$0xff]
      %v267 = vld [vmem:[%s2 + $0x68] sm:$0xff]
      %v268 = vld [vmem:[%s2 + $0x70] sm:$0xff]
      %v269 = vld [vmem:[%s2 + $0x78] sm:$0xff]
      %v270 = vld [vmem:[%s2 + $0x80] sm:$0xff]
      %v271 = vld [vmem:[%s2 + $0x88] sm:$0xff]
      %v272 = vld [vmem:[%s2 + $0x90] sm:$0xff]
      %v273 = vld [vmem:[%s2 + $0x98] sm:$0xff]
      %v274 = vld [vmem:[%s2 + $0xa0] sm:$0xff]
      %v275 = vld [vmem:[%s2 + $0xa8] sm:$0xff]
      %v276 = vld [vmem:[%s2 + $0xb0] sm:$0xff]
      %v277 = vld [vmem:[%s2 + $0xb8] sm:$0xff]
      %v278 = vld [vmem:[%s2 + $0xc0] sm:$0xff]
      %v279 = vld [vmem:[%s2 + $0xc8] sm:$0xff]
      %v280 = vld [vmem:[%s2 + $0xd0] sm:$0xff]
      %v281 = vld [vmem:[%s2 + $0xd8] sm:$0xff]
      %v282 = vld [vmem:[%s2 + $0xe0] sm:$0xff]
      %v283 = vld [vmem:[%s2 + $0xe8] sm:$0xff]
      %v284 = vld [vmem:[%s2 + $0xf0] sm:$0xff]
      %v285 = vld [vmem:[%s2 + $0xf8] sm:$0xff]
      %v286 = vld [vmem:[%s3] sm:$0x1]
      %v288 = vlaneseq
      %v289 = vshrl.u32 %v288, 7
      %v290 = vsub.s32 0, %v289
      %v291 = vrot.slane %v286, %v290
      %vm303 = vcmask 1040384
      %v304 = vrot.slane %v244, 7
      %v305 = vrot.slane %v246, 7
      %v306 = vsel %vm303, %v304, %v305
      %v307 = vrot.slane %v245, 7
      %v308 = vrot.slane %v247, 7
      %v309 = vsel %vm303, %v307, %v308
      %v310 = vrot.slane %v248, 7
      %v311 = vsel %vm303, %v305, %v310
      %v312 = vrot.slane %v249, 7
      %v313 = vsel %vm303, %v308, %v312
      %v314 = vrot.slane %v250, 7
      %v315 = vsel %vm303, %v310, %v314
      %v316 = vrot.slane %v251, 7
      %v317 = vsel %vm303, %v312, %v316
      %v318 = vrot.slane %v252, 7
      %v319 = vsel %vm303, %v314, %v318
      %v320 = vrot.slane %v253, 7
      %v321 = vsel %vm303, %v316, %v320
      %330 = vmatprep.subr.mxu0 0.0
      %331 = vmatpush1.msra.mxu0 %v269
      %332 = vmatprep.subr.mxu0 0.0
      %333 = vmatpush1.msra.mxu0 %v268
      %334 = vmatprep.subr.mxu0 0.0
      %335 = vmatpush1.msra.mxu0 %v267
      %336 = vmatprep.subr.mxu0 0.0
      %337 = vmatpush1.msra.mxu0 %v266
      %338 = vmatprep.subr.mxu0 0.0
      %339 = vmatpush1.msra.mxu0 %v265
      %340 = vmatprep.subr.mxu0 0.0
      %341 = vmatpush1.msra.mxu0 %v264
      %342 = vmatprep.subr.mxu0 0.0
      %343 = vmatpush1.msra.mxu0 %v263
      %344 = vmatprep.subr.mxu0 0.0
      %345 = vmatpush1.msra.mxu0 %v262
      %346 = vmatprep.subr.mxu0 0.0
      %347 = vmatpush1.msra.mxu0 %v261
      %348 = vmatprep.subr.mxu0 0.0
      %349 = vmatpush1.msra.mxu0 %v260
      %350 = vmatprep.subr.mxu0 0.0
      %351 = vmatpush1.msra.mxu0 %v259
      %352 = vmatprep.subr.mxu0 0.0
      %353 = vmatpush1.msra.mxu0 %v258
      %354 = vmatprep.subr.mxu0 0.0
      %355 = vmatpush1.msra.mxu0 %v257
      %356 = vmatprep.subr.mxu0 0.0
      %357 = vmatpush1.msra.mxu0 %v256
      %358 = vmatprep.subr.mxu0 0.0
      %359 = vmatpush1.msra.mxu0 %v255
      %360 = vmatprep.subr.mxu0 0.0
      %361 = vmatpush1.msra.mxu0 %v254
      %362 = vmatprep.subr.mxu0 0.0
      %363 = vmatpush2.msra.mxu0 %v285
      %364 = vmatprep.subr.mxu0 0.0
      %365 = vmatpush2.msra.mxu0 %v284
      %366 = vmatprep.subr.mxu0 0.0
      %367 = vmatpush2.msra.mxu0 %v283
      %368 = vmatprep.subr.mxu0 0.0
      %369 = vmatpush2.msra.mxu0 %v282
      %370 = vmatprep.subr.mxu0 0.0
      %371 = vmatpush2.msra.mxu0 %v281
      %372 = vmatprep.subr.mxu0 0.0
      %373 = vmatpush2.msra.mxu0 %v280
      %374 = vmatprep.subr.mxu0 0.0
      %375 = vmatpush2.msra.mxu0 %v279
      %376 = vmatprep.subr.mxu0 0.0
      %377 = vmatpush2.msra.mxu0 %v278
      %378 = vmatprep.subr.mxu0 0.0
      %379 = vmatpush2.msra.mxu0 %v277
      %380 = vmatprep.subr.mxu0 0.0
      %381 = vmatpush2.msra.mxu0 %v276
      %382 = vmatprep.subr.mxu0 0.0
      %383 = vmatpush2.msra.mxu0 %v275
      %384 = vmatprep.subr.mxu0 0.0
      %385 = vmatpush2.msra.mxu0 %v274
      %386 = vmatprep.subr.mxu0 0.0
      %387 = vmatpush2.msra.mxu0 %v273
      %388 = vmatprep.subr.mxu0 0.0
      %389 = vmatpush2.msra.mxu0 %v272
      %390 = vmatprep.subr.mxu0 0.0
      %391 = vmatpush2.msra.mxu0 %v271
      %392 = vmatprep.subr.mxu0 0.0
      %393 = vmatpush2.msra.mxu0 %v270
      %394 = vmatprep.mubr.f32.mxu0 %v309
      %395 = vmatmul.mubr.f32.gmra.mxu0 %v306
      %v396 = vpop.f32.mrf.mxu0
      %v397 = vadd.f32 %v291, %v396
      %v398 = vpop.f32.mrf.mxu0
      %399 = vmatprep.mubr.f32.mxu0 %v313
      %400 = vmatmul.mubr.f32.gmra.mxu0 %v311
      %v401 = vpop.f32.mrf.mxu0
      %v402 = vadd.f32 %v291, %v401
      %v403 = vpop.f32.mrf.mxu0
      %404 = vmatprep.mubr.f32.mxu0 %v317
      %405 = vmatmul.mubr.f32.gmra.mxu0 %v315
      %v406 = vpop.f32.mrf.mxu0
      %v407 = vadd.f32 %v291, %v406
      %v408 = vpop.f32.mrf.mxu0
      %409 = vmatprep.mubr.f32.mxu0 %v321
      %410 = vmatmul.mubr.f32.gmra.mxu0 %v319
      %v411 = vpop.f32.mrf.mxu0
      %v412 = vadd.f32 %v291, %v411
      %v413 = vpop.f32.mrf.mxu0
      %414 = vdwg.mxu0
      %v415 = vld [vmem:[#allocation2 + $0x40] sm:$0xff]
      %v416 = vld [vmem:[#allocation2 + $0x48] sm:$0xff]
      %s417 = scalar_lea.vmem %s2, 256
      %v418 = vld [vmem:[%s417] sm:$0xff]
      %v419 = vld [vmem:[%s417 + $0x8] sm:$0xff]
      %v420 = vld [vmem:[%s417 + $0x10] sm:$0xff]
      %v421 = vld [vmem:[%s417 + $0x18] sm:$0xff]
      %v422 = vld [vmem:[%s417 + $0x20] sm:$0xff]
      %v423 = vld [vmem:[%s417 + $0x28] sm:$0xff]
      %v424 = vld [vmem:[%s417 + $0x30] sm:$0xff]
      %v425 = vld [vmem:[%s417 + $0x38] sm:$0xff]
      %v426 = vld [vmem:[%s417 + $0x40] sm:$0xff]
      %v427 = vld [vmem:[%s417 + $0x48] sm:$0xff]
      %v428 = vld [vmem:[%s417 + $0x50] sm:$0xff]
      %v429 = vld [vmem:[%s417 + $0x58] sm:$0xff]
      %v430 = vld [vmem:[%s417 + $0x60] sm:$0xff]
      %v431 = vld [vmem:[%s417 + $0x68] sm:$0xff]
      %v432 = vld [vmem:[%s417 + $0x70] sm:$0xff]
      %v433 = vld [vmem:[%s417 + $0x78] sm:$0xff]
      %v434 = vld [vmem:[%s417 + $0x80] sm:$0xff]
      %v435 = vld [vmem:[%s417 + $0x88] sm:$0xff]
      %v436 = vld [vmem:[%s417 + $0x90] sm:$0xff]
      %v437 = vld [vmem:[%s417 + $0x98] sm:$0xff]
      %v438 = vld [vmem:[%s417 + $0xa0] sm:$0xff]
      %v439 = vld [vmem:[%s417 + $0xa8] sm:$0xff]
      %v440 = vld [vmem:[%s417 + $0xb0] sm:$0xff]
      %v441 = vld [vmem:[%s417 + $0xb8] sm:$0xff]
      %v442 = vld [vmem:[%s417 + $0xc0] sm:$0xff]
      %v443 = vld [vmem:[%s417 + $0xc8] sm:$0xff]
      %v444 = vld [vmem:[%s417 + $0xd0] sm:$0xff]
      %v445 = vld [vmem:[%s417 + $0xd8] sm:$0xff]
      %v446 = vld [vmem:[%s417 + $0xe0] sm:$0xff]
      %v447 = vld [vmem:[%s417 + $0xe8] sm:$0xff]
      %v448 = vld [vmem:[%s417 + $0xf0] sm:$0xff]
      %v449 = vld [vmem:[%s417 + $0xf8] sm:$0xff]
      %450 = vmatprep.subr.mxu0 0.0
      %451 = vmatpush1.msra.mxu0 %v433
      %452 = vmatprep.subr.mxu0 0.0
      %453 = vmatpush1.msra.mxu0 %v432
      %454 = vmatprep.subr.mxu0 0.0
      %455 = vmatpush1.msra.mxu0 %v431
      %456 = vmatprep.subr.mxu0 0.0
      %457 = vmatpush1.msra.mxu0 %v430
      %458 = vmatprep.subr.mxu0 0.0
      %459 = vmatpush1.msra.mxu0 %v429
      %460 = vmatprep.subr.mxu0 0.0
      %461 = vmatpush1.msra.mxu0 %v428
      %462 = vmatprep.subr.mxu0 0.0
      %463 = vmatpush1.msra.mxu0 %v427
      %464 = vmatprep.subr.mxu0 0.0
      %465 = vmatpush1.msra.mxu0 %v426
      %466 = vmatprep.subr.mxu0 0.0
      %467 = vmatpush1.msra.mxu0 %v425
      %468 = vmatprep.subr.mxu0 0.0
      %469 = vmatpush1.msra.mxu0 %v424
      %470 = vmatprep.subr.mxu0 0.0
      %471 = vmatpush1.msra.mxu0 %v423
      %472 = vmatprep.subr.mxu0 0.0
      %473 = vmatpush1.msra.mxu0 %v422
      %474 = vmatprep.subr.mxu0 0.0
      %475 = vmatpush1.msra.mxu0 %v421
      %476 = vmatprep.subr.mxu0 0.0
      %477 = vmatpush1.msra.mxu0 %v420
      %478 = vmatprep.subr.mxu0 0.0
      %479 = vmatpush1.msra.mxu0 %v419
      %480 = vmatprep.subr.mxu0 0.0
      %481 = vmatpush1.msra.mxu0 %v418
      %482 = vmatprep.subr.mxu0 0.0
      %483 = vmatpush2.msra.mxu0 %v449
      %484 = vmatprep.subr.mxu0 0.0
      %485 = vmatpush2.msra.mxu0 %v448
      %486 = vmatprep.subr.mxu0 0.0
      %487 = vmatpush2.msra.mxu0 %v447
      %488 = vmatprep.subr.mxu0 0.0
      %489 = vmatpush2.msra.mxu0 %v446
      %490 = vmatprep.subr.mxu0 0.0
      %491 = vmatpush2.msra.mxu0 %v445
      %492 = vmatprep.subr.mxu0 0.0
      %493 = vmatpush2.msra.mxu0 %v444
      %494 = vmatprep.subr.mxu0 0.0
      %495 = vmatpush2.msra.mxu0 %v443
      %496 = vmatprep.subr.mxu0 0.0
      %497 = vmatpush2.msra.mxu0 %v442
      %498 = vmatprep.subr.mxu0 0.0
      %499 = vmatpush2.msra.mxu0 %v441
      %500 = vmatprep.subr.mxu0 0.0
      %501 = vmatpush2.msra.mxu0 %v440
      %502 = vmatprep.subr.mxu0 0.0
      %503 = vmatpush2.msra.mxu0 %v439
      %504 = vmatprep.subr.mxu0 0.0
      %505 = vmatpush2.msra.mxu0 %v438
      %506 = vmatprep.subr.mxu0 0.0
      %507 = vmatpush2.msra.mxu0 %v437
      %508 = vmatprep.subr.mxu0 0.0
      %509 = vmatpush2.msra.mxu0 %v436
      %510 = vmatprep.subr.mxu0 0.0
      %511 = vmatpush2.msra.mxu0 %v435
      %512 = vmatprep.subr.mxu0 0.0
      %513 = vmatpush2.msra.mxu0 %v434
      %514 = vmatprep.mubr.f32.mxu0 %v247
      %515 = vmatmul.mubr.f32.gmra.mxu0 %v246
      %v516 = vpop.f32.mrf.mxu0
      %v517 = vadd.f32 0.0, %v516
      %v518 = vpop.f32.mrf.mxu0
      %519 = vmatprep.mubr.f32.mxu0 %v249
      %520 = vmatmul.mubr.f32.gmra.mxu0 %v248
      %v521 = vpop.f32.mrf.mxu0
      %v522 = vadd.f32 0.0, %v521
      %v523 = vpop.f32.mrf.mxu0
      %524 = vmatprep.mubr.f32.mxu0 %v251
      %525 = vmatmul.mubr.f32.gmra.mxu0 %v250
      %v526 = vpop.f32.mrf.mxu0
      %v527 = vadd.f32 0.0, %v526
      %v528 = vpop.f32.mrf.mxu0
      %529 = vmatprep.mubr.f32.mxu0 %v416
      %530 = vmatmul.mubr.f32.gmra.mxu0 %v415
      %v531 = vpop.f32.mrf.mxu0
      %v532 = vadd.f32 0.0, %v531
      %v533 = vpop.f32.mrf.mxu0
      %534 = vdwg.mxu0
      %v535 = vadd.f32 %v397, %v517
      %v536 = vadd.f32 %v402, %v522
      %v537 = vadd.f32 %v407, %v527
      %v538 = vadd.f32 %v412, %v532
      %v539 = vld [vmem:[#allocation2 + $0x10] sm:$0xfe]
      %v540 = vld [vmem:[#allocation2 + $0x18] sm:$0xfe]
      %v541 = vld [vmem:[#allocation2 + $0x20] sm:$0xff]
      %v542 = vld [vmem:[#allocation2 + $0x28] sm:$0xff]
      %v543 = vld [vmem:[#allocation2 + $0x30] sm:$0xff]
      %v544 = vld [vmem:[#allocation2 + $0x38] sm:$0xff]
      %v545 = vld [vmem:[#allocation2 + $0x40] sm:$0xff]
      %v546 = vld [vmem:[#allocation2 + $0x48] sm:$0xff]
      %v547 = vld [vmem:[#allocation2 + $0x50] sm:$0x1]
      %v548 = vld [vmem:[#allocation2 + $0x58] sm:$0x1]
      %s549 = scalar_lea.vmem %s2, 512
      %v550 = vld [vmem:[%s549] sm:$0xff]
      %v551 = vld [vmem:[%s549 + $0x8] sm:$0xff]
      %v552 = vld [vmem:[%s549 + $0x10] sm:$0xff]
      %v553 = vld [vmem:[%s549 + $0x18] sm:$0xff]
      %v554 = vld [vmem:[%s549 + $0x20] sm:$0xff]
      %v555 = vld [vmem:[%s549 + $0x28] sm:$0xff]
      %v556 = vld [vmem:[%s549 + $0x30] sm:$0xff]
      %v557 = vld [vmem:[%s549 + $0x38] sm:$0xff]
      %v558 = vld [vmem:[%s549 + $0x40] sm:$0xff]
      %v559 = vld [vmem:[%s549 + $0x48] sm:$0xff]
      %v560 = vld [vmem:[%s549 + $0x50] sm:$0xff]
      %v561 = vld [vmem:[%s549 + $0x58] sm:$0xff]
      %v562 = vld [vmem:[%s549 + $0x60] sm:$0xff]
      %v563 = vld [vmem:[%s549 + $0x68] sm:$0xff]
      %v564 = vld [vmem:[%s549 + $0x70] sm:$0xff]
      %v565 = vld [vmem:[%s549 + $0x78] sm:$0xff]
      %v566 = vld [vmem:[%s549 + $0x80] sm:$0xff]
      %v567 = vld [vmem:[%s549 + $0x88] sm:$0xff]
      %v568 = vld [vmem:[%s549 + $0x90] sm:$0xff]
      %v569 = vld [vmem:[%s549 + $0x98] sm:$0xff]
      %v570 = vld [vmem:[%s549 + $0xa0] sm:$0xff]
      %v571 = vld [vmem:[%s549 + $0xa8] sm:$0xff]
      %v572 = vld [vmem:[%s549 + $0xb0] sm:$0xff]
      %v573 = vld [vmem:[%s549 + $0xb8] sm:$0xff]
      %v574 = vld [vmem:[%s549 + $0xc0] sm:$0xff]
      %v575 = vld [vmem:[%s549 + $0xc8] sm:$0xff]
      %v576 = vld [vmem:[%s549 + $0xd0] sm:$0xff]
      %v577 = vld [vmem:[%s549 + $0xd8] sm:$0xff]
      %v578 = vld [vmem:[%s549 + $0xe0] sm:$0xff]
      %v579 = vld [vmem:[%s549 + $0xe8] sm:$0xff]
      %v580 = vld [vmem:[%s549 + $0xf0] sm:$0xff]
      %v581 = vld [vmem:[%s549 + $0xf8] sm:$0xff]
      %vm592 = vcmask 1046528
      %v593 = vrot.slane %v539, 1
      %v594 = vrot.slane %v541, 1
      %v595 = vsel %vm592, %v593, %v594
      %v596 = vrot.slane %v540, 1
      %v597 = vrot.slane %v542, 1
      %v598 = vsel %vm592, %v596, %v597
      %v599 = vrot.slane %v543, 1
      %v600 = vsel %vm592, %v594, %v599
      %v601 = vrot.slane %v544, 1
      %v602 = vsel %vm592, %v597, %v601
      %v603 = vrot.slane %v545, 1
      %v604 = vsel %vm592, %v599, %v603
      %v605 = vrot.slane %v546, 1
      %v606 = vsel %vm592, %v601, %v605
      %v607 = vrot.slane %v547, 1
      %v608 = vsel %vm592, %v603, %v607
      %v609 = vrot.slane %v548, 1
      %v610 = vsel %vm592, %v605, %v609
      %619 = vmatprep.subr.mxu0 0.0
      %620 = vmatpush1.msra.mxu0 %v565
      %621 = vmatprep.subr.mxu0 0.0
      %622 = vmatpush1.msra.mxu0 %v564
      %623 = vmatprep.subr.mxu0 0.0
      %624 = vmatpush1.msra.mxu0 %v563
      %625 = vmatprep.subr.mxu0 0.0
      %626 = vmatpush1.msra.mxu0 %v562
      %627 = vmatprep.subr.mxu0 0.0
      %628 = vmatpush1.msra.mxu0 %v561
      %629 = vmatprep.subr.mxu0 0.0
      %630 = vmatpush1.msra.mxu0 %v560
      %631 = vmatprep.subr.mxu0 0.0
      %632 = vmatpush1.msra.mxu0 %v559
      %633 = vmatprep.subr.mxu0 0.0
      %634 = vmatpush1.msra.mxu0 %v558
      %635 = vmatprep.subr.mxu0 0.0
      %636 = vmatpush1.msra.mxu0 %v557
      %637 = vmatprep.subr.mxu0 0.0
      %638 = vmatpush1.msra.mxu0 %v556
      %639 = vmatprep.subr.mxu0 0.0
      %640 = vmatpush1.msra.mxu0 %v555
      %641 = vmatprep.subr.mxu0 0.0
      %642 = vmatpush1.msra.mxu0 %v554
      %643 = vmatprep.subr.mxu0 0.0
      %644 = vmatpush1.msra.mxu0 %v553
      %645 = vmatprep.subr.mxu0 0.0
      %646 = vmatpush1.msra.mxu0 %v552
      %647 = vmatprep.subr.mxu0 0.0
      %648 = vmatpush1.msra.mxu0 %v551
      %649 = vmatprep.subr.mxu0 0.0
      %650 = vmatpush1.msra.mxu0 %v550
      %651 = vmatprep.subr.mxu0 0.0
      %652 = vmatpush2.msra.mxu0 %v581
      %653 = vmatprep.subr.mxu0 0.0
      %654 = vmatpush2.msra.mxu0 %v580
      %655 = vmatprep.subr.mxu0 0.0
      %656 = vmatpush2.msra.mxu0 %v579
      %657 = vmatprep.subr.mxu0 0.0
      %658 = vmatpush2.msra.mxu0 %v578
      %659 = vmatprep.subr.mxu0 0.0
      %660 = vmatpush2.msra.mxu0 %v577
      %661 = vmatprep.subr.mxu0 0.0
      %662 = vmatpush2.msra.mxu0 %v576
      %663 = vmatprep.subr.mxu0 0.0
      %664 = vmatpush2.msra.mxu0 %v575
      %665 = vmatprep.subr.mxu0 0.0
      %666 = vmatpush2.msra.mxu0 %v574
      %667 = vmatprep.subr.mxu0 0.0
      %668 = vmatpush2.msra.mxu0 %v573
      %669 = vmatprep.subr.mxu0 0.0
      %670 = vmatpush2.msra.mxu0 %v572
      %671 = vmatprep.subr.mxu0 0.0
      %672 = vmatpush2.msra.mxu0 %v571
      %673 = vmatprep.subr.mxu0 0.0
      %674 = vmatpush2.msra.mxu0 %v570
      %675 = vmatprep.subr.mxu0 0.0
      %676 = vmatpush2.msra.mxu0 %v569
      %677 = vmatprep.subr.mxu0 0.0
      %678 = vmatpush2.msra.mxu0 %v568
      %679 = vmatprep.subr.mxu0 0.0
      %680 = vmatpush2.msra.mxu0 %v567
      %681 = vmatprep.subr.mxu0 0.0
      %682 = vmatpush2.msra.mxu0 %v566
      %683 = vmatprep.mubr.f32.mxu0 %v598
      %684 = vmatmul.mubr.f32.gmra.mxu0 %v595
      %v685 = vpop.f32.mrf.mxu0
      %v686 = vadd.f32 0.0, %v685
      %v687 = vpop.f32.mrf.mxu0
      %688 = vmatprep.mubr.f32.mxu0 %v602
      %689 = vmatmul.mubr.f32.gmra.mxu0 %v600
      %v690 = vpop.f32.mrf.mxu0
      %v691 = vadd.f32 0.0, %v690
      %v692 = vpop.f32.mrf.mxu0
      %693 = vmatprep.mubr.f32.mxu0 %v606
      %694 = vmatmul.mubr.f32.gmra.mxu0 %v604
      %v695 = vpop.f32.mrf.mxu0
      %v696 = vadd.f32 0.0, %v695
      %v697 = vpop.f32.mrf.mxu0
      %698 = vmatprep.mubr.f32.mxu0 %v610
      %699 = vmatmul.mubr.f32.gmra.mxu0 %v608
      %v700 = vpop.f32.mrf.mxu0
      %v701 = vadd.f32 0.0, %v700
      %v702 = vpop.f32.mrf.mxu0
      %703 = vdwg.mxu0
      %v704 = vadd.f32 %v535, %v686
      %v705 = vadd.f32 %v536, %v691
      %v706 = vadd.f32 %v537, %v696
      %v707 = vadd.f32 %v538, %v701
      %v708 = vld [vmem:[%s212] sm:$0xff]
      %v709 = vld [vmem:[%s212 + $0x8] sm:$0xff]
      %v710 = vld [vmem:[%s212 + $0x10] sm:$0xff]
      %v711 = vld [vmem:[%s212 + $0x18] sm:$0xff]
      %v712 = vadd.f32 %v704, %v708
      %v713 = vadd.f32 %v705, %v709
      %v714 = vadd.f32 %v706, %v710
      %v715 = vadd.f32 %v707, %v711
      %vm716 = vcmask 785408
      %717 = vst.msk [vmem:[%s217] sm:$0xff] %vm716, %v712
      %718 = vst.msk [vmem:[%s217 + $0x8] sm:$0xff] %vm716, %v713
      %719 = vst.msk [vmem:[%s217 + $0x10] sm:$0xff] %vm716, %v714
      %720 = vst.msk [vmem:[%s217 + $0x18] sm:$0xff] %vm716, %v715
      %p721 = scmp.lt.s32.totalorder %s15, 1
      %s722 = scalar_select %p721, %s15, 1
      %s723 = smul.addr %s722, 4
      %s724 = smul.addr %s723, 8
      %s725 = scalar_lea.vmem %s4, %s724
      // Predicated region
      $region37: #{shuffle_mixer_forward.7} parent=35 // pred_check
        %p726 = pneg %p127
      $region38: #{shuffle_mixer_forward.7} parent=35 // pred_check_branch
        %728 = sbr.rel (%p726) target = $region40
      $region39: #{shuffle_mixer_forward.7} parent=35 // pred_region
        _
      $region40: #{shuffle_mixer_forward.7} parent=35 // pred_fallthru
        _
    $region36: #{shuffle_mixer_forward.7} parent=5 // pred_fallthru
      _
    %p729 = scmp.le.s32.totalorder 2, %s10
    // Predicated region
    $region41: #{shuffle_mixer_forward.7} parent=5 // pred_check
      %p730 = pneg %p729
    $region42: #{shuffle_mixer_forward.7} parent=5 // pred_check_branch
      %732 = sbr.rel (%p730) target = $region44
    $region43: #{shuffle_mixer_forward.7} parent=5 // pred_region
      %s733 = ssub.s32 %s10, 2
      // Predicated region
      $region45: #{shuffle_mixer_forward.7} parent=43 // pred_check
        %p734 = pneg %p133
      $region46: #{shuffle_mixer_forward.7} parent=43 // pred_check_branch
        %736 = sbr.rel (%p734) target = $region48
      $region47: #{shuffle_mixer_forward.7} parent=43 // pred_region
        %p737 = scmp.lt.s32.totalorder %s16, 1
        %s738 = scalar_select %p737, %s16, 1
        %s739 = smul.addr %s738, 4
        %s740 = smul.addr %s739, 8
        %s741 = scalar_lea.vmem %s4, %s740
      $region48: #{shuffle_mixer_forward.7} parent=43 // pred_fallthru
        _
    $region44: #{shuffle_mixer_forward.7} parent=5 // pred_fallthru
      _
  $region6: #{shuffle_mixer_forward.7} parent=0 // loop_footer
    %s14 = sadd.s32 1, %s10
  $region7: #{shuffle_mixer_forward.7} parent=0 // loop_footer_branch
    %9 = sbr.rel target = $region3
  $region8: #{shuffle_mixer_forward.7} parent=0 // loop_exit
    _

</llo_original>
